<compile_context>
chip_gen: v5e
topology: v5e:2x2
jax: 0.10.0
libtpu: 0.0.40
codegen_flags: <defaults>
</compile_context>

<pallas_src>
import functools

import jax
import jax.numpy as jnp
from jax.experimental import pallas as pl
from jax.experimental.pallas import tpu as pltpu


def _round_up(a, b):
    return ((a + b - 1) // b) * b


def _choose_tile(dim, cap, base):
    """Pick (tile, padded_dim): tile is a multiple of `base`, <= cap, and divides padded_dim."""
    dp = _round_up(max(dim, 1), base)
    if dp <= cap:
        return dp, dp
    t = (cap // base) * base
    while dp % t:
        t -= base
    return t, dp


# ----------------------- fused batched matmul kernel ------------------------

def _mm_kernel(x_ref, w_ref, b_ref, *refs, pre_act, post_act, compute_stats):
    if compute_stats:
        o_ref, stats_ref, acc_ref = refs
    else:
        o_ref, acc_ref = refs

    @pl.when(pl.program_id(3) == 0)
    def _():
        acc_ref[...] = jnp.zeros_like(acc_ref)

    x = x_ref[0]                                        # (tm, tk) bf16
    if pre_act == "leaky":
        x = jnp.where(x >= 0, x, x * jnp.asarray(0.2, x.dtype))
    elif pre_act == "relu":
        x = jnp.maximum(x, jnp.asarray(0.0, x.dtype))

    acc_ref[...] += jnp.dot(x, w_ref[0], preferred_element_type=jnp.float32)

    @pl.when(pl.program_id(3) == pl.num_programs(3) - 1)
    def _():
        y = acc_ref[...] + b_ref[0]                     # (tm, tn) f32
        if post_act == "relu":
            y = jnp.maximum(y, 0.0)
        elif post_act == "tanh":
            y = jnp.tanh(y)
        o_ref[...] = y.astype(o_ref.dtype)[None]
        if compute_stats:
            # per-column partial sum / sum-of-squares packed into an (8, tn) lane-dense tile
            s = jnp.sum(y, axis=0)
            q = jnp.sum(y * y, axis=0)
            rows = jax.lax.broadcasted_iota(jnp.int32, (8, y.shape[1]), 0)
            st = jnp.where(rows == 0, s[None, :],
                           jnp.where(rows == 1, q[None, :], jnp.float32(0.0)))
            stats_ref[...] = st[None, None]


def matmul_fused(x, w, b, meta, *, pre_act=None, post_act=None, compute_stats=False,
                 out_dtype=jnp.bfloat16):
    """post_act(pre_act(x) @ w + b), optionally with fused per-column BN partial stats.

    x: (B, M, K) bf16 (unpadded); w: (B, Kp, Np) bf16 pre-packed; b: (B, 1, Np) f32.
    Returns (y[(B, M, N) out_dtype], raw_stats_or_None).
    Only use compute_stats=True when the bias is all-zero (BN-followed convs): padded rows
    then stay exactly zero and do not pollute the statistics.
    """
    B, M, K = x.shape
    N, tk, tn = meta["N"], meta["tk"], meta["tn"]
    Kp, Np = w.shape[1], w.shape[2]
    assert K == meta["K"]
    tm, Mp = _choose_tile(M, 512, 16)                   # 16: bf16 sublane packing

    xp = jnp.pad(x.astype(jnp.bfloat16), ((0, 0), (0, Mp - M), (0, Kp - K)))

    grid = (B, Mp // tm, Np // tn, Kp // tk)
    kernel = functools.partial(_mm_kernel, pre_act=pre_act, post_act=post_act,
                               compute_stats=compute_stats)

    out_shape = [jax.ShapeDtypeStruct((B, Mp, Np), out_dtype)]
    out_specs = [pl.BlockSpec((1, tm, tn), lambda bb, i, j, k: (bb, i, j))]
    if compute_stats:
        out_shape.append(jax.ShapeDtypeStruct((B, Mp // tm, 8, Np), jnp.float32))
        out_specs.append(pl.BlockSpec((1, 1, 8, tn), lambda bb, i, j, k: (bb, i, 0, j)))

    bytes_out = B * Mp * Np * (4 if out_dtype == jnp.float32 else 2)
    cost = pl.CostEstimate(
        flops=2 * B * Mp * Np * Kp,
        transcendentals=(B * Mp * Np) if post_act == "tanh" else 0,
        bytes_accessed=xp.size * 2 + w.size * 2 + b.size * 4 + bytes_out)

    res = pl.pallas_call(
        kernel,
        out_shape=out_shape,
        grid_spec=pltpu.PrefetchScalarGridSpec(
            num_scalar_prefetch=0,
            grid=grid,
            in_specs=[
                pl.BlockSpec((1, tm, tk), lambda bb, i, j, k: (bb, i, k)),
                pl.BlockSpec((1, tk, tn), lambda bb, i, j, k: (bb, k, j)),
                pl.BlockSpec((1, 1, tn), lambda bb, i, j, k: (bb, 0, j)),
            ],
            out_specs=out_specs,
            scratch_shapes=[pltpu.VMEM((tm, tn), jnp.float32)],
        ),
        compiler_params=pltpu.CompilerParams(
            dimension_semantics=("parallel", "parallel", "parallel", "arbitrary"),
            vmem_limit_bytes=32 * 1024 * 1024,
        ),
        cost_estimate=cost,
    )(xp, w, b)

    y = res[0][:, :M, :N]
    stats = res[1] if compute_stats else None
    return y, stats


# ------------------------ BatchNorm (training mode) -------------------------

def _bn_norm_kernel(x_ref, sc_ref, sh_ref, o_ref):
    o_ref[...] = (x_ref[...].astype(jnp.float32) * sc_ref[...] + sh_ref[...]).astype(o_ref.dtype)


def batchnorm_apply(x, stats_raw, gamma, beta, eps=1e-5):
    """Training-mode BatchNorm using the sum/sum-of-squares fused into the conv epilogue."""
    n, h, w, c = x.shape
    count = float(n * h * w)
    st = jnp.sum(stats_raw, axis=(0, 1))                 # (8, Np) f32
    s, q = st[0, :c], st[1, :c]
    mean = s / count
    var = q / count - mean * mean                        # biased variance (PyTorch training norm)
    # TODO(synk): E[x^2]-E[x]^2 can cancel for large-mean activations; a mean-subtracted second
    # pass would be safer if reusing this kernel with pretrained weights.
    inv = jax.lax.rsqrt(var + eps)
    scale = gamma * inv
    shift = beta - mean * scale

    # Lane-dense 2-D view: fold W*C into lanes (scale/shift tiled) when small enough.
    if w * c <= 8192:
        rows, cols, rep = n * h, w * c, w
    else:
        rows, cols, rep = n * h * w, c, 1
    x2 = x.reshape(rows, cols)
    sc = jnp.tile(scale, rep).reshape(1, cols).astype(jnp.float32)
    sh = jnp.tile(shift, rep).reshape(1, cols).astype(jnp.float32)

    row_cap = max(16, min(512, ((1 << 21) // max(cols * 2, 1)) // 16 * 16))
    tr, rp = _choose_tile(rows, row_cap, 16)
    xp = jnp.pad(x2, ((0, rp - rows), (0, 0)))

    y = pl.pallas_call(
        _bn_norm_kernel,
        out_shape=jax.ShapeDtypeStruct((rp, cols), jnp.bfloat16),
        grid_spec=pltpu.PrefetchScalarGridSpec(
            num_scalar_prefetch=0,
            grid=(rp // tr,),
            in_specs=[pl.BlockSpec((tr, cols), lambda i: (i, 0)),
                      pl.BlockSpec((1, cols), lambda i: (0, 0)),
                      pl.BlockSpec((1, cols), lambda i: (0, 0))],
            out_specs=pl.BlockSpec((tr, cols), lambda i: (i, 0)),
        ),
        compiler_params=pltpu.CompilerParams(dimension_semantics=("parallel",)),
    )(xp, sc, sh)
    return y[:rows].reshape(n, h, w, c)


# ------------------------------ conv wrappers --------------------------------

def conv2d_s2(x, w, b, meta, *, pre_act, compute_stats):
    """Conv2d(k=4, s=2, p=1, bias=False) in NHWC with fused pre-activation (+BN stats)."""
    n, h, wd, cin = x.shape
    oh, ow = h // 2, wd // 2
    xp = jnp.pad(x, ((0, 0), (1, 1), (1, 1), (0, 0)))
    # TODO(synk): im2col (4x activation replication) is still jnp glue; an in-kernel tap grid
    # axis with strided DMA would remove this traffic.
    cols = [xp[:, kh:kh + 2 * oh:2, kw:kw + 2 * ow:2, :]
            for kh in range(4) for kw in range(4)]
    patches = jnp.concatenate(cols, axis=-1).reshape(1, n * oh * ow, 16 * cin)
    y, stats = matmul_fused(patches, w, b, meta, pre_act=pre_act, post_act=None,
                            compute_stats=compute_stats, out_dtype=jnp.bfloat16)
    return y[0].reshape(n, oh, ow, meta["N"]), stats


def conv_transpose2d_s2(xs, w, b, meta, *, pre_act, post_act, compute_stats, out_dtype):
    """ConvTranspose2d(k=4, s=2, p=1) via sub-pixel decomposition (4 parity 2x2 sub-convs).

    `xs` is a list of NHWC tensors whose channels are concatenated lazily during patch
    construction (avoids materializing the U-Net skip concat)."""
    n, h, wd = xs[0].shape[:3]
    cout = meta["N"]
    xps = [jnp.pad(t, ((0, 0), (1, 1), (1, 1), (0, 0))) for t in xs]
    pats = []
    for r in range(2):
        for s in range(2):
            cols = [xp[:, r + a:r + a + h, s + b:s + b + wd, :]
                    for a in range(2) for b in range(2) for xp in xps]
            pats.append(jnp.concatenate(cols, axis=-1).reshape(n * h * wd, -1))
    patches = jnp.stack(pats, axis=0)                     # (4, n*h*wd, 4*cin_total) bf16
    y, stats = matmul_fused(patches, w, b, meta, pre_act=pre_act, post_act=post_act,
                            compute_stats=compute_stats, out_dtype=out_dtype)
    # interleave parities: y[2r+s] -> out[:, 2i+r, 2j+s, :]
    # TODO(synk): write pre-interleaved from the kernel out_spec to save this transpose pass.
    y = y.reshape(2, 2, n, h, wd, cout).transpose(2, 3, 0, 4, 1, 5)
    return y.reshape(n, 2 * h, 2 * wd, cout), stats


# ------------------------- UnetSkipConnectionBlock ---------------------------

def _pack_weight(wmat, bias):
    """Pad to MXU-friendly tiles and cast to bf16 once at init (not per forward step)."""
    _, K, N = wmat.shape
    tk, Kp = _choose_tile(K, 1024, 128)
    tn, Np = _choose_tile(N, 256, 128)
    w = jnp.pad(wmat, ((0, 0), (0, Kp - K), (0, Np - N))).astype(jnp.bfloat16)
    b = jnp.pad(bias, ((0, 0), (0, 0), (0, Np - N))).astype(jnp.float32)
    return (w, b), dict(K=K, N=N, tk=tk, tn=tn)


def init_block(key, outer_nc, inner_nc, input_nc=None, innermost=False, outermost=False):
    if input_nc is None:
        input_nc = outer_nc
    k1, k2, k3 = jax.random.split(key, 3)
    p, meta = {}, {}

    # downconv: Conv2d(input_nc, inner_nc, 4, 2, 1, bias=False)  (BatchNorm => no conv bias)
    down_w = 0.02 * jax.random.normal(k1, (inner_nc, input_nc, 4, 4), jnp.float32)
    dmat = jnp.transpose(down_w, (2, 3, 1, 0)).reshape(1, 16 * input_nc, inner_nc)
    (p["down_w"], p["down_b"]), meta["down"] = _pack_weight(
        dmat, jnp.zeros((1, 1, inner_nc), jnp.float32))
    if (not outermost) and (not innermost):
        p["down_gamma"] = jnp.ones((inner_nc,), jnp.float32)
        p["down_beta"] = jnp.zeros((inner_nc,), jnp.float32)

    # upconv: ConvTranspose2d(up_in, outer_nc, 4, 2, 1); bias only in the outermost block.
    up_in = inner_nc if innermost else inner_nc * 2
    up_w = 0.02 * jax.random.normal(k2, (up_in, outer_nc, 4, 4), jnp.float32)
    subs = []
    for r in range(2):
        for s in range(2):
            rows = jnp.array([3 - r, 1 - r])        # kernel row hit by sub-tap a = 0, 1
            colsk = jnp.array([3 - s, 1 - s])       # kernel col hit by sub-tap b = 0, 1
            wsub = up_w[:, :, rows, :][:, :, :, colsk]            # (Cin, Cout, 2, 2)
            subs.append(jnp.transpose(wsub, (2, 3, 0, 1)).reshape(4 * up_in, outer_nc))
    up_mats = jnp.stack(subs, axis=0)                              # (4, 4*Cin, Cout)
    if outermost:
        up_b = 0.02 * jax.random.normal(k3, (outer_nc,), jnp.float32)
    else:
        up_b = jnp.zeros((outer_nc,), jnp.float32)
        p["up_gamma"] = jnp.ones((outer_nc,), jnp.float32)
        p["up_beta"] = jnp.zeros((outer_nc,), jnp.float32)
    (p["up_w"], p["up_b"]), meta["up"] = _pack_weight(
        up_mats, jnp.tile(up_b.reshape(1, 1, outer_nc), (4, 1, 1)))
    return p, meta


def make_block_fn(p, meta, spec, sub_fn):
    outermost, innermost = spec["outermost"], spec["innermost"]

    def fn(x):
        # down path: LeakyReLU(0.2) fused as matmul pre-activation (leaky(0)=0, so the zero
        # spatial padding stays correct).  Outermost block has no pre-activation.
        pre = None if outermost else "leaky"
        need_down_bn = (not outermost) and (not innermost)
        h, dstats = conv2d_s2(x, p["down_w"], p["down_b"], meta["down"],
                              pre_act=pre, compute_stats=need_down_bn)
        if need_down_bn:
            h = batchnorm_apply(h, dstats, p["down_gamma"], p["down_beta"])
        up_in = sub_fn(h) if sub_fn is not None else [h]
        # up path: ReLU fused as pre-activation; outermost fuses bias + Tanh into the epilogue.
        post = "tanh" if outermost else None
        out_dtype = jnp.float32 if outermost else jnp.bfloat16
        h2, ustats = conv_transpose2d_s2(up_in, p["up_w"], p["up_b"], meta["up"],
                                         pre_act="relu", post_act=post,
                                         compute_stats=(not outermost), out_dtype=out_dtype)
        if outermost:
            return h2
        h2 = batchnorm_apply(h2, ustats, p["up_gamma"], p["up_beta"])
        return [x, h2]     # lazy skip concat: channels consumed in order [x, h] by parent upconv

    return fn


# ------------------------------- UnetGenerator -------------------------------

def build_unet(key, input_nc, output_nc, num_downs, ngf=64):
    # built from the innermost block outward (mirrors the PyTorch constructor)
    specs = [dict(outer_nc=ngf * 8, inner_nc=ngf * 8, input_nc=None, innermost=True, outermost=False)]
    for _ in range(num_downs - 5):
        specs.append(dict(outer_nc=ngf * 8, inner_nc=ngf * 8, input_nc=None, innermost=False, outermost=False))
    # use_dropout=False in this configuration, so nn.Dropout is not emitted.
    specs.append(dict(outer_nc=ngf * 4, inner_nc=ngf * 8, input_nc=None, innermost=False, outermost=False))
    specs.append(dict(outer_nc=ngf * 2, inner_nc=ngf * 4, input_nc=None, innermost=False, outermost=False))
    specs.append(dict(outer_nc=ngf, inner_nc=ngf * 2, input_nc=None, innermost=False, outermost=False))
    specs.append(dict(outer_nc=output_nc, inner_nc=ngf, input_nc=input_nc, innermost=False, outermost=True))

    keys = jax.random.split(key, len(specs))
    params, metas = [], []
    for k, s in zip(keys, specs):
        p, m = init_block(k, s["outer_nc"], s["inner_nc"], s["input_nc"],
                          s["innermost"], s["outermost"])
        params.append(p)
        metas.append(m)
    return specs, metas, params


def unet_forward(specs, metas, params, x_nchw):
    x = jnp.transpose(x_nchw, (0, 2, 3, 1)).astype(jnp.bfloat16)   # NCHW -> NHWC, bf16 activations
    fn = None
    for spec, meta, p in zip(specs, metas, params):
        fn = make_block_fn(p, meta, spec, fn)
    y = fn(x)
    return jnp.transpose(y, (0, 3, 1, 2))                           # NHWC -> NCHW (f32)


# ------------------------------------ main ------------------------------------

if __name__ == "__main__":
    key = jax.random.PRNGKey(0)
    kx, kp = jax.random.split(key)

    batch, input_nc, output_nc, spatial = 2, 3, 3, 32
    num_downs, ngf = 5, 8        # 32x32 -> 1x1 at the bottleneck

    x = jax.random.normal(kx, (batch, input_nc, spatial, spatial), jnp.float32)
    specs, metas, params = build_unet(kp, input_nc, output_nc, num_downs, ngf)

    fwd = jax.jit(lambda prm, inp: unet_forward(specs, metas, prm, inp))
    y = fwd(params, x)
    jax.block_until_ready(y)

    assert y.shape == (batch, output_nc, spatial, spatial), y.shape
    assert bool(jnp.all(jnp.isfinite(y)))
    print("KERNEL_OK")
</pallas_src>

<mosaic_0001>
module attributes {stable_mosaic.version = 11 : i64} {
  func.func @_mm_kernel(%arg0: i32, %arg1: i32, %arg2: i32, %arg3: i32, %arg4: memref<1x512x128xbf16, #tpu.memory_space<vmem>>, %arg5: memref<1x128x128xbf16, #tpu.memory_space<vmem>>, %arg6: memref<1x1x128xf32, #tpu.memory_space<vmem>>, %arg7: memref<1x512x128xbf16, #tpu.memory_space<vmem>>, %arg8: memref<512x128xf32, #tpu.memory_space<vmem>>) attributes {dimension_semantics = [#tpu.dimension_semantics<parallel>, #tpu.dimension_semantics<parallel>, #tpu.dimension_semantics<parallel>, #tpu.dimension_semantics<arbitrary>], iteration_bounds = array<i64: 1, 1, 1, 1>, scalar_prefetch = 0 : i64, scratch_operands = 1 : i64, tpu.core_type = #tpu.core_type<tc>, window_params = [{transform_indices = @transform_0, window_bounds = array<i64: 1, 512, 128>}, {transform_indices = @transform_1, window_bounds = array<i64: 1, 128, 128>}, {transform_indices = @transform_2, window_bounds = array<i64: 1, 1, 128>}, {transform_indices = @transform_3, window_bounds = array<i64: 1, 512, 128>}]} {
    %c0_i32 = arith.constant 0 : i32
    %0 = arith.cmpi eq, %arg3, %c0_i32 : i32
    %1 = arith.extui %0 : i1 to i32
    %c0_i32_0 = arith.constant 0 : i32
    %2 = arith.cmpi ne, %1, %c0_i32_0 : i32
    scf.if %2 {
      %cst_12 = arith.constant 0.000000e+00 : f32
      %14 = vector.broadcast %cst_12 : f32 to vector<512x128xf32>
      %c0_13 = arith.constant 0 : index
      %c0_14 = arith.constant 0 : index
      %15 = vector.load %arg8[%c0_13, %c0_14] : memref<512x128xf32, #tpu.memory_space<vmem>>, vector<512x128xf32>
      tpu.vector_store %arg8[%c0_13, %c0_14], %14 {strides = array<i32>} : memref<512x128xf32, #tpu.memory_space<vmem>>, vector<512x128xf32>,
    } else {
    }
    %c0 = arith.constant 0 : index
    %c0_1 = arith.constant 0 : index
    %c0_2 = arith.constant 0 : index
    %3 = vector.load %arg4[%c0, %c0_1, %c0_2] : memref<1x512x128xbf16, #tpu.memory_space<vmem>>, vector<1x512x128xbf16>
    %4 = vector.shape_cast %3 : vector<1x512x128xbf16> to vector<512x128xbf16>
    %c0_3 = arith.constant 0 : index
    %c0_4 = arith.constant 0 : index
    %5 = vector.load %arg8[%c0_3, %c0_4] : memref<512x128xf32, #tpu.memory_space<vmem>>, vector<512x128xf32>
    %c0_5 = arith.constant 0 : index
    %c0_6 = arith.constant 0 : index
    %c0_7 = arith.constant 0 : index
    %6 = vector.load %arg5[%c0_5, %c0_6, %c0_7] : memref<1x128x128xbf16, #tpu.memory_space<vmem>>, vector<1x128x128xbf16>
    %7 = vector.shape_cast %6 : vector<1x128x128xbf16> to vector<128x128xbf16>
    %cst = arith.constant dense<0.000000e+00> : vector<512x128xf32>
    %8 = tpu.matmul %4, %7, %cst {dimension_numbers = #tpu.dot_dimension_numbers<[1], [0], [0], [1], [0, 0, 1, 1], [], []>} : vector<512x128xbf16>, vector<128x128xbf16>, vector<512x128xf32> -> vector<512x128xf32>
    %9 = arith.addf %5, %8 : vector<512x128xf32>
    %c0_8 = arith.constant 0 : index
    %c0_9 = arith.constant 0 : index
    %10 = vector.load %arg8[%c0_8, %c0_9] : memref<512x128xf32, #tpu.memory_space<vmem>>, vector<512x128xf32>
    tpu.vector_store %arg8[%c0_8, %c0_9], %9 {strides = array<i32>} : memref<512x128xf32, #tpu.memory_space<vmem>>, vector<512x128xf32>,
    %c0_i32_10 = arith.constant 0 : i32
    %11 = arith.cmpi eq, %arg3, %c0_i32_10 : i32
    %12 = arith.extui %11 : i1 to i32
    %c0_i32_11 = arith.constant 0 : i32
    %13 = arith.cmpi ne, %12, %c0_i32_11 : i32
    scf.if %13 {
      %c0_12 = arith.constant 0 : index
      %c0_13 = arith.constant 0 : index
      %14 = vector.load %arg8[%c0_12, %c0_13] : memref<512x128xf32, #tpu.memory_space<vmem>>, vector<512x128xf32>
      %c0_14 = arith.constant 0 : index
      %c0_15 = arith.constant 0 : index
      %c0_16 = arith.constant 0 : index
      %15 = vector.load %arg6[%c0_14, %c0_15, %c0_16] : memref<1x1x128xf32, #tpu.memory_space<vmem>>, vector<1x1x128xf32>
      %16 = vector.shape_cast %15 : vector<1x1x128xf32> to vector<1x128xf32>
      %17 = vector.broadcast %16 : vector<1x128xf32> to vector<512x128xf32>
      %18 = arith.addf %14, %17 : vector<512x128xf32>
      %19 = arith.truncf %18 : vector<512x128xf32> to vector<512x128xbf16>
      %20 = vector.shape_cast %19 : vector<512x128xbf16> to vector<1x512x128xbf16>
      %c0_17 = arith.constant 0 : index
      %c0_18 = arith.constant 0 : index
      %c0_19 = arith.constant 0 : index
      %21 = vector.load %arg7[%c0_17, %c0_18, %c0_19] : memref<1x512x128xbf16, #tpu.memory_space<vmem>>, vector<1x512x128xbf16>
      tpu.vector_store %arg7[%c0_17, %c0_18, %c0_19], %20 {strides = array<i32>} : memref<1x512x128xbf16, #tpu.memory_space<vmem>>, vector<1x512x128xbf16>,
    } else {
    }
    return
  }
  func.func @transform_0(%arg0: i32, %arg1: i32, %arg2: i32, %arg3: i32) -> (i32, i32, i32) {
    %c0_i32 = arith.constant 0 : i32
    return %arg0, %arg1, %arg3 : i32, i32, i32
  }
  func.func @transform_1(%arg0: i32, %arg1: i32, %arg2: i32, %arg3: i32) -> (i32, i32, i32) {
    %c0_i32 = arith.constant 0 : i32
    return %arg0, %arg3, %arg2 : i32, i32, i32
  }
  func.func @transform_2(%arg0: i32, %arg1: i32, %arg2: i32, %arg3: i32) -> (i32, i32, i32) {
    %c0_i32 = arith.constant 0 : i32
    %c0_i32_0 = arith.constant 0 : i32
    return %arg0, %c0_i32, %arg2 : i32, i32, i32
  }
  func.func @transform_3(%arg0: i32, %arg1: i32, %arg2: i32, %arg3: i32) -> (i32, i32, i32) {
    %c0_i32 = arith.constant 0 : i32
    return %arg0, %arg1, %arg2 : i32, i32, i32
  }
}

module attributes {stable_mosaic.version = 11 : i64} {
  func.func @_mm_kernel(%arg0: i32, %arg1: i32, %arg2: i32, %arg3: i32, %arg4: memref<1x128x128xbf16, #tpu.memory_space<vmem>>, %arg5: memref<1x128x128xbf16, #tpu.memory_space<vmem>>, %arg6: memref<1x1x128xf32, #tpu.memory_space<vmem>>, %arg7: memref<1x128x128xbf16, #tpu.memory_space<vmem>>, %arg8: memref<1x1x8x128xf32, #tpu.memory_space<vmem>>, %arg9: memref<128x128xf32, #tpu.memory_space<vmem>>) attributes {dimension_semantics = [#tpu.dimension_semantics<parallel>, #tpu.dimension_semantics<parallel>, #tpu.dimension_semantics<parallel>, #tpu.dimension_semantics<arbitrary>], iteration_bounds = array<i64: 1, 1, 1, 1>, scalar_prefetch = 0 : i64, scratch_operands = 1 : i64, tpu.core_type = #tpu.core_type<tc>, window_params = [{transform_indices = @transform_0, window_bounds = array<i64: 1, 128, 128>}, {transform_indices = @transform_1, window_bounds = array<i64: 1, 128, 128>}, {transform_indices = @transform_2, window_bounds = array<i64: 1, 1, 128>}, {transform_indices = @transform_3, window_bounds = array<i64: 1, 128, 128>}, {transform_indices = @transform_4, window_bounds = array<i64: 1, 1, 8, 128>}]} {
    %c0_i32 = arith.constant 0 : i32
    %0 = arith.cmpi eq, %arg3, %c0_i32 : i32
    %1 = arith.extui %0 : i1 to i32
    %c0_i32_0 = arith.constant 0 : i32
    %2 = arith.cmpi ne, %1, %c0_i32_0 : i32
    scf.if %2 {
      %cst_14 = arith.constant 0.000000e+00 : f32
      %19 = vector.broadcast %cst_14 : f32 to vector<128x128xf32>
      %c0_15 = arith.constant 0 : index
      %c0_16 = arith.constant 0 : index
      %20 = vector.load %arg9[%c0_15, %c0_16] : memref<128x128xf32, #tpu.memory_space<vmem>>, vector<128x128xf32>
      tpu.vector_store %arg9[%c0_15, %c0_16], %19 {strides = array<i32>} : memref<128x128xf32, #tpu.memory_space<vmem>>, vector<128x128xf32>,
    } else {
    }
    %c0 = arith.constant 0 : index
    %c0_1 = arith.constant 0 : index
    %c0_2 = arith.constant 0 : index
    %3 = vector.load %arg4[%c0, %c0_1, %c0_2] : memref<1x128x128xbf16, #tpu.memory_space<vmem>>, vector<1x128x128xbf16>
    %4 = vector.shape_cast %3 : vector<1x128x128xbf16> to vector<128x128xbf16>
    %cst = arith.constant 0.000000e+00 : bf16
    %5 = vector.broadcast %cst : bf16 to vector<128x128xbf16>
    %6 = arith.cmpf oge, %4, %5 : vector<128x128xbf16>
    %cst_3 = arith.constant 2.001950e-01 : bf16
    %7 = vector.broadcast %cst_3 : bf16 to vector<128x128xbf16>
    %8 = arith.mulf %4, %7 : vector<128x128xbf16>
    %9 = arith.select %6, %4, %8 : vector<128x128xi1>, vector<128x128xbf16>
    %c0_4 = arith.constant 0 : index
    %c0_5 = arith.constant 0 : index
    %10 = vector.load %arg9[%c0_4, %c0_5] : memref<128x128xf32, #tpu.memory_space<vmem>>, vector<128x128xf32>
    %c0_6 = arith.constant 0 : index
    %c0_7 = arith.constant 0 : index
    %c0_8 = arith.constant 0 : index
    %11 = vector.load %arg5[%c0_6, %c0_7, %c0_8] : memref<1x128x128xbf16, #tpu.memory_space<vmem>>, vector<1x128x128xbf16>
    %12 = vector.shape_cast %11 : vector<1x128x128xbf16> to vector<128x128xbf16>
    %cst_9 = arith.constant dense<0.000000e+00> : vector<128x128xf32>
    %13 = tpu.matmul %9, %12, %cst_9 {dimension_numbers = #tpu.dot_dimension_numbers<[1], [0], [0], [1], [0, 0, 1, 1], [], []>} : vector<128x128xbf16>, vector<128x128xbf16>, vector<128x128xf32> -> vector<128x128xf32>
    %14 = arith.addf %10, %13 : vector<128x128xf32>
    %c0_10 = arith.constant 0 : index
    %c0_11 = arith.constant 0 : index
    %15 = vector.load %arg9[%c0_10, %c0_11] : memref<128x128xf32, #tpu.memory_space<vmem>>, vector<128x128xf32>
    tpu.vector_store %arg9[%c0_10, %c0_11], %14 {strides = array<i32>} : memref<128x128xf32, #tpu.memory_space<vmem>>, vector<128x128xf32>,
    %c0_i32_12 = arith.constant 0 : i32
    %16 = arith.cmpi eq, %arg3, %c0_i32_12 : i32
    %17 = arith.extui %16 : i1 to i32
    %c0_i32_13 = arith.constant 0 : i32
    %18 = arith.cmpi ne, %17, %c0_i32_13 : i32
    scf.if %18 {
      %c0_14 = arith.constant 0 : index
      %c0_15 = arith.constant 0 : index
      %19 = vector.load %arg9[%c0_14, %c0_15] : memref<128x128xf32, #tpu.memory_space<vmem>>, vector<128x128xf32>
      %c0_16 = arith.constant 0 : index
      %c0_17 = arith.constant 0 : index
      %c0_18 = arith.constant 0 : index
      %20 = vector.load %arg6[%c0_16, %c0_17, %c0_18] : memref<1x1x128xf32, #tpu.memory_space<vmem>>, vector<1x1x128xf32>
      %21 = vector.shape_cast %20 : vector<1x1x128xf32> to vector<1x128xf32>
      %22 = vector.broadcast %21 : vector<1x128xf32> to vector<128x128xf32>
      %23 = arith.addf %19, %22 : vector<128x128xf32>
      %24 = arith.truncf %23 : vector<128x128xf32> to vector<128x128xbf16>
      %25 = vector.shape_cast %24 : vector<128x128xbf16> to vector<1x128x128xbf16>
      %c0_19 = arith.constant 0 : index
      %c0_20 = arith.constant 0 : index
      %c0_21 = arith.constant 0 : index
      %26 = vector.load %arg7[%c0_19, %c0_20, %c0_21] : memref<1x128x128xbf16, #tpu.memory_space<vmem>>, vector<1x128x128xbf16>
      tpu.vector_store %arg7[%c0_19, %c0_20, %c0_21], %25 {strides = array<i32>} : memref<1x128x128xbf16, #tpu.memory_space<vmem>>, vector<1x128x128xbf16>,
      %cst_22 = arith.constant dense<0.000000e+00> : vector<128xf32>
      %27 = vector.multi_reduction <add>, %23, %cst_22 [0] : vector<128x128xf32> to vector<128xf32>
      %28 = arith.mulf %23, %23 : vector<128x128xf32>
      %cst_23 = arith.constant dense<0.000000e+00> : vector<128xf32>
      %29 = vector.multi_reduction <add>, %28, %cst_23 [0] : vector<128x128xf32> to vector<128xf32>
      %30 = tpu.iota {dimensions = array<i32: 0>} : vector<8x128xi32>
      %c0_i32_24 = arith.constant 0 : i32
      %31 = vector.broadcast %c0_i32_24 : i32 to vector<8x128xi32>
      %32 = arith.cmpi eq, %30, %31 : vector<8x128xi32>
      %33 = vector.shape_cast %27 : vector<128xf32> to vector<1x128xf32>
      %c1_i32 = arith.constant 1 : i32
      %34 = vector.broadcast %c1_i32 : i32 to vector<8x128xi32>
      %35 = arith.cmpi eq, %30, %34 : vector<8x128xi32>
      %36 = vector.shape_cast %29 : vector<128xf32> to vector<1x128xf32>
      %cst_25 = arith.constant 0.000000e+00 : f32
      %37 = vector.shape_cast %36 : vector<1x128xf32> to vector<1x128xf32>
      %38 = vector.broadcast %37 : vector<1x128xf32> to vector<8x128xf32>
      %39 = vector.broadcast %cst_25 : f32 to vector<8x128xf32>
      %40 = arith.select %35, %38, %39 : vector<8x128xi1>, vector<8x128xf32>
      %41 = vector.shape_cast %33 : vector<1x128xf32> to vector<1x128xf32>
      %42 = vector.broadcast %41 : vector<1x128xf32> to vector<8x128xf32>
      %43 = arith.select %32, %42, %40 : vector<8x128xi1>, vector<8x128xf32>
      %44 = vector.shape_cast %43 : vector<8x128xf32> to vector<1x1x8x128xf32>
      %c0_26 = arith.constant 0 : index
      %c0_27 = arith.constant 0 : index
      %c0_28 = arith.constant 0 : index
      %c0_29 = arith.constant 0 : index
      %45 = vector.load %arg8[%c0_26, %c0_27, %c0_28, %c0_29] : memref<1x1x8x128xf32, #tpu.memory_space<vmem>>, vector<1x1x8x128xf32>
      tpu.vector_store %arg8[%c0_26, %c0_27, %c0_28, %c0_29], %44 {strides = array<i32>} : memref<1x1x8x128xf32, #tpu.memory_space<vmem>>, vector<1x1x8x128xf32>,
    } else {
    }
    return
  }
  func.func @transform_0(%arg0: i32, %arg1: i32, %arg2: i32, %arg3: i32) -> (i32, i32, i32) {
    %c0_i32 = arith.constant 0 : i32
    return %arg0, %arg1, %arg3 : i32, i32, i32
  }
  func.func @transform_1(%arg0: i32, %arg1: i32, %arg2: i32, %arg3: i32) -> (i32, i32, i32) {
    %c0_i32 = arith.constant 0 : i32
    return %arg0, %arg3, %arg2 : i32, i32, i32
  }
  func.func @transform_2(%arg0: i32, %arg1: i32, %arg2: i32, %arg3: i32) -> (i32, i32, i32) {
    %c0_i32 = arith.constant 0 : i32
    %c0_i32_0 = arith.constant 0 : i32
    return %arg0, %c0_i32, %arg2 : i32, i32, i32
  }
  func.func @transform_3(%arg0: i32, %arg1: i32, %arg2: i32, %arg3: i32) -> (i32, i32, i32) {
    %c0_i32 = arith.constant 0 : i32
    return %arg0, %arg1, %arg2 : i32, i32, i32
  }
  func.func @transform_4(%arg0: i32, %arg1: i32, %arg2: i32, %arg3: i32) -> (i32, i32, i32, i32) {
    %c0_i32 = arith.constant 0 : i32
    %c0_i32_0 = arith.constant 0 : i32
    return %arg0, %arg1, %c0_i32, %arg2 : i32, i32, i32, i32
  }
}

module attributes {stable_mosaic.version = 11 : i64} {
  func.func @_bn_norm_kernel(%arg0: i32, %arg1: memref<16x128xbf16, #tpu.memory_space<vmem>>, %arg2: memref<1x128xf32, #tpu.memory_space<vmem>>, %arg3: memref<1x128xf32, #tpu.memory_space<vmem>>, %arg4: memref<16x128xbf16, #tpu.memory_space<vmem>>) attributes {dimension_semantics = [#tpu.dimension_semantics<parallel>], iteration_bounds = array<i64: 1>, scalar_prefetch = 0 : i64, scratch_operands = 0 : i64, tpu.core_type = #tpu.core_type<tc>, window_params = [{transform_indices = @transform_0, window_bounds = array<i64: 16, 128>}, {pipeline_mode = #tpu.pipeline_mode<synchronous>, transform_indices = @transform_1, window_bounds = array<i64: 1, 128>}, {pipeline_mode = #tpu.pipeline_mode<synchronous>, transform_indices = @transform_2, window_bounds = array<i64: 1, 128>}, {transform_indices = @transform_3, window_bounds = array<i64: 16, 128>}]} {
    %c0 = arith.constant 0 : index
    %c0_0 = arith.constant 0 : index
    %0 = vector.load %arg1[%c0, %c0_0] : memref<16x128xbf16, #tpu.memory_space<vmem>>, vector<16x128xbf16>
    %1 = arith.extf %0 : vector<16x128xbf16> to vector<16x128xf32>
    %c0_1 = arith.constant 0 : index
    %c0_2 = arith.constant 0 : index
    %2 = vector.load %arg2[%c0_1, %c0_2] : memref<1x128xf32, #tpu.memory_space<vmem>>, vector<1x128xf32>
    %3 = vector.broadcast %2 : vector<1x128xf32> to vector<16x128xf32>
    %4 = arith.mulf %1, %3 : vector<16x128xf32>
    %c0_3 = arith.constant 0 : index
    %c0_4 = arith.constant 0 : index
    %5 = vector.load %arg3[%c0_3, %c0_4] : memref<1x128xf32, #tpu.memory_space<vmem>>, vector<1x128xf32>
    %6 = vector.broadcast %5 : vector<1x128xf32> to vector<16x128xf32>
    %7 = arith.addf %4, %6 : vector<16x128xf32>
    %8 = arith.truncf %7 : vector<16x128xf32> to vector<16x128xbf16>
    %c0_5 = arith.constant 0 : index
    %c0_6 = arith.constant 0 : index
    %9 = vector.load %arg4[%c0_5, %c0_6] : memref<16x128xbf16, #tpu.memory_space<vmem>>, vector<16x128xbf16>
    tpu.vector_store %arg4[%c0_5, %c0_6], %8 {strides = array<i32>} : memref<16x128xbf16, #tpu.memory_space<vmem>>, vector<16x128xbf16>,
    return
  }
  func.func @transform_0(%arg0: i32) -> (i32, i32) {
    %c0_i32 = arith.constant 0 : i32
    %c0_i32_0 = arith.constant 0 : i32
    return %arg0, %c0_i32 : i32, i32
  }
  func.func @transform_1(%arg0: i32) -> (i32, i32) {
    %c0_i32 = arith.constant 0 : i32
    %c0_i32_0 = arith.constant 0 : i32
    %c0_i32_1 = arith.constant 0 : i32
    return %c0_i32, %c0_i32_0 : i32, i32
  }
  func.func @transform_2(%arg0: i32) -> (i32, i32) {
    %c0_i32 = arith.constant 0 : i32
    %c0_i32_0 = arith.constant 0 : i32
    %c0_i32_1 = arith.constant 0 : i32
    return %c0_i32, %c0_i32_0 : i32, i32
  }
  func.func @transform_3(%arg0: i32) -> (i32, i32) {
    %c0_i32 = arith.constant 0 : i32
    %c0_i32_0 = arith.constant 0 : i32
    return %arg0, %c0_i32 : i32, i32
  }
}

module attributes {stable_mosaic.version = 11 : i64} {
  func.func @_mm_kernel(%arg0: i32, %arg1: i32, %arg2: i32, %arg3: i32, %arg4: memref<1x32x256xbf16, #tpu.memory_space<vmem>>, %arg5: memref<1x256x128xbf16, #tpu.memory_space<vmem>>, %arg6: memref<1x1x128xf32, #tpu.memory_space<vmem>>, %arg7: memref<1x32x128xbf16, #tpu.memory_space<vmem>>, %arg8: memref<1x1x8x128xf32, #tpu.memory_space<vmem>>, %arg9: memref<32x128xf32, #tpu.memory_space<vmem>>) attributes {dimension_semantics = [#tpu.dimension_semantics<parallel>, #tpu.dimension_semantics<parallel>, #tpu.dimension_semantics<parallel>, #tpu.dimension_semantics<arbitrary>], iteration_bounds = array<i64: 1, 1, 1, 1>, scalar_prefetch = 0 : i64, scratch_operands = 1 : i64, tpu.core_type = #tpu.core_type<tc>, window_params = [{transform_indices = @transform_0, window_bounds = array<i64: 1, 32, 256>}, {transform_indices = @transform_1, window_bounds = array<i64: 1, 256, 128>}, {transform_indices = @transform_2, window_bounds = array<i64: 1, 1, 128>}, {transform_indices = @transform_3, window_bounds = array<i64: 1, 32, 128>}, {transform_indices = @transform_4, window_bounds = array<i64: 1, 1, 8, 128>}]} {
    %c0_i32 = arith.constant 0 : i32
    %0 = arith.cmpi eq, %arg3, %c0_i32 : i32
    %1 = arith.extui %0 : i1 to i32
    %c0_i32_0 = arith.constant 0 : i32
    %2 = arith.cmpi ne, %1, %c0_i32_0 : i32
    scf.if %2 {
      %cst_14 = arith.constant 0.000000e+00 : f32
      %19 = vector.broadcast %cst_14 : f32 to vector<32x128xf32>
      %c0_15 = arith.constant 0 : index
      %c0_16 = arith.constant 0 : index
      %20 = vector.load %arg9[%c0_15, %c0_16] : memref<32x128xf32, #tpu.memory_space<vmem>>, vector<32x128xf32>
      tpu.vector_store %arg9[%c0_15, %c0_16], %19 {strides = array<i32>} : memref<32x128xf32, #tpu.memory_space<vmem>>, vector<32x128xf32>,
    } else {
    }
    %c0 = arith.constant 0 : index
    %c0_1 = arith.constant 0 : index
    %c0_2 = arith.constant 0 : index
    %3 = vector.load %arg4[%c0, %c0_1, %c0_2] : memref<1x32x256xbf16, #tpu.memory_space<vmem>>, vector<1x32x256xbf16>
    %4 = vector.shape_cast %3 : vector<1x32x256xbf16> to vector<32x256xbf16>
    %cst = arith.constant 0.000000e+00 : bf16
    %5 = vector.broadcast %cst : bf16 to vector<32x256xbf16>
    %6 = arith.cmpf oge, %4, %5 : vector<32x256xbf16>
    %cst_3 = arith.constant 2.001950e-01 : bf16
    %7 = vector.broadcast %cst_3 : bf16 to vector<32x256xbf16>
    %8 = arith.mulf %4, %7 : vector<32x256xbf16>
    %9 = arith.select %6, %4, %8 : vector<32x256xi1>, vector<32x256xbf16>
    %c0_4 = arith.constant 0 : index
    %c0_5 = arith.constant 0 : index
    %10 = vector.load %arg9[%c0_4, %c0_5] : memref<32x128xf32, #tpu.memory_space<vmem>>, vector<32x128xf32>
    %c0_6 = arith.constant 0 : index
    %c0_7 = arith.constant 0 : index
    %c0_8 = arith.constant 0 : index
    %11 = vector.load %arg5[%c0_6, %c0_7, %c0_8] : memref<1x256x128xbf16, #tpu.memory_space<vmem>>, vector<1x256x128xbf16>
    %12 = vector.shape_cast %11 : vector<1x256x128xbf16> to vector<256x128xbf16>
    %cst_9 = arith.constant dense<0.000000e+00> : vector<32x128xf32>
    %13 = tpu.matmul %9, %12, %cst_9 {dimension_numbers = #tpu.dot_dimension_numbers<[1], [0], [0], [1], [0, 0, 1, 1], [], []>} : vector<32x256xbf16>, vector<256x128xbf16>, vector<32x128xf32> -> vector<32x128xf32>
    %14 = arith.addf %10, %13 : vector<32x128xf32>
    %c0_10 = arith.constant 0 : index
    %c0_11 = arith.constant 0 : index
    %15 = vector.load %arg9[%c0_10, %c0_11] : memref<32x128xf32, #tpu.memory_space<vmem>>, vector<32x128xf32>
    tpu.vector_store %arg9[%c0_10, %c0_11], %14 {strides = array<i32>} : memref<32x128xf32, #tpu.memory_space<vmem>>, vector<32x128xf32>,
    %c0_i32_12 = arith.constant 0 : i32
    %16 = arith.cmpi eq, %arg3, %c0_i32_12 : i32
    %17 = arith.extui %16 : i1 to i32
    %c0_i32_13 = arith.constant 0 : i32
    %18 = arith.cmpi ne, %17, %c0_i32_13 : i32
    scf.if %18 {
      %c0_14 = arith.constant 0 : index
      %c0_15 = arith.constant 0 : index
      %19 = vector.load %arg9[%c0_14, %c0_15] : memref<32x128xf32, #tpu.memory_space<vmem>>, vector<32x128xf32>
      %c0_16 = arith.constant 0 : index
      %c0_17 = arith.constant 0 : index
      %c0_18 = arith.constant 0 : index
      %20 = vector.load %arg6[%c0_16, %c0_17, %c0_18] : memref<1x1x128xf32, #tpu.memory_space<vmem>>, vector<1x1x128xf32>
      %21 = vector.shape_cast %20 : vector<1x1x128xf32> to vector<1x128xf32>
      %22 = vector.broadcast %21 : vector<1x128xf32> to vector<32x128xf32>
      %23 = arith.addf %19, %22 : vector<32x128xf32>
      %24 = arith.truncf %23 : vector<32x128xf32> to vector<32x128xbf16>
      %25 = vector.shape_cast %24 : vector<32x128xbf16> to vector<1x32x128xbf16>
      %c0_19 = arith.constant 0 : index
      %c0_20 = arith.constant 0 : index
      %c0_21 = arith.constant 0 : index
      %26 = vector.load %arg7[%c0_19, %c0_20, %c0_21] : memref<1x32x128xbf16, #tpu.memory_space<vmem>>, vector<1x32x128xbf16>
      tpu.vector_store %arg7[%c0_19, %c0_20, %c0_21], %25 {strides = array<i32>} : memref<1x32x128xbf16, #tpu.memory_space<vmem>>, vector<1x32x128xbf16>,
      %cst_22 = arith.constant dense<0.000000e+00> : vector<128xf32>
      %27 = vector.multi_reduction <add>, %23, %cst_22 [0] : vector<32x128xf32> to vector<128xf32>
      %28 = arith.mulf %23, %23 : vector<32x128xf32>
      %cst_23 = arith.constant dense<0.000000e+00> : vector<128xf32>
      %29 = vector.multi_reduction <add>, %28, %cst_23 [0] : vector<32x128xf32> to vector<128xf32>
      %30 = tpu.iota {dimensions = array<i32: 0>} : vector<8x128xi32>
      %c0_i32_24 = arith.constant 0 : i32
      %31 = vector.broadcast %c0_i32_24 : i32 to vector<8x128xi32>
      %32 = arith.cmpi eq, %30, %31 : vector<8x128xi32>
      %33 = vector.shape_cast %27 : vector<128xf32> to vector<1x128xf32>
      %c1_i32 = arith.constant 1 : i32
      %34 = vector.broadcast %c1_i32 : i32 to vector<8x128xi32>
      %35 = arith.cmpi eq, %30, %34 : vector<8x128xi32>
      %36 = vector.shape_cast %29 : vector<128xf32> to vector<1x128xf32>
      %cst_25 = arith.constant 0.000000e+00 : f32
      %37 = vector.shape_cast %36 : vector<1x128xf32> to vector<1x128xf32>
      %38 = vector.broadcast %37 : vector<1x128xf32> to vector<8x128xf32>
      %39 = vector.broadcast %cst_25 : f32 to vector<8x128xf32>
      %40 = arith.select %35, %38, %39 : vector<8x128xi1>, vector<8x128xf32>
      %41 = vector.shape_cast %33 : vector<1x128xf32> to vector<1x128xf32>
      %42 = vector.broadcast %41 : vector<1x128xf32> to vector<8x128xf32>
      %43 = arith.select %32, %42, %40 : vector<8x128xi1>, vector<8x128xf32>
      %44 = vector.shape_cast %43 : vector<8x128xf32> to vector<1x1x8x128xf32>
      %c0_26 = arith.constant 0 : index
      %c0_27 = arith.constant 0 : index
      %c0_28 = arith.constant 0 : index
      %c0_29 = arith.constant 0 : index
      %45 = vector.load %arg8[%c0_26, %c0_27, %c0_28, %c0_29] : memref<1x1x8x128xf32, #tpu.memory_space<vmem>>, vector<1x1x8x128xf32>
      tpu.vector_store %arg8[%c0_26, %c0_27, %c0_28, %c0_29], %44 {strides = array<i32>} : memref<1x1x8x128xf32, #tpu.memory_space<vmem>>, vector<1x1x8x128xf32>,
    } else {
    }
    return
  }
  func.func @transform_0(%arg0: i32, %arg1: i32, %arg2: i32, %arg3: i32) -> (i32, i32, i32) {
    %c0_i32 = arith.constant 0 : i32
    return %arg0, %arg1, %arg3 : i32, i32, i32
  }
  func.func @transform_1(%arg0: i32, %arg1: i32, %arg2: i32, %arg3: i32) -> (i32, i32, i32) {
    %c0_i32 = arith.constant 0 : i32
    return %arg0, %arg3, %arg2 : i32, i32, i32
  }
  func.func @transform_2(%arg0: i32, %arg1: i32, %arg2: i32, %arg3: i32) -> (i32, i32, i32) {
    %c0_i32 = arith.constant 0 : i32
    %c0_i32_0 = arith.constant 0 : i32
    return %arg0, %c0_i32, %arg2 : i32, i32, i32
  }
  func.func @transform_3(%arg0: i32, %arg1: i32, %arg2: i32, %arg3: i32) -> (i32, i32, i32) {
    %c0_i32 = arith.constant 0 : i32
    return %arg0, %arg1, %arg2 : i32, i32, i32
  }
  func.func @transform_4(%arg0: i32, %arg1: i32, %arg2: i32, %arg3: i32) -> (i32, i32, i32, i32) {
    %c0_i32 = arith.constant 0 : i32
    %c0_i32_0 = arith.constant 0 : i32
    return %arg0, %arg1, %c0_i32, %arg2 : i32, i32, i32, i32
  }
}

module attributes {stable_mosaic.version = 11 : i64} {
  func.func @_mm_kernel(%arg0: i32, %arg1: i32, %arg2: i32, %arg3: i32, %arg4: memref<1x16x1024xbf16, #tpu.memory_space<vmem>>, %arg5: memref<1x1024x128xbf16, #tpu.memory_space<vmem>>, %arg6: memref<1x1x128xf32, #tpu.memory_space<vmem>>, %arg7: memref<1x16x128xbf16, #tpu.memory_space<vmem>>, %arg8: memref<16x128xf32, #tpu.memory_space<vmem>>) attributes {dimension_semantics = [#tpu.dimension_semantics<parallel>, #tpu.dimension_semantics<parallel>, #tpu.dimension_semantics<parallel>, #tpu.dimension_semantics<arbitrary>], iteration_bounds = array<i64: 1, 1, 1, 1>, scalar_prefetch = 0 : i64, scratch_operands = 1 : i64, tpu.core_type = #tpu.core_type<tc>, window_params = [{transform_indices = @transform_0, window_bounds = array<i64: 1, 16, 1024>}, {transform_indices = @transform_1, window_bounds = array<i64: 1, 1024, 128>}, {transform_indices = @transform_2, window_bounds = array<i64: 1, 1, 128>}, {transform_indices = @transform_3, window_bounds = array<i64: 1, 16, 128>}]} {
    %c0_i32 = arith.constant 0 : i32
    %0 = arith.cmpi eq, %arg3, %c0_i32 : i32
    %1 = arith.extui %0 : i1 to i32
    %c0_i32_0 = arith.constant 0 : i32
    %2 = arith.cmpi ne, %1, %c0_i32_0 : i32
    scf.if %2 {
      %cst_14 = arith.constant 0.000000e+00 : f32
      %19 = vector.broadcast %cst_14 : f32 to vector<16x128xf32>
      %c0_15 = arith.constant 0 : index
      %c0_16 = arith.constant 0 : index
      %20 = vector.load %arg8[%c0_15, %c0_16] : memref<16x128xf32, #tpu.memory_space<vmem>>, vector<16x128xf32>
      tpu.vector_store %arg8[%c0_15, %c0_16], %19 {strides = array<i32>} : memref<16x128xf32, #tpu.memory_space<vmem>>, vector<16x128xf32>,
    } else {
    }
    %c0 = arith.constant 0 : index
    %c0_1 = arith.constant 0 : index
    %c0_2 = arith.constant 0 : index
    %3 = vector.load %arg4[%c0, %c0_1, %c0_2] : memref<1x16x1024xbf16, #tpu.memory_space<vmem>>, vector<1x16x1024xbf16>
    %4 = vector.shape_cast %3 : vector<1x16x1024xbf16> to vector<16x1024xbf16>
    %cst = arith.constant 0.000000e+00 : bf16
    %5 = vector.broadcast %cst : bf16 to vector<16x1024xbf16>
    %6 = arith.cmpf oge, %4, %5 : vector<16x1024xbf16>
    %cst_3 = arith.constant 2.001950e-01 : bf16
    %7 = vector.broadcast %cst_3 : bf16 to vector<16x1024xbf16>
    %8 = arith.mulf %4, %7 : vector<16x1024xbf16>
    %9 = arith.select %6, %4, %8 : vector<16x1024xi1>, vector<16x1024xbf16>
    %c0_4 = arith.constant 0 : index
    %c0_5 = arith.constant 0 : index
    %10 = vector.load %arg8[%c0_4, %c0_5] : memref<16x128xf32, #tpu.memory_space<vmem>>, vector<16x128xf32>
    %c0_6 = arith.constant 0 : index
    %c0_7 = arith.constant 0 : index
    %c0_8 = arith.constant 0 : index
    %11 = vector.load %arg5[%c0_6, %c0_7, %c0_8] : memref<1x1024x128xbf16, #tpu.memory_space<vmem>>, vector<1x1024x128xbf16>
    %12 = vector.shape_cast %11 : vector<1x1024x128xbf16> to vector<1024x128xbf16>
    %cst_9 = arith.constant dense<0.000000e+00> : vector<16x128xf32>
    %13 = tpu.matmul %9, %12, %cst_9 {dimension_numbers = #tpu.dot_dimension_numbers<[1], [0], [0], [1], [0, 0, 1, 1], [], []>} : vector<16x1024xbf16>, vector<1024x128xbf16>, vector<16x128xf32> -> vector<16x128xf32>
    %14 = arith.addf %10, %13 : vector<16x128xf32>
    %c0_10 = arith.constant 0 : index
    %c0_11 = arith.constant 0 : index
    %15 = vector.load %arg8[%c0_10, %c0_11] : memref<16x128xf32, #tpu.memory_space<vmem>>, vector<16x128xf32>
    tpu.vector_store %arg8[%c0_10, %c0_11], %14 {strides = array<i32>} : memref<16x128xf32, #tpu.memory_space<vmem>>, vector<16x128xf32>,
    %c0_i32_12 = arith.constant 0 : i32
    %16 = arith.cmpi eq, %arg3, %c0_i32_12 : i32
    %17 = arith.extui %16 : i1 to i32
    %c0_i32_13 = arith.constant 0 : i32
    %18 = arith.cmpi ne, %17, %c0_i32_13 : i32
    scf.if %18 {
      %c0_14 = arith.constant 0 : index
      %c0_15 = arith.constant 0 : index
      %19 = vector.load %arg8[%c0_14, %c0_15] : memref<16x128xf32, #tpu.memory_space<vmem>>, vector<16x128xf32>
      %c0_16 = arith.constant 0 : index
      %c0_17 = arith.constant 0 : index
      %c0_18 = arith.constant 0 : index
      %20 = vector.load %arg6[%c0_16, %c0_17, %c0_18] : memref<1x1x128xf32, #tpu.memory_space<vmem>>, vector<1x1x128xf32>
      %21 = vector.shape_cast %20 : vector<1x1x128xf32> to vector<1x128xf32>
      %22 = vector.broadcast %21 : vector<1x128xf32> to vector<16x128xf32>
      %23 = arith.addf %19, %22 : vector<16x128xf32>
      %24 = arith.truncf %23 : vector<16x128xf32> to vector<16x128xbf16>
      %25 = vector.shape_cast %24 : vector<16x128xbf16> to vector<1x16x128xbf16>
      %c0_19 = arith.constant 0 : index
      %c0_20 = arith.constant 0 : index
      %c0_21 = arith.constant 0 : index
      %26 = vector.load %arg7[%c0_19, %c0_20, %c0_21] : memref<1x16x128xbf16, #tpu.memory_space<vmem>>, vector<1x16x128xbf16>
      tpu.vector_store %arg7[%c0_19, %c0_20, %c0_21], %25 {strides = array<i32>} : memref<1x16x128xbf16, #tpu.memory_space<vmem>>, vector<1x16x128xbf16>,
    } else {
    }
    return
  }
  func.func @transform_0(%arg0: i32, %arg1: i32, %arg2: i32, %arg3: i32) -> (i32, i32, i32) {
    %c0_i32 = arith.constant 0 : i32
    return %arg0, %arg1, %arg3 : i32, i32, i32
  }
  func.func @transform_1(%arg0: i32, %arg1: i32, %arg2: i32, %arg3: i32) -> (i32, i32, i32) {
    %c0_i32 = arith.constant 0 : i32
    return %arg0, %arg3, %arg2 : i32, i32, i32
  }
  func.func @transform_2(%arg0: i32, %arg1: i32, %arg2: i32, %arg3: i32) -> (i32, i32, i32) {
    %c0_i32 = arith.constant 0 : i32
    %c0_i32_0 = arith.constant 0 : i32
    return %arg0, %c0_i32, %arg2 : i32, i32, i32
  }
  func.func @transform_3(%arg0: i32, %arg1: i32, %arg2: i32, %arg3: i32) -> (i32, i32, i32) {
    %c0_i32 = arith.constant 0 : i32
    return %arg0, %arg1, %arg2 : i32, i32, i32
  }
}

module attributes {stable_mosaic.version = 11 : i64} {
  func.func @_mm_kernel(%arg0: i32, %arg1: i32, %arg2: i32, %arg3: i32, %arg4: memref<1x16x512xbf16, #tpu.memory_space<vmem>>, %arg5: memref<1x512x128xbf16, #tpu.memory_space<vmem>>, %arg6: memref<1x1x128xf32, #tpu.memory_space<vmem>>, %arg7: memref<1x16x128xbf16, #tpu.memory_space<vmem>>, %arg8: memref<1x1x8x128xf32, #tpu.memory_space<vmem>>, %arg9: memref<16x128xf32, #tpu.memory_space<vmem>>) attributes {dimension_semantics = [#tpu.dimension_semantics<parallel>, #tpu.dimension_semantics<parallel>, #tpu.dimension_semantics<parallel>, #tpu.dimension_semantics<arbitrary>], iteration_bounds = array<i64: 1, 1, 1, 1>, scalar_prefetch = 0 : i64, scratch_operands = 1 : i64, tpu.core_type = #tpu.core_type<tc>, window_params = [{transform_indices = @transform_0, window_bounds = array<i64: 1, 16, 512>}, {transform_indices = @transform_1, window_bounds = array<i64: 1, 512, 128>}, {transform_indices = @transform_2, window_bounds = array<i64: 1, 1, 128>}, {transform_indices = @transform_3, window_bounds = array<i64: 1, 16, 128>}, {transform_indices = @transform_4, window_bounds = array<i64: 1, 1, 8, 128>}]} {
    %c0_i32 = arith.constant 0 : i32
    %0 = arith.cmpi eq, %arg3, %c0_i32 : i32
    %1 = arith.extui %0 : i1 to i32
    %c0_i32_0 = arith.constant 0 : i32
    %2 = arith.cmpi ne, %1, %c0_i32_0 : i32
    scf.if %2 {
      %cst_14 = arith.constant 0.000000e+00 : f32
      %19 = vector.broadcast %cst_14 : f32 to vector<16x128xf32>
      %c0_15 = arith.constant 0 : index
      %c0_16 = arith.constant 0 : index
      %20 = vector.load %arg9[%c0_15, %c0_16] : memref<16x128xf32, #tpu.memory_space<vmem>>, vector<16x128xf32>
      tpu.vector_store %arg9[%c0_15, %c0_16], %19 {strides = array<i32>} : memref<16x128xf32, #tpu.memory_space<vmem>>, vector<16x128xf32>,
    } else {
    }
    %c0 = arith.constant 0 : index
    %c0_1 = arith.constant 0 : index
    %c0_2 = arith.constant 0 : index
    %3 = vector.load %arg4[%c0, %c0_1, %c0_2] : memref<1x16x512xbf16, #tpu.memory_space<vmem>>, vector<1x16x512xbf16>
    %4 = vector.shape_cast %3 : vector<1x16x512xbf16> to vector<16x512xbf16>
    %cst = arith.constant 0.000000e+00 : bf16
    %5 = vector.broadcast %cst : bf16 to vector<16x512xbf16>
    %6 = arith.cmpf oge, %4, %5 : vector<16x512xbf16>
    %cst_3 = arith.constant 2.001950e-01 : bf16
    %7 = vector.broadcast %cst_3 : bf16 to vector<16x512xbf16>
    %8 = arith.mulf %4, %7 : vector<16x512xbf16>
    %9 = arith.select %6, %4, %8 : vector<16x512xi1>, vector<16x512xbf16>
    %c0_4 = arith.constant 0 : index
    %c0_5 = arith.constant 0 : index
    %10 = vector.load %arg9[%c0_4, %c0_5] : memref<16x128xf32, #tpu.memory_space<vmem>>, vector<16x128xf32>
    %c0_6 = arith.constant 0 : index
    %c0_7 = arith.constant 0 : index
    %c0_8 = arith.constant 0 : index
    %11 = vector.load %arg5[%c0_6, %c0_7, %c0_8] : memref<1x512x128xbf16, #tpu.memory_space<vmem>>, vector<1x512x128xbf16>
    %12 = vector.shape_cast %11 : vector<1x512x128xbf16> to vector<512x128xbf16>
    %cst_9 = arith.constant dense<0.000000e+00> : vector<16x128xf32>
    %13 = tpu.matmul %9, %12, %cst_9 {dimension_numbers = #tpu.dot_dimension_numbers<[1], [0], [0], [1], [0, 0, 1, 1], [], []>} : vector<16x512xbf16>, vector<512x128xbf16>, vector<16x128xf32> -> vector<16x128xf32>
    %14 = arith.addf %10, %13 : vector<16x128xf32>
    %c0_10 = arith.constant 0 : index
    %c0_11 = arith.constant 0 : index
    %15 = vector.load %arg9[%c0_10, %c0_11] : memref<16x128xf32, #tpu.memory_space<vmem>>, vector<16x128xf32>
    tpu.vector_store %arg9[%c0_10, %c0_11], %14 {strides = array<i32>} : memref<16x128xf32, #tpu.memory_space<vmem>>, vector<16x128xf32>,
    %c0_i32_12 = arith.constant 0 : i32
    %16 = arith.cmpi eq, %arg3, %c0_i32_12 : i32
    %17 = arith.extui %16 : i1 to i32
    %c0_i32_13 = arith.constant 0 : i32
    %18 = arith.cmpi ne, %17, %c0_i32_13 : i32
    scf.if %18 {
      %c0_14 = arith.constant 0 : index
      %c0_15 = arith.constant 0 : index
      %19 = vector.load %arg9[%c0_14, %c0_15] : memref<16x128xf32, #tpu.memory_space<vmem>>, vector<16x128xf32>
      %c0_16 = arith.constant 0 : index
      %c0_17 = arith.constant 0 : index
      %c0_18 = arith.constant 0 : index
      %20 = vector.load %arg6[%c0_16, %c0_17, %c0_18] : memref<1x1x128xf32, #tpu.memory_space<vmem>>, vector<1x1x128xf32>
      %21 = vector.shape_cast %20 : vector<1x1x128xf32> to vector<1x128xf32>
      %22 = vector.broadcast %21 : vector<1x128xf32> to vector<16x128xf32>
      %23 = arith.addf %19, %22 : vector<16x128xf32>
      %24 = arith.truncf %23 : vector<16x128xf32> to vector<16x128xbf16>
      %25 = vector.shape_cast %24 : vector<16x128xbf16> to vector<1x16x128xbf16>
      %c0_19 = arith.constant 0 : index
      %c0_20 = arith.constant 0 : index
      %c0_21 = arith.constant 0 : index
      %26 = vector.load %arg7[%c0_19, %c0_20, %c0_21] : memref<1x16x128xbf16, #tpu.memory_space<vmem>>, vector<1x16x128xbf16>
      tpu.vector_store %arg7[%c0_19, %c0_20, %c0_21], %25 {strides = array<i32>} : memref<1x16x128xbf16, #tpu.memory_space<vmem>>, vector<1x16x128xbf16>,
      %cst_22 = arith.constant dense<0.000000e+00> : vector<128xf32>
      %27 = vector.multi_reduction <add>, %23, %cst_22 [0] : vector<16x128xf32> to vector<128xf32>
      %28 = arith.mulf %23, %23 : vector<16x128xf32>
      %cst_23 = arith.constant dense<0.000000e+00> : vector<128xf32>
      %29 = vector.multi_reduction <add>, %28, %cst_23 [0] : vector<16x128xf32> to vector<128xf32>
      %30 = tpu.iota {dimensions = array<i32: 0>} : vector<8x128xi32>
      %c0_i32_24 = arith.constant 0 : i32
      %31 = vector.broadcast %c0_i32_24 : i32 to vector<8x128xi32>
      %32 = arith.cmpi eq, %30, %31 : vector<8x128xi32>
      %33 = vector.shape_cast %27 : vector<128xf32> to vector<1x128xf32>
      %c1_i32 = arith.constant 1 : i32
      %34 = vector.broadcast %c1_i32 : i32 to vector<8x128xi32>
      %35 = arith.cmpi eq, %30, %34 : vector<8x128xi32>
      %36 = vector.shape_cast %29 : vector<128xf32> to vector<1x128xf32>
      %cst_25 = arith.constant 0.000000e+00 : f32
      %37 = vector.shape_cast %36 : vector<1x128xf32> to vector<1x128xf32>
      %38 = vector.broadcast %37 : vector<1x128xf32> to vector<8x128xf32>
      %39 = vector.broadcast %cst_25 : f32 to vector<8x128xf32>
      %40 = arith.select %35, %38, %39 : vector<8x128xi1>, vector<8x128xf32>
      %41 = vector.shape_cast %33 : vector<1x128xf32> to vector<1x128xf32>
      %42 = vector.broadcast %41 : vector<1x128xf32> to vector<8x128xf32>
      %43 = arith.select %32, %42, %40 : vector<8x128xi1>, vector<8x128xf32>
      %44 = vector.shape_cast %43 : vector<8x128xf32> to vector<1x1x8x128xf32>
      %c0_26 = arith.constant 0 : index
      %c0_27 = arith.constant 0 : index
      %c0_28 = arith.constant 0 : index
      %c0_29 = arith.constant 0 : index
      %45 = vector.load %arg8[%c0_26, %c0_27, %c0_28, %c0_29] : memref<1x1x8x128xf32, #tpu.memory_space<vmem>>, vector<1x1x8x128xf32>
      tpu.vector_store %arg8[%c0_26, %c0_27, %c0_28, %c0_29], %44 {strides = array<i32>} : memref<1x1x8x128xf32, #tpu.memory_space<vmem>>, vector<1x1x8x128xf32>,
    } else {
    }
    return
  }
  func.func @transform_0(%arg0: i32, %arg1: i32, %arg2: i32, %arg3: i32) -> (i32, i32, i32) {
    %c0_i32 = arith.constant 0 : i32
    return %arg0, %arg1, %arg3 : i32, i32, i32
  }
  func.func @transform_1(%arg0: i32, %arg1: i32, %arg2: i32, %arg3: i32) -> (i32, i32, i32) {
    %c0_i32 = arith.constant 0 : i32
    return %arg0, %arg3, %arg2 : i32, i32, i32
  }
  func.func @transform_2(%arg0: i32, %arg1: i32, %arg2: i32, %arg3: i32) -> (i32, i32, i32) {
    %c0_i32 = arith.constant 0 : i32
    %c0_i32_0 = arith.constant 0 : i32
    return %arg0, %c0_i32, %arg2 : i32, i32, i32
  }
  func.func @transform_3(%arg0: i32, %arg1: i32, %arg2: i32, %arg3: i32) -> (i32, i32, i32) {
    %c0_i32 = arith.constant 0 : i32
    return %arg0, %arg1, %arg2 : i32, i32, i32
  }
  func.func @transform_4(%arg0: i32, %arg1: i32, %arg2: i32, %arg3: i32) -> (i32, i32, i32, i32) {
    %c0_i32 = arith.constant 0 : i32
    %c0_i32_0 = arith.constant 0 : i32
    return %arg0, %arg1, %c0_i32, %arg2 : i32, i32, i32, i32
  }
}

module attributes {stable_mosaic.version = 11 : i64} {
  func.func @_mm_kernel(%arg0: i32, %arg1: i32, %arg2: i32, %arg3: i32, %arg4: memref<1x16x256xbf16, #tpu.memory_space<vmem>>, %arg5: memref<1x256x128xbf16, #tpu.memory_space<vmem>>, %arg6: memref<1x1x128xf32, #tpu.memory_space<vmem>>, %arg7: memref<1x16x128xbf16, #tpu.memory_space<vmem>>, %arg8: memref<1x1x8x128xf32, #tpu.memory_space<vmem>>, %arg9: memref<16x128xf32, #tpu.memory_space<vmem>>) attributes {dimension_semantics = [#tpu.dimension_semantics<parallel>, #tpu.dimension_semantics<parallel>, #tpu.dimension_semantics<parallel>, #tpu.dimension_semantics<arbitrary>], iteration_bounds = array<i64: 4, 1, 1, 1>, scalar_prefetch = 0 : i64, scratch_operands = 1 : i64, tpu.core_type = #tpu.core_type<tc>, window_params = [{transform_indices = @transform_0, window_bounds = array<i64: 1, 16, 256>}, {transform_indices = @transform_1, window_bounds = array<i64: 1, 256, 128>}, {transform_indices = @transform_2, window_bounds = array<i64: 1, 1, 128>}, {transform_indices = @transform_3, window_bounds = array<i64: 1, 16, 128>}, {transform_indices = @transform_4, window_bounds = array<i64: 1, 1, 8, 128>}]} {
    %c0_i32 = arith.constant 0 : i32
    %0 = arith.cmpi eq, %arg3, %c0_i32 : i32
    %1 = arith.extui %0 : i1 to i32
    %c0_i32_0 = arith.constant 0 : i32
    %2 = arith.cmpi ne, %1, %c0_i32_0 : i32
    scf.if %2 {
      %cst_13 = arith.constant 0.000000e+00 : f32
      %16 = vector.broadcast %cst_13 : f32 to vector<16x128xf32>
      %c0_14 = arith.constant 0 : index
      %c0_15 = arith.constant 0 : index
      %17 = vector.load %arg9[%c0_14, %c0_15] : memref<16x128xf32, #tpu.memory_space<vmem>>, vector<16x128xf32>
      tpu.vector_store %arg9[%c0_14, %c0_15], %16 {strides = array<i32>} : memref<16x128xf32, #tpu.memory_space<vmem>>, vector<16x128xf32>,
    } else {
    }
    %c0 = arith.constant 0 : index
    %c0_1 = arith.constant 0 : index
    %c0_2 = arith.constant 0 : index
    %3 = vector.load %arg4[%c0, %c0_1, %c0_2] : memref<1x16x256xbf16, #tpu.memory_space<vmem>>, vector<1x16x256xbf16>
    %4 = vector.shape_cast %3 : vector<1x16x256xbf16> to vector<16x256xbf16>
    %cst = arith.constant 0.000000e+00 : bf16
    %5 = vector.broadcast %cst : bf16 to vector<16x256xbf16>
    %6 = arith.maximumf %4, %5 : vector<16x256xbf16>
    %c0_3 = arith.constant 0 : index
    %c0_4 = arith.constant 0 : index
    %7 = vector.load %arg9[%c0_3, %c0_4] : memref<16x128xf32, #tpu.memory_space<vmem>>, vector<16x128xf32>
    %c0_5 = arith.constant 0 : index
    %c0_6 = arith.constant 0 : index
    %c0_7 = arith.constant 0 : index
    %8 = vector.load %arg5[%c0_5, %c0_6, %c0_7] : memref<1x256x128xbf16, #tpu.memory_space<vmem>>, vector<1x256x128xbf16>
    %9 = vector.shape_cast %8 : vector<1x256x128xbf16> to vector<256x128xbf16>
    %cst_8 = arith.constant dense<0.000000e+00> : vector<16x128xf32>
    %10 = tpu.matmul %6, %9, %cst_8 {dimension_numbers = #tpu.dot_dimension_numbers<[1], [0], [0], [1], [0, 0, 1, 1], [], []>} : vector<16x256xbf16>, vector<256x128xbf16>, vector<16x128xf32> -> vector<16x128xf32>
    %11 = arith.addf %7, %10 : vector<16x128xf32>
    %c0_9 = arith.constant 0 : index
    %c0_10 = arith.constant 0 : index
    %12 = vector.load %arg9[%c0_9, %c0_10] : memref<16x128xf32, #tpu.memory_space<vmem>>, vector<16x128xf32>
    tpu.vector_store %arg9[%c0_9, %c0_10], %11 {strides = array<i32>} : memref<16x128xf32, #tpu.memory_space<vmem>>, vector<16x128xf32>,
    %c0_i32_11 = arith.constant 0 : i32
    %13 = arith.cmpi eq, %arg3, %c0_i32_11 : i32
    %14 = arith.extui %13 : i1 to i32
    %c0_i32_12 = arith.constant 0 : i32
    %15 = arith.cmpi ne, %14, %c0_i32_12 : i32
    scf.if %15 {
      %c0_13 = arith.constant 0 : index
      %c0_14 = arith.constant 0 : index
      %16 = vector.load %arg9[%c0_13, %c0_14] : memref<16x128xf32, #tpu.memory_space<vmem>>, vector<16x128xf32>
      %c0_15 = arith.constant 0 : index
      %c0_16 = arith.constant 0 : index
      %c0_17 = arith.constant 0 : index
      %17 = vector.load %arg6[%c0_15, %c0_16, %c0_17] : memref<1x1x128xf32, #tpu.memory_space<vmem>>, vector<1x1x128xf32>
      %18 = vector.shape_cast %17 : vector<1x1x128xf32> to vector<1x128xf32>
      %19 = vector.broadcast %18 : vector<1x128xf32> to vector<16x128xf32>
      %20 = arith.addf %16, %19 : vector<16x128xf32>
      %21 = arith.truncf %20 : vector<16x128xf32> to vector<16x128xbf16>
      %22 = vector.shape_cast %21 : vector<16x128xbf16> to vector<1x16x128xbf16>
      %c0_18 = arith.constant 0 : index
      %c0_19 = arith.constant 0 : index
      %c0_20 = arith.constant 0 : index
      %23 = vector.load %arg7[%c0_18, %c0_19, %c0_20] : memref<1x16x128xbf16, #tpu.memory_space<vmem>>, vector<1x16x128xbf16>
      tpu.vector_store %arg7[%c0_18, %c0_19, %c0_20], %22 {strides = array<i32>} : memref<1x16x128xbf16, #tpu.memory_space<vmem>>, vector<1x16x128xbf16>,
      %cst_21 = arith.constant dense<0.000000e+00> : vector<128xf32>
      %24 = vector.multi_reduction <add>, %20, %cst_21 [0] : vector<16x128xf32> to vector<128xf32>
      %25 = arith.mulf %20, %20 : vector<16x128xf32>
      %cst_22 = arith.constant dense<0.000000e+00> : vector<128xf32>
      %26 = vector.multi_reduction <add>, %25, %cst_22 [0] : vector<16x128xf32> to vector<128xf32>
      %27 = tpu.iota {dimensions = array<i32: 0>} : vector<8x128xi32>
      %c0_i32_23 = arith.constant 0 : i32
      %28 = vector.broadcast %c0_i32_23 : i32 to vector<8x128xi32>
      %29 = arith.cmpi eq, %27, %28 : vector<8x128xi32>
      %30 = vector.shape_cast %24 : vector<128xf32> to vector<1x128xf32>
      %c1_i32 = arith.constant 1 : i32
      %31 = vector.broadcast %c1_i32 : i32 to vector<8x128xi32>
      %32 = arith.cmpi eq, %27, %31 : vector<8x128xi32>
      %33 = vector.shape_cast %26 : vector<128xf32> to vector<1x128xf32>
      %cst_24 = arith.constant 0.000000e+00 : f32
      %34 = vector.shape_cast %33 : vector<1x128xf32> to vector<1x128xf32>
      %35 = vector.broadcast %34 : vector<1x128xf32> to vector<8x128xf32>
      %36 = vector.broadcast %cst_24 : f32 to vector<8x128xf32>
      %37 = arith.select %32, %35, %36 : vector<8x128xi1>, vector<8x128xf32>
      %38 = vector.shape_cast %30 : vector<1x128xf32> to vector<1x128xf32>
      %39 = vector.broadcast %38 : vector<1x128xf32> to vector<8x128xf32>
      %40 = arith.select %29, %39, %37 : vector<8x128xi1>, vector<8x128xf32>
      %41 = vector.shape_cast %40 : vector<8x128xf32> to vector<1x1x8x128xf32>
      %c0_25 = arith.constant 0 : index
      %c0_26 = arith.constant 0 : index
      %c0_27 = arith.constant 0 : index
      %c0_28 = arith.constant 0 : index
      %42 = vector.load %arg8[%c0_25, %c0_26, %c0_27, %c0_28] : memref<1x1x8x128xf32, #tpu.memory_space<vmem>>, vector<1x1x8x128xf32>
      tpu.vector_store %arg8[%c0_25, %c0_26, %c0_27, %c0_28], %41 {strides = array<i32>} : memref<1x1x8x128xf32, #tpu.memory_space<vmem>>, vector<1x1x8x128xf32>,
    } else {
    }
    return
  }
  func.func @transform_0(%arg0: i32, %arg1: i32, %arg2: i32, %arg3: i32) -> (i32, i32, i32) {
    %c0_i32 = arith.constant 0 : i32
    return %arg0, %arg1, %arg3 : i32, i32, i32
  }
  func.func @transform_1(%arg0: i32, %arg1: i32, %arg2: i32, %arg3: i32) -> (i32, i32, i32) {
    %c0_i32 = arith.constant 0 : i32
    return %arg0, %arg3, %arg2 : i32, i32, i32
  }
  func.func @transform_2(%arg0: i32, %arg1: i32, %arg2: i32, %arg3: i32) -> (i32, i32, i32) {
    %c0_i32 = arith.constant 0 : i32
    %c0_i32_0 = arith.constant 0 : i32
    return %arg0, %c0_i32, %arg2 : i32, i32, i32
  }
  func.func @transform_3(%arg0: i32, %arg1: i32, %arg2: i32, %arg3: i32) -> (i32, i32, i32) {
    %c0_i32 = arith.constant 0 : i32
    return %arg0, %arg1, %arg2 : i32, i32, i32
  }
  func.func @transform_4(%arg0: i32, %arg1: i32, %arg2: i32, %arg3: i32) -> (i32, i32, i32, i32) {
    %c0_i32 = arith.constant 0 : i32
    %c0_i32_0 = arith.constant 0 : i32
    return %arg0, %arg1, %c0_i32, %arg2 : i32, i32, i32, i32
  }
}

module attributes {stable_mosaic.version = 11 : i64} {
  func.func @_mm_kernel(%arg0: i32, %arg1: i32, %arg2: i32, %arg3: i32, %arg4: memref<1x16x512xbf16, #tpu.memory_space<vmem>>, %arg5: memref<1x512x128xbf16, #tpu.memory_space<vmem>>, %arg6: memref<1x1x128xf32, #tpu.memory_space<vmem>>, %arg7: memref<1x16x128xbf16, #tpu.memory_space<vmem>>, %arg8: memref<1x1x8x128xf32, #tpu.memory_space<vmem>>, %arg9: memref<16x128xf32, #tpu.memory_space<vmem>>) attributes {dimension_semantics = [#tpu.dimension_semantics<parallel>, #tpu.dimension_semantics<parallel>, #tpu.dimension_semantics<parallel>, #tpu.dimension_semantics<arbitrary>], iteration_bounds = array<i64: 4, 1, 1, 1>, scalar_prefetch = 0 : i64, scratch_operands = 1 : i64, tpu.core_type = #tpu.core_type<tc>, window_params = [{transform_indices = @transform_0, window_bounds = array<i64: 1, 16, 512>}, {transform_indices = @transform_1, window_bounds = array<i64: 1, 512, 128>}, {transform_indices = @transform_2, window_bounds = array<i64: 1, 1, 128>}, {transform_indices = @transform_3, window_bounds = array<i64: 1, 16, 128>}, {transform_indices = @transform_4, window_bounds = array<i64: 1, 1, 8, 128>}]} {
    %c0_i32 = arith.constant 0 : i32
    %0 = arith.cmpi eq, %arg3, %c0_i32 : i32
    %1 = arith.extui %0 : i1 to i32
    %c0_i32_0 = arith.constant 0 : i32
    %2 = arith.cmpi ne, %1, %c0_i32_0 : i32
    scf.if %2 {
      %cst_13 = arith.constant 0.000000e+00 : f32
      %16 = vector.broadcast %cst_13 : f32 to vector<16x128xf32>
      %c0_14 = arith.constant 0 : index
      %c0_15 = arith.constant 0 : index
      %17 = vector.load %arg9[%c0_14, %c0_15] : memref<16x128xf32, #tpu.memory_space<vmem>>, vector<16x128xf32>
      tpu.vector_store %arg9[%c0_14, %c0_15], %16 {strides = array<i32>} : memref<16x128xf32, #tpu.memory_space<vmem>>, vector<16x128xf32>,
    } else {
    }
    %c0 = arith.constant 0 : index
    %c0_1 = arith.constant 0 : index
    %c0_2 = arith.constant 0 : index
    %3 = vector.load %arg4[%c0, %c0_1, %c0_2] : memref<1x16x512xbf16, #tpu.memory_space<vmem>>, vector<1x16x512xbf16>
    %4 = vector.shape_cast %3 : vector<1x16x512xbf16> to vector<16x512xbf16>
    %cst = arith.constant 0.000000e+00 : bf16
    %5 = vector.broadcast %cst : bf16 to vector<16x512xbf16>
    %6 = arith.maximumf %4, %5 : vector<16x512xbf16>
    %c0_3 = arith.constant 0 : index
    %c0_4 = arith.constant 0 : index
    %7 = vector.load %arg9[%c0_3, %c0_4] : memref<16x128xf32, #tpu.memory_space<vmem>>, vector<16x128xf32>
    %c0_5 = arith.constant 0 : index
    %c0_6 = arith.constant 0 : index
    %c0_7 = arith.constant 0 : index
    %8 = vector.load %arg5[%c0_5, %c0_6, %c0_7] : memref<1x512x128xbf16, #tpu.memory_space<vmem>>, vector<1x512x128xbf16>
    %9 = vector.shape_cast %8 : vector<1x512x128xbf16> to vector<512x128xbf16>
    %cst_8 = arith.constant dense<0.000000e+00> : vector<16x128xf32>
    %10 = tpu.matmul %6, %9, %cst_8 {dimension_numbers = #tpu.dot_dimension_numbers<[1], [0], [0], [1], [0, 0, 1, 1], [], []>} : vector<16x512xbf16>, vector<512x128xbf16>, vector<16x128xf32> -> vector<16x128xf32>
    %11 = arith.addf %7, %10 : vector<16x128xf32>
    %c0_9 = arith.constant 0 : index
    %c0_10 = arith.constant 0 : index
    %12 = vector.load %arg9[%c0_9, %c0_10] : memref<16x128xf32, #tpu.memory_space<vmem>>, vector<16x128xf32>
    tpu.vector_store %arg9[%c0_9, %c0_10], %11 {strides = array<i32>} : memref<16x128xf32, #tpu.memory_space<vmem>>, vector<16x128xf32>,
    %c0_i32_11 = arith.constant 0 : i32
    %13 = arith.cmpi eq, %arg3, %c0_i32_11 : i32
    %14 = arith.extui %13 : i1 to i32
    %c0_i32_12 = arith.constant 0 : i32
    %15 = arith.cmpi ne, %14, %c0_i32_12 : i32
    scf.if %15 {
      %c0_13 = arith.constant 0 : index
      %c0_14 = arith.constant 0 : index
      %16 = vector.load %arg9[%c0_13, %c0_14] : memref<16x128xf32, #tpu.memory_space<vmem>>, vector<16x128xf32>
      %c0_15 = arith.constant 0 : index
      %c0_16 = arith.constant 0 : index
      %c0_17 = arith.constant 0 : index
      %17 = vector.load %arg6[%c0_15, %c0_16, %c0_17] : memref<1x1x128xf32, #tpu.memory_space<vmem>>, vector<1x1x128xf32>
      %18 = vector.shape_cast %17 : vector<1x1x128xf32> to vector<1x128xf32>
      %19 = vector.broadcast %18 : vector<1x128xf32> to vector<16x128xf32>
      %20 = arith.addf %16, %19 : vector<16x128xf32>
      %21 = arith.truncf %20 : vector<16x128xf32> to vector<16x128xbf16>
      %22 = vector.shape_cast %21 : vector<16x128xbf16> to vector<1x16x128xbf16>
      %c0_18 = arith.constant 0 : index
      %c0_19 = arith.constant 0 : index
      %c0_20 = arith.constant 0 : index
      %23 = vector.load %arg7[%c0_18, %c0_19, %c0_20] : memref<1x16x128xbf16, #tpu.memory_space<vmem>>, vector<1x16x128xbf16>
      tpu.vector_store %arg7[%c0_18, %c0_19, %c0_20], %22 {strides = array<i32>} : memref<1x16x128xbf16, #tpu.memory_space<vmem>>, vector<1x16x128xbf16>,
      %cst_21 = arith.constant dense<0.000000e+00> : vector<128xf32>
      %24 = vector.multi_reduction <add>, %20, %cst_21 [0] : vector<16x128xf32> to vector<128xf32>
      %25 = arith.mulf %20, %20 : vector<16x128xf32>
      %cst_22 = arith.constant dense<0.000000e+00> : vector<128xf32>
      %26 = vector.multi_reduction <add>, %25, %cst_22 [0] : vector<16x128xf32> to vector<128xf32>
      %27 = tpu.iota {dimensions = array<i32: 0>} : vector<8x128xi32>
      %c0_i32_23 = arith.constant 0 : i32
      %28 = vector.broadcast %c0_i32_23 : i32 to vector<8x128xi32>
      %29 = arith.cmpi eq, %27, %28 : vector<8x128xi32>
      %30 = vector.shape_cast %24 : vector<128xf32> to vector<1x128xf32>
      %c1_i32 = arith.constant 1 : i32
      %31 = vector.broadcast %c1_i32 : i32 to vector<8x128xi32>
      %32 = arith.cmpi eq, %27, %31 : vector<8x128xi32>
      %33 = vector.shape_cast %26 : vector<128xf32> to vector<1x128xf32>
      %cst_24 = arith.constant 0.000000e+00 : f32
      %34 = vector.shape_cast %33 : vector<1x128xf32> to vector<1x128xf32>
      %35 = vector.broadcast %34 : vector<1x128xf32> to vector<8x128xf32>
      %36 = vector.broadcast %cst_24 : f32 to vector<8x128xf32>
      %37 = arith.select %32, %35, %36 : vector<8x128xi1>, vector<8x128xf32>
      %38 = vector.shape_cast %30 : vector<1x128xf32> to vector<1x128xf32>
      %39 = vector.broadcast %38 : vector<1x128xf32> to vector<8x128xf32>
      %40 = arith.select %29, %39, %37 : vector<8x128xi1>, vector<8x128xf32>
      %41 = vector.shape_cast %40 : vector<8x128xf32> to vector<1x1x8x128xf32>
      %c0_25 = arith.constant 0 : index
      %c0_26 = arith.constant 0 : index
      %c0_27 = arith.constant 0 : index
      %c0_28 = arith.constant 0 : index
      %42 = vector.load %arg8[%c0_25, %c0_26, %c0_27, %c0_28] : memref<1x1x8x128xf32, #tpu.memory_space<vmem>>, vector<1x1x8x128xf32>
      tpu.vector_store %arg8[%c0_25, %c0_26, %c0_27, %c0_28], %41 {strides = array<i32>} : memref<1x1x8x128xf32, #tpu.memory_space<vmem>>, vector<1x1x8x128xf32>,
    } else {
    }
    return
  }
  func.func @transform_0(%arg0: i32, %arg1: i32, %arg2: i32, %arg3: i32) -> (i32, i32, i32) {
    %c0_i32 = arith.constant 0 : i32
    return %arg0, %arg1, %arg3 : i32, i32, i32
  }
  func.func @transform_1(%arg0: i32, %arg1: i32, %arg2: i32, %arg3: i32) -> (i32, i32, i32) {
    %c0_i32 = arith.constant 0 : i32
    return %arg0, %arg3, %arg2 : i32, i32, i32
  }
  func.func @transform_2(%arg0: i32, %arg1: i32, %arg2: i32, %arg3: i32) -> (i32, i32, i32) {
    %c0_i32 = arith.constant 0 : i32
    %c0_i32_0 = arith.constant 0 : i32
    return %arg0, %c0_i32, %arg2 : i32, i32, i32
  }
  func.func @transform_3(%arg0: i32, %arg1: i32, %arg2: i32, %arg3: i32) -> (i32, i32, i32) {
    %c0_i32 = arith.constant 0 : i32
    return %arg0, %arg1, %arg2 : i32, i32, i32
  }
  func.func @transform_4(%arg0: i32, %arg1: i32, %arg2: i32, %arg3: i32) -> (i32, i32, i32, i32) {
    %c0_i32 = arith.constant 0 : i32
    %c0_i32_0 = arith.constant 0 : i32
    return %arg0, %arg1, %c0_i32, %arg2 : i32, i32, i32, i32
  }
}

module attributes {stable_mosaic.version = 11 : i64} {
  func.func @_mm_kernel(%arg0: i32, %arg1: i32, %arg2: i32, %arg3: i32, %arg4: memref<1x32x256xbf16, #tpu.memory_space<vmem>>, %arg5: memref<1x256x128xbf16, #tpu.memory_space<vmem>>, %arg6: memref<1x1x128xf32, #tpu.memory_space<vmem>>, %arg7: memref<1x32x128xbf16, #tpu.memory_space<vmem>>, %arg8: memref<1x1x8x128xf32, #tpu.memory_space<vmem>>, %arg9: memref<32x128xf32, #tpu.memory_space<vmem>>) attributes {dimension_semantics = [#tpu.dimension_semantics<parallel>, #tpu.dimension_semantics<parallel>, #tpu.dimension_semantics<parallel>, #tpu.dimension_semantics<arbitrary>], iteration_bounds = array<i64: 4, 1, 1, 1>, scalar_prefetch = 0 : i64, scratch_operands = 1 : i64, tpu.core_type = #tpu.core_type<tc>, window_params = [{transform_indices = @transform_0, window_bounds = array<i64: 1, 32, 256>}, {transform_indices = @transform_1, window_bounds = array<i64: 1, 256, 128>}, {transform_indices = @transform_2, window_bounds = array<i64: 1, 1, 128>}, {transform_indices = @transform_3, window_bounds = array<i64: 1, 32, 128>}, {transform_indices = @transform_4, window_bounds = array<i64: 1, 1, 8, 128>}]} {
    %c0_i32 = arith.constant 0 : i32
    %0 = arith.cmpi eq, %arg3, %c0_i32 : i32
    %1 = arith.extui %0 : i1 to i32
    %c0_i32_0 = arith.constant 0 : i32
    %2 = arith.cmpi ne, %1, %c0_i32_0 : i32
    scf.if %2 {
      %cst_13 = arith.constant 0.000000e+00 : f32
      %16 = vector.broadcast %cst_13 : f32 to vector<32x128xf32>
      %c0_14 = arith.constant 0 : index
      %c0_15 = arith.constant 0 : index
      %17 = vector.load %arg9[%c0_14, %c0_15] : memref<32x128xf32, #tpu.memory_space<vmem>>, vector<32x128xf32>
      tpu.vector_store %arg9[%c0_14, %c0_15], %16 {strides = array<i32>} : memref<32x128xf32, #tpu.memory_space<vmem>>, vector<32x128xf32>,
    } else {
    }
    %c0 = arith.constant 0 : index
    %c0_1 = arith.constant 0 : index
    %c0_2 = arith.constant 0 : index
    %3 = vector.load %arg4[%c0, %c0_1, %c0_2] : memref<1x32x256xbf16, #tpu.memory_space<vmem>>, vector<1x32x256xbf16>
    %4 = vector.shape_cast %3 : vector<1x32x256xbf16> to vector<32x256xbf16>
    %cst = arith.constant 0.000000e+00 : bf16
    %5 = vector.broadcast %cst : bf16 to vector<32x256xbf16>
    %6 = arith.maximumf %4, %5 : vector<32x256xbf16>
    %c0_3 = arith.constant 0 : index
    %c0_4 = arith.constant 0 : index
    %7 = vector.load %arg9[%c0_3, %c0_4] : memref<32x128xf32, #tpu.memory_space<vmem>>, vector<32x128xf32>
    %c0_5 = arith.constant 0 : index
    %c0_6 = arith.constant 0 : index
    %c0_7 = arith.constant 0 : index
    %8 = vector.load %arg5[%c0_5, %c0_6, %c0_7] : memref<1x256x128xbf16, #tpu.memory_space<vmem>>, vector<1x256x128xbf16>
    %9 = vector.shape_cast %8 : vector<1x256x128xbf16> to vector<256x128xbf16>
    %cst_8 = arith.constant dense<0.000000e+00> : vector<32x128xf32>
    %10 = tpu.matmul %6, %9, %cst_8 {dimension_numbers = #tpu.dot_dimension_numbers<[1], [0], [0], [1], [0, 0, 1, 1], [], []>} : vector<32x256xbf16>, vector<256x128xbf16>, vector<32x128xf32> -> vector<32x128xf32>
    %11 = arith.addf %7, %10 : vector<32x128xf32>
    %c0_9 = arith.constant 0 : index
    %c0_10 = arith.constant 0 : index
    %12 = vector.load %arg9[%c0_9, %c0_10] : memref<32x128xf32, #tpu.memory_space<vmem>>, vector<32x128xf32>
    tpu.vector_store %arg9[%c0_9, %c0_10], %11 {strides = array<i32>} : memref<32x128xf32, #tpu.memory_space<vmem>>, vector<32x128xf32>,
    %c0_i32_11 = arith.constant 0 : i32
    %13 = arith.cmpi eq, %arg3, %c0_i32_11 : i32
    %14 = arith.extui %13 : i1 to i32
    %c0_i32_12 = arith.constant 0 : i32
    %15 = arith.cmpi ne, %14, %c0_i32_12 : i32
    scf.if %15 {
      %c0_13 = arith.constant 0 : index
      %c0_14 = arith.constant 0 : index
      %16 = vector.load %arg9[%c0_13, %c0_14] : memref<32x128xf32, #tpu.memory_space<vmem>>, vector<32x128xf32>
      %c0_15 = arith.constant 0 : index
      %c0_16 = arith.constant 0 : index
      %c0_17 = arith.constant 0 : index
      %17 = vector.load %arg6[%c0_15, %c0_16, %c0_17] : memref<1x1x128xf32, #tpu.memory_space<vmem>>, vector<1x1x128xf32>
      %18 = vector.shape_cast %17 : vector<1x1x128xf32> to vector<1x128xf32>
      %19 = vector.broadcast %18 : vector<1x128xf32> to vector<32x128xf32>
      %20 = arith.addf %16, %19 : vector<32x128xf32>
      %21 = arith.truncf %20 : vector<32x128xf32> to vector<32x128xbf16>
      %22 = vector.shape_cast %21 : vector<32x128xbf16> to vector<1x32x128xbf16>
      %c0_18 = arith.constant 0 : index
      %c0_19 = arith.constant 0 : index
      %c0_20 = arith.constant 0 : index
      %23 = vector.load %arg7[%c0_18, %c0_19, %c0_20] : memref<1x32x128xbf16, #tpu.memory_space<vmem>>, vector<1x32x128xbf16>
      tpu.vector_store %arg7[%c0_18, %c0_19, %c0_20], %22 {strides = array<i32>} : memref<1x32x128xbf16, #tpu.memory_space<vmem>>, vector<1x32x128xbf16>,
      %cst_21 = arith.constant dense<0.000000e+00> : vector<128xf32>
      %24 = vector.multi_reduction <add>, %20, %cst_21 [0] : vector<32x128xf32> to vector<128xf32>
      %25 = arith.mulf %20, %20 : vector<32x128xf32>
      %cst_22 = arith.constant dense<0.000000e+00> : vector<128xf32>
      %26 = vector.multi_reduction <add>, %25, %cst_22 [0] : vector<32x128xf32> to vector<128xf32>
      %27 = tpu.iota {dimensions = array<i32: 0>} : vector<8x128xi32>
      %c0_i32_23 = arith.constant 0 : i32
      %28 = vector.broadcast %c0_i32_23 : i32 to vector<8x128xi32>
      %29 = arith.cmpi eq, %27, %28 : vector<8x128xi32>
      %30 = vector.shape_cast %24 : vector<128xf32> to vector<1x128xf32>
      %c1_i32 = arith.constant 1 : i32
      %31 = vector.broadcast %c1_i32 : i32 to vector<8x128xi32>
      %32 = arith.cmpi eq, %27, %31 : vector<8x128xi32>
      %33 = vector.shape_cast %26 : vector<128xf32> to vector<1x128xf32>
      %cst_24 = arith.constant 0.000000e+00 : f32
      %34 = vector.shape_cast %33 : vector<1x128xf32> to vector<1x128xf32>
      %35 = vector.broadcast %34 : vector<1x128xf32> to vector<8x128xf32>
      %36 = vector.broadcast %cst_24 : f32 to vector<8x128xf32>
      %37 = arith.select %32, %35, %36 : vector<8x128xi1>, vector<8x128xf32>
      %38 = vector.shape_cast %30 : vector<1x128xf32> to vector<1x128xf32>
      %39 = vector.broadcast %38 : vector<1x128xf32> to vector<8x128xf32>
      %40 = arith.select %29, %39, %37 : vector<8x128xi1>, vector<8x128xf32>
      %41 = vector.shape_cast %40 : vector<8x128xf32> to vector<1x1x8x128xf32>
      %c0_25 = arith.constant 0 : index
      %c0_26 = arith.constant 0 : index
      %c0_27 = arith.constant 0 : index
      %c0_28 = arith.constant 0 : index
      %42 = vector.load %arg8[%c0_25, %c0_26, %c0_27, %c0_28] : memref<1x1x8x128xf32, #tpu.memory_space<vmem>>, vector<1x1x8x128xf32>
      tpu.vector_store %arg8[%c0_25, %c0_26, %c0_27, %c0_28], %41 {strides = array<i32>} : memref<1x1x8x128xf32, #tpu.memory_space<vmem>>, vector<1x1x8x128xf32>,
    } else {
    }
    return
  }
  func.func @transform_0(%arg0: i32, %arg1: i32, %arg2: i32, %arg3: i32) -> (i32, i32, i32) {
    %c0_i32 = arith.constant 0 : i32
    return %arg0, %arg1, %arg3 : i32, i32, i32
  }
  func.func @transform_1(%arg0: i32, %arg1: i32, %arg2: i32, %arg3: i32) -> (i32, i32, i32) {
    %c0_i32 = arith.constant 0 : i32
    return %arg0, %arg3, %arg2 : i32, i32, i32
  }
  func.func @transform_2(%arg0: i32, %arg1: i32, %arg2: i32, %arg3: i32) -> (i32, i32, i32) {
    %c0_i32 = arith.constant 0 : i32
    %c0_i32_0 = arith.constant 0 : i32
    return %arg0, %c0_i32, %arg2 : i32, i32, i32
  }
  func.func @transform_3(%arg0: i32, %arg1: i32, %arg2: i32, %arg3: i32) -> (i32, i32, i32) {
    %c0_i32 = arith.constant 0 : i32
    return %arg0, %arg1, %arg2 : i32, i32, i32
  }
  func.func @transform_4(%arg0: i32, %arg1: i32, %arg2: i32, %arg3: i32) -> (i32, i32, i32, i32) {
    %c0_i32 = arith.constant 0 : i32
    %c0_i32_0 = arith.constant 0 : i32
    return %arg0, %arg1, %c0_i32, %arg2 : i32, i32, i32, i32
  }
}

module attributes {stable_mosaic.version = 11 : i64} {
  func.func @_mm_kernel(%arg0: i32, %arg1: i32, %arg2: i32, %arg3: i32, %arg4: memref<1x128x128xbf16, #tpu.memory_space<vmem>>, %arg5: memref<1x128x128xbf16, #tpu.memory_space<vmem>>, %arg6: memref<1x1x128xf32, #tpu.memory_space<vmem>>, %arg7: memref<1x128x128xbf16, #tpu.memory_space<vmem>>, %arg8: memref<1x1x8x128xf32, #tpu.memory_space<vmem>>, %arg9: memref<128x128xf32, #tpu.memory_space<vmem>>) attributes {dimension_semantics = [#tpu.dimension_semantics<parallel>, #tpu.dimension_semantics<parallel>, #tpu.dimension_semantics<parallel>, #tpu.dimension_semantics<arbitrary>], iteration_bounds = array<i64: 4, 1, 1, 1>, scalar_prefetch = 0 : i64, scratch_operands = 1 : i64, tpu.core_type = #tpu.core_type<tc>, window_params = [{transform_indices = @transform_0, window_bounds = array<i64: 1, 128, 128>}, {transform_indices = @transform_1, window_bounds = array<i64: 1, 128, 128>}, {transform_indices = @transform_2, window_bounds = array<i64: 1, 1, 128>}, {transform_indices = @transform_3, window_bounds = array<i64: 1, 128, 128>}, {transform_indices = @transform_4, window_bounds = array<i64: 1, 1, 8, 128>}]} {
    %c0_i32 = arith.constant 0 : i32
    %0 = arith.cmpi eq, %arg3, %c0_i32 : i32
    %1 = arith.extui %0 : i1 to i32
    %c0_i32_0 = arith.constant 0 : i32
    %2 = arith.cmpi ne, %1, %c0_i32_0 : i32
    scf.if %2 {
      %cst_13 = arith.constant 0.000000e+00 : f32
      %16 = vector.broadcast %cst_13 : f32 to vector<128x128xf32>
      %c0_14 = arith.constant 0 : index
      %c0_15 = arith.constant 0 : index
      %17 = vector.load %arg9[%c0_14, %c0_15] : memref<128x128xf32, #tpu.memory_space<vmem>>, vector<128x128xf32>
      tpu.vector_store %arg9[%c0_14, %c0_15], %16 {strides = array<i32>} : memref<128x128xf32, #tpu.memory_space<vmem>>, vector<128x128xf32>,
    } else {
    }
    %c0 = arith.constant 0 : index
    %c0_1 = arith.constant 0 : index
    %c0_2 = arith.constant 0 : index
    %3 = vector.load %arg4[%c0, %c0_1, %c0_2] : memref<1x128x128xbf16, #tpu.memory_space<vmem>>, vector<1x128x128xbf16>
    %4 = vector.shape_cast %3 : vector<1x128x128xbf16> to vector<128x128xbf16>
    %cst = arith.constant 0.000000e+00 : bf16
    %5 = vector.broadcast %cst : bf16 to vector<128x128xbf16>
    %6 = arith.maximumf %4, %5 : vector<128x128xbf16>
    %c0_3 = arith.constant 0 : index
    %c0_4 = arith.constant 0 : index
    %7 = vector.load %arg9[%c0_3, %c0_4] : memref<128x128xf32, #tpu.memory_space<vmem>>, vector<128x128xf32>
    %c0_5 = arith.constant 0 : index
    %c0_6 = arith.constant 0 : index
    %c0_7 = arith.constant 0 : index
    %8 = vector.load %arg5[%c0_5, %c0_6, %c0_7] : memref<1x128x128xbf16, #tpu.memory_space<vmem>>, vector<1x128x128xbf16>
    %9 = vector.shape_cast %8 : vector<1x128x128xbf16> to vector<128x128xbf16>
    %cst_8 = arith.constant dense<0.000000e+00> : vector<128x128xf32>
    %10 = tpu.matmul %6, %9, %cst_8 {dimension_numbers = #tpu.dot_dimension_numbers<[1], [0], [0], [1], [0, 0, 1, 1], [], []>} : vector<128x128xbf16>, vector<128x128xbf16>, vector<128x128xf32> -> vector<128x128xf32>
    %11 = arith.addf %7, %10 : vector<128x128xf32>
    %c0_9 = arith.constant 0 : index
    %c0_10 = arith.constant 0 : index
    %12 = vector.load %arg9[%c0_9, %c0_10] : memref<128x128xf32, #tpu.memory_space<vmem>>, vector<128x128xf32>
    tpu.vector_store %arg9[%c0_9, %c0_10], %11 {strides = array<i32>} : memref<128x128xf32, #tpu.memory_space<vmem>>, vector<128x128xf32>,
    %c0_i32_11 = arith.constant 0 : i32
    %13 = arith.cmpi eq, %arg3, %c0_i32_11 : i32
    %14 = arith.extui %13 : i1 to i32
    %c0_i32_12 = arith.constant 0 : i32
    %15 = arith.cmpi ne, %14, %c0_i32_12 : i32
    scf.if %15 {
      %c0_13 = arith.constant 0 : index
      %c0_14 = arith.constant 0 : index
      %16 = vector.load %arg9[%c0_13, %c0_14] : memref<128x128xf32, #tpu.memory_space<vmem>>, vector<128x128xf32>
      %c0_15 = arith.constant 0 : index
      %c0_16 = arith.constant 0 : index
      %c0_17 = arith.constant 0 : index
      %17 = vector.load %arg6[%c0_15, %c0_16, %c0_17] : memref<1x1x128xf32, #tpu.memory_space<vmem>>, vector<1x1x128xf32>
      %18 = vector.shape_cast %17 : vector<1x1x128xf32> to vector<1x128xf32>
      %19 = vector.broadcast %18 : vector<1x128xf32> to vector<128x128xf32>
      %20 = arith.addf %16, %19 : vector<128x128xf32>
      %21 = arith.truncf %20 : vector<128x128xf32> to vector<128x128xbf16>
      %22 = vector.shape_cast %21 : vector<128x128xbf16> to vector<1x128x128xbf16>
      %c0_18 = arith.constant 0 : index
      %c0_19 = arith.constant 0 : index
      %c0_20 = arith.constant 0 : index
      %23 = vector.load %arg7[%c0_18, %c0_19, %c0_20] : memref<1x128x128xbf16, #tpu.memory_space<vmem>>, vector<1x128x128xbf16>
      tpu.vector_store %arg7[%c0_18, %c0_19, %c0_20], %22 {strides = array<i32>} : memref<1x128x128xbf16, #tpu.memory_space<vmem>>, vector<1x128x128xbf16>,
      %cst_21 = arith.constant dense<0.000000e+00> : vector<128xf32>
      %24 = vector.multi_reduction <add>, %20, %cst_21 [0] : vector<128x128xf32> to vector<128xf32>
      %25 = arith.mulf %20, %20 : vector<128x128xf32>
      %cst_22 = arith.constant dense<0.000000e+00> : vector<128xf32>
      %26 = vector.multi_reduction <add>, %25, %cst_22 [0] : vector<128x128xf32> to vector<128xf32>
      %27 = tpu.iota {dimensions = array<i32: 0>} : vector<8x128xi32>
      %c0_i32_23 = arith.constant 0 : i32
      %28 = vector.broadcast %c0_i32_23 : i32 to vector<8x128xi32>
      %29 = arith.cmpi eq, %27, %28 : vector<8x128xi32>
      %30 = vector.shape_cast %24 : vector<128xf32> to vector<1x128xf32>
      %c1_i32 = arith.constant 1 : i32
      %31 = vector.broadcast %c1_i32 : i32 to vector<8x128xi32>
      %32 = arith.cmpi eq, %27, %31 : vector<8x128xi32>
      %33 = vector.shape_cast %26 : vector<128xf32> to vector<1x128xf32>
      %cst_24 = arith.constant 0.000000e+00 : f32
      %34 = vector.shape_cast %33 : vector<1x128xf32> to vector<1x128xf32>
      %35 = vector.broadcast %34 : vector<1x128xf32> to vector<8x128xf32>
      %36 = vector.broadcast %cst_24 : f32 to vector<8x128xf32>
      %37 = arith.select %32, %35, %36 : vector<8x128xi1>, vector<8x128xf32>
      %38 = vector.shape_cast %30 : vector<1x128xf32> to vector<1x128xf32>
      %39 = vector.broadcast %38 : vector<1x128xf32> to vector<8x128xf32>
      %40 = arith.select %29, %39, %37 : vector<8x128xi1>, vector<8x128xf32>
      %41 = vector.shape_cast %40 : vector<8x128xf32> to vector<1x1x8x128xf32>
      %c0_25 = arith.constant 0 : index
      %c0_26 = arith.constant 0 : index
      %c0_27 = arith.constant 0 : index
      %c0_28 = arith.constant 0 : index
      %42 = vector.load %arg8[%c0_25, %c0_26, %c0_27, %c0_28] : memref<1x1x8x128xf32, #tpu.memory_space<vmem>>, vector<1x1x8x128xf32>
      tpu.vector_store %arg8[%c0_25, %c0_26, %c0_27, %c0_28], %41 {strides = array<i32>} : memref<1x1x8x128xf32, #tpu.memory_space<vmem>>, vector<1x1x8x128xf32>,
    } else {
    }
    return
  }
  func.func @transform_0(%arg0: i32, %arg1: i32, %arg2: i32, %arg3: i32) -> (i32, i32, i32) {
    %c0_i32 = arith.constant 0 : i32
    return %arg0, %arg1, %arg3 : i32, i32, i32
  }
  func.func @transform_1(%arg0: i32, %arg1: i32, %arg2: i32, %arg3: i32) -> (i32, i32, i32) {
    %c0_i32 = arith.constant 0 : i32
    return %arg0, %arg3, %arg2 : i32, i32, i32
  }
  func.func @transform_2(%arg0: i32, %arg1: i32, %arg2: i32, %arg3: i32) -> (i32, i32, i32) {
    %c0_i32 = arith.constant 0 : i32
    %c0_i32_0 = arith.constant 0 : i32
    return %arg0, %c0_i32, %arg2 : i32, i32, i32
  }
  func.func @transform_3(%arg0: i32, %arg1: i32, %arg2: i32, %arg3: i32) -> (i32, i32, i32) {
    %c0_i32 = arith.constant 0 : i32
    return %arg0, %arg1, %arg2 : i32, i32, i32
  }
  func.func @transform_4(%arg0: i32, %arg1: i32, %arg2: i32, %arg3: i32) -> (i32, i32, i32, i32) {
    %c0_i32 = arith.constant 0 : i32
    %c0_i32_0 = arith.constant 0 : i32
    return %arg0, %arg1, %c0_i32, %arg2 : i32, i32, i32, i32
  }
}

module attributes {stable_mosaic.version = 11 : i64} {
  func.func @_bn_norm_kernel(%arg0: i32, %arg1: memref<32x128xbf16, #tpu.memory_space<vmem>>, %arg2: memref<1x128xf32, #tpu.memory_space<vmem>>, %arg3: memref<1x128xf32, #tpu.memory_space<vmem>>, %arg4: memref<32x128xbf16, #tpu.memory_space<vmem>>) attributes {dimension_semantics = [#tpu.dimension_semantics<parallel>], iteration_bounds = array<i64: 1>, scalar_prefetch = 0 : i64, scratch_operands = 0 : i64, tpu.core_type = #tpu.core_type<tc>, window_params = [{transform_indices = @transform_0, window_bounds = array<i64: 32, 128>}, {pipeline_mode = #tpu.pipeline_mode<synchronous>, transform_indices = @transform_1, window_bounds = array<i64: 1, 128>}, {pipeline_mode = #tpu.pipeline_mode<synchronous>, transform_indices = @transform_2, window_bounds = array<i64: 1, 128>}, {transform_indices = @transform_3, window_bounds = array<i64: 32, 128>}]} {
    %c0 = arith.constant 0 : index
    %c0_0 = arith.constant 0 : index
    %0 = vector.load %arg1[%c0, %c0_0] : memref<32x128xbf16, #tpu.memory_space<vmem>>, vector<32x128xbf16>
    %1 = arith.extf %0 : vector<32x128xbf16> to vector<32x128xf32>
    %c0_1 = arith.constant 0 : index
    %c0_2 = arith.constant 0 : index
    %2 = vector.load %arg2[%c0_1, %c0_2] : memref<1x128xf32, #tpu.memory_space<vmem>>, vector<1x128xf32>
    %3 = vector.broadcast %2 : vector<1x128xf32> to vector<32x128xf32>
    %4 = arith.mulf %1, %3 : vector<32x128xf32>
    %c0_3 = arith.constant 0 : index
    %c0_4 = arith.constant 0 : index
    %5 = vector.load %arg3[%c0_3, %c0_4] : memref<1x128xf32, #tpu.memory_space<vmem>>, vector<1x128xf32>
    %6 = vector.broadcast %5 : vector<1x128xf32> to vector<32x128xf32>
    %7 = arith.addf %4, %6 : vector<32x128xf32>
    %8 = arith.truncf %7 : vector<32x128xf32> to vector<32x128xbf16>
    %c0_5 = arith.constant 0 : index
    %c0_6 = arith.constant 0 : index
    %9 = vector.load %arg4[%c0_5, %c0_6] : memref<32x128xbf16, #tpu.memory_space<vmem>>, vector<32x128xbf16>
    tpu.vector_store %arg4[%c0_5, %c0_6], %8 {strides = array<i32>} : memref<32x128xbf16, #tpu.memory_space<vmem>>, vector<32x128xbf16>,
    return
  }
  func.func @transform_0(%arg0: i32) -> (i32, i32) {
    %c0_i32 = arith.constant 0 : i32
    %c0_i32_0 = arith.constant 0 : i32
    return %arg0, %c0_i32 : i32, i32
  }
  func.func @transform_1(%arg0: i32) -> (i32, i32) {
    %c0_i32 = arith.constant 0 : i32
    %c0_i32_0 = arith.constant 0 : i32
    %c0_i32_1 = arith.constant 0 : i32
    return %c0_i32, %c0_i32_0 : i32, i32
  }
  func.func @transform_2(%arg0: i32) -> (i32, i32) {
    %c0_i32 = arith.constant 0 : i32
    %c0_i32_0 = arith.constant 0 : i32
    %c0_i32_1 = arith.constant 0 : i32
    return %c0_i32, %c0_i32_0 : i32, i32
  }
  func.func @transform_3(%arg0: i32) -> (i32, i32) {
    %c0_i32 = arith.constant 0 : i32
    %c0_i32_0 = arith.constant 0 : i32
    return %arg0, %c0_i32 : i32, i32
  }
}

module attributes {stable_mosaic.version = 11 : i64} {
  func.func @_mm_kernel(%arg0: i32, %arg1: i32, %arg2: i32, %arg3: i32, %arg4: memref<1x512x128xbf16, #tpu.memory_space<vmem>>, %arg5: memref<1x128x128xbf16, #tpu.memory_space<vmem>>, %arg6: memref<1x1x128xf32, #tpu.memory_space<vmem>>, %arg7: memref<1x512x128xf32, #tpu.memory_space<vmem>>, %arg8: memref<512x128xf32, #tpu.memory_space<vmem>>) attributes {dimension_semantics = [#tpu.dimension_semantics<parallel>, #tpu.dimension_semantics<parallel>, #tpu.dimension_semantics<parallel>, #tpu.dimension_semantics<arbitrary>], iteration_bounds = array<i64: 4, 1, 1, 1>, scalar_prefetch = 0 : i64, scratch_operands = 1 : i64, tpu.core_type = #tpu.core_type<tc>, window_params = [{transform_indices = @transform_0, window_bounds = array<i64: 1, 512, 128>}, {transform_indices = @transform_1, window_bounds = array<i64: 1, 128, 128>}, {transform_indices = @transform_2, window_bounds = array<i64: 1, 1, 128>}, {transform_indices = @transform_3, window_bounds = array<i64: 1, 512, 128>}]} {
    %c0_i32 = arith.constant 0 : i32
    %0 = arith.cmpi eq, %arg3, %c0_i32 : i32
    %1 = arith.extui %0 : i1 to i32
    %c0_i32_0 = arith.constant 0 : i32
    %2 = arith.cmpi ne, %1, %c0_i32_0 : i32
    scf.if %2 {
      %cst_13 = arith.constant 0.000000e+00 : f32
      %16 = vector.broadcast %cst_13 : f32 to vector<512x128xf32>
      %c0_14 = arith.constant 0 : index
      %c0_15 = arith.constant 0 : index
      %17 = vector.load %arg8[%c0_14, %c0_15] : memref<512x128xf32, #tpu.memory_space<vmem>>, vector<512x128xf32>
      tpu.vector_store %arg8[%c0_14, %c0_15], %16 {strides = array<i32>} : memref<512x128xf32, #tpu.memory_space<vmem>>, vector<512x128xf32>,
    } else {
    }
    %c0 = arith.constant 0 : index
    %c0_1 = arith.constant 0 : index
    %c0_2 = arith.constant 0 : index
    %3 = vector.load %arg4[%c0, %c0_1, %c0_2] : memref<1x512x128xbf16, #tpu.memory_space<vmem>>, vector<1x512x128xbf16>
    %4 = vector.shape_cast %3 : vector<1x512x128xbf16> to vector<512x128xbf16>
    %cst = arith.constant 0.000000e+00 : bf16
    %5 = vector.broadcast %cst : bf16 to vector<512x128xbf16>
    %6 = arith.maximumf %4, %5 : vector<512x128xbf16>
    %c0_3 = arith.constant 0 : index
    %c0_4 = arith.constant 0 : index
    %7 = vector.load %arg8[%c0_3, %c0_4] : memref<512x128xf32, #tpu.memory_space<vmem>>, vector<512x128xf32>
    %c0_5 = arith.constant 0 : index
    %c0_6 = arith.constant 0 : index
    %c0_7 = arith.constant 0 : index
    %8 = vector.load %arg5[%c0_5, %c0_6, %c0_7] : memref<1x128x128xbf16, #tpu.memory_space<vmem>>, vector<1x128x128xbf16>
    %9 = vector.shape_cast %8 : vector<1x128x128xbf16> to vector<128x128xbf16>
    %cst_8 = arith.constant dense<0.000000e+00> : vector<512x128xf32>
    %10 = tpu.matmul %6, %9, %cst_8 {dimension_numbers = #tpu.dot_dimension_numbers<[1], [0], [0], [1], [0, 0, 1, 1], [], []>} : vector<512x128xbf16>, vector<128x128xbf16>, vector<512x128xf32> -> vector<512x128xf32>
    %11 = arith.addf %7, %10 : vector<512x128xf32>
    %c0_9 = arith.constant 0 : index
    %c0_10 = arith.constant 0 : index
    %12 = vector.load %arg8[%c0_9, %c0_10] : memref<512x128xf32, #tpu.memory_space<vmem>>, vector<512x128xf32>
    tpu.vector_store %arg8[%c0_9, %c0_10], %11 {strides = array<i32>} : memref<512x128xf32, #tpu.memory_space<vmem>>, vector<512x128xf32>,
    %c0_i32_11 = arith.constant 0 : i32
    %13 = arith.cmpi eq, %arg3, %c0_i32_11 : i32
    %14 = arith.extui %13 : i1 to i32
    %c0_i32_12 = arith.constant 0 : i32
    %15 = arith.cmpi ne, %14, %c0_i32_12 : i32
    scf.if %15 {
      %c0_13 = arith.constant 0 : index
      %c0_14 = arith.constant 0 : index
      %16 = vector.load %arg8[%c0_13, %c0_14] : memref<512x128xf32, #tpu.memory_space<vmem>>, vector<512x128xf32>
      %c0_15 = arith.constant 0 : index
      %c0_16 = arith.constant 0 : index
      %c0_17 = arith.constant 0 : index
      %17 = vector.load %arg6[%c0_15, %c0_16, %c0_17] : memref<1x1x128xf32, #tpu.memory_space<vmem>>, vector<1x1x128xf32>
      %18 = vector.shape_cast %17 : vector<1x1x128xf32> to vector<1x128xf32>
      %19 = vector.broadcast %18 : vector<1x128xf32> to vector<512x128xf32>
      %20 = arith.addf %16, %19 : vector<512x128xf32>
      %21 = math.tanh %20 : vector<512x128xf32>
      %22 = vector.shape_cast %21 : vector<512x128xf32> to vector<1x512x128xf32>
      %c0_18 = arith.constant 0 : index
      %c0_19 = arith.constant 0 : index
      %c0_20 = arith.constant 0 : index
      %23 = vector.load %arg7[%c0_18, %c0_19, %c0_20] : memref<1x512x128xf32, #tpu.memory_space<vmem>>, vector<1x512x128xf32>
      tpu.vector_store %arg7[%c0_18, %c0_19, %c0_20], %22 {strides = array<i32>} : memref<1x512x128xf32, #tpu.memory_space<vmem>>, vector<1x512x128xf32>,
    } else {
    }
    return
  }
  func.func @transform_0(%arg0: i32, %arg1: i32, %arg2: i32, %arg3: i32) -> (i32, i32, i32) {
    %c0_i32 = arith.constant 0 : i32
    return %arg0, %arg1, %arg3 : i32, i32, i32
  }
  func.func @transform_1(%arg0: i32, %arg1: i32, %arg2: i32, %arg3: i32) -> (i32, i32, i32) {
    %c0_i32 = arith.constant 0 : i32
    return %arg0, %arg3, %arg2 : i32, i32, i32
  }
  func.func @transform_2(%arg0: i32, %arg1: i32, %arg2: i32, %arg3: i32) -> (i32, i32, i32) {
    %c0_i32 = arith.constant 0 : i32
    %c0_i32_0 = arith.constant 0 : i32
    return %arg0, %c0_i32, %arg2 : i32, i32, i32
  }
  func.func @transform_3(%arg0: i32, %arg1: i32, %arg2: i32, %arg3: i32) -> (i32, i32, i32) {
    %c0_i32 = arith.constant 0 : i32
    return %arg0, %arg1, %arg2 : i32, i32, i32
  }
}

</mosaic_0001>

<llo_original>
// kernel: tile.73
$region0: #{tile.73}
  #allocation0 [shape = 's32[1]{0}', space=sflag, size = 0x4, scoped, tag = 'scoped memory for tile.73']
  %s0 = inlined_call_operand.vmem [shape: f32[16], index: 0, kind: input, shape index: {}]
  %s1 = inlined_call_operand.vmem [shape: f32[8,16], index: 1, kind: output, shape index: {}]
  // Predicated region
  $region2: #{tile.73} parent=0 // pred_check
    _
  $region3: #{tile.73} parent=0 // pred_check_branch
    %3 = sbr.rel (0) target = $region5
  $region4: #{tile.73} parent=0 // pred_region
    _
  $region5: #{tile.73} parent=0 // pred_fallthru
    _
  %v4 = vld [vmem:[%s0] ss:$0 sm:$0xff]
  %5 = vst [vmem:[%s1] sm:$0xff] %v4

// kernel: tile.74
$region0: #{tile.74}
  %s0 = inlined_call_operand.vmem [shape: f32[8,16], index: 0, kind: input, shape index: {}]
  %s1 = inlined_call_operand.vmem [shape: f32[1,128], index: 1, kind: output, shape index: {}]
  $region1: #{tile.74} parent=0
    #allocation0 [shape = 'u8[4096]{0}', space=vmem, size = 0x1000, scoped, tag = 'scoped mem for output reshape']
    %v2 = vld [vmem:[%s0] sm:$0x1]
    %vm3 = vcmask 130048
    %4 = vst.msk [vmem:[#allocation0] sm:$0x1] %vm3, %v2
    %s5 = scalar_lea.vmem %s0, 7
    %v6 = vld [vmem:[%s5] sm:$0x1]
    %7 = vrot.lane.b32.xlu0 %v6, 112
    %v8 = vpop.permute.xlu0 %7
    %vm9 = vcmask 1048448
    %10 = vst.msk [vmem:[#allocation0] sm:$0x1] %vm9, %v8
    %s11 = scalar_lea.vmem %s0, 6
    %v12 = vld [vmem:[%s11] sm:$0x1]
    %13 = vrot.lane.b32.xlu0 %v12, 96
    %v14 = vpop.permute.xlu0 %13
    %vm15 = vcmask 917248
    %16 = vst.msk [vmem:[#allocation0] sm:$0x1] %vm15, %v14
    %s17 = scalar_lea.vmem %s0, 5
    %v18 = vld [vmem:[%s17] sm:$0x1]
    %19 = vrot.lane.b32.xlu0 %v18, 80
    %v20 = vpop.permute.xlu0 %19
    %vm21 = vcmask 786048
    %22 = vst.msk [vmem:[#allocation0] sm:$0x1] %vm21, %v20
    %s23 = scalar_lea.vmem %s0, 4
    %v24 = vld [vmem:[%s23] sm:$0x1]
    %25 = vrot.lane.b32.xlu0 %v24, 64
    %v26 = vpop.permute.xlu0 %25
    %vm27 = vcmask 654848
    %28 = vst.msk [vmem:[#allocation0] sm:$0x1] %vm27, %v26
    %s29 = scalar_lea.vmem %s0, 3
    %v30 = vld [vmem:[%s29] sm:$0x1]
    %31 = vrot.lane.b32.xlu0 %v30, 48
    %v32 = vpop.permute.xlu0 %31
    %vm33 = vcmask 523648
    %34 = vst.msk [vmem:[#allocation0] sm:$0x1] %vm33, %v32
    %s35 = scalar_lea.vmem %s0, 2
    %v36 = vld [vmem:[%s35] sm:$0x1]
    %37 = vrot.lane.b32.xlu0 %v36, 32
    %v38 = vpop.permute.xlu0 %37
    %vm39 = vcmask 392448
    %40 = vst.msk [vmem:[#allocation0] sm:$0x1] %vm39, %v38
    %s41 = scalar_lea.vmem %s0, 1
    %v42 = vld [vmem:[%s41] sm:$0x1]
    %43 = vrot.lane.b32.xlu0 %v42, 16
    %v44 = vpop.permute.xlu0 %43
    %vm45 = vcmask 261248
    %46 = vst.msk [vmem:[#allocation0] sm:$0x1] %vm45, %v44
    %s48 = ssub.s32 2, 1
    %v49 = vld [vmem:[#allocation0] sm:%s48]
    %s51 = ssub.s32 2, 1
    %52 = vst [vmem:[%s1] sm:%s51] %v49

// kernel: squeeze.22
$region0: #{squeeze.22}
  %s0 = inlined_call_operand.vmem [shape: bf16[1,128,16], index: 0, kind: input, shape index: {}]
  %s1 = inlined_call_operand.vmem [shape: bf16[16,128], index: 1, kind: output, shape index: {}]
  $region1: #{squeeze.22} parent=0
    #allocation0 [shape = 'u8[8192]{0}', space=vmem, size = 0x2000, scoped, tag = 'scoped mem for output reshape']
    #allocation1 [shape = 'u8[65536]{0}', space=vmem, size = 0x10000, scoped, tag = 'scoped mem for input reshape']
    %s3 = ssub.s32 256, 1
    %s4 = scalar_lea.vmem %s0, 60
    %s5 = sshrl.u32 %s3, 1
    %s6 = sor.u32 %s3, %s5
    %s7 = sand.u32 %s6, 85
    %s8 = sshrl.u32 %s7, 1
    %s9 = sor.u32 %s7, %s8
    %s10 = sand.u32 51, %s9
    %s11 = sshrl.u32 %s10, 2
    %s12 = sor.u32 %s10, %s11
    %s13 = sand.u32 15, %s12
    %v14 = vld [vmem:[%s4] sm:%s13]
    %v15 = vunpack.c.l.bf16 %v14
    %v16 = vunpack.c.h.bf16 %v14
    %s17 = scalar_lea.vmem [#allocation1], 120
    %18 = vst [vmem:[%s17] sm:%s3] %v15
    %s19 = scalar_lea.vmem %s0, 56
    %s20 = sshrl.u32 %s3, 1
    %s21 = sor.u32 %s3, %s20
    %s22 = sand.u32 %s21, 85
    %s23 = sshrl.u32 %s22, 1
    %s24 = sor.u32 %s22, %s23
    %s25 = sand.u32 51, %s24
    %s26 = sshrl.u32 %s25, 2
    %s27 = sor.u32 %s25, %s26
    %s28 = sand.u32 15, %s27
    %v29 = vld [vmem:[%s19] sm:%s28]
    %v30 = vunpack.c.l.bf16 %v29
    %v31 = vunpack.c.h.bf16 %v29
    %s32 = scalar_lea.vmem [#allocation1], 112
    %33 = vst [vmem:[%s32] sm:%s3] %v30
    %s34 = scalar_lea.vmem %s0, 52
    %s35 = sshrl.u32 %s3, 1
    %s36 = sor.u32 %s3, %s35
    %s37 = sand.u32 %s36, 85
    %s38 = sshrl.u32 %s37, 1
    %s39 = sor.u32 %s37, %s38
    %s40 = sand.u32 51, %s39
    %s41 = sshrl.u32 %s40, 2
    %s42 = sor.u32 %s40, %s41
    %s43 = sand.u32 15, %s42
    %v44 = vld [vmem:[%s34] sm:%s43]
    %v45 = vunpack.c.l.bf16 %v44
    %v46 = vunpack.c.h.bf16 %v44
    %s47 = scalar_lea.vmem [#allocation1], 104
    %48 = vst [vmem:[%s47] sm:%s3] %v45
    %s49 = scalar_lea.vmem %s0, 48
    %s50 = sshrl.u32 %s3, 1
    %s51 = sor.u32 %s3, %s50
    %s52 = sand.u32 %s51, 85
    %s53 = sshrl.u32 %s52, 1
    %s54 = sor.u32 %s52, %s53
    %s55 = sand.u32 51, %s54
    %s56 = sshrl.u32 %s55, 2
    %s57 = sor.u32 %s55, %s56
    %s58 = sand.u32 15, %s57
    %v59 = vld [vmem:[%s49] sm:%s58]
    %v60 = vunpack.c.l.bf16 %v59
    %v61 = vunpack.c.h.bf16 %v59
    %s62 = scalar_lea.vmem [#allocation1], 96
    %63 = vst [vmem:[%s62] sm:%s3] %v60
    %s64 = scalar_lea.vmem %s0, 44
    %s65 = sshrl.u32 %s3, 1
    %s66 = sor.u32 %s3, %s65
    %s67 = sand.u32 %s66, 85
    %s68 = sshrl.u32 %s67, 1
    %s69 = sor.u32 %s67, %s68
    %s70 = sand.u32 51, %s69
    %s71 = sshrl.u32 %s70, 2
    %s72 = sor.u32 %s70, %s71
    %s73 = sand.u32 15, %s72
    %v74 = vld [vmem:[%s64] sm:%s73]
    %v75 = vunpack.c.l.bf16 %v74
    %v76 = vunpack.c.h.bf16 %v74
    %s77 = scalar_lea.vmem [#allocation1], 88
    %78 = vst [vmem:[%s77] sm:%s3] %v75
    %s79 = scalar_lea.vmem %s0, 40
    %s80 = sshrl.u32 %s3, 1
    %s81 = sor.u32 %s3, %s80
    %s82 = sand.u32 %s81, 85
    %s83 = sshrl.u32 %s82, 1
    %s84 = sor.u32 %s82, %s83
    %s85 = sand.u32 51, %s84
    %s86 = sshrl.u32 %s85, 2
    %s87 = sor.u32 %s85, %s86
    %s88 = sand.u32 15, %s87
    %v89 = vld [vmem:[%s79] sm:%s88]
    %v90 = vunpack.c.l.bf16 %v89
    %v91 = vunpack.c.h.bf16 %v89
    %s92 = scalar_lea.vmem [#allocation1], 80
    %93 = vst [vmem:[%s92] sm:%s3] %v90
    %s94 = scalar_lea.vmem %s0, 36
    %s95 = sshrl.u32 %s3, 1
    %s96 = sor.u32 %s3, %s95
    %s97 = sand.u32 %s96, 85
    %s98 = sshrl.u32 %s97, 1
    %s99 = sor.u32 %s97, %s98
    %s100 = sand.u32 51, %s99
    %s101 = sshrl.u32 %s100, 2
    %s102 = sor.u32 %s100, %s101
    %s103 = sand.u32 15, %s102
    %v104 = vld [vmem:[%s94] sm:%s103]
    %v105 = vunpack.c.l.bf16 %v104
    %v106 = vunpack.c.h.bf16 %v104
    %s107 = scalar_lea.vmem [#allocation1], 72
    %108 = vst [vmem:[%s107] sm:%s3] %v105
    %s109 = scalar_lea.vmem %s0, 32
    %s110 = sshrl.u32 %s3, 1
    %s111 = sor.u32 %s3, %s110
    %s112 = sand.u32 %s111, 85
    %s113 = sshrl.u32 %s112, 1
    %s114 = sor.u32 %s112, %s113
    %s115 = sand.u32 51, %s114
    %s116 = sshrl.u32 %s115, 2
    %s117 = sor.u32 %s115, %s116
    %s118 = sand.u32 15, %s117
    %v119 = vld [vmem:[%s109] sm:%s118]
    %v120 = vunpack.c.l.bf16 %v119
    %v121 = vunpack.c.h.bf16 %v119
    %s122 = scalar_lea.vmem [#allocation1], 64
    %123 = vst [vmem:[%s122] sm:%s3] %v120
    %s124 = scalar_lea.vmem %s0, 28
    %s125 = sshrl.u32 %s3, 1
    %s126 = sor.u32 %s3, %s125
    %s127 = sand.u32 %s126, 85
    %s128 = sshrl.u32 %s127, 1
    %s129 = sor.u32 %s127, %s128
    %s130 = sand.u32 51, %s129
    %s131 = sshrl.u32 %s130, 2
    %s132 = sor.u32 %s130, %s131
    %s133 = sand.u32 15, %s132
    %v134 = vld [vmem:[%s124] sm:%s133]
    %v135 = vunpack.c.l.bf16 %v134
    %v136 = vunpack.c.h.bf16 %v134
    %s137 = scalar_lea.vmem [#allocation1], 56
    %138 = vst [vmem:[%s137] sm:%s3] %v135
    %s139 = scalar_lea.vmem %s0, 24
    %s140 = sshrl.u32 %s3, 1
    %s141 = sor.u32 %s3, %s140
    %s142 = sand.u32 %s141, 85
    %s143 = sshrl.u32 %s142, 1
    %s144 = sor.u32 %s142, %s143
    %s145 = sand.u32 51, %s144
    %s146 = sshrl.u32 %s145, 2
    %s147 = sor.u32 %s145, %s146
    %s148 = sand.u32 15, %s147
    %v149 = vld [vmem:[%s139] sm:%s148]
    %v150 = vunpack.c.l.bf16 %v149
    %v151 = vunpack.c.h.bf16 %v149
    %s152 = scalar_lea.vmem [#allocation1], 48
    %153 = vst [vmem:[%s152] sm:%s3] %v150
    %s154 = scalar_lea.vmem %s0, 20
    %s155 = sshrl.u32 %s3, 1
    %s156 = sor.u32 %s3, %s155
    %s157 = sand.u32 %s156, 85
    %s158 = sshrl.u32 %s157, 1
    %s159 = sor.u32 %s157, %s158
    %s160 = sand.u32 51, %s159
    %s161 = sshrl.u32 %s160, 2
    %s162 = sor.u32 %s160, %s161
    %s163 = sand.u32 15, %s162
    %v164 = vld [vmem:[%s154] sm:%s163]
    %v165 = vunpack.c.l.bf16 %v164
    %v166 = vunpack.c.h.bf16 %v164
    %s167 = scalar_lea.vmem [#allocation1], 40
    %168 = vst [vmem:[%s167] sm:%s3] %v165
    %s169 = scalar_lea.vmem %s0, 16
    %s170 = sshrl.u32 %s3, 1
    %s171 = sor.u32 %s3, %s170
    %s172 = sand.u32 %s171, 85
    %s173 = sshrl.u32 %s172, 1
    %s174 = sor.u32 %s172, %s173
    %s175 = sand.u32 51, %s174
    %s176 = sshrl.u32 %s175, 2
    %s177 = sor.u32 %s175, %s176
    %s178 = sand.u32 15, %s177
    %v179 = vld [vmem:[%s169] sm:%s178]
    %v180 = vunpack.c.l.bf16 %v179
    %v181 = vunpack.c.h.bf16 %v179
    %s182 = scalar_lea.vmem [#allocation1], 32
    %183 = vst [vmem:[%s182] sm:%s3] %v180
    %s184 = scalar_lea.vmem %s0, 12
    %s185 = sshrl.u32 %s3, 1
    %s186 = sor.u32 %s3, %s185
    %s187 = sand.u32 %s186, 85
    %s188 = sshrl.u32 %s187, 1
    %s189 = sor.u32 %s187, %s188
    %s190 = sand.u32 51, %s189
    %s191 = sshrl.u32 %s190, 2
    %s192 = sor.u32 %s190, %s191
    %s193 = sand.u32 15, %s192
    %v194 = vld [vmem:[%s184] sm:%s193]
    %v195 = vunpack.c.l.bf16 %v194
    %v196 = vunpack.c.h.bf16 %v194
    %s197 = scalar_lea.vmem [#allocation1], 24
    %198 = vst [vmem:[%s197] sm:%s3] %v195
    %s199 = scalar_lea.vmem %s0, 8
    %s200 = sshrl.u32 %s3, 1
    %s201 = sor.u32 %s3, %s200
    %s202 = sand.u32 %s201, 85
    %s203 = sshrl.u32 %s202, 1
    %s204 = sor.u32 %s202, %s203
    %s205 = sand.u32 51, %s204
    %s206 = sshrl.u32 %s205, 2
    %s207 = sor.u32 %s205, %s206
    %s208 = sand.u32 15, %s207
    %v209 = vld [vmem:[%s199] sm:%s208]
    %v210 = vunpack.c.l.bf16 %v209
    %v211 = vunpack.c.h.bf16 %v209
    %s212 = scalar_lea.vmem [#allocation1], 16
    %213 = vst [vmem:[%s212] sm:%s3] %v210
    %s214 = scalar_lea.vmem %s0, 4
    %s215 = sshrl.u32 %s3, 1
    %s216 = sor.u32 %s3, %s215
    %s217 = sand.u32 %s216, 85
    %s218 = sshrl.u32 %s217, 1
    %s219 = sor.u32 %s217, %s218
    %s220 = sand.u32 51, %s219
    %s221 = sshrl.u32 %s220, 2
    %s222 = sor.u32 %s220, %s221
    %s223 = sand.u32 15, %s222
    %v224 = vld [vmem:[%s214] sm:%s223]
    %v225 = vunpack.c.l.bf16 %v224
    %v226 = vunpack.c.h.bf16 %v224
    %s227 = scalar_lea.vmem [#allocation1], 8
    %228 = vst [vmem:[%s227] sm:%s3] %v225
    %s229 = sshrl.u32 %s3, 1
    %s230 = sor.u32 %s3, %s229
    %s231 = sand.u32 %s230, 85
    %s232 = sshrl.u32 %s231, 1
    %s233 = sor.u32 %s231, %s232
    %s234 = sand.u32 51, %s233
    %s235 = sshrl.u32 %s234, 2
    %s236 = sor.u32 %s234, %s235
    %s237 = sand.u32 15, %s236
    %v238 = vld [vmem:[%s0] sm:%s237]
    %v239 = vunpack.c.l.bf16 %v238
    %v240 = vunpack.c.h.bf16 %v238
    %241 = vst [vmem:[#allocation1] sm:%s3] %v239
    %v242 = vld [vmem:[#allocation1] ss:$8 sm:$0xf]
    %v243 = vld [vmem:[#allocation1] ss:$8 sm:$0xf0]
    %vm244 = vcmask 1047556
    %v245 = vsel %vm244, %v243, %v242
    %vm246 = vcmask 130048
    %247 = vst.msk [vmem:[#allocation0] sm:$0xff] %vm246, %v245
    %s248 = scalar_lea.vmem [#allocation1], 64
    %v249 = vld [vmem:[%s248] ss:$8 sm:$0xf]
    %s250 = scalar_lea.vmem [#allocation1], 64
    %v251 = vld [vmem:[%s250] ss:$8 sm:$0xf0]
    %vm252 = vcmask 1047556
    %v253 = vsel %vm252, %v251, %v249
    %vm254 = vcmask 130048
    %s255 = scalar_lea.vmem [#allocation0], 8
    %256 = vst.msk [vmem:[%s255] sm:$0xff] %vm254, %v253
    %s257 = scalar_lea.vmem [#allocation1], 7
    %v258 = vld [vmem:[%s257] ss:$8 sm:$0xf]
    %s259 = scalar_lea.vmem [#allocation1], 7
    %v260 = vld [vmem:[%s259] ss:$8 sm:$0xf0]
    %vm261 = vcmask 1047556
    %v262 = vsel %vm261, %v260, %v258
    %263 = vrot.lane.b32.xlu0 %v262, 112
    %v264 = vpop.permute.xlu0 %263
    %vm265 = vcmask 1048448
    %266 = vst.msk [vmem:[#allocation0] sm:$0xff] %vm265, %v264
    %s267 = scalar_lea.vmem [#allocation1], 71
    %v268 = vld [vmem:[%s267] ss:$8 sm:$0xf]
    %s269 = scalar_lea.vmem [#allocation1], 71
    %v270 = vld [vmem:[%s269] ss:$8 sm:$0xf0]
    %vm271 = vcmask 1047556
    %v272 = vsel %vm271, %v270, %v268
    %273 = vrot.lane.b32.xlu0 %v272, 112
    %v274 = vpop.permute.xlu0 %273
    %vm275 = vcmask 1048448
    %s276 = scalar_lea.vmem [#allocation0], 8
    %277 = vst.msk [vmem:[%s276] sm:$0xff] %vm275, %v274
    %s278 = scalar_lea.vmem [#allocation1], 6
    %v279 = vld [vmem:[%s278] ss:$8 sm:$0xf]
    %s280 = scalar_lea.vmem [#allocation1], 6
    %v281 = vld [vmem:[%s280] ss:$8 sm:$0xf0]
    %vm282 = vcmask 1047556
    %v283 = vsel %vm282, %v281, %v279
    %284 = vrot.lane.b32.xlu0 %v283, 96
    %v285 = vpop.permute.xlu0 %284
    %vm286 = vcmask 917248
    %287 = vst.msk [vmem:[#allocation0] sm:$0xff] %vm286, %v285
    %s288 = scalar_lea.vmem [#allocation1], 70
    %v289 = vld [vmem:[%s288] ss:$8 sm:$0xf]
    %s290 = scalar_lea.vmem [#allocation1], 70
    %v291 = vld [vmem:[%s290] ss:$8 sm:$0xf0]
    %vm292 = vcmask 1047556
    %v293 = vsel %vm292, %v291, %v289
    %294 = vrot.lane.b32.xlu0 %v293, 96
    %v295 = vpop.permute.xlu0 %294
    %vm296 = vcmask 917248
    %s297 = scalar_lea.vmem [#allocation0], 8
    %298 = vst.msk [vmem:[%s297] sm:$0xff] %vm296, %v295
    %s299 = scalar_lea.vmem [#allocation1], 5
    %v300 = vld [vmem:[%s299] ss:$8 sm:$0xf]
    %s301 = scalar_lea.vmem [#allocation1], 5
    %v302 = vld [vmem:[%s301] ss:$8 sm:$0xf0]
    %vm303 = vcmask 1047556
    %v304 = vsel %vm303, %v302, %v300
    %305 = vrot.lane.b32.xlu0 %v304, 80
    %v306 = vpop.permute.xlu0 %305
    %vm307 = vcmask 786048
    %308 = vst.msk [vmem:[#allocation0] sm:$0xff] %vm307, %v306
    %s309 = scalar_lea.vmem [#allocation1], 69
    %v310 = vld [vmem:[%s309] ss:$8 sm:$0xf]
    %s311 = scalar_lea.vmem [#allocation1], 69
    %v312 = vld [vmem:[%s311] ss:$8 sm:$0xf0]
    %vm313 = vcmask 1047556
    %v314 = vsel %vm313, %v312, %v310
    %315 = vrot.lane.b32.xlu0 %v314, 80
    %v316 = vpop.permute.xlu0 %315
    %vm317 = vcmask 786048
    %s318 = scalar_lea.vmem [#allocation0], 8
    %319 = vst.msk [vmem:[%s318] sm:$0xff] %vm317, %v316
    %s320 = scalar_lea.vmem [#allocation1], 4
    %v321 = vld [vmem:[%s320] ss:$8 sm:$0xf]
    %s322 = scalar_lea.vmem [#allocation1], 4
    %v323 = vld [vmem:[%s322] ss:$8 sm:$0xf0]
    %vm324 = vcmask 1047556
    %v325 = vsel %vm324, %v323, %v321
    %326 = vrot.lane.b32.xlu0 %v325, 64
    %v327 = vpop.permute.xlu0 %326
    %vm328 = vcmask 654848
    %329 = vst.msk [vmem:[#allocation0] sm:$0xff] %vm328, %v327
    %s330 = scalar_lea.vmem [#allocation1], 68
    %v331 = vld [vmem:[%s330] ss:$8 sm:$0xf]
    %s332 = scalar_lea.vmem [#allocation1], 68
    %v333 = vld [vmem:[%s332] ss:$8 sm:$0xf0]
    %vm334 = vcmask 1047556
    %v335 = vsel %vm334, %v333, %v331
    %336 = vrot.lane.b32.xlu0 %v335, 64
    %v337 = vpop.permute.xlu0 %336
    %vm338 = vcmask 654848
    %s339 = scalar_lea.vmem [#allocation0], 8
    %340 = vst.msk [vmem:[%s339] sm:$0xff] %vm338, %v337
    %s341 = scalar_lea.vmem [#allocation1], 3
    %v342 = vld [vmem:[%s341] ss:$8 sm:$0xf]
    %s343 = scalar_lea.vmem [#allocation1], 3
    %v344 = vld [vmem:[%s343] ss:$8 sm:$0xf0]
    %vm345 = vcmask 1047556
    %v346 = vsel %vm345, %v344, %v342
    %347 = vrot.lane.b32.xlu0 %v346, 48
    %v348 = vpop.permute.xlu0 %347
    %vm349 = vcmask 523648
    %350 = vst.msk [vmem:[#allocation0] sm:$0xff] %vm349, %v348
    %s351 = scalar_lea.vmem [#allocation1], 67
    %v352 = vld [vmem:[%s351] ss:$8 sm:$0xf]
    %s353 = scalar_lea.vmem [#allocation1], 67
    %v354 = vld [vmem:[%s353] ss:$8 sm:$0xf0]
    %vm355 = vcmask 1047556
    %v356 = vsel %vm355, %v354, %v352
    %357 = vrot.lane.b32.xlu0 %v356, 48
    %v358 = vpop.permute.xlu0 %357
    %vm359 = vcmask 523648
    %s360 = scalar_lea.vmem [#allocation0], 8
    %361 = vst.msk [vmem:[%s360] sm:$0xff] %vm359, %v358
    %s362 = scalar_lea.vmem [#allocation1], 2
    %v363 = vld [vmem:[%s362] ss:$8 sm:$0xf]
    %s364 = scalar_lea.vmem [#allocation1], 2
    %v365 = vld [vmem:[%s364] ss:$8 sm:$0xf0]
    %vm366 = vcmask 1047556
    %v367 = vsel %vm366, %v365, %v363
    %368 = vrot.lane.b32.xlu0 %v367, 32
    %v369 = vpop.permute.xlu0 %368
    %vm370 = vcmask 392448
    %371 = vst.msk [vmem:[#allocation0] sm:$0xff] %vm370, %v369
    %s372 = scalar_lea.vmem [#allocation1], 66
    %v373 = vld [vmem:[%s372] ss:$8 sm:$0xf]
    %s374 = scalar_lea.vmem [#allocation1], 66
    %v375 = vld [vmem:[%s374] ss:$8 sm:$0xf0]
    %vm376 = vcmask 1047556
    %v377 = vsel %vm376, %v375, %v373
    %378 = vrot.lane.b32.xlu0 %v377, 32
    %v379 = vpop.permute.xlu0 %378
    %vm380 = vcmask 392448
    %s381 = scalar_lea.vmem [#allocation0], 8
    %382 = vst.msk [vmem:[%s381] sm:$0xff] %vm380, %v379
    %s383 = scalar_lea.vmem [#allocation1], 1
    %v384 = vld [vmem:[%s383] ss:$8 sm:$0xf]
    %s385 = scalar_lea.vmem [#allocation1], 1
    %v386 = vld [vmem:[%s385] ss:$8 sm:$0xf0]
    %vm387 = vcmask 1047556
    %v388 = vsel %vm387, %v386, %v384
    %389 = vrot.lane.b32.xlu0 %v388, 16
    %v390 = vpop.permute.xlu0 %389
    %vm391 = vcmask 261248
    %392 = vst.msk [vmem:[#allocation0] sm:$0xff] %vm391, %v390
    %s393 = scalar_lea.vmem [#allocation1], 65
    %v394 = vld [vmem:[%s393] ss:$8 sm:$0xf]
    %s395 = scalar_lea.vmem [#allocation1], 65
    %v396 = vld [vmem:[%s395] ss:$8 sm:$0xf0]
    %vm397 = vcmask 1047556
    %v398 = vsel %vm397, %v396, %v394
    %399 = vrot.lane.b32.xlu0 %v398, 16
    %v400 = vpop.permute.xlu0 %399
    %vm401 = vcmask 261248
    %s402 = scalar_lea.vmem [#allocation0], 8
    %403 = vst.msk [vmem:[%s402] sm:$0xff] %vm401, %v400
    %s405 = ssub.s32 256, 1
    %v406 = vld [vmem:[#allocation0] sm:%s405]
    %v407 = vpack.c.bf16 0.0, %v406
    %s409 = ssub.s32 16, 1
    %410 = vst [vmem:[%s1] sm:%s409] %v407
    %s411 = scalar_lea.vmem [#allocation0], 8
    %v412 = vld [vmem:[%s411] sm:%s405]
    %v413 = vpack.c.bf16 0.0, %v412
    %s415 = ssub.s32 16, 1
    %s416 = scalar_lea.vmem %s1, 4
    %417 = vst [vmem:[%s416] sm:%s415] %v413

// kernel: _lambda_.18
$region0: #{_lambda_.18}
  #allocation0 [shape = 'u32[]', space=smem, size = 0x4, offset = 0x4, fixed_abs, tag = 'smem constant byte address 0x4 - core index']
  #allocation1 [shape = 'u32[72,128]{1,0:T(1,128)}', space=vmem, size = 0x9000, scoped, tag = 'internal scratch']
  #allocation2 [shape = 'f32[128,128]{1,0:T(8,128)}', space=vmem, size = 0x10000, scoped, tag = 'scratch operand']
  %s0 = inlined_call_operand.vmem [shape: bf16[1,128,128], index: 0, kind: input, shape index: {}]
  %s1 = inlined_call_operand.vmem [shape: bf16[1,128,128], index: 1, kind: input, shape index: {}]
  %s2 = inlined_call_operand.vmem [shape: f32[1,1,128], index: 2, kind: input, shape index: {}]
  %s3 = inlined_call_operand.vmem [shape: bf16[1,128,128], index: 3, kind: output, shape index: {0}]
  %s4 = inlined_call_operand.vmem [shape: f32[1,1,8,128], index: 4, kind: output, shape index: {1}]
  %5 = xla_tuple %s3, %s4
  %s6 = sld [smem:[#allocation0]]
  $region38: #{_lambda_.18} parent=0
    _
  %s8 = ssub.s32 1, %s6
  %s9 = scalar_select 0, %s8, %s6
  // Predicated region
  $region2: #{_lambda_.18} parent=0 // pred_check
    _
  $region3: #{_lambda_.18} parent=0 // pred_check_branch
    %11 = sbr.rel (0) target = $region5
  $region4: #{_lambda_.18} parent=0 // pred_region
    _
  $region5: #{_lambda_.18} parent=0 // pred_fallthru
    _
  // Predicated region
  $region6: #{_lambda_.18} parent=0 // pred_check
    _
  $region7: #{_lambda_.18} parent=0 // pred_check_branch
    %13 = sbr.rel (0) target = $region9
  $region8: #{_lambda_.18} parent=0 // pred_region
    _
  $region9: #{_lambda_.18} parent=0 // pred_fallthru
    _
  // Predicated region
  $region10: #{_lambda_.18} parent=0 // pred_check
    _
  $region11: #{_lambda_.18} parent=0 // pred_check_branch
    %15 = sbr.rel (0) target = $region13
  $region12: #{_lambda_.18} parent=0 // pred_region
    _
  $region13: #{_lambda_.18} parent=0 // pred_fallthru
    _
  %p16 = scmp.eq.s32.totalorder 0, 0
  // Predicated region
  $region14: #{_lambda_.18} parent=0 // pred_check
    %p17 = pneg %p16
  $region15: #{_lambda_.18} parent=0 // pred_check_branch
    %19 = sbr.rel (%p17) target = $region17
  $region16: #{_lambda_.18} parent=0 // pred_region
    %20 = vst [vmem:[#allocation2] sm:$0xff] 0.0
    %21 = vst [vmem:[#allocation2 + $0x8] sm:$0xff] 0.0
    %22 = vst [vmem:[#allocation2 + $0x10] sm:$0xff] 0.0
    %23 = vst [vmem:[#allocation2 + $0x18] sm:$0xff] 0.0
    %24 = vst [vmem:[#allocation2 + $0x20] sm:$0xff] 0.0
    %25 = vst [vmem:[#allocation2 + $0x28] sm:$0xff] 0.0
    %26 = vst [vmem:[#allocation2 + $0x30] sm:$0xff] 0.0
    %27 = vst [vmem:[#allocation2 + $0x38] sm:$0xff] 0.0
    %28 = vst [vmem:[#allocation2 + $0x40] sm:$0xff] 0.0
    %29 = vst [vmem:[#allocation2 + $0x48] sm:$0xff] 0.0
    %30 = vst [vmem:[#allocation2 + $0x50] sm:$0xff] 0.0
    %31 = vst [vmem:[#allocation2 + $0x58] sm:$0xff] 0.0
    %32 = vst [vmem:[#allocation2 + $0x60] sm:$0xff] 0.0
    %33 = vst [vmem:[#allocation2 + $0x68] sm:$0xff] 0.0
    %34 = vst [vmem:[#allocation2 + $0x70] sm:$0xff] 0.0
    %35 = vst [vmem:[#allocation2 + $0x78] sm:$0xff] 0.0
  $region17: #{_lambda_.18} parent=0 // pred_fallthru
    _
  %v36 = vld [vmem:[%s0] sm:$0xf]
  %v37 = vld [vmem:[%s0 + $0x4] sm:$0xf]
  %v38 = vld [vmem:[%s0 + $0x8] sm:$0xf]
  %v39 = vld [vmem:[%s0 + $0xc] sm:$0xf]
  %v40 = vld [vmem:[%s0 + $0x10] sm:$0xf]
  %v41 = vld [vmem:[%s0 + $0x14] sm:$0xf]
  %v42 = vld [vmem:[%s0 + $0x18] sm:$0xf]
  %v43 = vld [vmem:[%s0 + $0x1c] sm:$0xf]
  %v44 = vld [vmem:[%s0 + $0x20] sm:$0xf]
  %v45 = vld [vmem:[%s0 + $0x24] sm:$0xf]
  %v46 = vld [vmem:[%s0 + $0x28] sm:$0xf]
  %v47 = vld [vmem:[%s0 + $0x2c] sm:$0xf]
  %v48 = vld [vmem:[%s0 + $0x30] sm:$0xf]
  %v49 = vld [vmem:[%s0 + $0x34] sm:$0xf]
  %v50 = vld [vmem:[%s0 + $0x38] sm:$0xf]
  %v51 = vld [vmem:[%s0 + $0x3c] sm:$0xf]
  %v52 = vunpack.c.l.bf16 %v36
  %v53 = vunpack.c.l.bf16 %v37
  %v54 = vunpack.c.l.bf16 %v38
  %v55 = vunpack.c.l.bf16 %v39
  %v56 = vunpack.c.l.bf16 %v40
  %v57 = vunpack.c.l.bf16 %v41
  %v58 = vunpack.c.l.bf16 %v42
  %v59 = vunpack.c.l.bf16 %v43
  %v60 = vunpack.c.l.bf16 %v44
  %v61 = vunpack.c.l.bf16 %v45
  %v62 = vunpack.c.l.bf16 %v46
  %v63 = vunpack.c.l.bf16 %v47
  %v64 = vunpack.c.l.bf16 %v48
  %v65 = vunpack.c.l.bf16 %v49
  %v66 = vunpack.c.l.bf16 %v50
  %v67 = vunpack.c.l.bf16 %v51
  %vm68 = vcmp.ge.f32.partialorder %v52, 0.0
  %vm69 = vcmp.ge.f32.partialorder %v53, 0.0
  %vm70 = vcmp.ge.f32.partialorder %v54, 0.0
  %vm71 = vcmp.ge.f32.partialorder %v55, 0.0
  %vm72 = vcmp.ge.f32.partialorder %v56, 0.0
  %vm73 = vcmp.ge.f32.partialorder %v57, 0.0
  %vm74 = vcmp.ge.f32.partialorder %v58, 0.0
  %vm75 = vcmp.ge.f32.partialorder %v59, 0.0
  %vm76 = vcmp.ge.f32.partialorder %v60, 0.0
  %vm77 = vcmp.ge.f32.partialorder %v61, 0.0
  %vm78 = vcmp.ge.f32.partialorder %v62, 0.0
  %vm79 = vcmp.ge.f32.partialorder %v63, 0.0
  %vm80 = vcmp.ge.f32.partialorder %v64, 0.0
  %vm81 = vcmp.ge.f32.partialorder %v65, 0.0
  %vm82 = vcmp.ge.f32.partialorder %v66, 0.0
  %vm83 = vcmp.ge.f32.partialorder %v67, 0.0
  %v84 = vmul.f32 %v52, 0.20019531
  %v85 = vmul.f32 %v53, 0.20019531
  %v86 = vmul.f32 %v54, 0.20019531
  %v87 = vmul.f32 %v55, 0.20019531
  %v88 = vmul.f32 %v56, 0.20019531
  %v89 = vmul.f32 %v57, 0.20019531
  %v90 = vmul.f32 %v58, 0.20019531
  %v91 = vmul.f32 %v59, 0.20019531
  %v92 = vmul.f32 %v60, 0.20019531
  %v93 = vmul.f32 %v61, 0.20019531
  %v94 = vmul.f32 %v62, 0.20019531
  %v95 = vmul.f32 %v63, 0.20019531
  %v96 = vmul.f32 %v64, 0.20019531
  %v97 = vmul.f32 %v65, 0.20019531
  %v98 = vmul.f32 %v66, 0.20019531
  %v99 = vmul.f32 %v67, 0.20019531
  %v100 = vpack.c.bf16 %v84, %v84
  %v101 = vpack.c.bf16 %v85, %v85
  %v102 = vpack.c.bf16 %v86, %v86
  %v103 = vpack.c.bf16 %v87, %v87
  %v104 = vpack.c.bf16 %v88, %v88
  %v105 = vpack.c.bf16 %v89, %v89
  %v106 = vpack.c.bf16 %v90, %v90
  %v107 = vpack.c.bf16 %v91, %v91
  %v108 = vpack.c.bf16 %v92, %v92
  %v109 = vpack.c.bf16 %v93, %v93
  %v110 = vpack.c.bf16 %v94, %v94
  %v111 = vpack.c.bf16 %v95, %v95
  %v112 = vpack.c.bf16 %v96, %v96
  %v113 = vpack.c.bf16 %v97, %v97
  %v114 = vpack.c.bf16 %v98, %v98
  %v115 = vpack.c.bf16 %v99, %v99
  %vm116 = vmpackc.low %vm68, %vm68
  %vm117 = vmpackc.low %vm69, %vm69
  %vm118 = vmpackc.low %vm70, %vm70
  %vm119 = vmpackc.low %vm71, %vm71
  %vm120 = vmpackc.low %vm72, %vm72
  %vm121 = vmpackc.low %vm73, %vm73
  %vm122 = vmpackc.low %vm74, %vm74
  %vm123 = vmpackc.low %vm75, %vm75
  %vm124 = vmpackc.low %vm76, %vm76
  %vm125 = vmpackc.low %vm77, %vm77
  %vm126 = vmpackc.low %vm78, %vm78
  %vm127 = vmpackc.low %vm79, %vm79
  %vm128 = vmpackc.low %vm80, %vm80
  %vm129 = vmpackc.low %vm81, %vm81
  %vm130 = vmpackc.low %vm82, %vm82
  %vm131 = vmpackc.low %vm83, %vm83
  %v132 = vsel %vm116, %v36, %v100
  %v133 = vsel %vm117, %v37, %v101
  %v134 = vsel %vm118, %v38, %v102
  %v135 = vsel %vm119, %v39, %v103
  %v136 = vsel %vm120, %v40, %v104
  %v137 = vsel %vm121, %v41, %v105
  %v138 = vsel %vm122, %v42, %v106
  %v139 = vsel %vm123, %v43, %v107
  %v140 = vsel %vm124, %v44, %v108
  %v141 = vsel %vm125, %v45, %v109
  %v142 = vsel %vm126, %v46, %v110
  %v143 = vsel %vm127, %v47, %v111
  %v144 = vsel %vm128, %v48, %v112
  %v145 = vsel %vm129, %v49, %v113
  %v146 = vsel %vm130, %v50, %v114
  %v147 = vsel %vm131, %v51, %v115
  %v148 = vld [vmem:[#allocation2] sm:$0xff]
  %v149 = vld [vmem:[#allocation2 + $0x8] sm:$0xff]
  %v150 = vld [vmem:[#allocation2 + $0x10] sm:$0xff]
  %v151 = vld [vmem:[#allocation2 + $0x18] sm:$0xff]
  %v152 = vld [vmem:[#allocation2 + $0x20] sm:$0xff]
  %v153 = vld [vmem:[#allocation2 + $0x28] sm:$0xff]
  %v154 = vld [vmem:[#allocation2 + $0x30] sm:$0xff]
  %v155 = vld [vmem:[#allocation2 + $0x38] sm:$0xff]
  %v156 = vld [vmem:[#allocation2 + $0x40] sm:$0xff]
  %v157 = vld [vmem:[#allocation2 + $0x48] sm:$0xff]
  %v158 = vld [vmem:[#allocation2 + $0x50] sm:$0xff]
  %v159 = vld [vmem:[#allocation2 + $0x58] sm:$0xff]
  %v160 = vld [vmem:[#allocation2 + $0x60] sm:$0xff]
  %v161 = vld [vmem:[#allocation2 + $0x68] sm:$0xff]
  %v162 = vld [vmem:[#allocation2 + $0x70] sm:$0xff]
  %v163 = vld [vmem:[#allocation2 + $0x78] sm:$0xff]
  %v164 = vld [vmem:[%s1] sm:$0xf]
  %v165 = vld [vmem:[%s1 + $0x4] sm:$0xf]
  %v166 = vld [vmem:[%s1 + $0x8] sm:$0xf]
  %v167 = vld [vmem:[%s1 + $0xc] sm:$0xf]
  %v168 = vld [vmem:[%s1 + $0x10] sm:$0xf]
  %v169 = vld [vmem:[%s1 + $0x14] sm:$0xf]
  %v170 = vld [vmem:[%s1 + $0x18] sm:$0xf]
  %v171 = vld [vmem:[%s1 + $0x1c] sm:$0xf]
  %v172 = vld [vmem:[%s1 + $0x20] sm:$0xf]
  %v173 = vld [vmem:[%s1 + $0x24] sm:$0xf]
  %v174 = vld [vmem:[%s1 + $0x28] sm:$0xf]
  %v175 = vld [vmem:[%s1 + $0x2c] sm:$0xf]
  %v176 = vld [vmem:[%s1 + $0x30] sm:$0xf]
  %v177 = vld [vmem:[%s1 + $0x34] sm:$0xf]
  %v178 = vld [vmem:[%s1 + $0x38] sm:$0xf]
  %v179 = vld [vmem:[%s1 + $0x3c] sm:$0xf]
  %v196 = vunpack.c.l.b16 %v132
  %v197 = vunpack.c.l.b16 %v133
  %v198 = vunpack.c.l.b16 %v134
  %v199 = vunpack.c.l.b16 %v135
  %v200 = vunpack.c.l.b16 %v136
  %v201 = vunpack.c.l.b16 %v137
  %v202 = vunpack.c.l.b16 %v138
  %v203 = vunpack.c.l.b16 %v139
  %v204 = vunpack.c.l.b16 %v140
  %v205 = vunpack.c.l.b16 %v141
  %v206 = vunpack.c.l.b16 %v142
  %v207 = vunpack.c.l.b16 %v143
  %v208 = vunpack.c.l.b16 %v144
  %v209 = vunpack.c.l.b16 %v145
  %v210 = vunpack.c.l.b16 %v146
  %v211 = vunpack.c.l.b16 %v147
  %v212 = vpack.c.b16 %v197, %v196
  %v213 = vpack.c.b16 %v199, %v198
  %v214 = vpack.c.b16 %v201, %v200
  %v215 = vpack.c.b16 %v203, %v202
  %v216 = vpack.c.b16 %v205, %v204
  %v217 = vpack.c.b16 %v207, %v206
  %v218 = vpack.c.b16 %v209, %v208
  %v219 = vpack.c.b16 %v211, %v210
  %v244 = vunpack.c.l.b16 %v164
  %v245 = vunpack.c.l.b16 %v165
  %v246 = vunpack.c.l.b16 %v166
  %v247 = vunpack.c.l.b16 %v167
  %v248 = vunpack.c.l.b16 %v168
  %v249 = vunpack.c.l.b16 %v169
  %v250 = vunpack.c.l.b16 %v170
  %v251 = vunpack.c.l.b16 %v171
  %v252 = vunpack.c.l.b16 %v172
  %v253 = vunpack.c.l.b16 %v173
  %v254 = vunpack.c.l.b16 %v174
  %v255 = vunpack.c.l.b16 %v175
  %v256 = vunpack.c.l.b16 %v176
  %v257 = vunpack.c.l.b16 %v177
  %v258 = vunpack.c.l.b16 %v178
  %v259 = vunpack.c.l.b16 %v179
  %v260 = vpack.c.b16 %v245, %v244
  %v261 = vpack.c.b16 %v247, %v246
  %v262 = vpack.c.b16 %v249, %v248
  %v263 = vpack.c.b16 %v251, %v250
  %v264 = vpack.c.b16 %v253, %v252
  %v265 = vpack.c.b16 %v255, %v254
  %v266 = vpack.c.b16 %v257, %v256
  %v267 = vpack.c.b16 %v259, %v258
  %276 = vmatpush.bf16.msra.mxu0 %v267
  %277 = vmatpush.bf16.msra.mxu0 %v266
  %278 = vmatpush.bf16.msra.mxu0 %v265
  %279 = vmatpush.bf16.msra.mxu0 %v264
  %280 = vmatpush.bf16.msra.mxu0 %v263
  %281 = vmatpush.bf16.msra.mxu0 %v262
  %282 = vmatpush.bf16.msra.mxu0 %v261
  %283 = vmatpush.bf16.msra.mxu0 %v260
  %284 = vmatmul.bf16.gmra.mxu0 %v212
  %v285 = vpop.f32.mrf.mxu0
  %v286 = vadd.f32 0.0, %v285
  %v287 = vpop.f32.mrf.mxu0
  %v288 = vadd.f32 0.0, %v287
  %289 = vmatmul.bf16.gmra.mxu0 %v213
  %v290 = vpop.f32.mrf.mxu0
  %v291 = vadd.f32 0.0, %v290
  %v292 = vpop.f32.mrf.mxu0
  %v293 = vadd.f32 0.0, %v292
  %294 = vmatmul.bf16.gmra.mxu0 %v214
  %v295 = vpop.f32.mrf.mxu0
  %v296 = vadd.f32 0.0, %v295
  %v297 = vpop.f32.mrf.mxu0
  %v298 = vadd.f32 0.0, %v297
  %299 = vmatmul.bf16.gmra.mxu0 %v215
  %v300 = vpop.f32.mrf.mxu0
  %v301 = vadd.f32 0.0, %v300
  %v302 = vpop.f32.mrf.mxu0
  %v303 = vadd.f32 0.0, %v302
  %304 = vmatmul.bf16.gmra.mxu0 %v216
  %v305 = vpop.f32.mrf.mxu0
  %v306 = vadd.f32 0.0, %v305
  %v307 = vpop.f32.mrf.mxu0
  %v308 = vadd.f32 0.0, %v307
  %309 = vmatmul.bf16.gmra.mxu0 %v217
  %v310 = vpop.f32.mrf.mxu0
  %v311 = vadd.f32 0.0, %v310
  %v312 = vpop.f32.mrf.mxu0
  %v313 = vadd.f32 0.0, %v312
  %314 = vmatmul.bf16.gmra.mxu0 %v218
  %v315 = vpop.f32.mrf.mxu0
  %v316 = vadd.f32 0.0, %v315
  %v317 = vpop.f32.mrf.mxu0
  %v318 = vadd.f32 0.0, %v317
  %319 = vmatmul.bf16.gmra.mxu0 %v219
  %v320 = vpop.f32.mrf.mxu0
  %v321 = vadd.f32 0.0, %v320
  %v322 = vpop.f32.mrf.mxu0
  %v323 = vadd.f32 0.0, %v322
  %324 = vdwg.mxu0
  %v325 = vadd.f32 %v148, %v286
  %v326 = vadd.f32 %v149, %v288
  %v327 = vadd.f32 %v150, %v291
  %v328 = vadd.f32 %v151, %v293
  %v329 = vadd.f32 %v152, %v296
  %v330 = vadd.f32 %v153, %v298
  %v331 = vadd.f32 %v154, %v301
  %v332 = vadd.f32 %v155, %v303
  %v333 = vadd.f32 %v156, %v306
  %v334 = vadd.f32 %v157, %v308
  %v335 = vadd.f32 %v158, %v311
  %v336 = vadd.f32 %v159, %v313
  %v337 = vadd.f32 %v160, %v316
  %v338 = vadd.f32 %v161, %v318
  %v339 = vadd.f32 %v162, %v321
  %v340 = vadd.f32 %v163, %v323
  %341 = vst [vmem:[#allocation2] sm:$0xff] %v325
  %342 = vst [vmem:[#allocation2 + $0x8] sm:$0xff] %v326
  %343 = vst [vmem:[#allocation2 + $0x10] sm:$0xff] %v327
  %344 = vst [vmem:[#allocation2 + $0x18] sm:$0xff] %v328
  %345 = vst [vmem:[#allocation2 + $0x20] sm:$0xff] %v329
  %346 = vst [vmem:[#allocation2 + $0x28] sm:$0xff] %v330
  %347 = vst [vmem:[#allocation2 + $0x30] sm:$0xff] %v331
  %348 = vst [vmem:[#allocation2 + $0x38] sm:$0xff] %v332
  %349 = vst [vmem:[#allocation2 + $0x40] sm:$0xff] %v333
  %350 = vst [vmem:[#allocation2 + $0x48] sm:$0xff] %v334
  %351 = vst [vmem:[#allocation2 + $0x50] sm:$0xff] %v335
  %352 = vst [vmem:[#allocation2 + $0x58] sm:$0xff] %v336
  %353 = vst [vmem:[#allocation2 + $0x60] sm:$0xff] %v337
  %354 = vst [vmem:[#allocation2 + $0x68] sm:$0xff] %v338
  %355 = vst [vmem:[#allocation2 + $0x70] sm:$0xff] %v339
  %356 = vst [vmem:[#allocation2 + $0x78] sm:$0xff] %v340
  // Predicated region
  $region18: #{_lambda_.18} parent=0 // pred_check
    %p357 = pneg %p16
  $region19: #{_lambda_.18} parent=0 // pred_check_branch
    %359 = sbr.rel (%p357) target = $region21
  $region20: #{_lambda_.18} parent=0 // pred_region
    %v360 = vld [vmem:[#allocation2] sm:$0xff]
    %v361 = vld [vmem:[#allocation2 + $0x8] sm:$0xff]
    %v362 = vld [vmem:[#allocation2 + $0x10] sm:$0xff]
    %v363 = vld [vmem:[#allocation2 + $0x18] sm:$0xff]
    %v364 = vld [vmem:[#allocation2 + $0x20] sm:$0xff]
    %v365 = vld [vmem:[#allocation2 + $0x28] sm:$0xff]
    %v366 = vld [vmem:[#allocation2 + $0x30] sm:$0xff]
    %v367 = vld [vmem:[#allocation2 + $0x38] sm:$0xff]
    %v368 = vld [vmem:[#allocation2 + $0x40] sm:$0xff]
    %v369 = vld [vmem:[#allocation2 + $0x48] sm:$0xff]
    %v370 = vld [vmem:[#allocation2 + $0x50] sm:$0xff]
    %v371 = vld [vmem:[#allocation2 + $0x58] sm:$0xff]
    %v372 = vld [vmem:[#allocation2 + $0x60] sm:$0xff]
    %v373 = vld [vmem:[#allocation2 + $0x68] sm:$0xff]
    %v374 = vld [vmem:[#allocation2 + $0x70] sm:$0xff]
    %v375 = vld [vmem:[#allocation2 + $0x78] sm:$0xff]
    %v376 = vld [vmem:[%s2] sm:$0x1]
    %v378 = vperm.slane %v376, 0
    %v380 = vadd.f32 %v360, %v378
    %v381 = vadd.f32 %v361, %v378
    %v382 = vadd.f32 %v362, %v378
    %v383 = vadd.f32 %v363, %v378
    %v384 = vadd.f32 %v364, %v378
    %v385 = vadd.f32 %v365, %v378
    %v386 = vadd.f32 %v366, %v378
    %v387 = vadd.f32 %v367, %v378
    %v388 = vadd.f32 %v368, %v378
    %v389 = vadd.f32 %v369, %v378
    %v390 = vadd.f32 %v370, %v378
    %v391 = vadd.f32 %v371, %v378
    %v392 = vadd.f32 %v372, %v378
    %v393 = vadd.f32 %v373, %v378
    %v394 = vadd.f32 %v374, %v378
    %v395 = vadd.f32 %v375, %v378
    %v396 = vpack.c.bf16 %v380, %v380
    %v397 = vpack.c.bf16 %v381, %v381
    %v398 = vpack.c.bf16 %v382, %v382
    %v399 = vpack.c.bf16 %v383, %v383
    %v400 = vpack.c.bf16 %v384, %v384
    %v401 = vpack.c.bf16 %v385, %v385
    %v402 = vpack.c.bf16 %v386, %v386
    %v403 = vpack.c.bf16 %v387, %v387
    %v404 = vpack.c.bf16 %v388, %v388
    %v405 = vpack.c.bf16 %v389, %v389
    %v406 = vpack.c.bf16 %v390, %v390
    %v407 = vpack.c.bf16 %v391, %v391
    %v408 = vpack.c.bf16 %v392, %v392
    %v409 = vpack.c.bf16 %v393, %v393
    %v410 = vpack.c.bf16 %v394, %v394
    %v411 = vpack.c.bf16 %v395, %v395
    %412 = vst [vmem:[%s3] sm:$0xf] %v396
    %413 = vst [vmem:[%s3 + $0x4] sm:$0xf] %v397
    %414 = vst [vmem:[%s3 + $0x8] sm:$0xf] %v398
    %415 = vst [vmem:[%s3 + $0xc] sm:$0xf] %v399
    %416 = vst [vmem:[%s3 + $0x10] sm:$0xf] %v400
    %417 = vst [vmem:[%s3 + $0x14] sm:$0xf] %v401
    %418 = vst [vmem:[%s3 + $0x18] sm:$0xf] %v402
    %419 = vst [vmem:[%s3 + $0x1c] sm:$0xf] %v403
    %420 = vst [vmem:[%s3 + $0x20] sm:$0xf] %v404
    %421 = vst [vmem:[%s3 + $0x24] sm:$0xf] %v405
    %422 = vst [vmem:[%s3 + $0x28] sm:$0xf] %v406
    %423 = vst [vmem:[%s3 + $0x2c] sm:$0xf] %v407
    %424 = vst [vmem:[%s3 + $0x30] sm:$0xf] %v408
    %425 = vst [vmem:[%s3 + $0x34] sm:$0xf] %v409
    %426 = vst [vmem:[%s3 + $0x38] sm:$0xf] %v410
    %427 = vst [vmem:[%s3 + $0x3c] sm:$0xf] %v411
    %v428 = vadd.f32 %v380, %v381
    %v429 = vadd.f32 %v428, %v382
    %v430 = vadd.f32 %v429, %v383
    %v431 = vadd.f32 %v430, %v384
    %v432 = vadd.f32 %v431, %v385
    %v433 = vadd.f32 %v432, %v386
    %v434 = vadd.f32 %v433, %v387
    %v435 = vadd.f32 %v434, %v388
    %v436 = vadd.f32 %v435, %v389
    %v437 = vadd.f32 %v436, %v390
    %v438 = vadd.f32 %v437, %v391
    %v439 = vadd.f32 %v438, %v392
    %v440 = vadd.f32 %v439, %v393
    %v441 = vadd.f32 %v440, %v394
    %v442 = vadd.f32 %v441, %v395
    %v443 = vrot.slane %v442, 4
    %v444 = vadd.f32 %v442, %v443
    %v445 = vrot.slane %v444, 2
    %v446 = vadd.f32 %v444, %v445
    %v447 = vrot.slane %v446, 1
    %v448 = vadd.f32 %v446, %v447
    %v449 = vmul.f32 %v380, %v380
    %v450 = vmul.f32 %v381, %v381
    %v451 = vmul.f32 %v382, %v382
    %v452 = vmul.f32 %v383, %v383
    %v453 = vmul.f32 %v384, %v384
    %v454 = vmul.f32 %v385, %v385
    %v455 = vmul.f32 %v386, %v386
    %v456 = vmul.f32 %v387, %v387
    %v457 = vmul.f32 %v388, %v388
    %v458 = vmul.f32 %v389, %v389
    %v459 = vmul.f32 %v390, %v390
    %v460 = vmul.f32 %v391, %v391
    %v461 = vmul.f32 %v392, %v392
    %v462 = vmul.f32 %v393, %v393
    %v463 = vmul.f32 %v394, %v394
    %v464 = vmul.f32 %v395, %v395
    %v465 = vadd.f32 %v449, %v450
    %v466 = vadd.f32 %v465, %v451
    %v467 = vadd.f32 %v466, %v452
    %v468 = vadd.f32 %v467, %v453
    %v469 = vadd.f32 %v468, %v454
    %v470 = vadd.f32 %v469, %v455
    %v471 = vadd.f32 %v470, %v456
    %v472 = vadd.f32 %v471, %v457
    %v473 = vadd.f32 %v472, %v458
    %v474 = vadd.f32 %v473, %v459
    %v475 = vadd.f32 %v474, %v460
    %v476 = vadd.f32 %v475, %v461
    %v477 = vadd.f32 %v476, %v462
    %v478 = vadd.f32 %v477, %v463
    %v479 = vadd.f32 %v478, %v464
    %v480 = vrot.slane %v479, 4
    %v481 = vadd.f32 %v479, %v480
    %v482 = vrot.slane %v481, 2
    %v483 = vadd.f32 %v481, %v482
    %v484 = vrot.slane %v483, 1
    %v485 = vadd.f32 %v483, %v484
    %v486 = vlaneseq
    %v487 = vshrl.u32 %v486, 7
    %vm488 = vcmp.eq.s32.totalorder %v487, 0
    %vm489 = vcmp.eq.s32.totalorder %v487, 1
    %v490 = vsel %vm489, %v485, 0.0
    %v491 = vsel %vm488, %v448, %v490
    %492 = vst [vmem:[%s4] sm:$0xff] %v491
  $region21: #{_lambda_.18} parent=0 // pred_fallthru
    _
  // Predicated region
  $region22: #{_lambda_.18} parent=0 // pred_check
    _
  $region23: #{_lambda_.18} parent=0 // pred_check_branch
    %494 = sbr.rel (0) target = $region25
  $region24: #{_lambda_.18} parent=0 // pred_region
    _
  $region25: #{_lambda_.18} parent=0 // pred_fallthru
    _
  // Predicated region
  $region26: #{_lambda_.18} parent=0 // pred_check
    _
  $region27: #{_lambda_.18} parent=0 // pred_check_branch
    %496 = sbr.rel (0) target = $region29
  $region28: #{_lambda_.18} parent=0 // pred_region
    _
  $region29: #{_lambda_.18} parent=0 // pred_fallthru
    _
  // Predicated region
  $region30: #{_lambda_.18} parent=0 // pred_check
    _
  $region31: #{_lambda_.18} parent=0 // pred_check_branch
    %498 = sbr.rel (0) target = $region33
  $region32: #{_lambda_.18} parent=0 // pred_region
    _
  $region33: #{_lambda_.18} parent=0 // pred_fallthru
    _
  // Predicated region
  $region34: #{_lambda_.18} parent=0 // pred_check
    _
  $region35: #{_lambda_.18} parent=0 // pred_check_branch
    %500 = sbr.rel (0) target = $region37
  $region36: #{_lambda_.18} parent=0 // pred_region
    _
  $region37: #{_lambda_.18} parent=0 // pred_fallthru
    _

// kernel: _lambda_.17
$region0: #{_lambda_.17}
  #allocation0 [shape = 'u32[]', space=smem, size = 0x4, offset = 0x4, fixed_abs, tag = 'smem constant byte address 0x4 - core index']
  #allocation1 [shape = 'u32[72,128]{1,0:T(1,128)}', space=vmem, size = 0x9000, scoped, tag = 'internal scratch']
  #allocation2 [shape = 'f32[512,128]{1,0:T(8,128)}', space=vmem, size = 0x40000, scoped, tag = 'scratch operand']
  %s0 = inlined_call_operand.vmem [shape: bf16[1,512,128], index: 0, kind: input, shape index: {}]
  %s1 = inlined_call_operand.vmem [shape: bf16[1,128,128], index: 1, kind: input, shape index: {}]
  %s2 = inlined_call_operand.vmem [shape: f32[1,1,128], index: 2, kind: input, shape index: {}]
  %s3 = inlined_call_operand.vmem [shape: bf16[1,512,128], index: 3, kind: output, shape index: {}]
  %s4 = sld [smem:[#allocation0]]
  $region30: #{_lambda_.17} parent=0
    _
  %s6 = ssub.s32 1, %s4
  %s7 = scalar_select 0, %s6, %s4
  // Predicated region
  $region2: #{_lambda_.17} parent=0 // pred_check
    _
  $region3: #{_lambda_.17} parent=0 // pred_check_branch
    %9 = sbr.rel (0) target = $region5
  $region4: #{_lambda_.17} parent=0 // pred_region
    _
  $region5: #{_lambda_.17} parent=0 // pred_fallthru
    _
  // Predicated region
  $region6: #{_lambda_.17} parent=0 // pred_check
    _
  $region7: #{_lambda_.17} parent=0 // pred_check_branch
    %11 = sbr.rel (0) target = $region9
  $region8: #{_lambda_.17} parent=0 // pred_region
    _
  $region9: #{_lambda_.17} parent=0 // pred_fallthru
    _
  // Predicated region
  $region10: #{_lambda_.17} parent=0 // pred_check
    _
  $region11: #{_lambda_.17} parent=0 // pred_check_branch
    %13 = sbr.rel (0) target = $region13
  $region12: #{_lambda_.17} parent=0 // pred_region
    _
  $region13: #{_lambda_.17} parent=0 // pred_fallthru
    _
  %p14 = scmp.eq.s32.totalorder 0, 0
  // Predicated region
  $region14: #{_lambda_.17} parent=0 // pred_check
    %p15 = pneg %p14
  $region15: #{_lambda_.17} parent=0 // pred_check_branch
    %17 = sbr.rel (%p15) target = $region17
  $region16: #{_lambda_.17} parent=0 // pred_region
    %18 = vst [vmem:[#allocation2] sm:$0xff] 0.0
    %19 = vst [vmem:[#allocation2 + $0x8] sm:$0xff] 0.0
    %20 = vst [vmem:[#allocation2 + $0x10] sm:$0xff] 0.0
    %21 = vst [vmem:[#allocation2 + $0x18] sm:$0xff] 0.0
    %22 = vst [vmem:[#allocation2 + $0x20] sm:$0xff] 0.0
    %23 = vst [vmem:[#allocation2 + $0x28] sm:$0xff] 0.0
    %24 = vst [vmem:[#allocation2 + $0x30] sm:$0xff] 0.0
    %25 = vst [vmem:[#allocation2 + $0x38] sm:$0xff] 0.0
    %26 = vst [vmem:[#allocation2 + $0x40] sm:$0xff] 0.0
    %27 = vst [vmem:[#allocation2 + $0x48] sm:$0xff] 0.0
    %28 = vst [vmem:[#allocation2 + $0x50] sm:$0xff] 0.0
    %29 = vst [vmem:[#allocation2 + $0x58] sm:$0xff] 0.0
    %30 = vst [vmem:[#allocation2 + $0x60] sm:$0xff] 0.0
    %31 = vst [vmem:[#allocation2 + $0x68] sm:$0xff] 0.0
    %32 = vst [vmem:[#allocation2 + $0x70] sm:$0xff] 0.0
    %33 = vst [vmem:[#allocation2 + $0x78] sm:$0xff] 0.0
    %34 = vst [vmem:[#allocation2 + $0x80] sm:$0xff] 0.0
    %35 = vst [vmem:[#allocation2 + $0x88] sm:$0xff] 0.0
    %36 = vst [vmem:[#allocation2 + $0x90] sm:$0xff] 0.0
    %37 = vst [vmem:[#allocation2 + $0x98] sm:$0xff] 0.0
    %38 = vst [vmem:[#allocation2 + $0xa0] sm:$0xff] 0.0
    %39 = vst [vmem:[#allocation2 + $0xa8] sm:$0xff] 0.0
    %40 = vst [vmem:[#allocation2 + $0xb0] sm:$0xff] 0.0
    %41 = vst [vmem:[#allocation2 + $0xb8] sm:$0xff] 0.0
    %42 = vst [vmem:[#allocation2 + $0xc0] sm:$0xff] 0.0
    %43 = vst [vmem:[#allocation2 + $0xc8] sm:$0xff] 0.0
    %44 = vst [vmem:[#allocation2 + $0xd0] sm:$0xff] 0.0
    %45 = vst [vmem:[#allocation2 + $0xd8] sm:$0xff] 0.0
    %46 = vst [vmem:[#allocation2 + $0xe0] sm:$0xff] 0.0
    %47 = vst [vmem:[#allocation2 + $0xe8] sm:$0xff] 0.0
    %48 = vst [vmem:[#allocation2 + $0xf0] sm:$0xff] 0.0
    %49 = vst [vmem:[#allocation2 + $0xf8] sm:$0xff] 0.0
    %50 = vst [vmem:[#allocation2 + $0x100] sm:$0xff] 0.0
    %51 = vst [vmem:[#allocation2 + $0x108] sm:$0xff] 0.0
    %52 = vst [vmem:[#allocation2 + $0x110] sm:$0xff] 0.0
    %53 = vst [vmem:[#allocation2 + $0x118] sm:$0xff] 0.0
    %54 = vst [vmem:[#allocation2 + $0x120] sm:$0xff] 0.0
    %55 = vst [vmem:[#allocation2 + $0x128] sm:$0xff] 0.0
    %56 = vst [vmem:[#allocation2 + $0x130] sm:$0xff] 0.0
    %57 = vst [vmem:[#allocation2 + $0x138] sm:$0xff] 0.0
    %58 = vst [vmem:[#allocation2 + $0x140] sm:$0xff] 0.0
    %59 = vst [vmem:[#allocation2 + $0x148] sm:$0xff] 0.0
    %60 = vst [vmem:[#allocation2 + $0x150] sm:$0xff] 0.0
    %61 = vst [vmem:[#allocation2 + $0x158] sm:$0xff] 0.0
    %62 = vst [vmem:[#allocation2 + $0x160] sm:$0xff] 0.0
    %63 = vst [vmem:[#allocation2 + $0x168] sm:$0xff] 0.0
    %64 = vst [vmem:[#allocation2 + $0x170] sm:$0xff] 0.0
    %65 = vst [vmem:[#allocation2 + $0x178] sm:$0xff] 0.0
    %66 = vst [vmem:[#allocation2 + $0x180] sm:$0xff] 0.0
    %67 = vst [vmem:[#allocation2 + $0x188] sm:$0xff] 0.0
    %68 = vst [vmem:[#allocation2 + $0x190] sm:$0xff] 0.0
    %69 = vst [vmem:[#allocation2 + $0x198] sm:$0xff] 0.0
    %70 = vst [vmem:[#allocation2 + $0x1a0] sm:$0xff] 0.0
    %71 = vst [vmem:[#allocation2 + $0x1a8] sm:$0xff] 0.0
    %72 = vst [vmem:[#allocation2 + $0x1b0] sm:$0xff] 0.0
    %73 = vst [vmem:[#allocation2 + $0x1b8] sm:$0xff] 0.0
    %74 = vst [vmem:[#allocation2 + $0x1c0] sm:$0xff] 0.0
    %75 = vst [vmem:[#allocation2 + $0x1c8] sm:$0xff] 0.0
    %76 = vst [vmem:[#allocation2 + $0x1d0] sm:$0xff] 0.0
    %77 = vst [vmem:[#allocation2 + $0x1d8] sm:$0xff] 0.0
    %78 = vst [vmem:[#allocation2 + $0x1e0] sm:$0xff] 0.0
    %79 = vst [vmem:[#allocation2 + $0x1e8] sm:$0xff] 0.0
    %80 = vst [vmem:[#allocation2 + $0x1f0] sm:$0xff] 0.0
    %81 = vst [vmem:[#allocation2 + $0x1f8] sm:$0xff] 0.0
  $region17: #{_lambda_.17} parent=0 // pred_fallthru
    _
  %v82 = vld [vmem:[%s0] sm:$0xf]
  %v83 = vld [vmem:[%s0 + $0x4] sm:$0xf]
  %v84 = vld [vmem:[%s0 + $0x8] sm:$0xf]
  %v85 = vld [vmem:[%s0 + $0xc] sm:$0xf]
  %v86 = vld [vmem:[%s0 + $0x10] sm:$0xf]
  %v87 = vld [vmem:[%s0 + $0x14] sm:$0xf]
  %v88 = vld [vmem:[%s0 + $0x18] sm:$0xf]
  %v89 = vld [vmem:[%s0 + $0x1c] sm:$0xf]
  %v90 = vld [vmem:[%s0 + $0x20] sm:$0xf]
  %v91 = vld [vmem:[%s0 + $0x24] sm:$0xf]
  %v92 = vld [vmem:[%s0 + $0x28] sm:$0xf]
  %v93 = vld [vmem:[%s0 + $0x2c] sm:$0xf]
  %v94 = vld [vmem:[%s0 + $0x30] sm:$0xf]
  %v95 = vld [vmem:[%s0 + $0x34] sm:$0xf]
  %v96 = vld [vmem:[%s0 + $0x38] sm:$0xf]
  %v97 = vld [vmem:[%s0 + $0x3c] sm:$0xf]
  %v98 = vld [vmem:[%s0 + $0x40] sm:$0xf]
  %v99 = vld [vmem:[%s0 + $0x44] sm:$0xf]
  %v100 = vld [vmem:[%s0 + $0x48] sm:$0xf]
  %v101 = vld [vmem:[%s0 + $0x4c] sm:$0xf]
  %v102 = vld [vmem:[%s0 + $0x50] sm:$0xf]
  %v103 = vld [vmem:[%s0 + $0x54] sm:$0xf]
  %v104 = vld [vmem:[%s0 + $0x58] sm:$0xf]
  %v105 = vld [vmem:[%s0 + $0x5c] sm:$0xf]
  %v106 = vld [vmem:[%s0 + $0x60] sm:$0xf]
  %v107 = vld [vmem:[%s0 + $0x64] sm:$0xf]
  %v108 = vld [vmem:[%s0 + $0x68] sm:$0xf]
  %v109 = vld [vmem:[%s0 + $0x6c] sm:$0xf]
  %v110 = vld [vmem:[%s0 + $0x70] sm:$0xf]
  %v111 = vld [vmem:[%s0 + $0x74] sm:$0xf]
  %v112 = vld [vmem:[%s0 + $0x78] sm:$0xf]
  %v113 = vld [vmem:[%s0 + $0x7c] sm:$0xf]
  %v114 = vld [vmem:[%s0 + $0x80] sm:$0xf]
  %v115 = vld [vmem:[%s0 + $0x84] sm:$0xf]
  %v116 = vld [vmem:[%s0 + $0x88] sm:$0xf]
  %v117 = vld [vmem:[%s0 + $0x8c] sm:$0xf]
  %v118 = vld [vmem:[%s0 + $0x90] sm:$0xf]
  %v119 = vld [vmem:[%s0 + $0x94] sm:$0xf]
  %v120 = vld [vmem:[%s0 + $0x98] sm:$0xf]
  %v121 = vld [vmem:[%s0 + $0x9c] sm:$0xf]
  %v122 = vld [vmem:[%s0 + $0xa0] sm:$0xf]
  %v123 = vld [vmem:[%s0 + $0xa4] sm:$0xf]
  %v124 = vld [vmem:[%s0 + $0xa8] sm:$0xf]
  %v125 = vld [vmem:[%s0 + $0xac] sm:$0xf]
  %v126 = vld [vmem:[%s0 + $0xb0] sm:$0xf]
  %v127 = vld [vmem:[%s0 + $0xb4] sm:$0xf]
  %v128 = vld [vmem:[%s0 + $0xb8] sm:$0xf]
  %v129 = vld [vmem:[%s0 + $0xbc] sm:$0xf]
  %v130 = vld [vmem:[%s0 + $0xc0] sm:$0xf]
  %v131 = vld [vmem:[%s0 + $0xc4] sm:$0xf]
  %v132 = vld [vmem:[%s0 + $0xc8] sm:$0xf]
  %v133 = vld [vmem:[%s0 + $0xcc] sm:$0xf]
  %v134 = vld [vmem:[%s0 + $0xd0] sm:$0xf]
  %v135 = vld [vmem:[%s0 + $0xd4] sm:$0xf]
  %v136 = vld [vmem:[%s0 + $0xd8] sm:$0xf]
  %v137 = vld [vmem:[%s0 + $0xdc] sm:$0xf]
  %v138 = vld [vmem:[%s0 + $0xe0] sm:$0xf]
  %v139 = vld [vmem:[%s0 + $0xe4] sm:$0xf]
  %v140 = vld [vmem:[%s0 + $0xe8] sm:$0xf]
  %v141 = vld [vmem:[%s0 + $0xec] sm:$0xf]
  %v142 = vld [vmem:[%s0 + $0xf0] sm:$0xf]
  %v143 = vld [vmem:[%s0 + $0xf4] sm:$0xf]
  %v144 = vld [vmem:[%s0 + $0xf8] sm:$0xf]
  %v145 = vld [vmem:[%s0 + $0xfc] sm:$0xf]
  %v146 = vld [vmem:[#allocation2] sm:$0xff]
  %v147 = vld [vmem:[#allocation2 + $0x8] sm:$0xff]
  %v148 = vld [vmem:[#allocation2 + $0x10] sm:$0xff]
  %v149 = vld [vmem:[#allocation2 + $0x18] sm:$0xff]
  %v150 = vld [vmem:[#allocation2 + $0x20] sm:$0xff]
  %v151 = vld [vmem:[#allocation2 + $0x28] sm:$0xff]
  %v152 = vld [vmem:[#allocation2 + $0x30] sm:$0xff]
  %v153 = vld [vmem:[#allocation2 + $0x38] sm:$0xff]
  %v154 = vld [vmem:[#allocation2 + $0x40] sm:$0xff]
  %v155 = vld [vmem:[#allocation2 + $0x48] sm:$0xff]
  %v156 = vld [vmem:[#allocation2 + $0x50] sm:$0xff]
  %v157 = vld [vmem:[#allocation2 + $0x58] sm:$0xff]
  %v158 = vld [vmem:[#allocation2 + $0x60] sm:$0xff]
  %v159 = vld [vmem:[#allocation2 + $0x68] sm:$0xff]
  %v160 = vld [vmem:[#allocation2 + $0x70] sm:$0xff]
  %v161 = vld [vmem:[#allocation2 + $0x78] sm:$0xff]
  %v162 = vld [vmem:[#allocation2 + $0x80] sm:$0xff]
  %v163 = vld [vmem:[#allocation2 + $0x88] sm:$0xff]
  %v164 = vld [vmem:[#allocation2 + $0x90] sm:$0xff]
  %v165 = vld [vmem:[#allocation2 + $0x98] sm:$0xff]
  %v166 = vld [vmem:[#allocation2 + $0xa0] sm:$0xff]
  %v167 = vld [vmem:[#allocation2 + $0xa8] sm:$0xff]
  %v168 = vld [vmem:[#allocation2 + $0xb0] sm:$0xff]
  %v169 = vld [vmem:[#allocation2 + $0xb8] sm:$0xff]
  %v170 = vld [vmem:[#allocation2 + $0xc0] sm:$0xff]
  %v171 = vld [vmem:[#allocation2 + $0xc8] sm:$0xff]
  %v172 = vld [vmem:[#allocation2 + $0xd0] sm:$0xff]
  %v173 = vld [vmem:[#allocation2 + $0xd8] sm:$0xff]
  %v174 = vld [vmem:[#allocation2 + $0xe0] sm:$0xff]
  %v175 = vld [vmem:[#allocation2 + $0xe8] sm:$0xff]
  %v176 = vld [vmem:[#allocation2 + $0xf0] sm:$0xff]
  %v177 = vld [vmem:[#allocation2 + $0xf8] sm:$0xff]
  %v178 = vld [vmem:[#allocation2 + $0x100] sm:$0xff]
  %v179 = vld [vmem:[#allocation2 + $0x108] sm:$0xff]
  %v180 = vld [vmem:[#allocation2 + $0x110] sm:$0xff]
  %v181 = vld [vmem:[#allocation2 + $0x118] sm:$0xff]
  %v182 = vld [vmem:[#allocation2 + $0x120] sm:$0xff]
  %v183 = vld [vmem:[#allocation2 + $0x128] sm:$0xff]
  %v184 = vld [vmem:[#allocation2 + $0x130] sm:$0xff]
  %v185 = vld [vmem:[#allocation2 + $0x138] sm:$0xff]
  %v186 = vld [vmem:[#allocation2 + $0x140] sm:$0xff]
  %v187 = vld [vmem:[#allocation2 + $0x148] sm:$0xff]
  %v188 = vld [vmem:[#allocation2 + $0x150] sm:$0xff]
  %v189 = vld [vmem:[#allocation2 + $0x158] sm:$0xff]
  %v190 = vld [vmem:[#allocation2 + $0x160] sm:$0xff]
  %v191 = vld [vmem:[#allocation2 + $0x168] sm:$0xff]
  %v192 = vld [vmem:[#allocation2 + $0x170] sm:$0xff]
  %v193 = vld [vmem:[#allocation2 + $0x178] sm:$0xff]
  %v194 = vld [vmem:[#allocation2 + $0x180] sm:$0xff]
  %v195 = vld [vmem:[#allocation2 + $0x188] sm:$0xff]
  %v196 = vld [vmem:[#allocation2 + $0x190] sm:$0xff]
  %v197 = vld [vmem:[#allocation2 + $0x198] sm:$0xff]
  %v198 = vld [vmem:[#allocation2 + $0x1a0] sm:$0xff]
  %v199 = vld [vmem:[#allocation2 + $0x1a8] sm:$0xff]
  %v200 = vld [vmem:[#allocation2 + $0x1b0] sm:$0xff]
  %v201 = vld [vmem:[#allocation2 + $0x1b8] sm:$0xff]
  %v202 = vld [vmem:[#allocation2 + $0x1c0] sm:$0xff]
  %v203 = vld [vmem:[#allocation2 + $0x1c8] sm:$0xff]
  %v204 = vld [vmem:[#allocation2 + $0x1d0] sm:$0xff]
  %v205 = vld [vmem:[#allocation2 + $0x1d8] sm:$0xff]
  %v206 = vld [vmem:[#allocation2 + $0x1e0] sm:$0xff]
  %v207 = vld [vmem:[#allocation2 + $0x1e8] sm:$0xff]
  %v208 = vld [vmem:[#allocation2 + $0x1f0] sm:$0xff]
  %v209 = vld [vmem:[#allocation2 + $0x1f8] sm:$0xff]
  %v210 = vld [vmem:[%s1] sm:$0xf]
  %v211 = vld [vmem:[%s1 + $0x4] sm:$0xf]
  %v212 = vld [vmem:[%s1 + $0x8] sm:$0xf]
  %v213 = vld [vmem:[%s1 + $0xc] sm:$0xf]
  %v214 = vld [vmem:[%s1 + $0x10] sm:$0xf]
  %v215 = vld [vmem:[%s1 + $0x14] sm:$0xf]
  %v216 = vld [vmem:[%s1 + $0x18] sm:$0xf]
  %v217 = vld [vmem:[%s1 + $0x1c] sm:$0xf]
  %v218 = vld [vmem:[%s1 + $0x20] sm:$0xf]
  %v219 = vld [vmem:[%s1 + $0x24] sm:$0xf]
  %v220 = vld [vmem:[%s1 + $0x28] sm:$0xf]
  %v221 = vld [vmem:[%s1 + $0x2c] sm:$0xf]
  %v222 = vld [vmem:[%s1 + $0x30] sm:$0xf]
  %v223 = vld [vmem:[%s1 + $0x34] sm:$0xf]
  %v224 = vld [vmem:[%s1 + $0x38] sm:$0xf]
  %v225 = vld [vmem:[%s1 + $0x3c] sm:$0xf]
  %v290 = vunpack.c.l.b16 %v82
  %v291 = vunpack.c.l.b16 %v83
  %v292 = vunpack.c.l.b16 %v84
  %v293 = vunpack.c.l.b16 %v85
  %v294 = vunpack.c.l.b16 %v86
  %v295 = vunpack.c.l.b16 %v87
  %v296 = vunpack.c.l.b16 %v88
  %v297 = vunpack.c.l.b16 %v89
  %v298 = vunpack.c.l.b16 %v90
  %v299 = vunpack.c.l.b16 %v91
  %v300 = vunpack.c.l.b16 %v92
  %v301 = vunpack.c.l.b16 %v93
  %v302 = vunpack.c.l.b16 %v94
  %v303 = vunpack.c.l.b16 %v95
  %v304 = vunpack.c.l.b16 %v96
  %v305 = vunpack.c.l.b16 %v97
  %v306 = vunpack.c.l.b16 %v98
  %v307 = vunpack.c.l.b16 %v99
  %v308 = vunpack.c.l.b16 %v100
  %v309 = vunpack.c.l.b16 %v101
  %v310 = vunpack.c.l.b16 %v102
  %v311 = vunpack.c.l.b16 %v103
  %v312 = vunpack.c.l.b16 %v104
  %v313 = vunpack.c.l.b16 %v105
  %v314 = vunpack.c.l.b16 %v106
  %v315 = vunpack.c.l.b16 %v107
  %v316 = vunpack.c.l.b16 %v108
  %v317 = vunpack.c.l.b16 %v109
  %v318 = vunpack.c.l.b16 %v110
  %v319 = vunpack.c.l.b16 %v111
  %v320 = vunpack.c.l.b16 %v112
  %v321 = vunpack.c.l.b16 %v113
  %v322 = vunpack.c.l.b16 %v114
  %v323 = vunpack.c.l.b16 %v115
  %v324 = vunpack.c.l.b16 %v116
  %v325 = vunpack.c.l.b16 %v117
  %v326 = vunpack.c.l.b16 %v118
  %v327 = vunpack.c.l.b16 %v119
  %v328 = vunpack.c.l.b16 %v120
  %v329 = vunpack.c.l.b16 %v121
  %v330 = vunpack.c.l.b16 %v122
  %v331 = vunpack.c.l.b16 %v123
  %v332 = vunpack.c.l.b16 %v124
  %v333 = vunpack.c.l.b16 %v125
  %v334 = vunpack.c.l.b16 %v126
  %v335 = vunpack.c.l.b16 %v127
  %v336 = vunpack.c.l.b16 %v128
  %v337 = vunpack.c.l.b16 %v129
  %v338 = vunpack.c.l.b16 %v130
  %v339 = vunpack.c.l.b16 %v131
  %v340 = vunpack.c.l.b16 %v132
  %v341 = vunpack.c.l.b16 %v133
  %v342 = vunpack.c.l.b16 %v134
  %v343 = vunpack.c.l.b16 %v135
  %v344 = vunpack.c.l.b16 %v136
  %v345 = vunpack.c.l.b16 %v137
  %v346 = vunpack.c.l.b16 %v138
  %v347 = vunpack.c.l.b16 %v139
  %v348 = vunpack.c.l.b16 %v140
  %v349 = vunpack.c.l.b16 %v141
  %v350 = vunpack.c.l.b16 %v142
  %v351 = vunpack.c.l.b16 %v143
  %v352 = vunpack.c.l.b16 %v144
  %v353 = vunpack.c.l.b16 %v145
  %v354 = vpack.c.b16 %v291, %v290
  %v355 = vpack.c.b16 %v293, %v292
  %v356 = vpack.c.b16 %v295, %v294
  %v357 = vpack.c.b16 %v297, %v296
  %v358 = vpack.c.b16 %v299, %v298
  %v359 = vpack.c.b16 %v301, %v300
  %v360 = vpack.c.b16 %v303, %v302
  %v361 = vpack.c.b16 %v305, %v304
  %v362 = vpack.c.b16 %v307, %v306
  %v363 = vpack.c.b16 %v309, %v308
  %v364 = vpack.c.b16 %v311, %v310
  %v365 = vpack.c.b16 %v313, %v312
  %v366 = vpack.c.b16 %v315, %v314
  %v367 = vpack.c.b16 %v317, %v316
  %v368 = vpack.c.b16 %v319, %v318
  %v369 = vpack.c.b16 %v321, %v320
  %v370 = vpack.c.b16 %v323, %v322
  %v371 = vpack.c.b16 %v325, %v324
  %v372 = vpack.c.b16 %v327, %v326
  %v373 = vpack.c.b16 %v329, %v328
  %v374 = vpack.c.b16 %v331, %v330
  %v375 = vpack.c.b16 %v333, %v332
  %v376 = vpack.c.b16 %v335, %v334
  %v377 = vpack.c.b16 %v337, %v336
  %v378 = vpack.c.b16 %v339, %v338
  %v379 = vpack.c.b16 %v341, %v340
  %v380 = vpack.c.b16 %v343, %v342
  %v381 = vpack.c.b16 %v345, %v344
  %v382 = vpack.c.b16 %v347, %v346
  %v383 = vpack.c.b16 %v349, %v348
  %v384 = vpack.c.b16 %v351, %v350
  %v385 = vpack.c.b16 %v353, %v352
  %v434 = vunpack.c.l.b16 %v210
  %v435 = vunpack.c.l.b16 %v211
  %v436 = vunpack.c.l.b16 %v212
  %v437 = vunpack.c.l.b16 %v213
  %v438 = vunpack.c.l.b16 %v214
  %v439 = vunpack.c.l.b16 %v215
  %v440 = vunpack.c.l.b16 %v216
  %v441 = vunpack.c.l.b16 %v217
  %v442 = vunpack.c.l.b16 %v218
  %v443 = vunpack.c.l.b16 %v219
  %v444 = vunpack.c.l.b16 %v220
  %v445 = vunpack.c.l.b16 %v221
  %v446 = vunpack.c.l.b16 %v222
  %v447 = vunpack.c.l.b16 %v223
  %v448 = vunpack.c.l.b16 %v224
  %v449 = vunpack.c.l.b16 %v225
  %v450 = vpack.c.b16 %v435, %v434
  %v451 = vpack.c.b16 %v437, %v436
  %v452 = vpack.c.b16 %v439, %v438
  %v453 = vpack.c.b16 %v441, %v440
  %v454 = vpack.c.b16 %v443, %v442
  %v455 = vpack.c.b16 %v445, %v444
  %v456 = vpack.c.b16 %v447, %v446
  %v457 = vpack.c.b16 %v449, %v448
  %466 = vmatpush.bf16.msra.mxu0 %v457
  %467 = vmatpush.bf16.msra.mxu0 %v456
  %468 = vmatpush.bf16.msra.mxu0 %v455
  %469 = vmatpush.bf16.msra.mxu0 %v454
  %470 = vmatpush.bf16.msra.mxu0 %v453
  %471 = vmatpush.bf16.msra.mxu0 %v452
  %472 = vmatpush.bf16.msra.mxu0 %v451
  %473 = vmatpush.bf16.msra.mxu0 %v450
  %474 = vmatmul.bf16.gmra.mxu0 %v354
  %v475 = vpop.f32.mrf.mxu0
  %v476 = vadd.f32 0.0, %v475
  %v477 = vpop.f32.mrf.mxu0
  %v478 = vadd.f32 0.0, %v477
  %479 = vmatmul.bf16.gmra.mxu0 %v355
  %v480 = vpop.f32.mrf.mxu0
  %v481 = vadd.f32 0.0, %v480
  %v482 = vpop.f32.mrf.mxu0
  %v483 = vadd.f32 0.0, %v482
  %484 = vmatmul.bf16.gmra.mxu0 %v356
  %v485 = vpop.f32.mrf.mxu0
  %v486 = vadd.f32 0.0, %v485
  %v487 = vpop.f32.mrf.mxu0
  %v488 = vadd.f32 0.0, %v487
  %489 = vmatmul.bf16.gmra.mxu0 %v357
  %v490 = vpop.f32.mrf.mxu0
  %v491 = vadd.f32 0.0, %v490
  %v492 = vpop.f32.mrf.mxu0
  %v493 = vadd.f32 0.0, %v492
  %494 = vmatmul.bf16.gmra.mxu0 %v358
  %v495 = vpop.f32.mrf.mxu0
  %v496 = vadd.f32 0.0, %v495
  %v497 = vpop.f32.mrf.mxu0
  %v498 = vadd.f32 0.0, %v497
  %499 = vmatmul.bf16.gmra.mxu0 %v359
  %v500 = vpop.f32.mrf.mxu0
  %v501 = vadd.f32 0.0, %v500
  %v502 = vpop.f32.mrf.mxu0
  %v503 = vadd.f32 0.0, %v502
  %504 = vmatmul.bf16.gmra.mxu0 %v360
  %v505 = vpop.f32.mrf.mxu0
  %v506 = vadd.f32 0.0, %v505
  %v507 = vpop.f32.mrf.mxu0
  %v508 = vadd.f32 0.0, %v507
  %509 = vmatmul.bf16.gmra.mxu0 %v361
  %v510 = vpop.f32.mrf.mxu0
  %v511 = vadd.f32 0.0, %v510
  %v512 = vpop.f32.mrf.mxu0
  %v513 = vadd.f32 0.0, %v512
  %514 = vmatmul.bf16.gmra.mxu0 %v362
  %v515 = vpop.f32.mrf.mxu0
  %v516 = vadd.f32 0.0, %v515
  %v517 = vpop.f32.mrf.mxu0
  %v518 = vadd.f32 0.0, %v517
  %519 = vmatmul.bf16.gmra.mxu0 %v363
  %v520 = vpop.f32.mrf.mxu0
  %v521 = vadd.f32 0.0, %v520
  %v522 = vpop.f32.mrf.mxu0
  %v523 = vadd.f32 0.0, %v522
  %524 = vmatmul.bf16.gmra.mxu0 %v364
  %v525 = vpop.f32.mrf.mxu0
  %v526 = vadd.f32 0.0, %v525
  %v527 = vpop.f32.mrf.mxu0
  %v528 = vadd.f32 0.0, %v527
  %529 = vmatmul.bf16.gmra.mxu0 %v365
  %v530 = vpop.f32.mrf.mxu0
  %v531 = vadd.f32 0.0, %v530
  %v532 = vpop.f32.mrf.mxu0
  %v533 = vadd.f32 0.0, %v532
  %534 = vmatmul.bf16.gmra.mxu0 %v366
  %v535 = vpop.f32.mrf.mxu0
  %v536 = vadd.f32 0.0, %v535
  %v537 = vpop.f32.mrf.mxu0
  %v538 = vadd.f32 0.0, %v537
  %539 = vmatmul.bf16.gmra.mxu0 %v367
  %v540 = vpop.f32.mrf.mxu0
  %v541 = vadd.f32 0.0, %v540
  %v542 = vpop.f32.mrf.mxu0
  %v543 = vadd.f32 0.0, %v542
  %544 = vmatmul.bf16.gmra.mxu0 %v368
  %v545 = vpop.f32.mrf.mxu0
  %v546 = vadd.f32 0.0, %v545
  %v547 = vpop.f32.mrf.mxu0
  %v548 = vadd.f32 0.0, %v547
  %549 = vmatmul.bf16.gmra.mxu0 %v369
  %v550 = vpop.f32.mrf.mxu0
  %v551 = vadd.f32 0.0, %v550
  %v552 = vpop.f32.mrf.mxu0
  %v553 = vadd.f32 0.0, %v552
  %554 = vmatmul.bf16.gmra.mxu0 %v370
  %v555 = vpop.f32.mrf.mxu0
  %v556 = vadd.f32 0.0, %v555
  %v557 = vpop.f32.mrf.mxu0
  %v558 = vadd.f32 0.0, %v557
  %559 = vmatmul.bf16.gmra.mxu0 %v371
  %v560 = vpop.f32.mrf.mxu0
  %v561 = vadd.f32 0.0, %v560
  %v562 = vpop.f32.mrf.mxu0
  %v563 = vadd.f32 0.0, %v562
  %564 = vmatmul.bf16.gmra.mxu0 %v372
  %v565 = vpop.f32.mrf.mxu0
  %v566 = vadd.f32 0.0, %v565
  %v567 = vpop.f32.mrf.mxu0
  %v568 = vadd.f32 0.0, %v567
  %569 = vmatmul.bf16.gmra.mxu0 %v373
  %v570 = vpop.f32.mrf.mxu0
  %v571 = vadd.f32 0.0, %v570
  %v572 = vpop.f32.mrf.mxu0
  %v573 = vadd.f32 0.0, %v572
  %574 = vmatmul.bf16.gmra.mxu0 %v374
  %v575 = vpop.f32.mrf.mxu0
  %v576 = vadd.f32 0.0, %v575
  %v577 = vpop.f32.mrf.mxu0
  %v578 = vadd.f32 0.0, %v577
  %579 = vmatmul.bf16.gmra.mxu0 %v375
  %v580 = vpop.f32.mrf.mxu0
  %v581 = vadd.f32 0.0, %v580
  %v582 = vpop.f32.mrf.mxu0
  %v583 = vadd.f32 0.0, %v582
  %584 = vmatmul.bf16.gmra.mxu0 %v376
  %v585 = vpop.f32.mrf.mxu0
  %v586 = vadd.f32 0.0, %v585
  %v587 = vpop.f32.mrf.mxu0
  %v588 = vadd.f32 0.0, %v587
  %589 = vmatmul.bf16.gmra.mxu0 %v377
  %v590 = vpop.f32.mrf.mxu0
  %v591 = vadd.f32 0.0, %v590
  %v592 = vpop.f32.mrf.mxu0
  %v593 = vadd.f32 0.0, %v592
  %594 = vmatmul.bf16.gmra.mxu0 %v378
  %v595 = vpop.f32.mrf.mxu0
  %v596 = vadd.f32 0.0, %v595
  %v597 = vpop.f32.mrf.mxu0
  %v598 = vadd.f32 0.0, %v597
  %599 = vmatmul.bf16.gmra.mxu0 %v379
  %v600 = vpop.f32.mrf.mxu0
  %v601 = vadd.f32 0.0, %v600
  %v602 = vpop.f32.mrf.mxu0
  %v603 = vadd.f32 0.0, %v602
  %604 = vmatmul.bf16.gmra.mxu0 %v380
  %v605 = vpop.f32.mrf.mxu0
  %v606 = vadd.f32 0.0, %v605
  %v607 = vpop.f32.mrf.mxu0
  %v608 = vadd.f32 0.0, %v607
  %609 = vmatmul.bf16.gmra.mxu0 %v381
  %v610 = vpop.f32.mrf.mxu0
  %v611 = vadd.f32 0.0, %v610
  %v612 = vpop.f32.mrf.mxu0
  %v613 = vadd.f32 0.0, %v612
  %614 = vmatmul.bf16.gmra.mxu0 %v382
  %v615 = vpop.f32.mrf.mxu0
  %v616 = vadd.f32 0.0, %v615
  %v617 = vpop.f32.mrf.mxu0
  %v618 = vadd.f32 0.0, %v617
  %619 = vmatmul.bf16.gmra.mxu0 %v383
  %v620 = vpop.f32.mrf.mxu0
  %v621 = vadd.f32 0.0, %v620
  %v622 = vpop.f32.mrf.mxu0
  %v623 = vadd.f32 0.0, %v622
  %624 = vmatmul.bf16.gmra.mxu0 %v384
  %v625 = vpop.f32.mrf.mxu0
  %v626 = vadd.f32 0.0, %v625
  %v627 = vpop.f32.mrf.mxu0
  %v628 = vadd.f32 0.0, %v627
  %629 = vmatmul.bf16.gmra.mxu0 %v385
  %v630 = vpop.f32.mrf.mxu0
  %v631 = vadd.f32 0.0, %v630
  %v632 = vpop.f32.mrf.mxu0
  %v633 = vadd.f32 0.0, %v632
  %634 = vdwg.mxu0
  %v635 = vadd.f32 %v146, %v476
  %v636 = vadd.f32 %v147, %v478
  %v637 = vadd.f32 %v148, %v481
  %v638 = vadd.f32 %v149, %v483
  %v639 = vadd.f32 %v150, %v486
  %v640 = vadd.f32 %v151, %v488
  %v641 = vadd.f32 %v152, %v491
  %v642 = vadd.f32 %v153, %v493
  %v643 = vadd.f32 %v154, %v496
  %v644 = vadd.f32 %v155, %v498
  %v645 = vadd.f32 %v156, %v501
  %v646 = vadd.f32 %v157, %v503
  %v647 = vadd.f32 %v158, %v506
  %v648 = vadd.f32 %v159, %v508
  %v649 = vadd.f32 %v160, %v511
  %v650 = vadd.f32 %v161, %v513
  %v651 = vadd.f32 %v162, %v516
  %v652 = vadd.f32 %v163, %v518
  %v653 = vadd.f32 %v164, %v521
  %v654 = vadd.f32 %v165, %v523
  %v655 = vadd.f32 %v166, %v526
  %v656 = vadd.f32 %v167, %v528
  %v657 = vadd.f32 %v168, %v531
  %v658 = vadd.f32 %v169, %v533
  %v659 = vadd.f32 %v170, %v536
  %v660 = vadd.f32 %v171, %v538
  %v661 = vadd.f32 %v172, %v541
  %v662 = vadd.f32 %v173, %v543
  %v663 = vadd.f32 %v174, %v546
  %v664 = vadd.f32 %v175, %v548
  %v665 = vadd.f32 %v176, %v551
  %v666 = vadd.f32 %v177, %v553
  %v667 = vadd.f32 %v178, %v556
  %v668 = vadd.f32 %v179, %v558
  %v669 = vadd.f32 %v180, %v561
  %v670 = vadd.f32 %v181, %v563
  %v671 = vadd.f32 %v182, %v566
  %v672 = vadd.f32 %v183, %v568
  %v673 = vadd.f32 %v184, %v571
  %v674 = vadd.f32 %v185, %v573
  %v675 = vadd.f32 %v186, %v576
  %v676 = vadd.f32 %v187, %v578
  %v677 = vadd.f32 %v188, %v581
  %v678 = vadd.f32 %v189, %v583
  %v679 = vadd.f32 %v190, %v586
  %v680 = vadd.f32 %v191, %v588
  %v681 = vadd.f32 %v192, %v591
  %v682 = vadd.f32 %v193, %v593
  %v683 = vadd.f32 %v194, %v596
  %v684 = vadd.f32 %v195, %v598
  %v685 = vadd.f32 %v196, %v601
  %v686 = vadd.f32 %v197, %v603
  %v687 = vadd.f32 %v198, %v606
  %v688 = vadd.f32 %v199, %v608
  %v689 = vadd.f32 %v200, %v611
  %v690 = vadd.f32 %v201, %v613
  %v691 = vadd.f32 %v202, %v616
  %v692 = vadd.f32 %v203, %v618
  %v693 = vadd.f32 %v204, %v621
  %v694 = vadd.f32 %v205, %v623
  %v695 = vadd.f32 %v206, %v626
  %v696 = vadd.f32 %v207, %v628
  %v697 = vadd.f32 %v208, %v631
  %v698 = vadd.f32 %v209, %v633
  %699 = vst [vmem:[#allocation2] sm:$0xff] %v635
  %700 = vst [vmem:[#allocation2 + $0x8] sm:$0xff] %v636
  %701 = vst [vmem:[#allocation2 + $0x10] sm:$0xff] %v637
  %702 = vst [vmem:[#allocation2 + $0x18] sm:$0xff] %v638
  %703 = vst [vmem:[#allocation2 + $0x20] sm:$0xff] %v639
  %704 = vst [vmem:[#allocation2 + $0x28] sm:$0xff] %v640
  %705 = vst [vmem:[#allocation2 + $0x30] sm:$0xff] %v641
  %706 = vst [vmem:[#allocation2 + $0x38] sm:$0xff] %v642
  %707 = vst [vmem:[#allocation2 + $0x40] sm:$0xff] %v643
  %708 = vst [vmem:[#allocation2 + $0x48] sm:$0xff] %v644
  %709 = vst [vmem:[#allocation2 + $0x50] sm:$0xff] %v645
  %710 = vst [vmem:[#allocation2 + $0x58] sm:$0xff] %v646
  %711 = vst [vmem:[#allocation2 + $0x60] sm:$0xff] %v647
  %712 = vst [vmem:[#allocation2 + $0x68] sm:$0xff] %v648
  %713 = vst [vmem:[#allocation2 + $0x70] sm:$0xff] %v649
  %714 = vst [vmem:[#allocation2 + $0x78] sm:$0xff] %v650
  %715 = vst [vmem:[#allocation2 + $0x80] sm:$0xff] %v651
  %716 = vst [vmem:[#allocation2 + $0x88] sm:$0xff] %v652
  %717 = vst [vmem:[#allocation2 + $0x90] sm:$0xff] %v653
  %718 = vst [vmem:[#allocation2 + $0x98] sm:$0xff] %v654
  %719 = vst [vmem:[#allocation2 + $0xa0] sm:$0xff] %v655
  %720 = vst [vmem:[#allocation2 + $0xa8] sm:$0xff] %v656
  %721 = vst [vmem:[#allocation2 + $0xb0] sm:$0xff] %v657
  %722 = vst [vmem:[#allocation2 + $0xb8] sm:$0xff] %v658
  %723 = vst [vmem:[#allocation2 + $0xc0] sm:$0xff] %v659
  %724 = vst [vmem:[#allocation2 + $0xc8] sm:$0xff] %v660
  %725 = vst [vmem:[#allocation2 + $0xd0] sm:$0xff] %v661
  %726 = vst [vmem:[#allocation2 + $0xd8] sm:$0xff] %v662
  %727 = vst [vmem:[#allocation2 + $0xe0] sm:$0xff] %v663
  %728 = vst [vmem:[#allocation2 + $0xe8] sm:$0xff] %v664
  %729 = vst [vmem:[#allocation2 + $0xf0] sm:$0xff] %v665
  %730 = vst [vmem:[#allocation2 + $0xf8] sm:$0xff] %v666
  %731 = vst [vmem:[#allocation2 + $0x100] sm:$0xff] %v667
  %732 = vst [vmem:[#allocation2 + $0x108] sm:$0xff] %v668
  %733 = vst [vmem:[#allocation2 + $0x110] sm:$0xff] %v669
  %734 = vst [vmem:[#allocation2 + $0x118] sm:$0xff] %v670
  %735 = vst [vmem:[#allocation2 + $0x120] sm:$0xff] %v671
  %736 = vst [vmem:[#allocation2 + $0x128] sm:$0xff] %v672
  %737 = vst [vmem:[#allocation2 + $0x130] sm:$0xff] %v673
  %738 = vst [vmem:[#allocation2 + $0x138] sm:$0xff] %v674
  %739 = vst [vmem:[#allocation2 + $0x140] sm:$0xff] %v675
  %740 = vst [vmem:[#allocation2 + $0x148] sm:$0xff] %v676
  %741 = vst [vmem:[#allocation2 + $0x150] sm:$0xff] %v677
  %742 = vst [vmem:[#allocation2 + $0x158] sm:$0xff] %v678
  %743 = vst [vmem:[#allocation2 + $0x160] sm:$0xff] %v679
  %744 = vst [vmem:[#allocation2 + $0x168] sm:$0xff] %v680
  %745 = vst [vmem:[#allocation2 + $0x170] sm:$0xff] %v681
  %746 = vst [vmem:[#allocation2 + $0x178] sm:$0xff] %v682
  %747 = vst [vmem:[#allocation2 + $0x180] sm:$0xff] %v683
  %748 = vst [vmem:[#allocation2 + $0x188] sm:$0xff] %v684
  %749 = vst [vmem:[#allocation2 + $0x190] sm:$0xff] %v685
  %750 = vst [vmem:[#allocation2 + $0x198] sm:$0xff] %v686
  %751 = vst [vmem:[#allocation2 + $0x1a0] sm:$0xff] %v687
  %752 = vst [vmem:[#allocation2 + $0x1a8] sm:$0xff] %v688
  %753 = vst [vmem:[#allocation2 + $0x1b0] sm:$0xff] %v689
  %754 = vst [vmem:[#allocation2 + $0x1b8] sm:$0xff] %v690
  %755 = vst [vmem:[#allocation2 + $0x1c0] sm:$0xff] %v691
  %756 = vst [vmem:[#allocation2 + $0x1c8] sm:$0xff] %v692
  %757 = vst [vmem:[#allocation2 + $0x1d0] sm:$0xff] %v693
  %758 = vst [vmem:[#allocation2 + $0x1d8] sm:$0xff] %v694
  %759 = vst [vmem:[#allocation2 + $0x1e0] sm:$0xff] %v695
  %760 = vst [vmem:[#allocation2 + $0x1e8] sm:$0xff] %v696
  %761 = vst [vmem:[#allocation2 + $0x1f0] sm:$0xff] %v697
  %762 = vst [vmem:[#allocation2 + $0x1f8] sm:$0xff] %v698
  // Predicated region
  $region18: #{_lambda_.17} parent=0 // pred_check
    %p763 = pneg %p14
  $region19: #{_lambda_.17} parent=0 // pred_check_branch
    %765 = sbr.rel (%p763) target = $region21
  $region20: #{_lambda_.17} parent=0 // pred_region
    %v766 = vld [vmem:[#allocation2] sm:$0xff]
    %v767 = vld [vmem:[#allocation2 + $0x8] sm:$0xff]
    %v768 = vld [vmem:[#allocation2 + $0x10] sm:$0xff]
    %v769 = vld [vmem:[#allocation2 + $0x18] sm:$0xff]
    %v770 = vld [vmem:[#allocation2 + $0x20] sm:$0xff]
    %v771 = vld [vmem:[#allocation2 + $0x28] sm:$0xff]
    %v772 = vld [vmem:[#allocation2 + $0x30] sm:$0xff]
    %v773 = vld [vmem:[#allocation2 + $0x38] sm:$0xff]
    %v774 = vld [vmem:[#allocation2 + $0x40] sm:$0xff]
    %v775 = vld [vmem:[#allocation2 + $0x48] sm:$0xff]
    %v776 = vld [vmem:[#allocation2 + $0x50] sm:$0xff]
    %v777 = vld [vmem:[#allocation2 + $0x58] sm:$0xff]
    %v778 = vld [vmem:[#allocation2 + $0x60] sm:$0xff]
    %v779 = vld [vmem:[#allocation2 + $0x68] sm:$0xff]
    %v780 = vld [vmem:[#allocation2 + $0x70] sm:$0xff]
    %v781 = vld [vmem:[#allocation2 + $0x78] sm:$0xff]
    %v782 = vld [vmem:[#allocation2 + $0x80] sm:$0xff]
    %v783 = vld [vmem:[#allocation2 + $0x88] sm:$0xff]
    %v784 = vld [vmem:[#allocation2 + $0x90] sm:$0xff]
    %v785 = vld [vmem:[#allocation2 + $0x98] sm:$0xff]
    %v786 = vld [vmem:[#allocation2 + $0xa0] sm:$0xff]
    %v787 = vld [vmem:[#allocation2 + $0xa8] sm:$0xff]
    %v788 = vld [vmem:[#allocation2 + $0xb0] sm:$0xff]
    %v789 = vld [vmem:[#allocation2 + $0xb8] sm:$0xff]
    %v790 = vld [vmem:[#allocation2 + $0xc0] sm:$0xff]
    %v791 = vld [vmem:[#allocation2 + $0xc8] sm:$0xff]
    %v792 = vld [vmem:[#allocation2 + $0xd0] sm:$0xff]
    %v793 = vld [vmem:[#allocation2 + $0xd8] sm:$0xff]
    %v794 = vld [vmem:[#allocation2 + $0xe0] sm:$0xff]
    %v795 = vld [vmem:[#allocation2 + $0xe8] sm:$0xff]
    %v796 = vld [vmem:[#allocation2 + $0xf0] sm:$0xff]
    %v797 = vld [vmem:[#allocation2 + $0xf8] sm:$0xff]
    %v798 = vld [vmem:[#allocation2 + $0x100] sm:$0xff]
    %v799 = vld [vmem:[#allocation2 + $0x108] sm:$0xff]
    %v800 = vld [vmem:[#allocation2 + $0x110] sm:$0xff]
    %v801 = vld [vmem:[#allocation2 + $0x118] sm:$0xff]
    %v802 = vld [vmem:[#allocation2 + $0x120] sm:$0xff]
    %v803 = vld [vmem:[#allocation2 + $0x128] sm:$0xff]
    %v804 = vld [vmem:[#allocation2 + $0x130] sm:$0xff]
    %v805 = vld [vmem:[#allocation2 + $0x138] sm:$0xff]
    %v806 = vld [vmem:[#allocation2 + $0x140] sm:$0xff]
    %v807 = vld [vmem:[#allocation2 + $0x148] sm:$0xff]
    %v808 = vld [vmem:[#allocation2 + $0x150] sm:$0xff]
    %v809 = vld [vmem:[#allocation2 + $0x158] sm:$0xff]
    %v810 = vld [vmem:[#allocation2 + $0x160] sm:$0xff]
    %v811 = vld [vmem:[#allocation2 + $0x168] sm:$0xff]
    %v812 = vld [vmem:[#allocation2 + $0x170] sm:$0xff]
    %v813 = vld [vmem:[#allocation2 + $0x178] sm:$0xff]
    %v814 = vld [vmem:[#allocation2 + $0x180] sm:$0xff]
    %v815 = vld [vmem:[#allocation2 + $0x188] sm:$0xff]
    %v816 = vld [vmem:[#allocation2 + $0x190] sm:$0xff]
    %v817 = vld [vmem:[#allocation2 + $0x198] sm:$0xff]
    %v818 = vld [vmem:[#allocation2 + $0x1a0] sm:$0xff]
    %v819 = vld [vmem:[#allocation2 + $0x1a8] sm:$0xff]
    %v820 = vld [vmem:[#allocation2 + $0x1b0] sm:$0xff]
    %v821 = vld [vmem:[#allocation2 + $0x1b8] sm:$0xff]
    %v822 = vld [vmem:[#allocation2 + $0x1c0] sm:$0xff]
    %v823 = vld [vmem:[#allocation2 + $0x1c8] sm:$0xff]
    %v824 = vld [vmem:[#allocation2 + $0x1d0] sm:$0xff]
    %v825 = vld [vmem:[#allocation2 + $0x1d8] sm:$0xff]
    %v826 = vld [vmem:[#allocation2 + $0x1e0] sm:$0xff]
    %v827 = vld [vmem:[#allocation2 + $0x1e8] sm:$0xff]
    %v828 = vld [vmem:[#allocation2 + $0x1f0] sm:$0xff]
    %v829 = vld [vmem:[#allocation2 + $0x1f8] sm:$0xff]
    %v830 = vld [vmem:[%s2] sm:$0x1]
    %v832 = vperm.slane %v830, 0
    %v834 = vadd.f32 %v766, %v832
    %v835 = vadd.f32 %v767, %v832
    %v836 = vadd.f32 %v768, %v832
    %v837 = vadd.f32 %v769, %v832
    %v838 = vadd.f32 %v770, %v832
    %v839 = vadd.f32 %v771, %v832
    %v840 = vadd.f32 %v772, %v832
    %v841 = vadd.f32 %v773, %v832
    %v842 = vadd.f32 %v774, %v832
    %v843 = vadd.f32 %v775, %v832
    %v844 = vadd.f32 %v776, %v832
    %v845 = vadd.f32 %v777, %v832
    %v846 = vadd.f32 %v778, %v832
    %v847 = vadd.f32 %v779, %v832
    %v848 = vadd.f32 %v780, %v832
    %v849 = vadd.f32 %v781, %v832
    %v850 = vadd.f32 %v782, %v832
    %v851 = vadd.f32 %v783, %v832
    %v852 = vadd.f32 %v784, %v832
    %v853 = vadd.f32 %v785, %v832
    %v854 = vadd.f32 %v786, %v832
    %v855 = vadd.f32 %v787, %v832
    %v856 = vadd.f32 %v788, %v832
    %v857 = vadd.f32 %v789, %v832
    %v858 = vadd.f32 %v790, %v832
    %v859 = vadd.f32 %v791, %v832
    %v860 = vadd.f32 %v792, %v832
    %v861 = vadd.f32 %v793, %v832
    %v862 = vadd.f32 %v794, %v832
    %v863 = vadd.f32 %v795, %v832
    %v864 = vadd.f32 %v796, %v832
    %v865 = vadd.f32 %v797, %v832
    %v866 = vadd.f32 %v798, %v832
    %v867 = vadd.f32 %v799, %v832
    %v868 = vadd.f32 %v800, %v832
    %v869 = vadd.f32 %v801, %v832
    %v870 = vadd.f32 %v802, %v832
    %v871 = vadd.f32 %v803, %v832
    %v872 = vadd.f32 %v804, %v832
    %v873 = vadd.f32 %v805, %v832
    %v874 = vadd.f32 %v806, %v832
    %v875 = vadd.f32 %v807, %v832
    %v876 = vadd.f32 %v808, %v832
    %v877 = vadd.f32 %v809, %v832
    %v878 = vadd.f32 %v810, %v832
    %v879 = vadd.f32 %v811, %v832
    %v880 = vadd.f32 %v812, %v832
    %v881 = vadd.f32 %v813, %v832
    %v882 = vadd.f32 %v814, %v832
    %v883 = vadd.f32 %v815, %v832
    %v884 = vadd.f32 %v816, %v832
    %v885 = vadd.f32 %v817, %v832
    %v886 = vadd.f32 %v818, %v832
    %v887 = vadd.f32 %v819, %v832
    %v888 = vadd.f32 %v820, %v832
    %v889 = vadd.f32 %v821, %v832
    %v890 = vadd.f32 %v822, %v832
    %v891 = vadd.f32 %v823, %v832
    %v892 = vadd.f32 %v824, %v832
    %v893 = vadd.f32 %v825, %v832
    %v894 = vadd.f32 %v826, %v832
    %v895 = vadd.f32 %v827, %v832
    %v896 = vadd.f32 %v828, %v832
    %v897 = vadd.f32 %v829, %v832
    %v898 = vpack.c.bf16 %v834, %v834
    %v899 = vpack.c.bf16 %v835, %v835
    %v900 = vpack.c.bf16 %v836, %v836
    %v901 = vpack.c.bf16 %v837, %v837
    %v902 = vpack.c.bf16 %v838, %v838
    %v903 = vpack.c.bf16 %v839, %v839
    %v904 = vpack.c.bf16 %v840, %v840
    %v905 = vpack.c.bf16 %v841, %v841
    %v906 = vpack.c.bf16 %v842, %v842
    %v907 = vpack.c.bf16 %v843, %v843
    %v908 = vpack.c.bf16 %v844, %v844
    %v909 = vpack.c.bf16 %v845, %v845
    %v910 = vpack.c.bf16 %v846, %v846
    %v911 = vpack.c.bf16 %v847, %v847
    %v912 = vpack.c.bf16 %v848, %v848
    %v913 = vpack.c.bf16 %v849, %v849
    %v914 = vpack.c.bf16 %v850, %v850
    %v915 = vpack.c.bf16 %v851, %v851
    %v916 = vpack.c.bf16 %v852, %v852
    %v917 = vpack.c.bf16 %v853, %v853
    %v918 = vpack.c.bf16 %v854, %v854
    %v919 = vpack.c.bf16 %v855, %v855
    %v920 = vpack.c.bf16 %v856, %v856
    %v921 = vpack.c.bf16 %v857, %v857
    %v922 = vpack.c.bf16 %v858, %v858
    %v923 = vpack.c.bf16 %v859, %v859
    %v924 = vpack.c.bf16 %v860, %v860
    %v925 = vpack.c.bf16 %v861, %v861
    %v926 = vpack.c.bf16 %v862, %v862
    %v927 = vpack.c.bf16 %v863, %v863
    %v928 = vpack.c.bf16 %v864, %v864
    %v929 = vpack.c.bf16 %v865, %v865
    %v930 = vpack.c.bf16 %v866, %v866
    %v931 = vpack.c.bf16 %v867, %v867
    %v932 = vpack.c.bf16 %v868, %v868
    %v933 = vpack.c.bf16 %v869, %v869
    %v934 = vpack.c.bf16 %v870, %v870
    %v935 = vpack.c.bf16 %v871, %v871
    %v936 = vpack.c.bf16 %v872, %v872
    %v937 = vpack.c.bf16 %v873, %v873
    %v938 = vpack.c.bf16 %v874, %v874
    %v939 = vpack.c.bf16 %v875, %v875
    %v940 = vpack.c.bf16 %v876, %v876
    %v941 = vpack.c.bf16 %v877, %v877
    %v942 = vpack.c.bf16 %v878, %v878
    %v943 = vpack.c.bf16 %v879, %v879
    %v944 = vpack.c.bf16 %v880, %v880
    %v945 = vpack.c.bf16 %v881, %v881
    %v946 = vpack.c.bf16 %v882, %v882
    %v947 = vpack.c.bf16 %v883, %v883
    %v948 = vpack.c.bf16 %v884, %v884
    %v949 = vpack.c.bf16 %v885, %v885
    %v950 = vpack.c.bf16 %v886, %v886
    %v951 = vpack.c.bf16 %v887, %v887
    %v952 = vpack.c.bf16 %v888, %v888
    %v953 = vpack.c.bf16 %v889, %v889
    %v954 = vpack.c.bf16 %v890, %v890
    %v955 = vpack.c.bf16 %v891, %v891
    %v956 = vpack.c.bf16 %v892, %v892
    %v957 = vpack.c.bf16 %v893, %v893
    %v958 = vpack.c.bf16 %v894, %v894
    %v959 = vpack.c.bf16 %v895, %v895
    %v960 = vpack.c.bf16 %v896, %v896
    %v961 = vpack.c.bf16 %v897, %v897
    %962 = vst [vmem:[%s3] sm:$0xf] %v898
    %963 = vst [vmem:[%s3 + $0x4] sm:$0xf] %v899
    %964 = vst [vmem:[%s3 + $0x8] sm:$0xf] %v900
    %965 = vst [vmem:[%s3 + $0xc] sm:$0xf] %v901
    %966 = vst [vmem:[%s3 + $0x10] sm:$0xf] %v902
    %967 = vst [vmem:[%s3 + $0x14] sm:$0xf] %v903
    %968 = vst [vmem:[%s3 + $0x18] sm:$0xf] %v904
    %969 = vst [vmem:[%s3 + $0x1c] sm:$0xf] %v905
    %970 = vst [vmem:[%s3 + $0x20] sm:$0xf] %v906
    %971 = vst [vmem:[%s3 + $0x24] sm:$0xf] %v907
    %972 = vst [vmem:[%s3 + $0x28] sm:$0xf] %v908
    %973 = vst [vmem:[%s3 + $0x2c] sm:$0xf] %v909
    %974 = vst [vmem:[%s3 + $0x30] sm:$0xf] %v910
    %975 = vst [vmem:[%s3 + $0x34] sm:$0xf] %v911
    %976 = vst [vmem:[%s3 + $0x38] sm:$0xf] %v912
    %977 = vst [vmem:[%s3 + $0x3c] sm:$0xf] %v913
    %978 = vst [vmem:[%s3 + $0x40] sm:$0xf] %v914
    %979 = vst [vmem:[%s3 + $0x44] sm:$0xf] %v915
    %980 = vst [vmem:[%s3 + $0x48] sm:$0xf] %v916
    %981 = vst [vmem:[%s3 + $0x4c] sm:$0xf] %v917
    %982 = vst [vmem:[%s3 + $0x50] sm:$0xf] %v918
    %983 = vst [vmem:[%s3 + $0x54] sm:$0xf] %v919
    %984 = vst [vmem:[%s3 + $0x58] sm:$0xf] %v920
    %985 = vst [vmem:[%s3 + $0x5c] sm:$0xf] %v921
    %986 = vst [vmem:[%s3 + $0x60] sm:$0xf] %v922
    %987 = vst [vmem:[%s3 + $0x64] sm:$0xf] %v923
    %988 = vst [vmem:[%s3 + $0x68] sm:$0xf] %v924
    %989 = vst [vmem:[%s3 + $0x6c] sm:$0xf] %v925
    %990 = vst [vmem:[%s3 + $0x70] sm:$0xf] %v926
    %991 = vst [vmem:[%s3 + $0x74] sm:$0xf] %v927
    %992 = vst [vmem:[%s3 + $0x78] sm:$0xf] %v928
    %993 = vst [vmem:[%s3 + $0x7c] sm:$0xf] %v929
    %994 = vst [vmem:[%s3 + $0x80] sm:$0xf] %v930
    %995 = vst [vmem:[%s3 + $0x84] sm:$0xf] %v931
    %996 = vst [vmem:[%s3 + $0x88] sm:$0xf] %v932
    %997 = vst [vmem:[%s3 + $0x8c] sm:$0xf] %v933
    %998 = vst [vmem:[%s3 + $0x90] sm:$0xf] %v934
    %999 = vst [vmem:[%s3 + $0x94] sm:$0xf] %v935
    %1000 = vst [vmem:[%s3 + $0x98] sm:$0xf] %v936
    %1001 = vst [vmem:[%s3 + $0x9c] sm:$0xf] %v937
    %1002 = vst [vmem:[%s3 + $0xa0] sm:$0xf] %v938
    %1003 = vst [vmem:[%s3 + $0xa4] sm:$0xf] %v939
    %1004 = vst [vmem:[%s3 + $0xa8] sm:$0xf] %v940
    %1005 = vst [vmem:[%s3 + $0xac] sm:$0xf] %v941
    %1006 = vst [vmem:[%s3 + $0xb0] sm:$0xf] %v942
    %1007 = vst [vmem:[%s3 + $0xb4] sm:$0xf] %v943
    %1008 = vst [vmem:[%s3 + $0xb8] sm:$0xf] %v944
    %1009 = vst [vmem:[%s3 + $0xbc] sm:$0xf] %v945
    %1010 = vst [vmem:[%s3 + $0xc0] sm:$0xf] %v946
    %1011 = vst [vmem:[%s3 + $0xc4] sm:$0xf] %v947
    %1012 = vst [vmem:[%s3 + $0xc8] sm:$0xf] %v948
    %1013 = vst [vmem:[%s3 + $0xcc] sm:$0xf] %v949
    %1014 = vst [vmem:[%s3 + $0xd0] sm:$0xf] %v950
    %1015 = vst [vmem:[%s3 + $0xd4] sm:$0xf] %v951
    %1016 = vst [vmem:[%s3 + $0xd8] sm:$0xf] %v952
    %1017 = vst [vmem:[%s3 + $0xdc] sm:$0xf] %v953
    %1018 = vst [vmem:[%s3 + $0xe0] sm:$0xf] %v954
    %1019 = vst [vmem:[%s3 + $0xe4] sm:$0xf] %v955
    %1020 = vst [vmem:[%s3 + $0xe8] sm:$0xf] %v956
    %1021 = vst [vmem:[%s3 + $0xec] sm:$0xf] %v957
    %1022 = vst [vmem:[%s3 + $0xf0] sm:$0xf] %v958
    %1023 = vst [vmem:[%s3 + $0xf4] sm:$0xf] %v959
    %1024 = vst [vmem:[%s3 + $0xf8] sm:$0xf] %v960
    %1025 = vst [vmem:[%s3 + $0xfc] sm:$0xf] %v961
  $region21: #{_lambda_.17} parent=0 // pred_fallthru
    _
  // Predicated region
  $region22: #{_lambda_.17} parent=0 // pred_check
    _
  $region23: #{_lambda_.17} parent=0 // pred_check_branch
    %1027 = sbr.rel (0) target = $region25
  $region24: #{_lambda_.17} parent=0 // pred_region
    _
  $region25: #{_lambda_.17} parent=0 // pred_fallthru
    _
  // Predicated region
  $region26: #{_lambda_.17} parent=0 // pred_check
    _
  $region27: #{_lambda_.17} parent=0 // pred_check_branch
    %1029 = sbr.rel (0) target = $region29
  $region28: #{_lambda_.17} parent=0 // pred_region
    _
  $region29: #{_lambda_.17} parent=0 // pred_fallthru
    _

// kernel: _lambda_.19
$region0: #{_lambda_.19}
  #allocation0 [shape = 'u32[]', space=smem, size = 0x4, offset = 0x4, fixed_abs, tag = 'smem constant byte address 0x4 - core index']
  #allocation1 [shape = 'u32[72,128]{1,0:T(1,128)}', space=vmem, size = 0x9000, scoped, tag = 'internal scratch']
  %s0 = inlined_call_operand.vmem [shape: bf16[16,128], index: 0, kind: input, shape index: {}]
  %s1 = inlined_call_operand.vmem [shape: f32[1,128], index: 1, kind: input, shape index: {}]
  %s2 = inlined_call_operand.vmem [shape: f32[1,128], index: 2, kind: input, shape index: {}]
  %s3 = inlined_call_operand.vmem [shape: bf16[16,128], index: 3, kind: output, shape index: {}]
  %s4 = sld [smem:[#allocation0]]
  $region22: #{_lambda_.19} parent=0
    _
  %s6 = ssub.s32 1, %s4
  %s7 = scalar_select 0, %s6, %s4
  // Predicated region
  $region2: #{_lambda_.19} parent=0 // pred_check
    _
  $region3: #{_lambda_.19} parent=0 // pred_check_branch
    %9 = sbr.rel (0) target = $region5
  $region4: #{_lambda_.19} parent=0 // pred_region
    _
  $region5: #{_lambda_.19} parent=0 // pred_fallthru
    _
  // Predicated region
  $region6: #{_lambda_.19} parent=0 // pred_check
    _
  $region7: #{_lambda_.19} parent=0 // pred_check_branch
    %11 = sbr.rel (0) target = $region9
  $region8: #{_lambda_.19} parent=0 // pred_region
    _
  $region9: #{_lambda_.19} parent=0 // pred_fallthru
    _
  // Predicated region
  $region10: #{_lambda_.19} parent=0 // pred_check
    _
  $region11: #{_lambda_.19} parent=0 // pred_check_branch
    %13 = sbr.rel (0) target = $region13
  $region12: #{_lambda_.19} parent=0 // pred_region
    _
  $region13: #{_lambda_.19} parent=0 // pred_fallthru
    _
  %v14 = vld [vmem:[%s0] sm:$0xf]
  %v15 = vld [vmem:[%s0 + $0x4] sm:$0xf]
  %v16 = vunpack.c.l.bf16 %v14
  %v17 = vunpack.c.l.bf16 %v15
  %v18 = vld [vmem:[%s1] sm:$0x1]
  %v20 = vperm.slane %v18, 0
  %v22 = vmul.f32 %v16, %v20
  %v23 = vmul.f32 %v17, %v20
  %v24 = vld [vmem:[%s2] sm:$0x1]
  %v26 = vperm.slane %v24, 0
  %v28 = vadd.f32 %v22, %v26
  %v29 = vadd.f32 %v23, %v26
  %v30 = vpack.c.bf16 %v28, %v28
  %v31 = vpack.c.bf16 %v29, %v29
  %32 = vst [vmem:[%s3] sm:$0xf] %v30
  %33 = vst [vmem:[%s3 + $0x4] sm:$0xf] %v31
  // Predicated region
  $region14: #{_lambda_.19} parent=0 // pred_check
    _
  $region15: #{_lambda_.19} parent=0 // pred_check_branch
    %35 = sbr.rel (0) target = $region17
  $region16: #{_lambda_.19} parent=0 // pred_region
    _
  $region17: #{_lambda_.19} parent=0 // pred_fallthru
    _
  // Predicated region
  $region18: #{_lambda_.19} parent=0 // pred_check
    _
  $region19: #{_lambda_.19} parent=0 // pred_check_branch
    %37 = sbr.rel (0) target = $region21
  $region20: #{_lambda_.19} parent=0 // pred_region
    _
  $region21: #{_lambda_.19} parent=0 // pred_fallthru
    _

// kernel: squeeze.25
$region0: #{squeeze.25}
  %s0 = inlined_call_operand.vmem [shape: bf16[1,32,32], index: 0, kind: input, shape index: {}]
  %s1 = inlined_call_operand.vmem [shape: bf16[8,128], index: 1, kind: output, shape index: {}]
  $region1: #{squeeze.25} parent=0
    #allocation0 [shape = 'u8[4096]{0}', space=vmem, size = 0x1000, scoped, tag = 'scoped mem for output reshape']
    #allocation1 [shape = 'u8[16384]{0}', space=vmem, size = 0x4000, scoped, tag = 'scoped mem for input reshape']
    %s3 = ssub.s32 256, 1
    %s4 = scalar_lea.vmem %s0, 12
    %s5 = sshrl.u32 %s3, 1
    %s6 = sor.u32 %s3, %s5
    %s7 = sand.u32 %s6, 85
    %s8 = sshrl.u32 %s7, 1
    %s9 = sor.u32 %s7, %s8
    %s10 = sand.u32 51, %s9
    %s11 = sshrl.u32 %s10, 2
    %s12 = sor.u32 %s10, %s11
    %s13 = sand.u32 15, %s12
    %v14 = vld [vmem:[%s4] sm:%s13]
    %v15 = vunpack.c.l.bf16 %v14
    %v16 = vunpack.c.h.bf16 %v14
    %s17 = scalar_lea.vmem [#allocation1], 24
    %18 = vst [vmem:[%s17] sm:%s3] %v15
    %s19 = scalar_lea.vmem %s0, 8
    %s20 = sshrl.u32 %s3, 1
    %s21 = sor.u32 %s3, %s20
    %s22 = sand.u32 %s21, 85
    %s23 = sshrl.u32 %s22, 1
    %s24 = sor.u32 %s22, %s23
    %s25 = sand.u32 51, %s24
    %s26 = sshrl.u32 %s25, 2
    %s27 = sor.u32 %s25, %s26
    %s28 = sand.u32 15, %s27
    %v29 = vld [vmem:[%s19] sm:%s28]
    %v30 = vunpack.c.l.bf16 %v29
    %v31 = vunpack.c.h.bf16 %v29
    %s32 = scalar_lea.vmem [#allocation1], 16
    %33 = vst [vmem:[%s32] sm:%s3] %v30
    %s34 = scalar_lea.vmem %s0, 4
    %s35 = sshrl.u32 %s3, 1
    %s36 = sor.u32 %s3, %s35
    %s37 = sand.u32 %s36, 85
    %s38 = sshrl.u32 %s37, 1
    %s39 = sor.u32 %s37, %s38
    %s40 = sand.u32 51, %s39
    %s41 = sshrl.u32 %s40, 2
    %s42 = sor.u32 %s40, %s41
    %s43 = sand.u32 15, %s42
    %v44 = vld [vmem:[%s34] sm:%s43]
    %v45 = vunpack.c.l.bf16 %v44
    %v46 = vunpack.c.h.bf16 %v44
    %s47 = scalar_lea.vmem [#allocation1], 8
    %48 = vst [vmem:[%s47] sm:%s3] %v45
    %s49 = sshrl.u32 %s3, 1
    %s50 = sor.u32 %s3, %s49
    %s51 = sand.u32 %s50, 85
    %s52 = sshrl.u32 %s51, 1
    %s53 = sor.u32 %s51, %s52
    %s54 = sand.u32 51, %s53
    %s55 = sshrl.u32 %s54, 2
    %s56 = sor.u32 %s54, %s55
    %s57 = sand.u32 15, %s56
    %v58 = vld [vmem:[%s0] sm:%s57]
    %v59 = vunpack.c.l.bf16 %v58
    %v60 = vunpack.c.h.bf16 %v58
    %61 = vst [vmem:[#allocation1] sm:%s3] %v59
    %v62 = vld [vmem:[#allocation1] ss:$4 sm:$0xff]
    %vm63 = vcmask 261120
    %64 = vst.msk [vmem:[#allocation0] sm:$0xff] %vm63, %v62
    %s65 = scalar_lea.vmem [#allocation1], 3
    %v66 = vld [vmem:[%s65] ss:$4 sm:$0xff]
    %67 = vrot.lane.b32.xlu0 %v66, 96
    %v68 = vpop.permute.xlu0 %67
    %vm69 = vcmask 1048320
    %70 = vst.msk [vmem:[#allocation0] sm:$0xff] %vm69, %v68
    %s71 = scalar_lea.vmem [#allocation1], 2
    %v72 = vld [vmem:[%s71] ss:$4 sm:$0xff]
    %73 = vrot.lane.b32.xlu0 %v72, 64
    %v74 = vpop.permute.xlu0 %73
    %vm75 = vcmask 785920
    %76 = vst.msk [vmem:[#allocation0] sm:$0xff] %vm75, %v74
    %s77 = scalar_lea.vmem [#allocation1], 1
    %v78 = vld [vmem:[%s77] ss:$4 sm:$0xff]
    %79 = vrot.lane.b32.xlu0 %v78, 32
    %v80 = vpop.permute.xlu0 %79
    %vm81 = vcmask 523520
    %82 = vst.msk [vmem:[#allocation0] sm:$0xff] %vm81, %v80
    %s84 = ssub.s32 256, 1
    %v85 = vld [vmem:[#allocation0] sm:%s84]
    %v86 = vpack.c.bf16 0.0, %v85
    %s88 = ssub.s32 16, 1
    %89 = vst [vmem:[%s1] sm:%s88] %v86

// kernel: tile.83
$region0: #{tile.83}
  #allocation0 [shape = 's32[1]{0}', space=sflag, size = 0x4, scoped, tag = 'scoped memory for tile.83']
  %s0 = inlined_call_operand.vmem [shape: f32[32], index: 0, kind: input, shape index: {}]
  %s1 = inlined_call_operand.vmem [shape: f32[4,32], index: 1, kind: output, shape index: {}]
  // Predicated region
  $region2: #{tile.83} parent=0 // pred_check
    _
  $region3: #{tile.83} parent=0 // pred_check_branch
    %3 = sbr.rel (0) target = $region5
  $region4: #{tile.83} parent=0 // pred_region
    _
  $region5: #{tile.83} parent=0 // pred_fallthru
    _
  %v4 = vld [vmem:[%s0] ss:$0 sm:$0xff]
  %5 = vst [vmem:[%s1] sm:$0xf] %v4

// kernel: tile.84
$region0: #{tile.84}
  %s0 = inlined_call_operand.vmem [shape: f32[4,32], index: 0, kind: input, shape index: {}]
  %s1 = inlined_call_operand.vmem [shape: f32[1,128], index: 1, kind: output, shape index: {}]
  $region1: #{tile.84} parent=0
    #allocation0 [shape = 'u8[4096]{0}', space=vmem, size = 0x1000, scoped, tag = 'scoped mem for output reshape']
    #allocation1 [shape = 'u8[4096]{0}', space=vmem, size = 0x1000, scoped, tag = 'scoped mem for input reshape']
    %s3 = ssub.s32 16, 1
    %v4 = vld [vmem:[%s0] sm:%s3]
    %5 = vst [vmem:[#allocation1] sm:%s3] %v4
    %v6 = vld [vmem:[#allocation1] sm:$0x1]
    %vm7 = vcmask 261120
    %8 = vst.msk [vmem:[#allocation0] sm:$0x1] %vm7, %v6
    %s9 = scalar_lea.vmem [#allocation1], 3
    %v10 = vld [vmem:[%s9] sm:$0x1]
    %11 = vrot.lane.b32.xlu0 %v10, 96
    %v12 = vpop.permute.xlu0 %11
    %vm13 = vcmask 1048320
    %14 = vst.msk [vmem:[#allocation0] sm:$0x1] %vm13, %v12
    %s15 = scalar_lea.vmem [#allocation1], 2
    %v16 = vld [vmem:[%s15] sm:$0x1]
    %17 = vrot.lane.b32.xlu0 %v16, 64
    %v18 = vpop.permute.xlu0 %17
    %vm19 = vcmask 785920
    %20 = vst.msk [vmem:[#allocation0] sm:$0x1] %vm19, %v18
    %s21 = scalar_lea.vmem [#allocation1], 1
    %v22 = vld [vmem:[%s21] sm:$0x1]
    %23 = vrot.lane.b32.xlu0 %v22, 32
    %v24 = vpop.permute.xlu0 %23
    %vm25 = vcmask 523520
    %26 = vst.msk [vmem:[#allocation0] sm:$0x1] %vm25, %v24
    %s28 = ssub.s32 2, 1
    %v29 = vld [vmem:[#allocation0] sm:%s28]
    %s31 = ssub.s32 2, 1
    %32 = vst [vmem:[%s1] sm:%s31] %v29

// kernel: _lambda_.20
$region0: #{_lambda_.20}
  #allocation0 [shape = 'u32[]', space=smem, size = 0x4, offset = 0x4, fixed_abs, tag = 'smem constant byte address 0x4 - core index']
  #allocation1 [shape = 'u32[72,128]{1,0:T(1,128)}', space=vmem, size = 0x9000, scoped, tag = 'internal scratch']
  #allocation2 [shape = 'f32[32,128]{1,0:T(8,128)}', space=vmem, size = 0x4000, scoped, tag = 'scratch operand']
  %s0 = inlined_call_operand.vmem [shape: bf16[1,32,256], index: 0, kind: input, shape index: {}]
  %s1 = inlined_call_operand.vmem [shape: bf16[1,256,128], index: 1, kind: input, shape index: {}]
  %s2 = inlined_call_operand.vmem [shape: f32[1,1,128], index: 2, kind: input, shape index: {}]
  %s3 = inlined_call_operand.vmem [shape: bf16[1,32,128], index: 3, kind: output, shape index: {0}]
  %s4 = inlined_call_operand.vmem [shape: f32[1,1,8,128], index: 4, kind: output, shape index: {1}]
  %5 = xla_tuple %s3, %s4
  %s6 = sld [smem:[#allocation0]]
  $region38: #{_lambda_.20} parent=0
    _
  %s8 = ssub.s32 1, %s6
  %s9 = scalar_select 0, %s8, %s6
  // Predicated region
  $region2: #{_lambda_.20} parent=0 // pred_check
    _
  $region3: #{_lambda_.20} parent=0 // pred_check_branch
    %11 = sbr.rel (0) target = $region5
  $region4: #{_lambda_.20} parent=0 // pred_region
    _
  $region5: #{_lambda_.20} parent=0 // pred_fallthru
    _
  // Predicated region
  $region6: #{_lambda_.20} parent=0 // pred_check
    _
  $region7: #{_lambda_.20} parent=0 // pred_check_branch
    %13 = sbr.rel (0) target = $region9
  $region8: #{_lambda_.20} parent=0 // pred_region
    _
  $region9: #{_lambda_.20} parent=0 // pred_fallthru
    _
  // Predicated region
  $region10: #{_lambda_.20} parent=0 // pred_check
    _
  $region11: #{_lambda_.20} parent=0 // pred_check_branch
    %15 = sbr.rel (0) target = $region13
  $region12: #{_lambda_.20} parent=0 // pred_region
    _
  $region13: #{_lambda_.20} parent=0 // pred_fallthru
    _
  %p16 = scmp.eq.s32.totalorder 0, 0
  // Predicated region
  $region14: #{_lambda_.20} parent=0 // pred_check
    %p17 = pneg %p16
  $region15: #{_lambda_.20} parent=0 // pred_check_branch
    %19 = sbr.rel (%p17) target = $region17
  $region16: #{_lambda_.20} parent=0 // pred_region
    %20 = vst [vmem:[#allocation2] sm:$0xff] 0.0
    %21 = vst [vmem:[#allocation2 + $0x8] sm:$0xff] 0.0
    %22 = vst [vmem:[#allocation2 + $0x10] sm:$0xff] 0.0
    %23 = vst [vmem:[#allocation2 + $0x18] sm:$0xff] 0.0
  $region17: #{_lambda_.20} parent=0 // pred_fallthru
    _
  %v24 = vld [vmem:[%s0] sm:$0xff]
  %v25 = vld [vmem:[%s0 + $0x8] sm:$0xff]
  %v26 = vld [vmem:[%s0 + $0x10] sm:$0xff]
  %v27 = vld [vmem:[%s0 + $0x18] sm:$0xff]
  %v28 = vunpack.c.l.bf16 %v24
  %v29 = vunpack.c.h.bf16 %v24
  %v30 = vunpack.c.l.bf16 %v25
  %v31 = vunpack.c.h.bf16 %v25
  %v32 = vunpack.c.l.bf16 %v26
  %v33 = vunpack.c.h.bf16 %v26
  %v34 = vunpack.c.l.bf16 %v27
  %v35 = vunpack.c.h.bf16 %v27
  %vm36 = vcmp.ge.f32.partialorder %v28, 0.0
  %vm37 = vcmp.ge.f32.partialorder %v29, 0.0
  %vm38 = vcmp.ge.f32.partialorder %v30, 0.0
  %vm39 = vcmp.ge.f32.partialorder %v31, 0.0
  %vm40 = vcmp.ge.f32.partialorder %v32, 0.0
  %vm41 = vcmp.ge.f32.partialorder %v33, 0.0
  %vm42 = vcmp.ge.f32.partialorder %v34, 0.0
  %vm43 = vcmp.ge.f32.partialorder %v35, 0.0
  %v44 = vmul.f32 %v28, 0.20019531
  %v45 = vmul.f32 %v29, 0.20019531
  %v46 = vmul.f32 %v30, 0.20019531
  %v47 = vmul.f32 %v31, 0.20019531
  %v48 = vmul.f32 %v32, 0.20019531
  %v49 = vmul.f32 %v33, 0.20019531
  %v50 = vmul.f32 %v34, 0.20019531
  %v51 = vmul.f32 %v35, 0.20019531
  %v52 = vpack.c.bf16 %v45, %v44
  %v53 = vpack.c.bf16 %v47, %v46
  %v54 = vpack.c.bf16 %v49, %v48
  %v55 = vpack.c.bf16 %v51, %v50
  %vm56 = vmpackc.low %vm37, %vm36
  %vm57 = vmpackc.low %vm39, %vm38
  %vm58 = vmpackc.low %vm41, %vm40
  %vm59 = vmpackc.low %vm43, %vm42
  %v60 = vsel %vm56, %v24, %v52
  %v61 = vsel %vm57, %v25, %v53
  %v62 = vsel %vm58, %v26, %v54
  %v63 = vsel %vm59, %v27, %v55
  %v64 = vld [vmem:[#allocation2] sm:$0xff]
  %v65 = vld [vmem:[#allocation2 + $0x8] sm:$0xff]
  %v66 = vld [vmem:[#allocation2 + $0x10] sm:$0xff]
  %v67 = vld [vmem:[#allocation2 + $0x18] sm:$0xff]
  %v68 = vld [vmem:[%s1] sm:$0xf]
  %v69 = vld [vmem:[%s1 + $0x4] sm:$0xf]
  %v70 = vld [vmem:[%s1 + $0x8] sm:$0xf]
  %v71 = vld [vmem:[%s1 + $0xc] sm:$0xf]
  %v72 = vld [vmem:[%s1 + $0x10] sm:$0xf]
  %v73 = vld [vmem:[%s1 + $0x14] sm:$0xf]
  %v74 = vld [vmem:[%s1 + $0x18] sm:$0xf]
  %v75 = vld [vmem:[%s1 + $0x1c] sm:$0xf]
  %v76 = vld [vmem:[%s1 + $0x20] sm:$0xf]
  %v77 = vld [vmem:[%s1 + $0x24] sm:$0xf]
  %v78 = vld [vmem:[%s1 + $0x28] sm:$0xf]
  %v79 = vld [vmem:[%s1 + $0x2c] sm:$0xf]
  %v80 = vld [vmem:[%s1 + $0x30] sm:$0xf]
  %v81 = vld [vmem:[%s1 + $0x34] sm:$0xf]
  %v82 = vld [vmem:[%s1 + $0x38] sm:$0xf]
  %v83 = vld [vmem:[%s1 + $0x3c] sm:$0xf]
  %v84 = vld [vmem:[%s1 + $0x40] sm:$0xf]
  %v85 = vld [vmem:[%s1 + $0x44] sm:$0xf]
  %v86 = vld [vmem:[%s1 + $0x48] sm:$0xf]
  %v87 = vld [vmem:[%s1 + $0x4c] sm:$0xf]
  %v88 = vld [vmem:[%s1 + $0x50] sm:$0xf]
  %v89 = vld [vmem:[%s1 + $0x54] sm:$0xf]
  %v90 = vld [vmem:[%s1 + $0x58] sm:$0xf]
  %v91 = vld [vmem:[%s1 + $0x5c] sm:$0xf]
  %v92 = vld [vmem:[%s1 + $0x60] sm:$0xf]
  %v93 = vld [vmem:[%s1 + $0x64] sm:$0xf]
  %v94 = vld [vmem:[%s1 + $0x68] sm:$0xf]
  %v95 = vld [vmem:[%s1 + $0x6c] sm:$0xf]
  %v96 = vld [vmem:[%s1 + $0x70] sm:$0xf]
  %v97 = vld [vmem:[%s1 + $0x74] sm:$0xf]
  %v98 = vld [vmem:[%s1 + $0x78] sm:$0xf]
  %v99 = vld [vmem:[%s1 + $0x7c] sm:$0xf]
  %v104 = vunpack.c.l.b16 %v60
  %v105 = vunpack.c.h.b16 %v60
  %v106 = vunpack.c.l.b16 %v61
  %v107 = vunpack.c.h.b16 %v61
  %v108 = vunpack.c.l.b16 %v62
  %v109 = vunpack.c.h.b16 %v62
  %v110 = vunpack.c.l.b16 %v63
  %v111 = vunpack.c.h.b16 %v63
  %v112 = vpack.c.b16 %v106, %v104
  %v113 = vpack.c.b16 %v107, %v105
  %v114 = vpack.c.b16 %v110, %v108
  %v115 = vpack.c.b16 %v111, %v109
  %v152 = vunpack.c.l.b16 %v68
  %v153 = vunpack.c.l.b16 %v69
  %v154 = vunpack.c.l.b16 %v70
  %v155 = vunpack.c.l.b16 %v71
  %v156 = vunpack.c.l.b16 %v72
  %v157 = vunpack.c.l.b16 %v73
  %v158 = vunpack.c.l.b16 %v74
  %v159 = vunpack.c.l.b16 %v75
  %v160 = vunpack.c.l.b16 %v76
  %v161 = vunpack.c.l.b16 %v77
  %v162 = vunpack.c.l.b16 %v78
  %v163 = vunpack.c.l.b16 %v79
  %v164 = vunpack.c.l.b16 %v80
  %v165 = vunpack.c.l.b16 %v81
  %v166 = vunpack.c.l.b16 %v82
  %v167 = vunpack.c.l.b16 %v83
  %v168 = vunpack.c.l.b16 %v84
  %v169 = vunpack.c.l.b16 %v85
  %v170 = vunpack.c.l.b16 %v86
  %v171 = vunpack.c.l.b16 %v87
  %v172 = vunpack.c.l.b16 %v88
  %v173 = vunpack.c.l.b16 %v89
  %v174 = vunpack.c.l.b16 %v90
  %v175 = vunpack.c.l.b16 %v91
  %v176 = vunpack.c.l.b16 %v92
  %v177 = vunpack.c.l.b16 %v93
  %v178 = vunpack.c.l.b16 %v94
  %v179 = vunpack.c.l.b16 %v95
  %v180 = vunpack.c.l.b16 %v96
  %v181 = vunpack.c.l.b16 %v97
  %v182 = vunpack.c.l.b16 %v98
  %v183 = vunpack.c.l.b16 %v99
  %v184 = vpack.c.b16 %v153, %v152
  %v185 = vpack.c.b16 %v155, %v154
  %v186 = vpack.c.b16 %v157, %v156
  %v187 = vpack.c.b16 %v159, %v158
  %v188 = vpack.c.b16 %v161, %v160
  %v189 = vpack.c.b16 %v163, %v162
  %v190 = vpack.c.b16 %v165, %v164
  %v191 = vpack.c.b16 %v167, %v166
  %v192 = vpack.c.b16 %v169, %v168
  %v193 = vpack.c.b16 %v171, %v170
  %v194 = vpack.c.b16 %v173, %v172
  %v195 = vpack.c.b16 %v175, %v174
  %v196 = vpack.c.b16 %v177, %v176
  %v197 = vpack.c.b16 %v179, %v178
  %v198 = vpack.c.b16 %v181, %v180
  %v199 = vpack.c.b16 %v183, %v182
  %216 = vmatpush.bf16.msra.mxu0 %v191
  %217 = vmatpush.bf16.msra.mxu0 %v190
  %218 = vmatpush.bf16.msra.mxu0 %v189
  %219 = vmatpush.bf16.msra.mxu0 %v188
  %220 = vmatpush.bf16.msra.mxu0 %v187
  %221 = vmatpush.bf16.msra.mxu0 %v186
  %222 = vmatpush.bf16.msra.mxu0 %v185
  %223 = vmatpush.bf16.msra.mxu0 %v184
  %224 = vmatmul.bf16.gmra.mxu0 %v112
  %v225 = vpop.f32.mrf.mxu0
  %v226 = vadd.f32 0.0, %v225
  %v227 = vpop.f32.mrf.mxu0
  %v228 = vadd.f32 0.0, %v227
  %229 = vmatmul.bf16.gmra.mxu0 %v114
  %v230 = vpop.f32.mrf.mxu0
  %v231 = vadd.f32 0.0, %v230
  %v232 = vpop.f32.mrf.mxu0
  %v233 = vadd.f32 0.0, %v232
  %234 = vdwg.mxu0
  %235 = vmatpush.bf16.msra.mxu0 %v199
  %236 = vmatpush.bf16.msra.mxu0 %v198
  %237 = vmatpush.bf16.msra.mxu0 %v197
  %238 = vmatpush.bf16.msra.mxu0 %v196
  %239 = vmatpush.bf16.msra.mxu0 %v195
  %240 = vmatpush.bf16.msra.mxu0 %v194
  %241 = vmatpush.bf16.msra.mxu0 %v193
  %242 = vmatpush.bf16.msra.mxu0 %v192
  %243 = vmatmul.bf16.gmra.mxu0 %v113
  %v244 = vpop.f32.mrf.mxu0
  %v245 = vadd.f32 %v226, %v244
  %v246 = vpop.f32.mrf.mxu0
  %v247 = vadd.f32 %v228, %v246
  %248 = vmatmul.bf16.gmra.mxu0 %v115
  %v249 = vpop.f32.mrf.mxu0
  %v250 = vadd.f32 %v231, %v249
  %v251 = vpop.f32.mrf.mxu0
  %v252 = vadd.f32 %v233, %v251
  %253 = vdwg.mxu0
  %v254 = vadd.f32 %v64, %v245
  %v255 = vadd.f32 %v65, %v247
  %v256 = vadd.f32 %v66, %v250
  %v257 = vadd.f32 %v67, %v252
  %258 = vst [vmem:[#allocation2] sm:$0xff] %v254
  %259 = vst [vmem:[#allocation2 + $0x8] sm:$0xff] %v255
  %260 = vst [vmem:[#allocation2 + $0x10] sm:$0xff] %v256
  %261 = vst [vmem:[#allocation2 + $0x18] sm:$0xff] %v257
  // Predicated region
  $region18: #{_lambda_.20} parent=0 // pred_check
    %p262 = pneg %p16
  $region19: #{_lambda_.20} parent=0 // pred_check_branch
    %264 = sbr.rel (%p262) target = $region21
  $region20: #{_lambda_.20} parent=0 // pred_region
    %v265 = vld [vmem:[#allocation2] sm:$0xff]
    %v266 = vld [vmem:[#allocation2 + $0x8] sm:$0xff]
    %v267 = vld [vmem:[#allocation2 + $0x10] sm:$0xff]
    %v268 = vld [vmem:[#allocation2 + $0x18] sm:$0xff]
    %v269 = vld [vmem:[%s2] sm:$0x1]
    %v271 = vperm.slane %v269, 0
    %v273 = vadd.f32 %v265, %v271
    %v274 = vadd.f32 %v266, %v271
    %v275 = vadd.f32 %v267, %v271
    %v276 = vadd.f32 %v268, %v271
    %v277 = vpack.c.bf16 %v273, %v273
    %v278 = vpack.c.bf16 %v274, %v274
    %v279 = vpack.c.bf16 %v275, %v275
    %v280 = vpack.c.bf16 %v276, %v276
    %281 = vst [vmem:[%s3] sm:$0xf] %v277
    %282 = vst [vmem:[%s3 + $0x4] sm:$0xf] %v278
    %283 = vst [vmem:[%s3 + $0x8] sm:$0xf] %v279
    %284 = vst [vmem:[%s3 + $0xc] sm:$0xf] %v280
    %v285 = vadd.f32 %v273, %v274
    %v286 = vadd.f32 %v285, %v275
    %v287 = vadd.f32 %v286, %v276
    %v288 = vrot.slane %v287, 4
    %v289 = vadd.f32 %v287, %v288
    %v290 = vrot.slane %v289, 2
    %v291 = vadd.f32 %v289, %v290
    %v292 = vrot.slane %v291, 1
    %v293 = vadd.f32 %v291, %v292
    %v294 = vmul.f32 %v273, %v273
    %v295 = vmul.f32 %v274, %v274
    %v296 = vmul.f32 %v275, %v275
    %v297 = vmul.f32 %v276, %v276
    %v298 = vadd.f32 %v294, %v295
    %v299 = vadd.f32 %v298, %v296
    %v300 = vadd.f32 %v299, %v297
    %v301 = vrot.slane %v300, 4
    %v302 = vadd.f32 %v300, %v301
    %v303 = vrot.slane %v302, 2
    %v304 = vadd.f32 %v302, %v303
    %v305 = vrot.slane %v304, 1
    %v306 = vadd.f32 %v304, %v305
    %v307 = vlaneseq
    %v308 = vshrl.u32 %v307, 7
    %vm309 = vcmp.eq.s32.totalorder %v308, 0
    %vm310 = vcmp.eq.s32.totalorder %v308, 1
    %v311 = vsel %vm310, %v306, 0.0
    %v312 = vsel %vm309, %v293, %v311
    %313 = vst [vmem:[%s4] sm:$0xff] %v312
  $region21: #{_lambda_.20} parent=0 // pred_fallthru
    _
  // Predicated region
  $region22: #{_lambda_.20} parent=0 // pred_check
    _
  $region23: #{_lambda_.20} parent=0 // pred_check_branch
    %315 = sbr.rel (0) target = $region25
  $region24: #{_lambda_.20} parent=0 // pred_region
    _
  $region25: #{_lambda_.20} parent=0 // pred_fallthru
    _
  // Predicated region
  $region26: #{_lambda_.20} parent=0 // pred_check
    _
  $region27: #{_lambda_.20} parent=0 // pred_check_branch
    %317 = sbr.rel (0) target = $region29
  $region28: #{_lambda_.20} parent=0 // pred_region
    _
  $region29: #{_lambda_.20} parent=0 // pred_fallthru
    _
  // Predicated region
  $region30: #{_lambda_.20} parent=0 // pred_check
    _
  $region31: #{_lambda_.20} parent=0 // pred_check_branch
    %319 = sbr.rel (0) target = $region33
  $region32: #{_lambda_.20} parent=0 // pred_region
    _
  $region33: #{_lambda_.20} parent=0 // pred_fallthru
    _
  // Predicated region
  $region34: #{_lambda_.20} parent=0 // pred_check
    _
  $region35: #{_lambda_.20} parent=0 // pred_check_branch
    %321 = sbr.rel (0) target = $region37
  $region36: #{_lambda_.20} parent=0 // pred_region
    _
  $region37: #{_lambda_.20} parent=0 // pred_fallthru
    _

// kernel: squeeze.28
$region0: #{squeeze.28}
  %s0 = inlined_call_operand.vmem [shape: bf16[1,8,64], index: 0, kind: input, shape index: {}]
  %s1 = inlined_call_operand.vmem [shape: bf16[4,128], index: 1, kind: output, shape index: {}]
  $region1: #{squeeze.28} parent=0
    #allocation0 [shape = 'u8[4096]{0}', space=vmem, size = 0x1000, scoped, tag = 'scoped mem for output reshape']
    #allocation1 [shape = 'u8[4096]{0}', space=vmem, size = 0x1000, scoped, tag = 'scoped mem for input reshape']
    %s3 = ssub.s32 256, 1
    %s4 = sshrl.u32 %s3, 1
    %s5 = sor.u32 %s3, %s4
    %s6 = sand.u32 %s5, 85
    %s7 = sshrl.u32 %s6, 1
    %s8 = sor.u32 %s6, %s7
    %s9 = sand.u32 51, %s8
    %s10 = sshrl.u32 %s9, 2
    %s11 = sor.u32 %s9, %s10
    %s12 = sand.u32 15, %s11
    %v13 = vld [vmem:[%s0] sm:%s12]
    %v14 = vunpack.c.l.bf16 %v13
    %v15 = vunpack.c.h.bf16 %v13
    %16 = vst [vmem:[#allocation1] sm:%s3] %v14
    %v17 = vld [vmem:[#allocation1] ss:$2 sm:$0xf]
    %vm18 = vcmask 523264
    %19 = vst.msk [vmem:[#allocation0] sm:$0xf] %vm18, %v17
    %s20 = scalar_lea.vmem [#allocation1], 1
    %v21 = vld [vmem:[%s20] ss:$2 sm:$0xf]
    %22 = vrot.lane.b32.xlu0 %v21, 64
    %v23 = vpop.permute.xlu0 %22
    %vm24 = vcmask 1048064
    %25 = vst.msk [vmem:[#allocation0] sm:$0xf] %vm24, %v23
    %s27 = ssub.s32 16, 1
    %v28 = vld [vmem:[#allocation0] sm:%s27]
    %v29 = vpack.c.bf16 0.0, %v28
    %s31 = ssub.s32 4, 1
    %32 = vst [vmem:[%s1] sm:%s31] %v29

// kernel: tile.93
$region0: #{tile.93}
  #allocation0 [shape = 's32[1]{0}', space=sflag, size = 0x4, scoped, tag = 'scoped memory for tile.93']
  %s0 = inlined_call_operand.vmem [shape: f32[64], index: 0, kind: input, shape index: {}]
  %s1 = inlined_call_operand.vmem [shape: f32[2,64], index: 1, kind: output, shape index: {}]
  // Predicated region
  $region2: #{tile.93} parent=0 // pred_check
    _
  $region3: #{tile.93} parent=0 // pred_check_branch
    %3 = sbr.rel (0) target = $region5
  $region4: #{tile.93} parent=0 // pred_region
    _
  $region5: #{tile.93} parent=0 // pred_fallthru
    _
  %v4 = vld [vmem:[%s0] ss:$0 sm:$0xff]
  %5 = vst [vmem:[%s1] sm:$0x3] %v4

// kernel: tile.94
$region0: #{tile.94}
  %s0 = inlined_call_operand.vmem [shape: f32[2,64], index: 0, kind: input, shape index: {}]
  %s1 = inlined_call_operand.vmem [shape: f32[1,128], index: 1, kind: output, shape index: {}]
  $region1: #{tile.94} parent=0
    #allocation0 [shape = 'u8[4096]{0}', space=vmem, size = 0x1000, scoped, tag = 'scoped mem for output reshape']
    #allocation1 [shape = 'u8[4096]{0}', space=vmem, size = 0x1000, scoped, tag = 'scoped mem for input reshape']
    %s3 = ssub.s32 4, 1
    %v4 = vld [vmem:[%s0] sm:%s3]
    %5 = vst [vmem:[#allocation1] sm:%s3] %v4
    %v6 = vld [vmem:[#allocation1] sm:$0x1]
    %vm7 = vcmask 523264
    %8 = vst.msk [vmem:[#allocation0] sm:$0x1] %vm7, %v6
    %s9 = scalar_lea.vmem [#allocation1], 1
    %v10 = vld [vmem:[%s9] sm:$0x1]
    %11 = vrot.lane.b32.xlu0 %v10, 64
    %v12 = vpop.permute.xlu0 %11
    %vm13 = vcmask 1048064
    %14 = vst.msk [vmem:[#allocation0] sm:$0x1] %vm13, %v12
    %s16 = ssub.s32 2, 1
    %v17 = vld [vmem:[#allocation0] sm:%s16]
    %s19 = ssub.s32 2, 1
    %20 = vst [vmem:[%s1] sm:%s19] %v17

// kernel: _lambda_.22
$region0: #{_lambda_.22}
  #allocation0 [shape = 'u32[]', space=smem, size = 0x4, offset = 0x4, fixed_abs, tag = 'smem constant byte address 0x4 - core index']
  #allocation1 [shape = 'u32[72,128]{1,0:T(1,128)}', space=vmem, size = 0x9000, scoped, tag = 'internal scratch']
  #allocation2 [shape = 'f32[16,128]{1,0:T(8,128)}', space=vmem, size = 0x2000, scoped, tag = 'scratch operand']
  %s0 = inlined_call_operand.vmem [shape: bf16[1,16,512], index: 0, kind: input, shape index: {}]
  %s1 = inlined_call_operand.vmem [shape: bf16[1,512,128], index: 1, kind: input, shape index: {}]
  %s2 = inlined_call_operand.vmem [shape: f32[1,1,128], index: 2, kind: input, shape index: {}]
  %s3 = inlined_call_operand.vmem [shape: bf16[1,16,128], index: 3, kind: output, shape index: {0}]
  %s4 = inlined_call_operand.vmem [shape: f32[1,1,8,128], index: 4, kind: output, shape index: {1}]
  %5 = xla_tuple %s3, %s4
  %s6 = sld [smem:[#allocation0]]
  $region38: #{_lambda_.22} parent=0
    _
  %s8 = ssub.s32 1, %s6
  %s9 = scalar_select 0, %s8, %s6
  // Predicated region
  $region2: #{_lambda_.22} parent=0 // pred_check
    _
  $region3: #{_lambda_.22} parent=0 // pred_check_branch
    %11 = sbr.rel (0) target = $region5
  $region4: #{_lambda_.22} parent=0 // pred_region
    _
  $region5: #{_lambda_.22} parent=0 // pred_fallthru
    _
  // Predicated region
  $region6: #{_lambda_.22} parent=0 // pred_check
    _
  $region7: #{_lambda_.22} parent=0 // pred_check_branch
    %13 = sbr.rel (0) target = $region9
  $region8: #{_lambda_.22} parent=0 // pred_region
    _
  $region9: #{_lambda_.22} parent=0 // pred_fallthru
    _
  // Predicated region
  $region10: #{_lambda_.22} parent=0 // pred_check
    _
  $region11: #{_lambda_.22} parent=0 // pred_check_branch
    %15 = sbr.rel (0) target = $region13
  $region12: #{_lambda_.22} parent=0 // pred_region
    _
  $region13: #{_lambda_.22} parent=0 // pred_fallthru
    _
  %p16 = scmp.eq.s32.totalorder 0, 0
  // Predicated region
  $region14: #{_lambda_.22} parent=0 // pred_check
    %p17 = pneg %p16
  $region15: #{_lambda_.22} parent=0 // pred_check_branch
    %19 = sbr.rel (%p17) target = $region17
  $region16: #{_lambda_.22} parent=0 // pred_region
    %20 = vst [vmem:[#allocation2] sm:$0xff] 0.0
    %21 = vst [vmem:[#allocation2 + $0x8] sm:$0xff] 0.0
  $region17: #{_lambda_.22} parent=0 // pred_fallthru
    _
  %v22 = vld [vmem:[%s0] sm:$0xff]
  %v23 = vld [vmem:[%s0 + $0x8] sm:$0xff]
  %v24 = vld [vmem:[%s0 + $0x10] sm:$0xff]
  %v25 = vld [vmem:[%s0 + $0x18] sm:$0xff]
  %v26 = vunpack.c.l.bf16 %v22
  %v27 = vunpack.c.h.bf16 %v22
  %v28 = vunpack.c.l.bf16 %v23
  %v29 = vunpack.c.h.bf16 %v23
  %v30 = vunpack.c.l.bf16 %v24
  %v31 = vunpack.c.h.bf16 %v24
  %v32 = vunpack.c.l.bf16 %v25
  %v33 = vunpack.c.h.bf16 %v25
  %vm34 = vcmp.ge.f32.partialorder %v26, 0.0
  %vm35 = vcmp.ge.f32.partialorder %v27, 0.0
  %vm36 = vcmp.ge.f32.partialorder %v28, 0.0
  %vm37 = vcmp.ge.f32.partialorder %v29, 0.0
  %vm38 = vcmp.ge.f32.partialorder %v30, 0.0
  %vm39 = vcmp.ge.f32.partialorder %v31, 0.0
  %vm40 = vcmp.ge.f32.partialorder %v32, 0.0
  %vm41 = vcmp.ge.f32.partialorder %v33, 0.0
  %v42 = vmul.f32 %v26, 0.20019531
  %v43 = vmul.f32 %v27, 0.20019531
  %v44 = vmul.f32 %v28, 0.20019531
  %v45 = vmul.f32 %v29, 0.20019531
  %v46 = vmul.f32 %v30, 0.20019531
  %v47 = vmul.f32 %v31, 0.20019531
  %v48 = vmul.f32 %v32, 0.20019531
  %v49 = vmul.f32 %v33, 0.20019531
  %v50 = vpack.c.bf16 %v43, %v42
  %v51 = vpack.c.bf16 %v45, %v44
  %v52 = vpack.c.bf16 %v47, %v46
  %v53 = vpack.c.bf16 %v49, %v48
  %vm54 = vmpackc.low %vm35, %vm34
  %vm55 = vmpackc.low %vm37, %vm36
  %vm56 = vmpackc.low %vm39, %vm38
  %vm57 = vmpackc.low %vm41, %vm40
  %v58 = vsel %vm54, %v22, %v50
  %v59 = vsel %vm55, %v23, %v51
  %v60 = vsel %vm56, %v24, %v52
  %v61 = vsel %vm57, %v25, %v53
  %v62 = vld [vmem:[#allocation2] sm:$0xff]
  %v63 = vld [vmem:[#allocation2 + $0x8] sm:$0xff]
  %v64 = vld [vmem:[%s1] sm:$0xf]
  %v65 = vld [vmem:[%s1 + $0x4] sm:$0xf]
  %v66 = vld [vmem:[%s1 + $0x8] sm:$0xf]
  %v67 = vld [vmem:[%s1 + $0xc] sm:$0xf]
  %v68 = vld [vmem:[%s1 + $0x10] sm:$0xf]
  %v69 = vld [vmem:[%s1 + $0x14] sm:$0xf]
  %v70 = vld [vmem:[%s1 + $0x18] sm:$0xf]
  %v71 = vld [vmem:[%s1 + $0x1c] sm:$0xf]
  %v72 = vld [vmem:[%s1 + $0x20] sm:$0xf]
  %v73 = vld [vmem:[%s1 + $0x24] sm:$0xf]
  %v74 = vld [vmem:[%s1 + $0x28] sm:$0xf]
  %v75 = vld [vmem:[%s1 + $0x2c] sm:$0xf]
  %v76 = vld [vmem:[%s1 + $0x30] sm:$0xf]
  %v77 = vld [vmem:[%s1 + $0x34] sm:$0xf]
  %v78 = vld [vmem:[%s1 + $0x38] sm:$0xf]
  %v79 = vld [vmem:[%s1 + $0x3c] sm:$0xf]
  %v80 = vld [vmem:[%s1 + $0x40] sm:$0xf]
  %v81 = vld [vmem:[%s1 + $0x44] sm:$0xf]
  %v82 = vld [vmem:[%s1 + $0x48] sm:$0xf]
  %v83 = vld [vmem:[%s1 + $0x4c] sm:$0xf]
  %v84 = vld [vmem:[%s1 + $0x50] sm:$0xf]
  %v85 = vld [vmem:[%s1 + $0x54] sm:$0xf]
  %v86 = vld [vmem:[%s1 + $0x58] sm:$0xf]
  %v87 = vld [vmem:[%s1 + $0x5c] sm:$0xf]
  %v88 = vld [vmem:[%s1 + $0x60] sm:$0xf]
  %v89 = vld [vmem:[%s1 + $0x64] sm:$0xf]
  %v90 = vld [vmem:[%s1 + $0x68] sm:$0xf]
  %v91 = vld [vmem:[%s1 + $0x6c] sm:$0xf]
  %v92 = vld [vmem:[%s1 + $0x70] sm:$0xf]
  %v93 = vld [vmem:[%s1 + $0x74] sm:$0xf]
  %v94 = vld [vmem:[%s1 + $0x78] sm:$0xf]
  %v95 = vld [vmem:[%s1 + $0x7c] sm:$0xf]
  %v96 = vld [vmem:[%s1 + $0x80] sm:$0xf]
  %v97 = vld [vmem:[%s1 + $0x84] sm:$0xf]
  %v98 = vld [vmem:[%s1 + $0x88] sm:$0xf]
  %v99 = vld [vmem:[%s1 + $0x8c] sm:$0xf]
  %v100 = vld [vmem:[%s1 + $0x90] sm:$0xf]
  %v101 = vld [vmem:[%s1 + $0x94] sm:$0xf]
  %v102 = vld [vmem:[%s1 + $0x98] sm:$0xf]
  %v103 = vld [vmem:[%s1 + $0x9c] sm:$0xf]
  %v104 = vld [vmem:[%s1 + $0xa0] sm:$0xf]
  %v105 = vld [vmem:[%s1 + $0xa4] sm:$0xf]
  %v106 = vld [vmem:[%s1 + $0xa8] sm:$0xf]
  %v107 = vld [vmem:[%s1 + $0xac] sm:$0xf]
  %v108 = vld [vmem:[%s1 + $0xb0] sm:$0xf]
  %v109 = vld [vmem:[%s1 + $0xb4] sm:$0xf]
  %v110 = vld [vmem:[%s1 + $0xb8] sm:$0xf]
  %v111 = vld [vmem:[%s1 + $0xbc] sm:$0xf]
  %v112 = vld [vmem:[%s1 + $0xc0] sm:$0xf]
  %v113 = vld [vmem:[%s1 + $0xc4] sm:$0xf]
  %v114 = vld [vmem:[%s1 + $0xc8] sm:$0xf]
  %v115 = vld [vmem:[%s1 + $0xcc] sm:$0xf]
  %v116 = vld [vmem:[%s1 + $0xd0] sm:$0xf]
  %v117 = vld [vmem:[%s1 + $0xd4] sm:$0xf]
  %v118 = vld [vmem:[%s1 + $0xd8] sm:$0xf]
  %v119 = vld [vmem:[%s1 + $0xdc] sm:$0xf]
  %v120 = vld [vmem:[%s1 + $0xe0] sm:$0xf]
  %v121 = vld [vmem:[%s1 + $0xe4] sm:$0xf]
  %v122 = vld [vmem:[%s1 + $0xe8] sm:$0xf]
  %v123 = vld [vmem:[%s1 + $0xec] sm:$0xf]
  %v124 = vld [vmem:[%s1 + $0xf0] sm:$0xf]
  %v125 = vld [vmem:[%s1 + $0xf4] sm:$0xf]
  %v126 = vld [vmem:[%s1 + $0xf8] sm:$0xf]
  %v127 = vld [vmem:[%s1 + $0xfc] sm:$0xf]
  %v132 = vunpack.c.l.b16 %v58
  %v133 = vunpack.c.h.b16 %v58
  %v134 = vunpack.c.l.b16 %v59
  %v135 = vunpack.c.h.b16 %v59
  %v136 = vunpack.c.l.b16 %v60
  %v137 = vunpack.c.h.b16 %v60
  %v138 = vunpack.c.l.b16 %v61
  %v139 = vunpack.c.h.b16 %v61
  %v140 = vpack.c.b16 %v136, %v132
  %v141 = vpack.c.b16 %v137, %v133
  %v142 = vpack.c.b16 %v138, %v134
  %v143 = vpack.c.b16 %v139, %v135
  %v212 = vunpack.c.l.b16 %v64
  %v213 = vunpack.c.l.b16 %v65
  %v214 = vunpack.c.l.b16 %v66
  %v215 = vunpack.c.l.b16 %v67
  %v216 = vunpack.c.l.b16 %v68
  %v217 = vunpack.c.l.b16 %v69
  %v218 = vunpack.c.l.b16 %v70
  %v219 = vunpack.c.l.b16 %v71
  %v220 = vunpack.c.l.b16 %v72
  %v221 = vunpack.c.l.b16 %v73
  %v222 = vunpack.c.l.b16 %v74
  %v223 = vunpack.c.l.b16 %v75
  %v224 = vunpack.c.l.b16 %v76
  %v225 = vunpack.c.l.b16 %v77
  %v226 = vunpack.c.l.b16 %v78
  %v227 = vunpack.c.l.b16 %v79
  %v228 = vunpack.c.l.b16 %v80
  %v229 = vunpack.c.l.b16 %v81
  %v230 = vunpack.c.l.b16 %v82
  %v231 = vunpack.c.l.b16 %v83
  %v232 = vunpack.c.l.b16 %v84
  %v233 = vunpack.c.l.b16 %v85
  %v234 = vunpack.c.l.b16 %v86
  %v235 = vunpack.c.l.b16 %v87
  %v236 = vunpack.c.l.b16 %v88
  %v237 = vunpack.c.l.b16 %v89
  %v238 = vunpack.c.l.b16 %v90
  %v239 = vunpack.c.l.b16 %v91
  %v240 = vunpack.c.l.b16 %v92
  %v241 = vunpack.c.l.b16 %v93
  %v242 = vunpack.c.l.b16 %v94
  %v243 = vunpack.c.l.b16 %v95
  %v244 = vunpack.c.l.b16 %v96
  %v245 = vunpack.c.l.b16 %v97
  %v246 = vunpack.c.l.b16 %v98
  %v247 = vunpack.c.l.b16 %v99
  %v248 = vunpack.c.l.b16 %v100
  %v249 = vunpack.c.l.b16 %v101
  %v250 = vunpack.c.l.b16 %v102
  %v251 = vunpack.c.l.b16 %v103
  %v252 = vunpack.c.l.b16 %v104
  %v253 = vunpack.c.l.b16 %v105
  %v254 = vunpack.c.l.b16 %v106
  %v255 = vunpack.c.l.b16 %v107
  %v256 = vunpack.c.l.b16 %v108
  %v257 = vunpack.c.l.b16 %v109
  %v258 = vunpack.c.l.b16 %v110
  %v259 = vunpack.c.l.b16 %v111
  %v260 = vunpack.c.l.b16 %v112
  %v261 = vunpack.c.l.b16 %v113
  %v262 = vunpack.c.l.b16 %v114
  %v263 = vunpack.c.l.b16 %v115
  %v264 = vunpack.c.l.b16 %v116
  %v265 = vunpack.c.l.b16 %v117
  %v266 = vunpack.c.l.b16 %v118
  %v267 = vunpack.c.l.b16 %v119
  %v268 = vunpack.c.l.b16 %v120
  %v269 = vunpack.c.l.b16 %v121
  %v270 = vunpack.c.l.b16 %v122
  %v271 = vunpack.c.l.b16 %v123
  %v272 = vunpack.c.l.b16 %v124
  %v273 = vunpack.c.l.b16 %v125
  %v274 = vunpack.c.l.b16 %v126
  %v275 = vunpack.c.l.b16 %v127
  %v276 = vpack.c.b16 %v213, %v212
  %v277 = vpack.c.b16 %v215, %v214
  %v278 = vpack.c.b16 %v217, %v216
  %v279 = vpack.c.b16 %v219, %v218
  %v280 = vpack.c.b16 %v221, %v220
  %v281 = vpack.c.b16 %v223, %v222
  %v282 = vpack.c.b16 %v225, %v224
  %v283 = vpack.c.b16 %v227, %v226
  %v284 = vpack.c.b16 %v229, %v228
  %v285 = vpack.c.b16 %v231, %v230
  %v286 = vpack.c.b16 %v233, %v232
  %v287 = vpack.c.b16 %v235, %v234
  %v288 = vpack.c.b16 %v237, %v236
  %v289 = vpack.c.b16 %v239, %v238
  %v290 = vpack.c.b16 %v241, %v240
  %v291 = vpack.c.b16 %v243, %v242
  %v292 = vpack.c.b16 %v245, %v244
  %v293 = vpack.c.b16 %v247, %v246
  %v294 = vpack.c.b16 %v249, %v248
  %v295 = vpack.c.b16 %v251, %v250
  %v296 = vpack.c.b16 %v253, %v252
  %v297 = vpack.c.b16 %v255, %v254
  %v298 = vpack.c.b16 %v257, %v256
  %v299 = vpack.c.b16 %v259, %v258
  %v300 = vpack.c.b16 %v261, %v260
  %v301 = vpack.c.b16 %v263, %v262
  %v302 = vpack.c.b16 %v265, %v264
  %v303 = vpack.c.b16 %v267, %v266
  %v304 = vpack.c.b16 %v269, %v268
  %v305 = vpack.c.b16 %v271, %v270
  %v306 = vpack.c.b16 %v273, %v272
  %v307 = vpack.c.b16 %v275, %v274
  %340 = vmatpush.bf16.msra.mxu0 %v283
  %341 = vmatpush.bf16.msra.mxu0 %v282
  %342 = vmatpush.bf16.msra.mxu0 %v281
  %343 = vmatpush.bf16.msra.mxu0 %v280
  %344 = vmatpush.bf16.msra.mxu0 %v279
  %345 = vmatpush.bf16.msra.mxu0 %v278
  %346 = vmatpush.bf16.msra.mxu0 %v277
  %347 = vmatpush.bf16.msra.mxu0 %v276
  %348 = vmatmul.bf16.gmra.mxu0 %v140
  %v349 = vpop.f32.mrf.mxu0
  %v350 = vadd.f32 0.0, %v349
  %v351 = vpop.f32.mrf.mxu0
  %v352 = vadd.f32 0.0, %v351
  %353 = vdwg.mxu0
  %354 = vmatpush.bf16.msra.mxu0 %v291
  %355 = vmatpush.bf16.msra.mxu0 %v290
  %356 = vmatpush.bf16.msra.mxu0 %v289
  %357 = vmatpush.bf16.msra.mxu0 %v288
  %358 = vmatpush.bf16.msra.mxu0 %v287
  %359 = vmatpush.bf16.msra.mxu0 %v286
  %360 = vmatpush.bf16.msra.mxu0 %v285
  %361 = vmatpush.bf16.msra.mxu0 %v284
  %362 = vmatmul.bf16.gmra.mxu0 %v141
  %v363 = vpop.f32.mrf.mxu0
  %v364 = vadd.f32 %v350, %v363
  %v365 = vpop.f32.mrf.mxu0
  %v366 = vadd.f32 %v352, %v365
  %367 = vdwg.mxu0
  %368 = vmatpush.bf16.msra.mxu0 %v299
  %369 = vmatpush.bf16.msra.mxu0 %v298
  %370 = vmatpush.bf16.msra.mxu0 %v297
  %371 = vmatpush.bf16.msra.mxu0 %v296
  %372 = vmatpush.bf16.msra.mxu0 %v295
  %373 = vmatpush.bf16.msra.mxu0 %v294
  %374 = vmatpush.bf16.msra.mxu0 %v293
  %375 = vmatpush.bf16.msra.mxu0 %v292
  %376 = vmatmul.bf16.gmra.mxu0 %v142
  %v377 = vpop.f32.mrf.mxu0
  %v378 = vadd.f32 %v364, %v377
  %v379 = vpop.f32.mrf.mxu0
  %v380 = vadd.f32 %v366, %v379
  %381 = vdwg.mxu0
  %382 = vmatpush.bf16.msra.mxu0 %v307
  %383 = vmatpush.bf16.msra.mxu0 %v306
  %384 = vmatpush.bf16.msra.mxu0 %v305
  %385 = vmatpush.bf16.msra.mxu0 %v304
  %386 = vmatpush.bf16.msra.mxu0 %v303
  %387 = vmatpush.bf16.msra.mxu0 %v302
  %388 = vmatpush.bf16.msra.mxu0 %v301
  %389 = vmatpush.bf16.msra.mxu0 %v300
  %390 = vmatmul.bf16.gmra.mxu0 %v143
  %v391 = vpop.f32.mrf.mxu0
  %v392 = vadd.f32 %v378, %v391
  %v393 = vpop.f32.mrf.mxu0
  %v394 = vadd.f32 %v380, %v393
  %395 = vdwg.mxu0
  %v396 = vadd.f32 %v62, %v392
  %v397 = vadd.f32 %v63, %v394
  %398 = vst [vmem:[#allocation2] sm:$0xff] %v396
  %399 = vst [vmem:[#allocation2 + $0x8] sm:$0xff] %v397
  // Predicated region
  $region18: #{_lambda_.22} parent=0 // pred_check
    %p400 = pneg %p16
  $region19: #{_lambda_.22} parent=0 // pred_check_branch
    %402 = sbr.rel (%p400) target = $region21
  $region20: #{_lambda_.22} parent=0 // pred_region
    %v403 = vld [vmem:[#allocation2] sm:$0xff]
    %v404 = vld [vmem:[#allocation2 + $0x8] sm:$0xff]
    %v405 = vld [vmem:[%s2] sm:$0x1]
    %v407 = vperm.slane %v405, 0
    %v409 = vadd.f32 %v403, %v407
    %v410 = vadd.f32 %v404, %v407
    %v411 = vpack.c.bf16 %v409, %v409
    %v412 = vpack.c.bf16 %v410, %v410
    %413 = vst [vmem:[%s3] sm:$0xf] %v411
    %414 = vst [vmem:[%s3 + $0x4] sm:$0xf] %v412
    %v415 = vadd.f32 %v409, %v410
    %v416 = vrot.slane %v415, 4
    %v417 = vadd.f32 %v415, %v416
    %v418 = vrot.slane %v417, 2
    %v419 = vadd.f32 %v417, %v418
    %v420 = vrot.slane %v419, 1
    %v421 = vadd.f32 %v419, %v420
    %v422 = vmul.f32 %v409, %v409
    %v423 = vmul.f32 %v410, %v410
    %v424 = vadd.f32 %v422, %v423
    %v425 = vrot.slane %v424, 4
    %v426 = vadd.f32 %v424, %v425
    %v427 = vrot.slane %v426, 2
    %v428 = vadd.f32 %v426, %v427
    %v429 = vrot.slane %v428, 1
    %v430 = vadd.f32 %v428, %v429
    %v431 = vlaneseq
    %v432 = vshrl.u32 %v431, 7
    %vm433 = vcmp.eq.s32.totalorder %v432, 0
    %vm434 = vcmp.eq.s32.totalorder %v432, 1
    %v435 = vsel %vm434, %v430, 0.0
    %v436 = vsel %vm433, %v421, %v435
    %437 = vst [vmem:[%s4] sm:$0xff] %v436
  $region21: #{_lambda_.22} parent=0 // pred_fallthru
    _
  // Predicated region
  $region22: #{_lambda_.22} parent=0 // pred_check
    _
  $region23: #{_lambda_.22} parent=0 // pred_check_branch
    %439 = sbr.rel (0) target = $region25
  $region24: #{_lambda_.22} parent=0 // pred_region
    _
  $region25: #{_lambda_.22} parent=0 // pred_fallthru
    _
  // Predicated region
  $region26: #{_lambda_.22} parent=0 // pred_check
    _
  $region27: #{_lambda_.22} parent=0 // pred_check_branch
    %441 = sbr.rel (0) target = $region29
  $region28: #{_lambda_.22} parent=0 // pred_region
    _
  $region29: #{_lambda_.22} parent=0 // pred_fallthru
    _
  // Predicated region
  $region30: #{_lambda_.22} parent=0 // pred_check
    _
  $region31: #{_lambda_.22} parent=0 // pred_check_branch
    %443 = sbr.rel (0) target = $region33
  $region32: #{_lambda_.22} parent=0 // pred_region
    _
  $region33: #{_lambda_.22} parent=0 // pred_fallthru
    _
  // Predicated region
  $region34: #{_lambda_.22} parent=0 // pred_check
    _
  $region35: #{_lambda_.22} parent=0 // pred_check_branch
    %445 = sbr.rel (0) target = $region37
  $region36: #{_lambda_.22} parent=0 // pred_region
    _
  $region37: #{_lambda_.22} parent=0 // pred_fallthru
    _

// kernel: _lambda_.25
$region0: #{_lambda_.25}
  #allocation0 [shape = 'u32[]', space=smem, size = 0x4, offset = 0x4, fixed_abs, tag = 'smem constant byte address 0x4 - core index']
  #allocation1 [shape = 'u32[72,128]{1,0:T(1,128)}', space=vmem, size = 0x9000, scoped, tag = 'internal scratch']
  #allocation2 [shape = 'f32[16,128]{1,0:T(8,128)}', space=vmem, size = 0x2000, scoped, tag = 'scratch operand']
  %s0 = inlined_call_operand.vmem [shape: bf16[4,16,256], index: 0, kind: input, shape index: {}]
  %s1 = inlined_call_operand.vmem [shape: bf16[4,256,128], index: 1, kind: input, shape index: {}]
  %s2 = inlined_call_operand.vmem [shape: f32[4,1,128], index: 2, kind: input, shape index: {}]
  %s3 = inlined_call_operand.vmem [shape: bf16[4,16,128], index: 3, kind: output, shape index: {0}]
  %s4 = inlined_call_operand.vmem [shape: f32[4,1,8,128], index: 4, kind: output, shape index: {1}]
  %5 = xla_tuple %s3, %s4
  %s6 = sld [smem:[#allocation0]]
  $region61: #{_lambda_.25} parent=0
    _
  %s8 = ssub.s32 1, %s6
  %s9 = scalar_select 0, %s8, %s6
  loop: start=0, step=1, limit=6
  $region2: #{_lambda_.25} parent=0 // loop_pre_header
    _
  $region3: #{_lambda_.25} parent=0 // loop_header
    %s11 = sphi 0, %s15
    %p12 = scmp.ge.s32.totalorder %s11, 6
    %s18 = sphi 0, %s44
    %s19 = sphi 0, %s40
    %s20 = sphi 0, %s36
    %s21 = sphi 0, %s32
    %s22 = sphi 0, %s18
    %s23 = sphi 0, %s19
    %s24 = sphi 0, %s20
    %s25 = sphi 0, %s21
    %s26 = sphi 0, %s22
    %s27 = sphi 0, %s23
    %s28 = sphi 0, %s24
    %s29 = sphi 0, %s25
    %s51 = sphi 0, %s53
    %s54 = sphi 0, %s51
    %s55 = sphi 0, %s54
    %s71 = sphi 0, %s55
    %s81 = sphi 0, %s83
    %s84 = sphi 0, %s81
    %s85 = sphi 0, %s84
    %s101 = sphi 0, %s85
    %s109 = sphi 0, %s111
    %s112 = sphi 0, %s109
    %s113 = sphi 0, %s112
    %s129 = sphi 0, %s113
    %s139 = sphi 0, %s141
    %s142 = sphi 0, %s139
    %s143 = sphi 0, %s142
    %s159 = sphi 0, %s143
    %s169 = sphi 0, %s171
    %s172 = sphi 0, %s169
    %s173 = sphi 0, %s172
    %s189 = sphi 0, %s173
  $region4: #{_lambda_.25} parent=0 // loop_header_branch
    %14 = sbr.rel (%p12) target = $region8
  $region5: #{_lambda_.25} parent=0 // loop_body
    %s16 = ssub.s32 %s11, 1
    %s17 = ssub.s32 %s11, 2
    %s30 = sadd.s32 1, %s21
    %p31 = scmp.ge.s32.totalorder %s30, 1
    %s32 = scalar_select %p31, 0, %s30
    %s33 = sadd.s32 1, %s20
    %s34 = scalar_select %p31, %s33, %s20
    %p35 = scmp.ge.s32.totalorder %s34, 1
    %s36 = scalar_select %p35, 0, %s34
    %s37 = sadd.s32 1, %s19
    %s38 = scalar_select %p35, %s37, %s19
    %p39 = scmp.ge.s32.totalorder %s38, 1
    %s40 = scalar_select %p39, 0, %s38
    %s41 = sadd.s32 1, %s18
    %s42 = scalar_select %p39, %s41, %s18
    %p43 = scmp.ge.s32.totalorder %s42, 4
    %s44 = scalar_select %p43, 0, %s42
    %s45 = ssub.s32 %s18, %s44
    %s46 = ssub.s32 %s19, %s40
    %s47 = sor.u32 %s45, %s46
    %s48 = ssub.s32 %s21, %s32
    %s49 = sor.u32 %s47, %s48
    %p50 = scmp.eq.s32.totalorder %s49, 0
    %s52 = sadd.s32 %s51, 1
    %s53 = scalar_select %p50, %s51, %s52
    %p56 = pneg %p50
    %p57 = scmp.eq.s32.totalorder %s11, 3
    %p58 = por %p56, %p57
    %p59 = scmp.ne.s32.totalorder %s51, %s54
    %p60 = scmp.eq.s32.totalorder %s11, 0
    %p61 = por %p59, %p60
    %p62 = scmp.ne.s32.totalorder %s51, %s54
    %p63 = scmp.eq.s32.totalorder %s16, 3
    %p64 = por %p62, %p63
    %p65 = scmp.ne.s32.totalorder %s54, %s55
    %p66 = scmp.eq.s32.totalorder %s16, 0
    %p67 = por %p65, %p66
    %p68 = scmp.ne.s32.totalorder %s54, %s55
    %p69 = scmp.eq.s32.totalorder %s17, 3
    %p70 = por %p68, %p69
    %p72 = scmp.ne.s32.totalorder %s55, %s71
    %p73 = scmp.eq.s32.totalorder %s17, 0
    %p74 = por %p72, %p73
    %s75 = ssub.s32 %s18, %s44
    %s76 = ssub.s32 %s21, %s32
    %s77 = sor.u32 %s75, %s76
    %s78 = ssub.s32 %s20, %s36
    %s79 = sor.u32 %s77, %s78
    %p80 = scmp.eq.s32.totalorder %s79, 0
    %s82 = sadd.s32 %s81, 1
    %s83 = scalar_select %p80, %s81, %s82
    %p86 = pneg %p80
    %p87 = scmp.eq.s32.totalorder %s11, 3
    %p88 = por %p86, %p87
    %p89 = scmp.ne.s32.totalorder %s81, %s84
    %p90 = scmp.eq.s32.totalorder %s11, 0
    %p91 = por %p89, %p90
    %p92 = scmp.ne.s32.totalorder %s81, %s84
    %p93 = scmp.eq.s32.totalorder %s16, 3
    %p94 = por %p92, %p93
    %p95 = scmp.ne.s32.totalorder %s84, %s85
    %p96 = scmp.eq.s32.totalorder %s16, 0
    %p97 = por %p95, %p96
    %p98 = scmp.ne.s32.totalorder %s84, %s85
    %p99 = scmp.eq.s32.totalorder %s17, 3
    %p100 = por %p98, %p99
    %p102 = scmp.ne.s32.totalorder %s85, %s101
    %p103 = scmp.eq.s32.totalorder %s17, 0
    %p104 = por %p102, %p103
    %s105 = ssub.s32 %s18, %s44
    %s106 = ssub.s32 %s20, %s36
    %s107 = sor.u32 %s105, %s106
    %p108 = scmp.eq.s32.totalorder %s107, 0
    %s110 = sadd.s32 %s109, 1
    %s111 = scalar_select %p108, %s109, %s110
    %p114 = pneg %p108
    %p115 = scmp.eq.s32.totalorder %s11, 3
    %p116 = por %p114, %p115
    %p117 = scmp.ne.s32.totalorder %s109, %s112
    %p118 = scmp.eq.s32.totalorder %s11, 0
    %p119 = por %p117, %p118
    %p120 = scmp.ne.s32.totalorder %s109, %s112
    %p121 = scmp.eq.s32.totalorder %s16, 3
    %p122 = por %p120, %p121
    %p123 = scmp.ne.s32.totalorder %s112, %s113
    %p124 = scmp.eq.s32.totalorder %s16, 0
    %p125 = por %p123, %p124
    %p126 = scmp.ne.s32.totalorder %s112, %s113
    %p127 = scmp.eq.s32.totalorder %s17, 3
    %p128 = por %p126, %p127
    %p130 = scmp.ne.s32.totalorder %s113, %s129
    %p131 = scmp.eq.s32.totalorder %s17, 0
    %p132 = por %p130, %p131
    %s133 = ssub.s32 %s18, %s44
    %s134 = ssub.s32 %s19, %s40
    %s135 = sor.u32 %s133, %s134
    %s136 = ssub.s32 %s20, %s36
    %s137 = sor.u32 %s135, %s136
    %p138 = scmp.eq.s32.totalorder %s137, 0
    %s140 = sadd.s32 %s139, 1
    %s141 = scalar_select %p138, %s139, %s140
    %p144 = pneg %p138
    %p145 = scmp.eq.s32.totalorder %s11, 3
    %p146 = por %p144, %p145
    %p147 = scmp.ne.s32.totalorder %s139, %s142
    %p148 = scmp.eq.s32.totalorder %s11, 0
    %p149 = por %p147, %p148
    %p150 = scmp.ne.s32.totalorder %s139, %s142
    %p151 = scmp.eq.s32.totalorder %s16, 3
    %p152 = por %p150, %p151
    %p153 = scmp.ne.s32.totalorder %s142, %s143
    %p154 = scmp.eq.s32.totalorder %s16, 0
    %p155 = por %p153, %p154
    %p156 = scmp.ne.s32.totalorder %s142, %s143
    %p157 = scmp.eq.s32.totalorder %s17, 3
    %p158 = por %p156, %p157
    %p160 = scmp.ne.s32.totalorder %s143, %s159
    %p161 = scmp.eq.s32.totalorder %s17, 0
    %p162 = por %p160, %p161
    %s163 = ssub.s32 %s18, %s44
    %s164 = ssub.s32 %s19, %s40
    %s165 = sor.u32 %s163, %s164
    %s166 = ssub.s32 %s20, %s36
    %s167 = sor.u32 %s165, %s166
    %p168 = scmp.eq.s32.totalorder %s167, 0
    %s170 = sadd.s32 %s169, 1
    %s171 = scalar_select %p168, %s169, %s170
    %p174 = pneg %p168
    %p175 = scmp.eq.s32.totalorder %s11, 3
    %p176 = por %p174, %p175
    %p177 = scmp.ne.s32.totalorder %s169, %s172
    %p178 = scmp.eq.s32.totalorder %s11, 0
    %p179 = por %p177, %p178
    %p180 = scmp.ne.s32.totalorder %s169, %s172
    %p181 = scmp.eq.s32.totalorder %s16, 3
    %p182 = por %p180, %p181
    %p183 = scmp.ne.s32.totalorder %s172, %s173
    %p184 = scmp.eq.s32.totalorder %s16, 0
    %p185 = por %p183, %p184
    %p186 = scmp.ne.s32.totalorder %s172, %s173
    %p187 = scmp.eq.s32.totalorder %s17, 3
    %p188 = por %p186, %p187
    %p190 = scmp.ne.s32.totalorder %s173, %s189
    %p191 = scmp.eq.s32.totalorder %s17, 0
    %p192 = por %p190, %p191
    %p193 = scmp.le.s32.totalorder 1, %s11
    %p194 = scmp.lt.s32.totalorder %s11, 5
    %p195 = pnand %p193, %p194
    %p196 = pneg %p195
    // Predicated region
    $region9: #{_lambda_.25} parent=5 // pred_check
      _
    $region10: #{_lambda_.25} parent=5 // pred_check_branch
      %198 = sbr.rel (%p195) target = $region12
    $region11: #{_lambda_.25} parent=5 // pred_region
      %s199 = ssub.s32 %s11, 1
    $region12: #{_lambda_.25} parent=5 // pred_fallthru
      _
    %p200 = scmp.lt.s32.totalorder %s11, 4
    // Predicated region
    $region13: #{_lambda_.25} parent=5 // pred_check
      %p201 = pneg %p200
    $region14: #{_lambda_.25} parent=5 // pred_check_branch
      %203 = sbr.rel (%p201) target = $region16
    $region15: #{_lambda_.25} parent=5 // pred_region
      // Predicated region
      $region17: #{_lambda_.25} parent=15 // pred_check
        %p204 = pneg %p61
      $region18: #{_lambda_.25} parent=15 // pred_check_branch
        %206 = sbr.rel (%p204) target = $region20
      $region19: #{_lambda_.25} parent=15 // pred_region
        %s207 = smul.u32 2, %s19
        %s208 = smul.u32 2, %s21
        %p209 = scmp.lt.s32.totalorder %s18, 3
        %s210 = scalar_select %p209, %s18, 3
        %p211 = scmp.lt.s32.totalorder %s207, 1
        %s212 = scalar_select %p211, %s207, 1
        %p213 = scmp.lt.s32.totalorder %s208, 1
        %s214 = scalar_select %p213, %s208, 1
        %s215 = smul.addr %s212, 2
        %s216 = sadd.s32 %s214, %s215
        %s217 = smul.addr %s210, 4
        %s218 = sadd.s32 %s216, %s217
        %s219 = smul.addr %s218, 4
        %s220 = scalar_lea.vmem %s0, %s219
        %s221 = smul.u32 2, %s19
        %s222 = smul.u32 2, %s21
      $region20: #{_lambda_.25} parent=15 // pred_fallthru
        _
      // Predicated region
      $region21: #{_lambda_.25} parent=15 // pred_check
        %p223 = pneg %p91
      $region22: #{_lambda_.25} parent=15 // pred_check_branch
        %225 = sbr.rel (%p223) target = $region24
      $region23: #{_lambda_.25} parent=15 // pred_region
        %s226 = smul.u32 32, %s21
        %p227 = scmp.lt.s32.totalorder %s18, 3
        %s228 = scalar_select %p227, %s18, 3
        %p229 = scmp.lt.s32.totalorder %s226, 31
        %s230 = scalar_select %p229, %s226, 31
        %p231 = scmp.lt.s32.totalorder %s20, 0
        %s232 = scalar_select %p231, %s20, 0
        %s233 = sadd.s32 %s232, %s230
        %s234 = smul.addr %s228, 32
        %s235 = sadd.s32 %s233, %s234
        %s236 = smul.addr %s235, 4
        %s237 = scalar_lea.vmem %s1, %s236
        %s238 = smul.u32 32, %s21
      $region24: #{_lambda_.25} parent=15 // pred_fallthru
        _
      // Predicated region
      $region25: #{_lambda_.25} parent=15 // pred_check
        %p239 = pneg %p119
      $region26: #{_lambda_.25} parent=15 // pred_check_branch
        %241 = sbr.rel (%p239) target = $region28
      $region27: #{_lambda_.25} parent=15 // pred_region
        %p242 = scmp.lt.s32.totalorder %s18, 3
        %s243 = scalar_select %p242, %s18, 3
        %p244 = scmp.lt.s32.totalorder %s20, 0
        %s245 = scalar_select %p244, %s20, 0
        %s246 = sadd.s32 %s245, %s243
        %s247 = scalar_lea.vmem %s2, %s246
      $region28: #{_lambda_.25} parent=15 // pred_fallthru
        _
    $region16: #{_lambda_.25} parent=5 // pred_fallthru
      _
    %p248 = scmp.le.s32.totalorder 1, %s11
    %p249 = scmp.lt.s32.totalorder %s11, 5
    %p250 = pnand %p248, %p249
    %p251 = pneg %p250
    // Predicated region
    $region29: #{_lambda_.25} parent=5 // pred_check
      _
    $region30: #{_lambda_.25} parent=5 // pred_check_branch
      %253 = sbr.rel (%p250) target = $region32
    $region31: #{_lambda_.25} parent=5 // pred_region
      %s254 = ssub.s32 %s11, 1
      %s255 = smul.u32 2, %s23
      %s256 = smul.u32 2, %s25
      %p257 = scmp.lt.s32.totalorder %s22, 3
      %s258 = scalar_select %p257, %s22, 3
      %p259 = scmp.lt.s32.totalorder %s255, 1
      %s260 = scalar_select %p259, %s255, 1
      %p261 = scmp.lt.s32.totalorder %s256, 1
      %s262 = scalar_select %p261, %s256, 1
      %s263 = smul.addr %s260, 2
      %s264 = sadd.s32 %s262, %s263
      %s265 = smul.addr %s258, 4
      %s266 = sadd.s32 %s264, %s265
      %s267 = smul.addr %s266, 4
      %s268 = scalar_lea.vmem %s0, %s267
      %p269 = pneg %p67
      %p270 = pneg %p64
      %s271 = smul.u32 32, %s25
      %p272 = scmp.lt.s32.totalorder %s22, 3
      %s273 = scalar_select %p272, %s22, 3
      %p274 = scmp.lt.s32.totalorder %s271, 31
      %s275 = scalar_select %p274, %s271, 31
      %p276 = scmp.lt.s32.totalorder %s24, 0
      %s277 = scalar_select %p276, %s24, 0
      %s278 = sadd.s32 %s277, %s275
      %s279 = smul.addr %s273, 32
      %s280 = sadd.s32 %s278, %s279
      %s281 = smul.addr %s280, 4
      %s282 = scalar_lea.vmem %s1, %s281
      %p283 = pneg %p97
      %p284 = pneg %p94
      %p285 = scmp.lt.s32.totalorder %s22, 3
      %s286 = scalar_select %p285, %s22, 3
      %p287 = scmp.lt.s32.totalorder %s24, 0
      %s288 = scalar_select %p287, %s24, 0
      %s289 = sadd.s32 %s288, %s286
      %s290 = scalar_lea.vmem %s2, %s289
      %p291 = pneg %p125
      %p292 = pneg %p122
      %p293 = pneg %p155
      %p294 = pneg %p152
      %s295 = smul.u32 2, %s23
      %p296 = scmp.lt.s32.totalorder %s22, 3
      %s297 = scalar_select %p296, %s22, 3
      %p298 = scmp.lt.s32.totalorder %s295, 1
      %s299 = scalar_select %p298, %s295, 1
      %p300 = scmp.lt.s32.totalorder %s24, 0
      %s301 = scalar_select %p300, %s24, 0
      %s302 = sadd.s32 %s301, %s299
      %s303 = smul.addr %s297, 2
      %s304 = sadd.s32 %s302, %s303
      %s305 = smul.addr %s304, 4
      %s306 = scalar_lea.vmem %s3, %s305
      %p307 = pneg %p185
      %p308 = pneg %p182
      %p309 = scmp.lt.s32.totalorder %s22, 3
      %s310 = scalar_select %p309, %s22, 3
      %p311 = scmp.lt.s32.totalorder %s23, 0
      %s312 = scalar_select %p311, %s23, 0
      %p313 = scmp.lt.s32.totalorder %s24, 0
      %s314 = scalar_select %p313, %s24, 0
      %s315 = sadd.s32 %s314, %s312
      %s316 = sadd.s32 %s315, %s310
      %s317 = smul.addr %s316, 8
      %s318 = scalar_lea.vmem %s4, %s317
      %s319 = smul.u32 2, %s23
      %s320 = smul.u32 2, %s25
      %p321 = scmp.lt.s32.totalorder %s22, 3
      %s322 = scalar_select %p321, %s22, 3
      %p323 = scmp.lt.s32.totalorder %s319, 1
      %s324 = scalar_select %p323, %s319, 1
      %p325 = scmp.lt.s32.totalorder %s320, 1
      %s326 = scalar_select %p325, %s320, 1
      %s327 = smul.addr %s324, 2
      %s328 = sadd.s32 %s326, %s327
      %s329 = smul.addr %s322, 4
      %s330 = sadd.s32 %s328, %s329
      %s331 = smul.addr %s330, 4
      %s332 = scalar_lea.vmem %s0, %s331
      %s333 = smul.u32 2, %s23
      %s334 = smul.u32 2, %s25
      %s335 = smul.u32 32, %s25
      %p336 = scmp.lt.s32.totalorder %s22, 3
      %s337 = scalar_select %p336, %s22, 3
      %p338 = scmp.lt.s32.totalorder %s335, 31
      %s339 = scalar_select %p338, %s335, 31
      %p340 = scmp.lt.s32.totalorder %s24, 0
      %s341 = scalar_select %p340, %s24, 0
      %s342 = sadd.s32 %s341, %s339
      %s343 = smul.addr %s337, 32
      %s344 = sadd.s32 %s342, %s343
      %s345 = smul.addr %s344, 4
      %s346 = scalar_lea.vmem %s1, %s345
      %s347 = smul.u32 32, %s25
      %p348 = scmp.lt.s32.totalorder %s22, 3
      %s349 = scalar_select %p348, %s22, 3
      %p350 = scmp.lt.s32.totalorder %s24, 0
      %s351 = scalar_select %p350, %s24, 0
      %s352 = sadd.s32 %s351, %s349
      %s353 = scalar_lea.vmem %s2, %s352
      %s354 = smul.u32 2, %s23
      %p355 = scmp.lt.s32.totalorder %s22, 3
      %s356 = scalar_select %p355, %s22, 3
      %p357 = scmp.lt.s32.totalorder %s354, 1
      %s358 = scalar_select %p357, %s354, 1
      %p359 = scmp.lt.s32.totalorder %s24, 0
      %s360 = scalar_select %p359, %s24, 0
      %s361 = sadd.s32 %s360, %s358
      %s362 = smul.addr %s356, 2
      %s363 = sadd.s32 %s361, %s362
      %s364 = smul.addr %s363, 4
      %s365 = scalar_lea.vmem %s3, %s364
      %s366 = smul.u32 2, %s23
      %p367 = scmp.lt.s32.totalorder %s22, 3
      %s368 = scalar_select %p367, %s22, 3
      %p369 = scmp.lt.s32.totalorder %s23, 0
      %s370 = scalar_select %p369, %s23, 0
      %p371 = scmp.lt.s32.totalorder %s24, 0
      %s372 = scalar_select %p371, %s24, 0
      %s373 = sadd.s32 %s372, %s370
      %s374 = sadd.s32 %s373, %s368
      %s375 = smul.addr %s374, 8
      %s376 = scalar_lea.vmem %s4, %s375
      %p377 = scmp.eq.s32.totalorder %s25, 0
      // Predicated region
      $region33: #{_lambda_.25} parent=31 // pred_check
        %p378 = pneg %p377
      $region34: #{_lambda_.25} parent=31 // pred_check_branch
        %380 = sbr.rel (%p378) target = $region36
      $region35: #{_lambda_.25} parent=31 // pred_region
        %381 = vst [vmem:[#allocation2] sm:$0xff] 0.0
        %382 = vst [vmem:[#allocation2 + $0x8] sm:$0xff] 0.0
      $region36: #{_lambda_.25} parent=31 // pred_fallthru
        _
      %v383 = vld [vmem:[%s332] sm:$0xff]
      %v384 = vld [vmem:[%s332 + $0x8] sm:$0xff]
      %v385 = vunpack.c.l.bf16 %v383
      %v386 = vunpack.c.h.bf16 %v383
      %v387 = vunpack.c.l.bf16 %v384
      %v388 = vunpack.c.h.bf16 %v384
      %v389 = vmax.f32 %v385, 0.0
      %v390 = vmax.f32 %v386, 0.0
      %v391 = vmax.f32 %v387, 0.0
      %v392 = vmax.f32 %v388, 0.0
      %v393 = vpack.c.bf16 %v391, %v389
      %v394 = vpack.c.bf16 %v392, %v390
      %v395 = vld [vmem:[#allocation2] sm:$0xff]
      %v396 = vld [vmem:[#allocation2 + $0x8] sm:$0xff]
      %v397 = vld [vmem:[%s346] sm:$0xf]
      %v398 = vld [vmem:[%s346 + $0x4] sm:$0xf]
      %v399 = vld [vmem:[%s346 + $0x8] sm:$0xf]
      %v400 = vld [vmem:[%s346 + $0xc] sm:$0xf]
      %v401 = vld [vmem:[%s346 + $0x10] sm:$0xf]
      %v402 = vld [vmem:[%s346 + $0x14] sm:$0xf]
      %v403 = vld [vmem:[%s346 + $0x18] sm:$0xf]
      %v404 = vld [vmem:[%s346 + $0x1c] sm:$0xf]
      %v405 = vld [vmem:[%s346 + $0x20] sm:$0xf]
      %v406 = vld [vmem:[%s346 + $0x24] sm:$0xf]
      %v407 = vld [vmem:[%s346 + $0x28] sm:$0xf]
      %v408 = vld [vmem:[%s346 + $0x2c] sm:$0xf]
      %v409 = vld [vmem:[%s346 + $0x30] sm:$0xf]
      %v410 = vld [vmem:[%s346 + $0x34] sm:$0xf]
      %v411 = vld [vmem:[%s346 + $0x38] sm:$0xf]
      %v412 = vld [vmem:[%s346 + $0x3c] sm:$0xf]
      %v413 = vld [vmem:[%s346 + $0x40] sm:$0xf]
      %v414 = vld [vmem:[%s346 + $0x44] sm:$0xf]
      %v415 = vld [vmem:[%s346 + $0x48] sm:$0xf]
      %v416 = vld [vmem:[%s346 + $0x4c] sm:$0xf]
      %v417 = vld [vmem:[%s346 + $0x50] sm:$0xf]
      %v418 = vld [vmem:[%s346 + $0x54] sm:$0xf]
      %v419 = vld [vmem:[%s346 + $0x58] sm:$0xf]
      %v420 = vld [vmem:[%s346 + $0x5c] sm:$0xf]
      %v421 = vld [vmem:[%s346 + $0x60] sm:$0xf]
      %v422 = vld [vmem:[%s346 + $0x64] sm:$0xf]
      %v423 = vld [vmem:[%s346 + $0x68] sm:$0xf]
      %v424 = vld [vmem:[%s346 + $0x6c] sm:$0xf]
      %v425 = vld [vmem:[%s346 + $0x70] sm:$0xf]
      %v426 = vld [vmem:[%s346 + $0x74] sm:$0xf]
      %v427 = vld [vmem:[%s346 + $0x78] sm:$0xf]
      %v428 = vld [vmem:[%s346 + $0x7c] sm:$0xf]
      %v461 = vunpack.c.l.b16 %v397
      %v462 = vunpack.c.l.b16 %v398
      %v463 = vunpack.c.l.b16 %v399
      %v464 = vunpack.c.l.b16 %v400
      %v465 = vunpack.c.l.b16 %v401
      %v466 = vunpack.c.l.b16 %v402
      %v467 = vunpack.c.l.b16 %v403
      %v468 = vunpack.c.l.b16 %v404
      %v469 = vunpack.c.l.b16 %v405
      %v470 = vunpack.c.l.b16 %v406
      %v471 = vunpack.c.l.b16 %v407
      %v472 = vunpack.c.l.b16 %v408
      %v473 = vunpack.c.l.b16 %v409
      %v474 = vunpack.c.l.b16 %v410
      %v475 = vunpack.c.l.b16 %v411
      %v476 = vunpack.c.l.b16 %v412
      %v477 = vunpack.c.l.b16 %v413
      %v478 = vunpack.c.l.b16 %v414
      %v479 = vunpack.c.l.b16 %v415
      %v480 = vunpack.c.l.b16 %v416
      %v481 = vunpack.c.l.b16 %v417
      %v482 = vunpack.c.l.b16 %v418
      %v483 = vunpack.c.l.b16 %v419
      %v484 = vunpack.c.l.b16 %v420
      %v485 = vunpack.c.l.b16 %v421
      %v486 = vunpack.c.l.b16 %v422
      %v487 = vunpack.c.l.b16 %v423
      %v488 = vunpack.c.l.b16 %v424
      %v489 = vunpack.c.l.b16 %v425
      %v490 = vunpack.c.l.b16 %v426
      %v491 = vunpack.c.l.b16 %v427
      %v492 = vunpack.c.l.b16 %v428
      %v493 = vpack.c.b16 %v462, %v461
      %v494 = vpack.c.b16 %v464, %v463
      %v495 = vpack.c.b16 %v466, %v465
      %v496 = vpack.c.b16 %v468, %v467
      %v497 = vpack.c.b16 %v470, %v469
      %v498 = vpack.c.b16 %v472, %v471
      %v499 = vpack.c.b16 %v474, %v473
      %v500 = vpack.c.b16 %v476, %v475
      %v501 = vpack.c.b16 %v478, %v477
      %v502 = vpack.c.b16 %v480, %v479
      %v503 = vpack.c.b16 %v482, %v481
      %v504 = vpack.c.b16 %v484, %v483
      %v505 = vpack.c.b16 %v486, %v485
      %v506 = vpack.c.b16 %v488, %v487
      %v507 = vpack.c.b16 %v490, %v489
      %v508 = vpack.c.b16 %v492, %v491
      %525 = vmatpush.bf16.msra.mxu0 %v500
      %526 = vmatpush.bf16.msra.mxu0 %v499
      %527 = vmatpush.bf16.msra.mxu0 %v498
      %528 = vmatpush.bf16.msra.mxu0 %v497
      %529 = vmatpush.bf16.msra.mxu0 %v496
      %530 = vmatpush.bf16.msra.mxu0 %v495
      %531 = vmatpush.bf16.msra.mxu0 %v494
      %532 = vmatpush.bf16.msra.mxu0 %v493
      %533 = vmatmul.bf16.gmra.mxu0 %v393
      %v534 = vpop.f32.mrf.mxu0
      %v535 = vadd.f32 0.0, %v534
      %v536 = vpop.f32.mrf.mxu0
      %v537 = vadd.f32 0.0, %v536
      %538 = vdwg.mxu0
      %539 = vmatpush.bf16.msra.mxu0 %v508
      %540 = vmatpush.bf16.msra.mxu0 %v507
      %541 = vmatpush.bf16.msra.mxu0 %v506
      %542 = vmatpush.bf16.msra.mxu0 %v505
      %543 = vmatpush.bf16.msra.mxu0 %v504
      %544 = vmatpush.bf16.msra.mxu0 %v503
      %545 = vmatpush.bf16.msra.mxu0 %v502
      %546 = vmatpush.bf16.msra.mxu0 %v501
      %547 = vmatmul.bf16.gmra.mxu0 %v394
      %v548 = vpop.f32.mrf.mxu0
      %v549 = vadd.f32 %v535, %v548
      %v550 = vpop.f32.mrf.mxu0
      %v551 = vadd.f32 %v537, %v550
      %552 = vdwg.mxu0
      %v553 = vadd.f32 %v395, %v549
      %v554 = vadd.f32 %v396, %v551
      %555 = vst [vmem:[#allocation2] sm:$0xff] %v553
      %556 = vst [vmem:[#allocation2 + $0x8] sm:$0xff] %v554
      // Predicated region
      $region37: #{_lambda_.25} parent=31 // pred_check
        %p557 = pneg %p377
      $region38: #{_lambda_.25} parent=31 // pred_check_branch
        %559 = sbr.rel (%p557) target = $region40
      $region39: #{_lambda_.25} parent=31 // pred_region
        %v560 = vld [vmem:[#allocation2] sm:$0xff]
        %v561 = vld [vmem:[#allocation2 + $0x8] sm:$0xff]
        %v562 = vld [vmem:[%s353] sm:$0x1]
        %v564 = vperm.slane %v562, 0
        %v566 = vadd.f32 %v560, %v564
        %v567 = vadd.f32 %v561, %v564
        %v568 = vpack.c.bf16 %v566, %v566
        %v569 = vpack.c.bf16 %v567, %v567
        %570 = vst [vmem:[%s365] sm:$0xf] %v568
        %571 = vst [vmem:[%s365 + $0x4] sm:$0xf] %v569
        %v572 = vadd.f32 %v566, %v567
        %v573 = vrot.slane %v572, 4
        %v574 = vadd.f32 %v572, %v573
        %v575 = vrot.slane %v574, 2
        %v576 = vadd.f32 %v574, %v575
        %v577 = vrot.slane %v576, 1
        %v578 = vadd.f32 %v576, %v577
        %v579 = vmul.f32 %v566, %v566
        %v580 = vmul.f32 %v567, %v567
        %v581 = vadd.f32 %v579, %v580
        %v582 = vrot.slane %v581, 4
        %v583 = vadd.f32 %v581, %v582
        %v584 = vrot.slane %v583, 2
        %v585 = vadd.f32 %v583, %v584
        %v586 = vrot.slane %v585, 1
        %v587 = vadd.f32 %v585, %v586
        %v588 = vlaneseq
        %v589 = vshrl.u32 %v588, 7
        %vm590 = vcmp.eq.s32.totalorder %v589, 0
        %vm591 = vcmp.eq.s32.totalorder %v589, 1
        %v592 = vsel %vm591, %v587, 0.0
        %v593 = vsel %vm590, %v578, %v592
        %594 = vst [vmem:[%s376] sm:$0xff] %v593
      $region40: #{_lambda_.25} parent=31 // pred_fallthru
        _
      %s595 = smul.u32 2, %s23
      %p596 = scmp.lt.s32.totalorder %s22, 3
      %s597 = scalar_select %p596, %s22, 3
      %p598 = scmp.lt.s32.totalorder %s595, 1
      %s599 = scalar_select %p598, %s595, 1
      %p600 = scmp.lt.s32.totalorder %s24, 0
      %s601 = scalar_select %p600, %s24, 0
      %s602 = sadd.s32 %s601, %s599
      %s603 = smul.addr %s597, 2
      %s604 = sadd.s32 %s602, %s603
      %s605 = smul.addr %s604, 4
      %s606 = scalar_lea.vmem %s3, %s605
      %p607 = scmp.lt.s32.totalorder %s22, 3
      %s608 = scalar_select %p607, %s22, 3
      %p609 = scmp.lt.s32.totalorder %s23, 0
      %s610 = scalar_select %p609, %s23, 0
      %p611 = scmp.lt.s32.totalorder %s24, 0
      %s612 = scalar_select %p611, %s24, 0
      %s613 = sadd.s32 %s612, %s610
      %s614 = sadd.s32 %s613, %s608
      %s615 = smul.addr %s614, 8
      %s616 = scalar_lea.vmem %s4, %s615
      // Predicated region
      $region41: #{_lambda_.25} parent=31 // pred_check
        %p617 = pneg %p152
      $region42: #{_lambda_.25} parent=31 // pred_check_branch
        %619 = sbr.rel (%p617) target = $region44
      $region43: #{_lambda_.25} parent=31 // pred_region
        %s620 = smul.u32 2, %s23
      $region44: #{_lambda_.25} parent=31 // pred_fallthru
        _
      // Predicated region
      $region45: #{_lambda_.25} parent=31 // pred_check
        %p621 = pneg %p182
      $region46: #{_lambda_.25} parent=31 // pred_check_branch
        %623 = sbr.rel (%p621) target = $region48
      $region47: #{_lambda_.25} parent=31 // pred_region
        _
      $region48: #{_lambda_.25} parent=31 // pred_fallthru
        _
    $region32: #{_lambda_.25} parent=5 // pred_fallthru
      _
    %p624 = scmp.le.s32.totalorder 2, %s11
    // Predicated region
    $region49: #{_lambda_.25} parent=5 // pred_check
      %p625 = pneg %p624
    $region50: #{_lambda_.25} parent=5 // pred_check_branch
      %627 = sbr.rel (%p625) target = $region52
    $region51: #{_lambda_.25} parent=5 // pred_region
      %s628 = ssub.s32 %s11, 2
      // Predicated region
      $region53: #{_lambda_.25} parent=51 // pred_check
        %p629 = pneg %p158
      $region54: #{_lambda_.25} parent=51 // pred_check_branch
        %631 = sbr.rel (%p629) target = $region56
      $region55: #{_lambda_.25} parent=51 // pred_region
        %s632 = smul.u32 2, %s27
        %p633 = scmp.lt.s32.totalorder %s26, 3
        %s634 = scalar_select %p633, %s26, 3
        %p635 = scmp.lt.s32.totalorder %s632, 1
        %s636 = scalar_select %p635, %s632, 1
        %p637 = scmp.lt.s32.totalorder %s28, 0
        %s638 = scalar_select %p637, %s28, 0
        %s639 = sadd.s32 %s638, %s636
        %s640 = smul.addr %s634, 2
        %s641 = sadd.s32 %s639, %s640
        %s642 = smul.addr %s641, 4
        %s643 = scalar_lea.vmem %s3, %s642
      $region56: #{_lambda_.25} parent=51 // pred_fallthru
        _
      // Predicated region
      $region57: #{_lambda_.25} parent=51 // pred_check
        %p644 = pneg %p188
      $region58: #{_lambda_.25} parent=51 // pred_check_branch
        %646 = sbr.rel (%p644) target = $region60
      $region59: #{_lambda_.25} parent=51 // pred_region
        %p647 = scmp.lt.s32.totalorder %s26, 3
        %s648 = scalar_select %p647, %s26, 3
        %p649 = scmp.lt.s32.totalorder %s27, 0
        %s650 = scalar_select %p649, %s27, 0
        %p651 = scmp.lt.s32.totalorder %s28, 0
        %s652 = scalar_select %p651, %s28, 0
        %s653 = sadd.s32 %s652, %s650
        %s654 = sadd.s32 %s653, %s648
        %s655 = smul.addr %s654, 8
        %s656 = scalar_lea.vmem %s4, %s655
      $region60: #{_lambda_.25} parent=51 // pred_fallthru
        _
    $region52: #{_lambda_.25} parent=5 // pred_fallthru
      _
  $region6: #{_lambda_.25} parent=0 // loop_footer
    %s15 = sadd.s32 1, %s11
  $region7: #{_lambda_.25} parent=0 // loop_footer_branch
    %10 = sbr.rel target = $region3
  $region8: #{_lambda_.25} parent=0 // loop_exit
    _

// kernel: _lambda_.24
$region0: #{_lambda_.24}
  #allocation0 [shape = 'u32[]', space=smem, size = 0x4, offset = 0x4, fixed_abs, tag = 'smem constant byte address 0x4 - core index']
  #allocation1 [shape = 'u32[72,128]{1,0:T(1,128)}', space=vmem, size = 0x9000, scoped, tag = 'internal scratch']
  #allocation2 [shape = 'f32[16,128]{1,0:T(8,128)}', space=vmem, size = 0x2000, scoped, tag = 'scratch operand']
  %s0 = inlined_call_operand.vmem [shape: bf16[1,16,1024], index: 0, kind: input, shape index: {}]
  %s1 = inlined_call_operand.vmem [shape: bf16[1,1024,128], index: 1, kind: input, shape index: {}]
  %s2 = inlined_call_operand.vmem [shape: f32[1,1,128], index: 2, kind: input, shape index: {}]
  %s3 = inlined_call_operand.vmem [shape: bf16[1,16,128], index: 3, kind: output, shape index: {}]
  %s4 = sld [smem:[#allocation0]]
  $region30: #{_lambda_.24} parent=0
    _
  %s6 = ssub.s32 1, %s4
  %s7 = scalar_select 0, %s6, %s4
  // Predicated region
  $region2: #{_lambda_.24} parent=0 // pred_check
    _
  $region3: #{_lambda_.24} parent=0 // pred_check_branch
    %9 = sbr.rel (0) target = $region5
  $region4: #{_lambda_.24} parent=0 // pred_region
    _
  $region5: #{_lambda_.24} parent=0 // pred_fallthru
    _
  // Predicated region
  $region6: #{_lambda_.24} parent=0 // pred_check
    _
  $region7: #{_lambda_.24} parent=0 // pred_check_branch
    %11 = sbr.rel (0) target = $region9
  $region8: #{_lambda_.24} parent=0 // pred_region
    _
  $region9: #{_lambda_.24} parent=0 // pred_fallthru
    _
  // Predicated region
  $region10: #{_lambda_.24} parent=0 // pred_check
    _
  $region11: #{_lambda_.24} parent=0 // pred_check_branch
    %13 = sbr.rel (0) target = $region13
  $region12: #{_lambda_.24} parent=0 // pred_region
    _
  $region13: #{_lambda_.24} parent=0 // pred_fallthru
    _
  %p14 = scmp.eq.s32.totalorder 0, 0
  // Predicated region
  $region14: #{_lambda_.24} parent=0 // pred_check
    %p15 = pneg %p14
  $region15: #{_lambda_.24} parent=0 // pred_check_branch
    %17 = sbr.rel (%p15) target = $region17
  $region16: #{_lambda_.24} parent=0 // pred_region
    %18 = vst [vmem:[#allocation2] sm:$0xff] 0.0
    %19 = vst [vmem:[#allocation2 + $0x8] sm:$0xff] 0.0
  $region17: #{_lambda_.24} parent=0 // pred_fallthru
    _
  %v20 = vld [vmem:[%s0] sm:$0xff]
  %v21 = vld [vmem:[%s0 + $0x8] sm:$0xff]
  %v22 = vld [vmem:[%s0 + $0x10] sm:$0xff]
  %v23 = vld [vmem:[%s0 + $0x18] sm:$0xff]
  %v24 = vld [vmem:[%s0 + $0x20] sm:$0xff]
  %v25 = vld [vmem:[%s0 + $0x28] sm:$0xff]
  %v26 = vld [vmem:[%s0 + $0x30] sm:$0xff]
  %v27 = vld [vmem:[%s0 + $0x38] sm:$0xff]
  %v28 = vunpack.c.l.bf16 %v20
  %v29 = vunpack.c.h.bf16 %v20
  %v30 = vunpack.c.l.bf16 %v21
  %v31 = vunpack.c.h.bf16 %v21
  %v32 = vunpack.c.l.bf16 %v22
  %v33 = vunpack.c.h.bf16 %v22
  %v34 = vunpack.c.l.bf16 %v23
  %v35 = vunpack.c.h.bf16 %v23
  %v36 = vunpack.c.l.bf16 %v24
  %v37 = vunpack.c.h.bf16 %v24
  %v38 = vunpack.c.l.bf16 %v25
  %v39 = vunpack.c.h.bf16 %v25
  %v40 = vunpack.c.l.bf16 %v26
  %v41 = vunpack.c.h.bf16 %v26
  %v42 = vunpack.c.l.bf16 %v27
  %v43 = vunpack.c.h.bf16 %v27
  %vm44 = vcmp.ge.f32.partialorder %v28, 0.0
  %vm45 = vcmp.ge.f32.partialorder %v29, 0.0
  %vm46 = vcmp.ge.f32.partialorder %v30, 0.0
  %vm47 = vcmp.ge.f32.partialorder %v31, 0.0
  %vm48 = vcmp.ge.f32.partialorder %v32, 0.0
  %vm49 = vcmp.ge.f32.partialorder %v33, 0.0
  %vm50 = vcmp.ge.f32.partialorder %v34, 0.0
  %vm51 = vcmp.ge.f32.partialorder %v35, 0.0
  %vm52 = vcmp.ge.f32.partialorder %v36, 0.0
  %vm53 = vcmp.ge.f32.partialorder %v37, 0.0
  %vm54 = vcmp.ge.f32.partialorder %v38, 0.0
  %vm55 = vcmp.ge.f32.partialorder %v39, 0.0
  %vm56 = vcmp.ge.f32.partialorder %v40, 0.0
  %vm57 = vcmp.ge.f32.partialorder %v41, 0.0
  %vm58 = vcmp.ge.f32.partialorder %v42, 0.0
  %vm59 = vcmp.ge.f32.partialorder %v43, 0.0
  %v60 = vmul.f32 %v28, 0.20019531
  %v61 = vmul.f32 %v29, 0.20019531
  %v62 = vmul.f32 %v30, 0.20019531
  %v63 = vmul.f32 %v31, 0.20019531
  %v64 = vmul.f32 %v32, 0.20019531
  %v65 = vmul.f32 %v33, 0.20019531
  %v66 = vmul.f32 %v34, 0.20019531
  %v67 = vmul.f32 %v35, 0.20019531
  %v68 = vmul.f32 %v36, 0.20019531
  %v69 = vmul.f32 %v37, 0.20019531
  %v70 = vmul.f32 %v38, 0.20019531
  %v71 = vmul.f32 %v39, 0.20019531
  %v72 = vmul.f32 %v40, 0.20019531
  %v73 = vmul.f32 %v41, 0.20019531
  %v74 = vmul.f32 %v42, 0.20019531
  %v75 = vmul.f32 %v43, 0.20019531
  %v76 = vpack.c.bf16 %v61, %v60
  %v77 = vpack.c.bf16 %v63, %v62
  %v78 = vpack.c.bf16 %v65, %v64
  %v79 = vpack.c.bf16 %v67, %v66
  %v80 = vpack.c.bf16 %v69, %v68
  %v81 = vpack.c.bf16 %v71, %v70
  %v82 = vpack.c.bf16 %v73, %v72
  %v83 = vpack.c.bf16 %v75, %v74
  %vm84 = vmpackc.low %vm45, %vm44
  %vm85 = vmpackc.low %vm47, %vm46
  %vm86 = vmpackc.low %vm49, %vm48
  %vm87 = vmpackc.low %vm51, %vm50
  %vm88 = vmpackc.low %vm53, %vm52
  %vm89 = vmpackc.low %vm55, %vm54
  %vm90 = vmpackc.low %vm57, %vm56
  %vm91 = vmpackc.low %vm59, %vm58
  %v92 = vsel %vm84, %v20, %v76
  %v93 = vsel %vm85, %v21, %v77
  %v94 = vsel %vm86, %v22, %v78
  %v95 = vsel %vm87, %v23, %v79
  %v96 = vsel %vm88, %v24, %v80
  %v97 = vsel %vm89, %v25, %v81
  %v98 = vsel %vm90, %v26, %v82
  %v99 = vsel %vm91, %v27, %v83
  %v100 = vld [vmem:[#allocation2] sm:$0xff]
  %v101 = vld [vmem:[#allocation2 + $0x8] sm:$0xff]
  %v102 = vld [vmem:[%s1] sm:$0xf]
  %v103 = vld [vmem:[%s1 + $0x4] sm:$0xf]
  %v104 = vld [vmem:[%s1 + $0x8] sm:$0xf]
  %v105 = vld [vmem:[%s1 + $0xc] sm:$0xf]
  %v106 = vld [vmem:[%s1 + $0x10] sm:$0xf]
  %v107 = vld [vmem:[%s1 + $0x14] sm:$0xf]
  %v108 = vld [vmem:[%s1 + $0x18] sm:$0xf]
  %v109 = vld [vmem:[%s1 + $0x1c] sm:$0xf]
  %v110 = vld [vmem:[%s1 + $0x20] sm:$0xf]
  %v111 = vld [vmem:[%s1 + $0x24] sm:$0xf]
  %v112 = vld [vmem:[%s1 + $0x28] sm:$0xf]
  %v113 = vld [vmem:[%s1 + $0x2c] sm:$0xf]
  %v114 = vld [vmem:[%s1 + $0x30] sm:$0xf]
  %v115 = vld [vmem:[%s1 + $0x34] sm:$0xf]
  %v116 = vld [vmem:[%s1 + $0x38] sm:$0xf]
  %v117 = vld [vmem:[%s1 + $0x3c] sm:$0xf]
  %v118 = vld [vmem:[%s1 + $0x40] sm:$0xf]
  %v119 = vld [vmem:[%s1 + $0x44] sm:$0xf]
  %v120 = vld [vmem:[%s1 + $0x48] sm:$0xf]
  %v121 = vld [vmem:[%s1 + $0x4c] sm:$0xf]
  %v122 = vld [vmem:[%s1 + $0x50] sm:$0xf]
  %v123 = vld [vmem:[%s1 + $0x54] sm:$0xf]
  %v124 = vld [vmem:[%s1 + $0x58] sm:$0xf]
  %v125 = vld [vmem:[%s1 + $0x5c] sm:$0xf]
  %v126 = vld [vmem:[%s1 + $0x60] sm:$0xf]
  %v127 = vld [vmem:[%s1 + $0x64] sm:$0xf]
  %v128 = vld [vmem:[%s1 + $0x68] sm:$0xf]
  %v129 = vld [vmem:[%s1 + $0x6c] sm:$0xf]
  %v130 = vld [vmem:[%s1 + $0x70] sm:$0xf]
  %v131 = vld [vmem:[%s1 + $0x74] sm:$0xf]
  %v132 = vld [vmem:[%s1 + $0x78] sm:$0xf]
  %v133 = vld [vmem:[%s1 + $0x7c] sm:$0xf]
  %v134 = vld [vmem:[%s1 + $0x80] sm:$0xf]
  %v135 = vld [vmem:[%s1 + $0x84] sm:$0xf]
  %v136 = vld [vmem:[%s1 + $0x88] sm:$0xf]
  %v137 = vld [vmem:[%s1 + $0x8c] sm:$0xf]
  %v138 = vld [vmem:[%s1 + $0x90] sm:$0xf]
  %v139 = vld [vmem:[%s1 + $0x94] sm:$0xf]
  %v140 = vld [vmem:[%s1 + $0x98] sm:$0xf]
  %v141 = vld [vmem:[%s1 + $0x9c] sm:$0xf]
  %v142 = vld [vmem:[%s1 + $0xa0] sm:$0xf]
  %v143 = vld [vmem:[%s1 + $0xa4] sm:$0xf]
  %v144 = vld [vmem:[%s1 + $0xa8] sm:$0xf]
  %v145 = vld [vmem:[%s1 + $0xac] sm:$0xf]
  %v146 = vld [vmem:[%s1 + $0xb0] sm:$0xf]
  %v147 = vld [vmem:[%s1 + $0xb4] sm:$0xf]
  %v148 = vld [vmem:[%s1 + $0xb8] sm:$0xf]
  %v149 = vld [vmem:[%s1 + $0xbc] sm:$0xf]
  %v150 = vld [vmem:[%s1 + $0xc0] sm:$0xf]
  %v151 = vld [vmem:[%s1 + $0xc4] sm:$0xf]
  %v152 = vld [vmem:[%s1 + $0xc8] sm:$0xf]
  %v153 = vld [vmem:[%s1 + $0xcc] sm:$0xf]
  %v154 = vld [vmem:[%s1 + $0xd0] sm:$0xf]
  %v155 = vld [vmem:[%s1 + $0xd4] sm:$0xf]
  %v156 = vld [vmem:[%s1 + $0xd8] sm:$0xf]
  %v157 = vld [vmem:[%s1 + $0xdc] sm:$0xf]
  %v158 = vld [vmem:[%s1 + $0xe0] sm:$0xf]
  %v159 = vld [vmem:[%s1 + $0xe4] sm:$0xf]
  %v160 = vld [vmem:[%s1 + $0xe8] sm:$0xf]
  %v161 = vld [vmem:[%s1 + $0xec] sm:$0xf]
  %v162 = vld [vmem:[%s1 + $0xf0] sm:$0xf]
  %v163 = vld [vmem:[%s1 + $0xf4] sm:$0xf]
  %v164 = vld [vmem:[%s1 + $0xf8] sm:$0xf]
  %v165 = vld [vmem:[%s1 + $0xfc] sm:$0xf]
  %v166 = vld [vmem:[%s1 + $0x100] sm:$0xf]
  %v167 = vld [vmem:[%s1 + $0x104] sm:$0xf]
  %v168 = vld [vmem:[%s1 + $0x108] sm:$0xf]
  %v169 = vld [vmem:[%s1 + $0x10c] sm:$0xf]
  %v170 = vld [vmem:[%s1 + $0x110] sm:$0xf]
  %v171 = vld [vmem:[%s1 + $0x114] sm:$0xf]
  %v172 = vld [vmem:[%s1 + $0x118] sm:$0xf]
  %v173 = vld [vmem:[%s1 + $0x11c] sm:$0xf]
  %v174 = vld [vmem:[%s1 + $0x120] sm:$0xf]
  %v175 = vld [vmem:[%s1 + $0x124] sm:$0xf]
  %v176 = vld [vmem:[%s1 + $0x128] sm:$0xf]
  %v177 = vld [vmem:[%s1 + $0x12c] sm:$0xf]
  %v178 = vld [vmem:[%s1 + $0x130] sm:$0xf]
  %v179 = vld [vmem:[%s1 + $0x134] sm:$0xf]
  %v180 = vld [vmem:[%s1 + $0x138] sm:$0xf]
  %v181 = vld [vmem:[%s1 + $0x13c] sm:$0xf]
  %v182 = vld [vmem:[%s1 + $0x140] sm:$0xf]
  %v183 = vld [vmem:[%s1 + $0x144] sm:$0xf]
  %v184 = vld [vmem:[%s1 + $0x148] sm:$0xf]
  %v185 = vld [vmem:[%s1 + $0x14c] sm:$0xf]
  %v186 = vld [vmem:[%s1 + $0x150] sm:$0xf]
  %v187 = vld [vmem:[%s1 + $0x154] sm:$0xf]
  %v188 = vld [vmem:[%s1 + $0x158] sm:$0xf]
  %v189 = vld [vmem:[%s1 + $0x15c] sm:$0xf]
  %v190 = vld [vmem:[%s1 + $0x160] sm:$0xf]
  %v191 = vld [vmem:[%s1 + $0x164] sm:$0xf]
  %v192 = vld [vmem:[%s1 + $0x168] sm:$0xf]
  %v193 = vld [vmem:[%s1 + $0x16c] sm:$0xf]
  %v194 = vld [vmem:[%s1 + $0x170] sm:$0xf]
  %v195 = vld [vmem:[%s1 + $0x174] sm:$0xf]
  %v196 = vld [vmem:[%s1 + $0x178] sm:$0xf]
  %v197 = vld [vmem:[%s1 + $0x17c] sm:$0xf]
  %v198 = vld [vmem:[%s1 + $0x180] sm:$0xf]
  %v199 = vld [vmem:[%s1 + $0x184] sm:$0xf]
  %v200 = vld [vmem:[%s1 + $0x188] sm:$0xf]
  %v201 = vld [vmem:[%s1 + $0x18c] sm:$0xf]
  %v202 = vld [vmem:[%s1 + $0x190] sm:$0xf]
  %v203 = vld [vmem:[%s1 + $0x194] sm:$0xf]
  %v204 = vld [vmem:[%s1 + $0x198] sm:$0xf]
  %v205 = vld [vmem:[%s1 + $0x19c] sm:$0xf]
  %v206 = vld [vmem:[%s1 + $0x1a0] sm:$0xf]
  %v207 = vld [vmem:[%s1 + $0x1a4] sm:$0xf]
  %v208 = vld [vmem:[%s1 + $0x1a8] sm:$0xf]
  %v209 = vld [vmem:[%s1 + $0x1ac] sm:$0xf]
  %v210 = vld [vmem:[%s1 + $0x1b0] sm:$0xf]
  %v211 = vld [vmem:[%s1 + $0x1b4] sm:$0xf]
  %v212 = vld [vmem:[%s1 + $0x1b8] sm:$0xf]
  %v213 = vld [vmem:[%s1 + $0x1bc] sm:$0xf]
  %v214 = vld [vmem:[%s1 + $0x1c0] sm:$0xf]
  %v215 = vld [vmem:[%s1 + $0x1c4] sm:$0xf]
  %v216 = vld [vmem:[%s1 + $0x1c8] sm:$0xf]
  %v217 = vld [vmem:[%s1 + $0x1cc] sm:$0xf]
  %v218 = vld [vmem:[%s1 + $0x1d0] sm:$0xf]
  %v219 = vld [vmem:[%s1 + $0x1d4] sm:$0xf]
  %v220 = vld [vmem:[%s1 + $0x1d8] sm:$0xf]
  %v221 = vld [vmem:[%s1 + $0x1dc] sm:$0xf]
  %v222 = vld [vmem:[%s1 + $0x1e0] sm:$0xf]
  %v223 = vld [vmem:[%s1 + $0x1e4] sm:$0xf]
  %v224 = vld [vmem:[%s1 + $0x1e8] sm:$0xf]
  %v225 = vld [vmem:[%s1 + $0x1ec] sm:$0xf]
  %v226 = vld [vmem:[%s1 + $0x1f0] sm:$0xf]
  %v227 = vld [vmem:[%s1 + $0x1f4] sm:$0xf]
  %v228 = vld [vmem:[%s1 + $0x1f8] sm:$0xf]
  %v229 = vld [vmem:[%s1 + $0x1fc] sm:$0xf]
  %v238 = vunpack.c.l.b16 %v92
  %v239 = vunpack.c.h.b16 %v92
  %v240 = vunpack.c.l.b16 %v93
  %v241 = vunpack.c.h.b16 %v93
  %v242 = vunpack.c.l.b16 %v94
  %v243 = vunpack.c.h.b16 %v94
  %v244 = vunpack.c.l.b16 %v95
  %v245 = vunpack.c.h.b16 %v95
  %v246 = vunpack.c.l.b16 %v96
  %v247 = vunpack.c.h.b16 %v96
  %v248 = vunpack.c.l.b16 %v97
  %v249 = vunpack.c.h.b16 %v97
  %v250 = vunpack.c.l.b16 %v98
  %v251 = vunpack.c.h.b16 %v98
  %v252 = vunpack.c.l.b16 %v99
  %v253 = vunpack.c.h.b16 %v99
  %v254 = vpack.c.b16 %v246, %v238
  %v255 = vpack.c.b16 %v247, %v239
  %v256 = vpack.c.b16 %v248, %v240
  %v257 = vpack.c.b16 %v249, %v241
  %v258 = vpack.c.b16 %v250, %v242
  %v259 = vpack.c.b16 %v251, %v243
  %v260 = vpack.c.b16 %v252, %v244
  %v261 = vpack.c.b16 %v253, %v245
  %v398 = vunpack.c.l.b16 %v102
  %v399 = vunpack.c.l.b16 %v103
  %v400 = vunpack.c.l.b16 %v104
  %v401 = vunpack.c.l.b16 %v105
  %v402 = vunpack.c.l.b16 %v106
  %v403 = vunpack.c.l.b16 %v107
  %v404 = vunpack.c.l.b16 %v108
  %v405 = vunpack.c.l.b16 %v109
  %v406 = vunpack.c.l.b16 %v110
  %v407 = vunpack.c.l.b16 %v111
  %v408 = vunpack.c.l.b16 %v112
  %v409 = vunpack.c.l.b16 %v113
  %v410 = vunpack.c.l.b16 %v114
  %v411 = vunpack.c.l.b16 %v115
  %v412 = vunpack.c.l.b16 %v116
  %v413 = vunpack.c.l.b16 %v117
  %v414 = vunpack.c.l.b16 %v118
  %v415 = vunpack.c.l.b16 %v119
  %v416 = vunpack.c.l.b16 %v120
  %v417 = vunpack.c.l.b16 %v121
  %v418 = vunpack.c.l.b16 %v122
  %v419 = vunpack.c.l.b16 %v123
  %v420 = vunpack.c.l.b16 %v124
  %v421 = vunpack.c.l.b16 %v125
  %v422 = vunpack.c.l.b16 %v126
  %v423 = vunpack.c.l.b16 %v127
  %v424 = vunpack.c.l.b16 %v128
  %v425 = vunpack.c.l.b16 %v129
  %v426 = vunpack.c.l.b16 %v130
  %v427 = vunpack.c.l.b16 %v131
  %v428 = vunpack.c.l.b16 %v132
  %v429 = vunpack.c.l.b16 %v133
  %v430 = vunpack.c.l.b16 %v134
  %v431 = vunpack.c.l.b16 %v135
  %v432 = vunpack.c.l.b16 %v136
  %v433 = vunpack.c.l.b16 %v137
  %v434 = vunpack.c.l.b16 %v138
  %v435 = vunpack.c.l.b16 %v139
  %v436 = vunpack.c.l.b16 %v140
  %v437 = vunpack.c.l.b16 %v141
  %v438 = vunpack.c.l.b16 %v142
  %v439 = vunpack.c.l.b16 %v143
  %v440 = vunpack.c.l.b16 %v144
  %v441 = vunpack.c.l.b16 %v145
  %v442 = vunpack.c.l.b16 %v146
  %v443 = vunpack.c.l.b16 %v147
  %v444 = vunpack.c.l.b16 %v148
  %v445 = vunpack.c.l.b16 %v149
  %v446 = vunpack.c.l.b16 %v150
  %v447 = vunpack.c.l.b16 %v151
  %v448 = vunpack.c.l.b16 %v152
  %v449 = vunpack.c.l.b16 %v153
  %v450 = vunpack.c.l.b16 %v154
  %v451 = vunpack.c.l.b16 %v155
  %v452 = vunpack.c.l.b16 %v156
  %v453 = vunpack.c.l.b16 %v157
  %v454 = vunpack.c.l.b16 %v158
  %v455 = vunpack.c.l.b16 %v159
  %v456 = vunpack.c.l.b16 %v160
  %v457 = vunpack.c.l.b16 %v161
  %v458 = vunpack.c.l.b16 %v162
  %v459 = vunpack.c.l.b16 %v163
  %v460 = vunpack.c.l.b16 %v164
  %v461 = vunpack.c.l.b16 %v165
  %v462 = vunpack.c.l.b16 %v166
  %v463 = vunpack.c.l.b16 %v167
  %v464 = vunpack.c.l.b16 %v168
  %v465 = vunpack.c.l.b16 %v169
  %v466 = vunpack.c.l.b16 %v170
  %v467 = vunpack.c.l.b16 %v171
  %v468 = vunpack.c.l.b16 %v172
  %v469 = vunpack.c.l.b16 %v173
  %v470 = vunpack.c.l.b16 %v174
  %v471 = vunpack.c.l.b16 %v175
  %v472 = vunpack.c.l.b16 %v176
  %v473 = vunpack.c.l.b16 %v177
  %v474 = vunpack.c.l.b16 %v178
  %v475 = vunpack.c.l.b16 %v179
  %v476 = vunpack.c.l.b16 %v180
  %v477 = vunpack.c.l.b16 %v181
  %v478 = vunpack.c.l.b16 %v182
  %v479 = vunpack.c.l.b16 %v183
  %v480 = vunpack.c.l.b16 %v184
  %v481 = vunpack.c.l.b16 %v185
  %v482 = vunpack.c.l.b16 %v186
  %v483 = vunpack.c.l.b16 %v187
  %v484 = vunpack.c.l.b16 %v188
  %v485 = vunpack.c.l.b16 %v189
  %v486 = vunpack.c.l.b16 %v190
  %v487 = vunpack.c.l.b16 %v191
  %v488 = vunpack.c.l.b16 %v192
  %v489 = vunpack.c.l.b16 %v193
  %v490 = vunpack.c.l.b16 %v194
  %v491 = vunpack.c.l.b16 %v195
  %v492 = vunpack.c.l.b16 %v196
  %v493 = vunpack.c.l.b16 %v197
  %v494 = vunpack.c.l.b16 %v198
  %v495 = vunpack.c.l.b16 %v199
  %v496 = vunpack.c.l.b16 %v200
  %v497 = vunpack.c.l.b16 %v201
  %v498 = vunpack.c.l.b16 %v202
  %v499 = vunpack.c.l.b16 %v203
  %v500 = vunpack.c.l.b16 %v204
  %v501 = vunpack.c.l.b16 %v205
  %v502 = vunpack.c.l.b16 %v206
  %v503 = vunpack.c.l.b16 %v207
  %v504 = vunpack.c.l.b16 %v208
  %v505 = vunpack.c.l.b16 %v209
  %v506 = vunpack.c.l.b16 %v210
  %v507 = vunpack.c.l.b16 %v211
  %v508 = vunpack.c.l.b16 %v212
  %v509 = vunpack.c.l.b16 %v213
  %v510 = vunpack.c.l.b16 %v214
  %v511 = vunpack.c.l.b16 %v215
  %v512 = vunpack.c.l.b16 %v216
  %v513 = vunpack.c.l.b16 %v217
  %v514 = vunpack.c.l.b16 %v218
  %v515 = vunpack.c.l.b16 %v219
  %v516 = vunpack.c.l.b16 %v220
  %v517 = vunpack.c.l.b16 %v221
  %v518 = vunpack.c.l.b16 %v222
  %v519 = vunpack.c.l.b16 %v223
  %v520 = vunpack.c.l.b16 %v224
  %v521 = vunpack.c.l.b16 %v225
  %v522 = vunpack.c.l.b16 %v226
  %v523 = vunpack.c.l.b16 %v227
  %v524 = vunpack.c.l.b16 %v228
  %v525 = vunpack.c.l.b16 %v229
  %v526 = vpack.c.b16 %v399, %v398
  %v527 = vpack.c.b16 %v401, %v400
  %v528 = vpack.c.b16 %v403, %v402
  %v529 = vpack.c.b16 %v405, %v404
  %v530 = vpack.c.b16 %v407, %v406
  %v531 = vpack.c.b16 %v409, %v408
  %v532 = vpack.c.b16 %v411, %v410
  %v533 = vpack.c.b16 %v413, %v412
  %v534 = vpack.c.b16 %v415, %v414
  %v535 = vpack.c.b16 %v417, %v416
  %v536 = vpack.c.b16 %v419, %v418
  %v537 = vpack.c.b16 %v421, %v420
  %v538 = vpack.c.b16 %v423, %v422
  %v539 = vpack.c.b16 %v425, %v424
  %v540 = vpack.c.b16 %v427, %v426
  %v541 = vpack.c.b16 %v429, %v428
  %v542 = vpack.c.b16 %v431, %v430
  %v543 = vpack.c.b16 %v433, %v432
  %v544 = vpack.c.b16 %v435, %v434
  %v545 = vpack.c.b16 %v437, %v436
  %v546 = vpack.c.b16 %v439, %v438
  %v547 = vpack.c.b16 %v441, %v440
  %v548 = vpack.c.b16 %v443, %v442
  %v549 = vpack.c.b16 %v445, %v444
  %v550 = vpack.c.b16 %v447, %v446
  %v551 = vpack.c.b16 %v449, %v448
  %v552 = vpack.c.b16 %v451, %v450
  %v553 = vpack.c.b16 %v453, %v452
  %v554 = vpack.c.b16 %v455, %v454
  %v555 = vpack.c.b16 %v457, %v456
  %v556 = vpack.c.b16 %v459, %v458
  %v557 = vpack.c.b16 %v461, %v460
  %v558 = vpack.c.b16 %v463, %v462
  %v559 = vpack.c.b16 %v465, %v464
  %v560 = vpack.c.b16 %v467, %v466
  %v561 = vpack.c.b16 %v469, %v468
  %v562 = vpack.c.b16 %v471, %v470
  %v563 = vpack.c.b16 %v473, %v472
  %v564 = vpack.c.b16 %v475, %v474
  %v565 = vpack.c.b16 %v477, %v476
  %v566 = vpack.c.b16 %v479, %v478
  %v567 = vpack.c.b16 %v481, %v480
  %v568 = vpack.c.b16 %v483, %v482
  %v569 = vpack.c.b16 %v485, %v484
  %v570 = vpack.c.b16 %v487, %v486
  %v571 = vpack.c.b16 %v489, %v488
  %v572 = vpack.c.b16 %v491, %v490
  %v573 = vpack.c.b16 %v493, %v492
  %v574 = vpack.c.b16 %v495, %v494
  %v575 = vpack.c.b16 %v497, %v496
  %v576 = vpack.c.b16 %v499, %v498
  %v577 = vpack.c.b16 %v501, %v500
  %v578 = vpack.c.b16 %v503, %v502
  %v579 = vpack.c.b16 %v505, %v504
  %v580 = vpack.c.b16 %v507, %v506
  %v581 = vpack.c.b16 %v509, %v508
  %v582 = vpack.c.b16 %v511, %v510
  %v583 = vpack.c.b16 %v513, %v512
  %v584 = vpack.c.b16 %v515, %v514
  %v585 = vpack.c.b16 %v517, %v516
  %v586 = vpack.c.b16 %v519, %v518
  %v587 = vpack.c.b16 %v521, %v520
  %v588 = vpack.c.b16 %v523, %v522
  %v589 = vpack.c.b16 %v525, %v524
  %654 = vmatpush.bf16.msra.mxu0 %v533
  %655 = vmatpush.bf16.msra.mxu0 %v532
  %656 = vmatpush.bf16.msra.mxu0 %v531
  %657 = vmatpush.bf16.msra.mxu0 %v530
  %658 = vmatpush.bf16.msra.mxu0 %v529
  %659 = vmatpush.bf16.msra.mxu0 %v528
  %660 = vmatpush.bf16.msra.mxu0 %v527
  %661 = vmatpush.bf16.msra.mxu0 %v526
  %662 = vmatmul.bf16.gmra.mxu0 %v254
  %v663 = vpop.f32.mrf.mxu0
  %v664 = vadd.f32 0.0, %v663
  %v665 = vpop.f32.mrf.mxu0
  %v666 = vadd.f32 0.0, %v665
  %667 = vdwg.mxu0
  %668 = vmatpush.bf16.msra.mxu0 %v541
  %669 = vmatpush.bf16.msra.mxu0 %v540
  %670 = vmatpush.bf16.msra.mxu0 %v539
  %671 = vmatpush.bf16.msra.mxu0 %v538
  %672 = vmatpush.bf16.msra.mxu0 %v537
  %673 = vmatpush.bf16.msra.mxu0 %v536
  %674 = vmatpush.bf16.msra.mxu0 %v535
  %675 = vmatpush.bf16.msra.mxu0 %v534
  %676 = vmatmul.bf16.gmra.mxu0 %v255
  %v677 = vpop.f32.mrf.mxu0
  %v678 = vadd.f32 %v664, %v677
  %v679 = vpop.f32.mrf.mxu0
  %v680 = vadd.f32 %v666, %v679
  %681 = vdwg.mxu0
  %682 = vmatpush.bf16.msra.mxu0 %v549
  %683 = vmatpush.bf16.msra.mxu0 %v548
  %684 = vmatpush.bf16.msra.mxu0 %v547
  %685 = vmatpush.bf16.msra.mxu0 %v546
  %686 = vmatpush.bf16.msra.mxu0 %v545
  %687 = vmatpush.bf16.msra.mxu0 %v544
  %688 = vmatpush.bf16.msra.mxu0 %v543
  %689 = vmatpush.bf16.msra.mxu0 %v542
  %690 = vmatmul.bf16.gmra.mxu0 %v256
  %v691 = vpop.f32.mrf.mxu0
  %v692 = vadd.f32 %v678, %v691
  %v693 = vpop.f32.mrf.mxu0
  %v694 = vadd.f32 %v680, %v693
  %695 = vdwg.mxu0
  %696 = vmatpush.bf16.msra.mxu0 %v557
  %697 = vmatpush.bf16.msra.mxu0 %v556
  %698 = vmatpush.bf16.msra.mxu0 %v555
  %699 = vmatpush.bf16.msra.mxu0 %v554
  %700 = vmatpush.bf16.msra.mxu0 %v553
  %701 = vmatpush.bf16.msra.mxu0 %v552
  %702 = vmatpush.bf16.msra.mxu0 %v551
  %703 = vmatpush.bf16.msra.mxu0 %v550
  %704 = vmatmul.bf16.gmra.mxu0 %v257
  %v705 = vpop.f32.mrf.mxu0
  %v706 = vadd.f32 %v692, %v705
  %v707 = vpop.f32.mrf.mxu0
  %v708 = vadd.f32 %v694, %v707
  %709 = vdwg.mxu0
  %710 = vmatpush.bf16.msra.mxu0 %v565
  %711 = vmatpush.bf16.msra.mxu0 %v564
  %712 = vmatpush.bf16.msra.mxu0 %v563
  %713 = vmatpush.bf16.msra.mxu0 %v562
  %714 = vmatpush.bf16.msra.mxu0 %v561
  %715 = vmatpush.bf16.msra.mxu0 %v560
  %716 = vmatpush.bf16.msra.mxu0 %v559
  %717 = vmatpush.bf16.msra.mxu0 %v558
  %718 = vmatmul.bf16.gmra.mxu0 %v258
  %v719 = vpop.f32.mrf.mxu0
  %v720 = vadd.f32 %v706, %v719
  %v721 = vpop.f32.mrf.mxu0
  %v722 = vadd.f32 %v708, %v721
  %723 = vdwg.mxu0
  %724 = vmatpush.bf16.msra.mxu0 %v573
  %725 = vmatpush.bf16.msra.mxu0 %v572
  %726 = vmatpush.bf16.msra.mxu0 %v571
  %727 = vmatpush.bf16.msra.mxu0 %v570
  %728 = vmatpush.bf16.msra.mxu0 %v569
  %729 = vmatpush.bf16.msra.mxu0 %v568
  %730 = vmatpush.bf16.msra.mxu0 %v567
  %731 = vmatpush.bf16.msra.mxu0 %v566
  %732 = vmatmul.bf16.gmra.mxu0 %v259
  %v733 = vpop.f32.mrf.mxu0
  %v734 = vadd.f32 %v720, %v733
  %v735 = vpop.f32.mrf.mxu0
  %v736 = vadd.f32 %v722, %v735
  %737 = vdwg.mxu0
  %738 = vmatpush.bf16.msra.mxu0 %v581
  %739 = vmatpush.bf16.msra.mxu0 %v580
  %740 = vmatpush.bf16.msra.mxu0 %v579
  %741 = vmatpush.bf16.msra.mxu0 %v578
  %742 = vmatpush.bf16.msra.mxu0 %v577
  %743 = vmatpush.bf16.msra.mxu0 %v576
  %744 = vmatpush.bf16.msra.mxu0 %v575
  %745 = vmatpush.bf16.msra.mxu0 %v574
  %746 = vmatmul.bf16.gmra.mxu0 %v260
  %v747 = vpop.f32.mrf.mxu0
  %v748 = vadd.f32 %v734, %v747
  %v749 = vpop.f32.mrf.mxu0
  %v750 = vadd.f32 %v736, %v749
  %751 = vdwg.mxu0
  %752 = vmatpush.bf16.msra.mxu0 %v589
  %753 = vmatpush.bf16.msra.mxu0 %v588
  %754 = vmatpush.bf16.msra.mxu0 %v587
  %755 = vmatpush.bf16.msra.mxu0 %v586
  %756 = vmatpush.bf16.msra.mxu0 %v585
  %757 = vmatpush.bf16.msra.mxu0 %v584
  %758 = vmatpush.bf16.msra.mxu0 %v583
  %759 = vmatpush.bf16.msra.mxu0 %v582
  %760 = vmatmul.bf16.gmra.mxu0 %v261
  %v761 = vpop.f32.mrf.mxu0
  %v762 = vadd.f32 %v748, %v761
  %v763 = vpop.f32.mrf.mxu0
  %v764 = vadd.f32 %v750, %v763
  %765 = vdwg.mxu0
  %v766 = vadd.f32 %v100, %v762
  %v767 = vadd.f32 %v101, %v764
  %768 = vst [vmem:[#allocation2] sm:$0xff] %v766
  %769 = vst [vmem:[#allocation2 + $0x8] sm:$0xff] %v767
  // Predicated region
  $region18: #{_lambda_.24} parent=0 // pred_check
    %p770 = pneg %p14
  $region19: #{_lambda_.24} parent=0 // pred_check_branch
    %772 = sbr.rel (%p770) target = $region21
  $region20: #{_lambda_.24} parent=0 // pred_region
    %v773 = vld [vmem:[#allocation2] sm:$0xff]
    %v774 = vld [vmem:[#allocation2 + $0x8] sm:$0xff]
    %v775 = vld [vmem:[%s2] sm:$0x1]
    %v777 = vperm.slane %v775, 0
    %v779 = vadd.f32 %v773, %v777
    %v780 = vadd.f32 %v774, %v777
    %v781 = vpack.c.bf16 %v779, %v779
    %v782 = vpack.c.bf16 %v780, %v780
    %783 = vst [vmem:[%s3] sm:$0xf] %v781
    %784 = vst [vmem:[%s3 + $0x4] sm:$0xf] %v782
  $region21: #{_lambda_.24} parent=0 // pred_fallthru
    _
  // Predicated region
  $region22: #{_lambda_.24} parent=0 // pred_check
    _
  $region23: #{_lambda_.24} parent=0 // pred_check_branch
    %786 = sbr.rel (0) target = $region25
  $region24: #{_lambda_.24} parent=0 // pred_region
    _
  $region25: #{_lambda_.24} parent=0 // pred_fallthru
    _
  // Predicated region
  $region26: #{_lambda_.24} parent=0 // pred_check
    _
  $region27: #{_lambda_.24} parent=0 // pred_check_branch
    %788 = sbr.rel (0) target = $region29
  $region28: #{_lambda_.24} parent=0 // pred_region
    _
  $region29: #{_lambda_.24} parent=0 // pred_fallthru
    _

// kernel: _lambda_.27
$region0: #{_lambda_.27}
  #allocation0 [shape = 'u32[]', space=smem, size = 0x4, offset = 0x4, fixed_abs, tag = 'smem constant byte address 0x4 - core index']
  #allocation1 [shape = 'u32[72,128]{1,0:T(1,128)}', space=vmem, size = 0x9000, scoped, tag = 'internal scratch']
  #allocation2 [shape = 'f32[16,128]{1,0:T(8,128)}', space=vmem, size = 0x2000, scoped, tag = 'scratch operand']
  %s0 = inlined_call_operand.vmem [shape: bf16[4,16,512], index: 0, kind: input, shape index: {}]
  %s1 = inlined_call_operand.vmem [shape: bf16[4,512,128], index: 1, kind: input, shape index: {}]
  %s2 = inlined_call_operand.vmem [shape: f32[4,1,128], index: 2, kind: input, shape index: {}]
  %s3 = inlined_call_operand.vmem [shape: bf16[4,16,128], index: 3, kind: output, shape index: {0}]
  %s4 = inlined_call_operand.vmem [shape: f32[4,1,8,128], index: 4, kind: output, shape index: {1}]
  %5 = xla_tuple %s3, %s4
  %s6 = sld [smem:[#allocation0]]
  $region61: #{_lambda_.27} parent=0
    _
  %s8 = ssub.s32 1, %s6
  %s9 = scalar_select 0, %s8, %s6
  loop: start=0, step=1, limit=6
  $region2: #{_lambda_.27} parent=0 // loop_pre_header
    _
  $region3: #{_lambda_.27} parent=0 // loop_header
    %s11 = sphi 0, %s15
    %p12 = scmp.ge.s32.totalorder %s11, 6
    %s18 = sphi 0, %s44
    %s19 = sphi 0, %s40
    %s20 = sphi 0, %s36
    %s21 = sphi 0, %s32
    %s22 = sphi 0, %s18
    %s23 = sphi 0, %s19
    %s24 = sphi 0, %s20
    %s25 = sphi 0, %s21
    %s26 = sphi 0, %s22
    %s27 = sphi 0, %s23
    %s28 = sphi 0, %s24
    %s29 = sphi 0, %s25
    %s51 = sphi 0, %s53
    %s54 = sphi 0, %s51
    %s55 = sphi 0, %s54
    %s71 = sphi 0, %s55
    %s81 = sphi 0, %s83
    %s84 = sphi 0, %s81
    %s85 = sphi 0, %s84
    %s101 = sphi 0, %s85
    %s109 = sphi 0, %s111
    %s112 = sphi 0, %s109
    %s113 = sphi 0, %s112
    %s129 = sphi 0, %s113
    %s139 = sphi 0, %s141
    %s142 = sphi 0, %s139
    %s143 = sphi 0, %s142
    %s159 = sphi 0, %s143
    %s169 = sphi 0, %s171
    %s172 = sphi 0, %s169
    %s173 = sphi 0, %s172
    %s189 = sphi 0, %s173
  $region4: #{_lambda_.27} parent=0 // loop_header_branch
    %14 = sbr.rel (%p12) target = $region8
  $region5: #{_lambda_.27} parent=0 // loop_body
    %s16 = ssub.s32 %s11, 1
    %s17 = ssub.s32 %s11, 2
    %s30 = sadd.s32 1, %s21
    %p31 = scmp.ge.s32.totalorder %s30, 1
    %s32 = scalar_select %p31, 0, %s30
    %s33 = sadd.s32 1, %s20
    %s34 = scalar_select %p31, %s33, %s20
    %p35 = scmp.ge.s32.totalorder %s34, 1
    %s36 = scalar_select %p35, 0, %s34
    %s37 = sadd.s32 1, %s19
    %s38 = scalar_select %p35, %s37, %s19
    %p39 = scmp.ge.s32.totalorder %s38, 1
    %s40 = scalar_select %p39, 0, %s38
    %s41 = sadd.s32 1, %s18
    %s42 = scalar_select %p39, %s41, %s18
    %p43 = scmp.ge.s32.totalorder %s42, 4
    %s44 = scalar_select %p43, 0, %s42
    %s45 = ssub.s32 %s18, %s44
    %s46 = ssub.s32 %s19, %s40
    %s47 = sor.u32 %s45, %s46
    %s48 = ssub.s32 %s21, %s32
    %s49 = sor.u32 %s47, %s48
    %p50 = scmp.eq.s32.totalorder %s49, 0
    %s52 = sadd.s32 %s51, 1
    %s53 = scalar_select %p50, %s51, %s52
    %p56 = pneg %p50
    %p57 = scmp.eq.s32.totalorder %s11, 3
    %p58 = por %p56, %p57
    %p59 = scmp.ne.s32.totalorder %s51, %s54
    %p60 = scmp.eq.s32.totalorder %s11, 0
    %p61 = por %p59, %p60
    %p62 = scmp.ne.s32.totalorder %s51, %s54
    %p63 = scmp.eq.s32.totalorder %s16, 3
    %p64 = por %p62, %p63
    %p65 = scmp.ne.s32.totalorder %s54, %s55
    %p66 = scmp.eq.s32.totalorder %s16, 0
    %p67 = por %p65, %p66
    %p68 = scmp.ne.s32.totalorder %s54, %s55
    %p69 = scmp.eq.s32.totalorder %s17, 3
    %p70 = por %p68, %p69
    %p72 = scmp.ne.s32.totalorder %s55, %s71
    %p73 = scmp.eq.s32.totalorder %s17, 0
    %p74 = por %p72, %p73
    %s75 = ssub.s32 %s18, %s44
    %s76 = ssub.s32 %s21, %s32
    %s77 = sor.u32 %s75, %s76
    %s78 = ssub.s32 %s20, %s36
    %s79 = sor.u32 %s77, %s78
    %p80 = scmp.eq.s32.totalorder %s79, 0
    %s82 = sadd.s32 %s81, 1
    %s83 = scalar_select %p80, %s81, %s82
    %p86 = pneg %p80
    %p87 = scmp.eq.s32.totalorder %s11, 3
    %p88 = por %p86, %p87
    %p89 = scmp.ne.s32.totalorder %s81, %s84
    %p90 = scmp.eq.s32.totalorder %s11, 0
    %p91 = por %p89, %p90
    %p92 = scmp.ne.s32.totalorder %s81, %s84
    %p93 = scmp.eq.s32.totalorder %s16, 3
    %p94 = por %p92, %p93
    %p95 = scmp.ne.s32.totalorder %s84, %s85
    %p96 = scmp.eq.s32.totalorder %s16, 0
    %p97 = por %p95, %p96
    %p98 = scmp.ne.s32.totalorder %s84, %s85
    %p99 = scmp.eq.s32.totalorder %s17, 3
    %p100 = por %p98, %p99
    %p102 = scmp.ne.s32.totalorder %s85, %s101
    %p103 = scmp.eq.s32.totalorder %s17, 0
    %p104 = por %p102, %p103
    %s105 = ssub.s32 %s18, %s44
    %s106 = ssub.s32 %s20, %s36
    %s107 = sor.u32 %s105, %s106
    %p108 = scmp.eq.s32.totalorder %s107, 0
    %s110 = sadd.s32 %s109, 1
    %s111 = scalar_select %p108, %s109, %s110
    %p114 = pneg %p108
    %p115 = scmp.eq.s32.totalorder %s11, 3
    %p116 = por %p114, %p115
    %p117 = scmp.ne.s32.totalorder %s109, %s112
    %p118 = scmp.eq.s32.totalorder %s11, 0
    %p119 = por %p117, %p118
    %p120 = scmp.ne.s32.totalorder %s109, %s112
    %p121 = scmp.eq.s32.totalorder %s16, 3
    %p122 = por %p120, %p121
    %p123 = scmp.ne.s32.totalorder %s112, %s113
    %p124 = scmp.eq.s32.totalorder %s16, 0
    %p125 = por %p123, %p124
    %p126 = scmp.ne.s32.totalorder %s112, %s113
    %p127 = scmp.eq.s32.totalorder %s17, 3
    %p128 = por %p126, %p127
    %p130 = scmp.ne.s32.totalorder %s113, %s129
    %p131 = scmp.eq.s32.totalorder %s17, 0
    %p132 = por %p130, %p131
    %s133 = ssub.s32 %s18, %s44
    %s134 = ssub.s32 %s19, %s40
    %s135 = sor.u32 %s133, %s134
    %s136 = ssub.s32 %s20, %s36
    %s137 = sor.u32 %s135, %s136
    %p138 = scmp.eq.s32.totalorder %s137, 0
    %s140 = sadd.s32 %s139, 1
    %s141 = scalar_select %p138, %s139, %s140
    %p144 = pneg %p138
    %p145 = scmp.eq.s32.totalorder %s11, 3
    %p146 = por %p144, %p145
    %p147 = scmp.ne.s32.totalorder %s139, %s142
    %p148 = scmp.eq.s32.totalorder %s11, 0
    %p149 = por %p147, %p148
    %p150 = scmp.ne.s32.totalorder %s139, %s142
    %p151 = scmp.eq.s32.totalorder %s16, 3
    %p152 = por %p150, %p151
    %p153 = scmp.ne.s32.totalorder %s142, %s143
    %p154 = scmp.eq.s32.totalorder %s16, 0
    %p155 = por %p153, %p154
    %p156 = scmp.ne.s32.totalorder %s142, %s143
    %p157 = scmp.eq.s32.totalorder %s17, 3
    %p158 = por %p156, %p157
    %p160 = scmp.ne.s32.totalorder %s143, %s159
    %p161 = scmp.eq.s32.totalorder %s17, 0
    %p162 = por %p160, %p161
    %s163 = ssub.s32 %s18, %s44
    %s164 = ssub.s32 %s19, %s40
    %s165 = sor.u32 %s163, %s164
    %s166 = ssub.s32 %s20, %s36
    %s167 = sor.u32 %s165, %s166
    %p168 = scmp.eq.s32.totalorder %s167, 0
    %s170 = sadd.s32 %s169, 1
    %s171 = scalar_select %p168, %s169, %s170
    %p174 = pneg %p168
    %p175 = scmp.eq.s32.totalorder %s11, 3
    %p176 = por %p174, %p175
    %p177 = scmp.ne.s32.totalorder %s169, %s172
    %p178 = scmp.eq.s32.totalorder %s11, 0
    %p179 = por %p177, %p178
    %p180 = scmp.ne.s32.totalorder %s169, %s172
    %p181 = scmp.eq.s32.totalorder %s16, 3
    %p182 = por %p180, %p181
    %p183 = scmp.ne.s32.totalorder %s172, %s173
    %p184 = scmp.eq.s32.totalorder %s16, 0
    %p185 = por %p183, %p184
    %p186 = scmp.ne.s32.totalorder %s172, %s173
    %p187 = scmp.eq.s32.totalorder %s17, 3
    %p188 = por %p186, %p187
    %p190 = scmp.ne.s32.totalorder %s173, %s189
    %p191 = scmp.eq.s32.totalorder %s17, 0
    %p192 = por %p190, %p191
    %p193 = scmp.le.s32.totalorder 1, %s11
    %p194 = scmp.lt.s32.totalorder %s11, 5
    %p195 = pnand %p193, %p194
    %p196 = pneg %p195
    // Predicated region
    $region9: #{_lambda_.27} parent=5 // pred_check
      _
    $region10: #{_lambda_.27} parent=5 // pred_check_branch
      %198 = sbr.rel (%p195) target = $region12
    $region11: #{_lambda_.27} parent=5 // pred_region
      %s199 = ssub.s32 %s11, 1
    $region12: #{_lambda_.27} parent=5 // pred_fallthru
      _
    %p200 = scmp.lt.s32.totalorder %s11, 4
    // Predicated region
    $region13: #{_lambda_.27} parent=5 // pred_check
      %p201 = pneg %p200
    $region14: #{_lambda_.27} parent=5 // pred_check_branch
      %203 = sbr.rel (%p201) target = $region16
    $region15: #{_lambda_.27} parent=5 // pred_region
      // Predicated region
      $region17: #{_lambda_.27} parent=15 // pred_check
        %p204 = pneg %p61
      $region18: #{_lambda_.27} parent=15 // pred_check_branch
        %206 = sbr.rel (%p204) target = $region20
      $region19: #{_lambda_.27} parent=15 // pred_region
        %s207 = smul.u32 2, %s19
        %s208 = smul.u32 4, %s21
        %p209 = scmp.lt.s32.totalorder %s18, 3
        %s210 = scalar_select %p209, %s18, 3
        %p211 = scmp.lt.s32.totalorder %s207, 1
        %s212 = scalar_select %p211, %s207, 1
        %p213 = scmp.lt.s32.totalorder %s208, 3
        %s214 = scalar_select %p213, %s208, 3
        %s215 = smul.addr %s212, 4
        %s216 = sadd.s32 %s214, %s215
        %s217 = smul.addr %s210, 8
        %s218 = sadd.s32 %s216, %s217
        %s219 = smul.addr %s218, 4
        %s220 = scalar_lea.vmem %s0, %s219
        %s221 = smul.u32 2, %s19
        %s222 = smul.u32 4, %s21
      $region20: #{_lambda_.27} parent=15 // pred_fallthru
        _
      // Predicated region
      $region21: #{_lambda_.27} parent=15 // pred_check
        %p223 = pneg %p91
      $region22: #{_lambda_.27} parent=15 // pred_check_branch
        %225 = sbr.rel (%p223) target = $region24
      $region23: #{_lambda_.27} parent=15 // pred_region
        %s226 = smul.u32 64, %s21
        %p227 = scmp.lt.s32.totalorder %s18, 3
        %s228 = scalar_select %p227, %s18, 3
        %p229 = scmp.lt.s32.totalorder %s226, 63
        %s230 = scalar_select %p229, %s226, 63
        %p231 = scmp.lt.s32.totalorder %s20, 0
        %s232 = scalar_select %p231, %s20, 0
        %s233 = sadd.s32 %s232, %s230
        %s234 = smul.addr %s228, 64
        %s235 = sadd.s32 %s233, %s234
        %s236 = smul.addr %s235, 4
        %s237 = scalar_lea.vmem %s1, %s236
        %s238 = smul.u32 64, %s21
      $region24: #{_lambda_.27} parent=15 // pred_fallthru
        _
      // Predicated region
      $region25: #{_lambda_.27} parent=15 // pred_check
        %p239 = pneg %p119
      $region26: #{_lambda_.27} parent=15 // pred_check_branch
        %241 = sbr.rel (%p239) target = $region28
      $region27: #{_lambda_.27} parent=15 // pred_region
        %p242 = scmp.lt.s32.totalorder %s18, 3
        %s243 = scalar_select %p242, %s18, 3
        %p244 = scmp.lt.s32.totalorder %s20, 0
        %s245 = scalar_select %p244, %s20, 0
        %s246 = sadd.s32 %s245, %s243
        %s247 = scalar_lea.vmem %s2, %s246
      $region28: #{_lambda_.27} parent=15 // pred_fallthru
        _
    $region16: #{_lambda_.27} parent=5 // pred_fallthru
      _
    %p248 = scmp.le.s32.totalorder 1, %s11
    %p249 = scmp.lt.s32.totalorder %s11, 5
    %p250 = pnand %p248, %p249
    %p251 = pneg %p250
    // Predicated region
    $region29: #{_lambda_.27} parent=5 // pred_check
      _
    $region30: #{_lambda_.27} parent=5 // pred_check_branch
      %253 = sbr.rel (%p250) target = $region32
    $region31: #{_lambda_.27} parent=5 // pred_region
      %s254 = ssub.s32 %s11, 1
      %s255 = smul.u32 2, %s23
      %s256 = smul.u32 4, %s25
      %p257 = scmp.lt.s32.totalorder %s22, 3
      %s258 = scalar_select %p257, %s22, 3
      %p259 = scmp.lt.s32.totalorder %s255, 1
      %s260 = scalar_select %p259, %s255, 1
      %p261 = scmp.lt.s32.totalorder %s256, 3
      %s262 = scalar_select %p261, %s256, 3
      %s263 = smul.addr %s260, 4
      %s264 = sadd.s32 %s262, %s263
      %s265 = smul.addr %s258, 8
      %s266 = sadd.s32 %s264, %s265
      %s267 = smul.addr %s266, 4
      %s268 = scalar_lea.vmem %s0, %s267
      %p269 = pneg %p67
      %p270 = pneg %p64
      %s271 = smul.u32 64, %s25
      %p272 = scmp.lt.s32.totalorder %s22, 3
      %s273 = scalar_select %p272, %s22, 3
      %p274 = scmp.lt.s32.totalorder %s271, 63
      %s275 = scalar_select %p274, %s271, 63
      %p276 = scmp.lt.s32.totalorder %s24, 0
      %s277 = scalar_select %p276, %s24, 0
      %s278 = sadd.s32 %s277, %s275
      %s279 = smul.addr %s273, 64
      %s280 = sadd.s32 %s278, %s279
      %s281 = smul.addr %s280, 4
      %s282 = scalar_lea.vmem %s1, %s281
      %p283 = pneg %p97
      %p284 = pneg %p94
      %p285 = scmp.lt.s32.totalorder %s22, 3
      %s286 = scalar_select %p285, %s22, 3
      %p287 = scmp.lt.s32.totalorder %s24, 0
      %s288 = scalar_select %p287, %s24, 0
      %s289 = sadd.s32 %s288, %s286
      %s290 = scalar_lea.vmem %s2, %s289
      %p291 = pneg %p125
      %p292 = pneg %p122
      %p293 = pneg %p155
      %p294 = pneg %p152
      %s295 = smul.u32 2, %s23
      %p296 = scmp.lt.s32.totalorder %s22, 3
      %s297 = scalar_select %p296, %s22, 3
      %p298 = scmp.lt.s32.totalorder %s295, 1
      %s299 = scalar_select %p298, %s295, 1
      %p300 = scmp.lt.s32.totalorder %s24, 0
      %s301 = scalar_select %p300, %s24, 0
      %s302 = sadd.s32 %s301, %s299
      %s303 = smul.addr %s297, 2
      %s304 = sadd.s32 %s302, %s303
      %s305 = smul.addr %s304, 4
      %s306 = scalar_lea.vmem %s3, %s305
      %p307 = pneg %p185
      %p308 = pneg %p182
      %p309 = scmp.lt.s32.totalorder %s22, 3
      %s310 = scalar_select %p309, %s22, 3
      %p311 = scmp.lt.s32.totalorder %s23, 0
      %s312 = scalar_select %p311, %s23, 0
      %p313 = scmp.lt.s32.totalorder %s24, 0
      %s314 = scalar_select %p313, %s24, 0
      %s315 = sadd.s32 %s314, %s312
      %s316 = sadd.s32 %s315, %s310
      %s317 = smul.addr %s316, 8
      %s318 = scalar_lea.vmem %s4, %s317
      %s319 = smul.u32 2, %s23
      %s320 = smul.u32 4, %s25
      %p321 = scmp.lt.s32.totalorder %s22, 3
      %s322 = scalar_select %p321, %s22, 3
      %p323 = scmp.lt.s32.totalorder %s319, 1
      %s324 = scalar_select %p323, %s319, 1
      %p325 = scmp.lt.s32.totalorder %s320, 3
      %s326 = scalar_select %p325, %s320, 3
      %s327 = smul.addr %s324, 4
      %s328 = sadd.s32 %s326, %s327
      %s329 = smul.addr %s322, 8
      %s330 = sadd.s32 %s328, %s329
      %s331 = smul.addr %s330, 4
      %s332 = scalar_lea.vmem %s0, %s331
      %s333 = smul.u32 2, %s23
      %s334 = smul.u32 4, %s25
      %s335 = smul.u32 64, %s25
      %p336 = scmp.lt.s32.totalorder %s22, 3
      %s337 = scalar_select %p336, %s22, 3
      %p338 = scmp.lt.s32.totalorder %s335, 63
      %s339 = scalar_select %p338, %s335, 63
      %p340 = scmp.lt.s32.totalorder %s24, 0
      %s341 = scalar_select %p340, %s24, 0
      %s342 = sadd.s32 %s341, %s339
      %s343 = smul.addr %s337, 64
      %s344 = sadd.s32 %s342, %s343
      %s345 = smul.addr %s344, 4
      %s346 = scalar_lea.vmem %s1, %s345
      %s347 = smul.u32 64, %s25
      %p348 = scmp.lt.s32.totalorder %s22, 3
      %s349 = scalar_select %p348, %s22, 3
      %p350 = scmp.lt.s32.totalorder %s24, 0
      %s351 = scalar_select %p350, %s24, 0
      %s352 = sadd.s32 %s351, %s349
      %s353 = scalar_lea.vmem %s2, %s352
      %s354 = smul.u32 2, %s23
      %p355 = scmp.lt.s32.totalorder %s22, 3
      %s356 = scalar_select %p355, %s22, 3
      %p357 = scmp.lt.s32.totalorder %s354, 1
      %s358 = scalar_select %p357, %s354, 1
      %p359 = scmp.lt.s32.totalorder %s24, 0
      %s360 = scalar_select %p359, %s24, 0
      %s361 = sadd.s32 %s360, %s358
      %s362 = smul.addr %s356, 2
      %s363 = sadd.s32 %s361, %s362
      %s364 = smul.addr %s363, 4
      %s365 = scalar_lea.vmem %s3, %s364
      %s366 = smul.u32 2, %s23
      %p367 = scmp.lt.s32.totalorder %s22, 3
      %s368 = scalar_select %p367, %s22, 3
      %p369 = scmp.lt.s32.totalorder %s23, 0
      %s370 = scalar_select %p369, %s23, 0
      %p371 = scmp.lt.s32.totalorder %s24, 0
      %s372 = scalar_select %p371, %s24, 0
      %s373 = sadd.s32 %s372, %s370
      %s374 = sadd.s32 %s373, %s368
      %s375 = smul.addr %s374, 8
      %s376 = scalar_lea.vmem %s4, %s375
      %p377 = scmp.eq.s32.totalorder %s25, 0
      // Predicated region
      $region33: #{_lambda_.27} parent=31 // pred_check
        %p378 = pneg %p377
      $region34: #{_lambda_.27} parent=31 // pred_check_branch
        %380 = sbr.rel (%p378) target = $region36
      $region35: #{_lambda_.27} parent=31 // pred_region
        %381 = vst [vmem:[#allocation2] sm:$0xff] 0.0
        %382 = vst [vmem:[#allocation2 + $0x8] sm:$0xff] 0.0
      $region36: #{_lambda_.27} parent=31 // pred_fallthru
        _
      %v383 = vld [vmem:[%s332] sm:$0xff]
      %v384 = vld [vmem:[%s332 + $0x8] sm:$0xff]
      %v385 = vld [vmem:[%s332 + $0x10] sm:$0xff]
      %v386 = vld [vmem:[%s332 + $0x18] sm:$0xff]
      %v387 = vunpack.c.l.bf16 %v383
      %v388 = vunpack.c.h.bf16 %v383
      %v389 = vunpack.c.l.bf16 %v384
      %v390 = vunpack.c.h.bf16 %v384
      %v391 = vunpack.c.l.bf16 %v385
      %v392 = vunpack.c.h.bf16 %v385
      %v393 = vunpack.c.l.bf16 %v386
      %v394 = vunpack.c.h.bf16 %v386
      %v395 = vmax.f32 %v387, 0.0
      %v396 = vmax.f32 %v388, 0.0
      %v397 = vmax.f32 %v389, 0.0
      %v398 = vmax.f32 %v390, 0.0
      %v399 = vmax.f32 %v391, 0.0
      %v400 = vmax.f32 %v392, 0.0
      %v401 = vmax.f32 %v393, 0.0
      %v402 = vmax.f32 %v394, 0.0
      %v403 = vpack.c.bf16 %v399, %v395
      %v404 = vpack.c.bf16 %v400, %v396
      %v405 = vpack.c.bf16 %v401, %v397
      %v406 = vpack.c.bf16 %v402, %v398
      %v407 = vld [vmem:[#allocation2] sm:$0xff]
      %v408 = vld [vmem:[#allocation2 + $0x8] sm:$0xff]
      %v409 = vld [vmem:[%s346] sm:$0xf]
      %v410 = vld [vmem:[%s346 + $0x4] sm:$0xf]
      %v411 = vld [vmem:[%s346 + $0x8] sm:$0xf]
      %v412 = vld [vmem:[%s346 + $0xc] sm:$0xf]
      %v413 = vld [vmem:[%s346 + $0x10] sm:$0xf]
      %v414 = vld [vmem:[%s346 + $0x14] sm:$0xf]
      %v415 = vld [vmem:[%s346 + $0x18] sm:$0xf]
      %v416 = vld [vmem:[%s346 + $0x1c] sm:$0xf]
      %v417 = vld [vmem:[%s346 + $0x20] sm:$0xf]
      %v418 = vld [vmem:[%s346 + $0x24] sm:$0xf]
      %v419 = vld [vmem:[%s346 + $0x28] sm:$0xf]
      %v420 = vld [vmem:[%s346 + $0x2c] sm:$0xf]
      %v421 = vld [vmem:[%s346 + $0x30] sm:$0xf]
      %v422 = vld [vmem:[%s346 + $0x34] sm:$0xf]
      %v423 = vld [vmem:[%s346 + $0x38] sm:$0xf]
      %v424 = vld [vmem:[%s346 + $0x3c] sm:$0xf]
      %v425 = vld [vmem:[%s346 + $0x40] sm:$0xf]
      %v426 = vld [vmem:[%s346 + $0x44] sm:$0xf]
      %v427 = vld [vmem:[%s346 + $0x48] sm:$0xf]
      %v428 = vld [vmem:[%s346 + $0x4c] sm:$0xf]
      %v429 = vld [vmem:[%s346 + $0x50] sm:$0xf]
      %v430 = vld [vmem:[%s346 + $0x54] sm:$0xf]
      %v431 = vld [vmem:[%s346 + $0x58] sm:$0xf]
      %v432 = vld [vmem:[%s346 + $0x5c] sm:$0xf]
      %v433 = vld [vmem:[%s346 + $0x60] sm:$0xf]
      %v434 = vld [vmem:[%s346 + $0x64] sm:$0xf]
      %v435 = vld [vmem:[%s346 + $0x68] sm:$0xf]
      %v436 = vld [vmem:[%s346 + $0x6c] sm:$0xf]
      %v437 = vld [vmem:[%s346 + $0x70] sm:$0xf]
      %v438 = vld [vmem:[%s346 + $0x74] sm:$0xf]
      %v439 = vld [vmem:[%s346 + $0x78] sm:$0xf]
      %v440 = vld [vmem:[%s346 + $0x7c] sm:$0xf]
      %v441 = vld [vmem:[%s346 + $0x80] sm:$0xf]
      %v442 = vld [vmem:[%s346 + $0x84] sm:$0xf]
      %v443 = vld [vmem:[%s346 + $0x88] sm:$0xf]
      %v444 = vld [vmem:[%s346 + $0x8c] sm:$0xf]
      %v445 = vld [vmem:[%s346 + $0x90] sm:$0xf]
      %v446 = vld [vmem:[%s346 + $0x94] sm:$0xf]
      %v447 = vld [vmem:[%s346 + $0x98] sm:$0xf]
      %v448 = vld [vmem:[%s346 + $0x9c] sm:$0xf]
      %v449 = vld [vmem:[%s346 + $0xa0] sm:$0xf]
      %v450 = vld [vmem:[%s346 + $0xa4] sm:$0xf]
      %v451 = vld [vmem:[%s346 + $0xa8] sm:$0xf]
      %v452 = vld [vmem:[%s346 + $0xac] sm:$0xf]
      %v453 = vld [vmem:[%s346 + $0xb0] sm:$0xf]
      %v454 = vld [vmem:[%s346 + $0xb4] sm:$0xf]
      %v455 = vld [vmem:[%s346 + $0xb8] sm:$0xf]
      %v456 = vld [vmem:[%s346 + $0xbc] sm:$0xf]
      %v457 = vld [vmem:[%s346 + $0xc0] sm:$0xf]
      %v458 = vld [vmem:[%s346 + $0xc4] sm:$0xf]
      %v459 = vld [vmem:[%s346 + $0xc8] sm:$0xf]
      %v460 = vld [vmem:[%s346 + $0xcc] sm:$0xf]
      %v461 = vld [vmem:[%s346 + $0xd0] sm:$0xf]
      %v462 = vld [vmem:[%s346 + $0xd4] sm:$0xf]
      %v463 = vld [vmem:[%s346 + $0xd8] sm:$0xf]
      %v464 = vld [vmem:[%s346 + $0xdc] sm:$0xf]
      %v465 = vld [vmem:[%s346 + $0xe0] sm:$0xf]
      %v466 = vld [vmem:[%s346 + $0xe4] sm:$0xf]
      %v467 = vld [vmem:[%s346 + $0xe8] sm:$0xf]
      %v468 = vld [vmem:[%s346 + $0xec] sm:$0xf]
      %v469 = vld [vmem:[%s346 + $0xf0] sm:$0xf]
      %v470 = vld [vmem:[%s346 + $0xf4] sm:$0xf]
      %v471 = vld [vmem:[%s346 + $0xf8] sm:$0xf]
      %v472 = vld [vmem:[%s346 + $0xfc] sm:$0xf]
      %v537 = vunpack.c.l.b16 %v409
      %v538 = vunpack.c.l.b16 %v410
      %v539 = vunpack.c.l.b16 %v411
      %v540 = vunpack.c.l.b16 %v412
      %v541 = vunpack.c.l.b16 %v413
      %v542 = vunpack.c.l.b16 %v414
      %v543 = vunpack.c.l.b16 %v415
      %v544 = vunpack.c.l.b16 %v416
      %v545 = vunpack.c.l.b16 %v417
      %v546 = vunpack.c.l.b16 %v418
      %v547 = vunpack.c.l.b16 %v419
      %v548 = vunpack.c.l.b16 %v420
      %v549 = vunpack.c.l.b16 %v421
      %v550 = vunpack.c.l.b16 %v422
      %v551 = vunpack.c.l.b16 %v423
      %v552 = vunpack.c.l.b16 %v424
      %v553 = vunpack.c.l.b16 %v425
      %v554 = vunpack.c.l.b16 %v426
      %v555 = vunpack.c.l.b16 %v427
      %v556 = vunpack.c.l.b16 %v428
      %v557 = vunpack.c.l.b16 %v429
      %v558 = vunpack.c.l.b16 %v430
      %v559 = vunpack.c.l.b16 %v431
      %v560 = vunpack.c.l.b16 %v432
      %v561 = vunpack.c.l.b16 %v433
      %v562 = vunpack.c.l.b16 %v434
      %v563 = vunpack.c.l.b16 %v435
      %v564 = vunpack.c.l.b16 %v436
      %v565 = vunpack.c.l.b16 %v437
      %v566 = vunpack.c.l.b16 %v438
      %v567 = vunpack.c.l.b16 %v439
      %v568 = vunpack.c.l.b16 %v440
      %v569 = vunpack.c.l.b16 %v441
      %v570 = vunpack.c.l.b16 %v442
      %v571 = vunpack.c.l.b16 %v443
      %v572 = vunpack.c.l.b16 %v444
      %v573 = vunpack.c.l.b16 %v445
      %v574 = vunpack.c.l.b16 %v446
      %v575 = vunpack.c.l.b16 %v447
      %v576 = vunpack.c.l.b16 %v448
      %v577 = vunpack.c.l.b16 %v449
      %v578 = vunpack.c.l.b16 %v450
      %v579 = vunpack.c.l.b16 %v451
      %v580 = vunpack.c.l.b16 %v452
      %v581 = vunpack.c.l.b16 %v453
      %v582 = vunpack.c.l.b16 %v454
      %v583 = vunpack.c.l.b16 %v455
      %v584 = vunpack.c.l.b16 %v456
      %v585 = vunpack.c.l.b16 %v457
      %v586 = vunpack.c.l.b16 %v458
      %v587 = vunpack.c.l.b16 %v459
      %v588 = vunpack.c.l.b16 %v460
      %v589 = vunpack.c.l.b16 %v461
      %v590 = vunpack.c.l.b16 %v462
      %v591 = vunpack.c.l.b16 %v463
      %v592 = vunpack.c.l.b16 %v464
      %v593 = vunpack.c.l.b16 %v465
      %v594 = vunpack.c.l.b16 %v466
      %v595 = vunpack.c.l.b16 %v467
      %v596 = vunpack.c.l.b16 %v468
      %v597 = vunpack.c.l.b16 %v469
      %v598 = vunpack.c.l.b16 %v470
      %v599 = vunpack.c.l.b16 %v471
      %v600 = vunpack.c.l.b16 %v472
      %v601 = vpack.c.b16 %v538, %v537
      %v602 = vpack.c.b16 %v540, %v539
      %v603 = vpack.c.b16 %v542, %v541
      %v604 = vpack.c.b16 %v544, %v543
      %v605 = vpack.c.b16 %v546, %v545
      %v606 = vpack.c.b16 %v548, %v547
      %v607 = vpack.c.b16 %v550, %v549
      %v608 = vpack.c.b16 %v552, %v551
      %v609 = vpack.c.b16 %v554, %v553
      %v610 = vpack.c.b16 %v556, %v555
      %v611 = vpack.c.b16 %v558, %v557
      %v612 = vpack.c.b16 %v560, %v559
      %v613 = vpack.c.b16 %v562, %v561
      %v614 = vpack.c.b16 %v564, %v563
      %v615 = vpack.c.b16 %v566, %v565
      %v616 = vpack.c.b16 %v568, %v567
      %v617 = vpack.c.b16 %v570, %v569
      %v618 = vpack.c.b16 %v572, %v571
      %v619 = vpack.c.b16 %v574, %v573
      %v620 = vpack.c.b16 %v576, %v575
      %v621 = vpack.c.b16 %v578, %v577
      %v622 = vpack.c.b16 %v580, %v579
      %v623 = vpack.c.b16 %v582, %v581
      %v624 = vpack.c.b16 %v584, %v583
      %v625 = vpack.c.b16 %v586, %v585
      %v626 = vpack.c.b16 %v588, %v587
      %v627 = vpack.c.b16 %v590, %v589
      %v628 = vpack.c.b16 %v592, %v591
      %v629 = vpack.c.b16 %v594, %v593
      %v630 = vpack.c.b16 %v596, %v595
      %v631 = vpack.c.b16 %v598, %v597
      %v632 = vpack.c.b16 %v600, %v599
      %665 = vmatpush.bf16.msra.mxu0 %v608
      %666 = vmatpush.bf16.msra.mxu0 %v607
      %667 = vmatpush.bf16.msra.mxu0 %v606
      %668 = vmatpush.bf16.msra.mxu0 %v605
      %669 = vmatpush.bf16.msra.mxu0 %v604
      %670 = vmatpush.bf16.msra.mxu0 %v603
      %671 = vmatpush.bf16.msra.mxu0 %v602
      %672 = vmatpush.bf16.msra.mxu0 %v601
      %673 = vmatmul.bf16.gmra.mxu0 %v403
      %v674 = vpop.f32.mrf.mxu0
      %v675 = vadd.f32 0.0, %v674
      %v676 = vpop.f32.mrf.mxu0
      %v677 = vadd.f32 0.0, %v676
      %678 = vdwg.mxu0
      %679 = vmatpush.bf16.msra.mxu0 %v616
      %680 = vmatpush.bf16.msra.mxu0 %v615
      %681 = vmatpush.bf16.msra.mxu0 %v614
      %682 = vmatpush.bf16.msra.mxu0 %v613
      %683 = vmatpush.bf16.msra.mxu0 %v612
      %684 = vmatpush.bf16.msra.mxu0 %v611
      %685 = vmatpush.bf16.msra.mxu0 %v610
      %686 = vmatpush.bf16.msra.mxu0 %v609
      %687 = vmatmul.bf16.gmra.mxu0 %v404
      %v688 = vpop.f32.mrf.mxu0
      %v689 = vadd.f32 %v675, %v688
      %v690 = vpop.f32.mrf.mxu0
      %v691 = vadd.f32 %v677, %v690
      %692 = vdwg.mxu0
      %693 = vmatpush.bf16.msra.mxu0 %v624
      %694 = vmatpush.bf16.msra.mxu0 %v623
      %695 = vmatpush.bf16.msra.mxu0 %v622
      %696 = vmatpush.bf16.msra.mxu0 %v621
      %697 = vmatpush.bf16.msra.mxu0 %v620
      %698 = vmatpush.bf16.msra.mxu0 %v619
      %699 = vmatpush.bf16.msra.mxu0 %v618
      %700 = vmatpush.bf16.msra.mxu0 %v617
      %701 = vmatmul.bf16.gmra.mxu0 %v405
      %v702 = vpop.f32.mrf.mxu0
      %v703 = vadd.f32 %v689, %v702
      %v704 = vpop.f32.mrf.mxu0
      %v705 = vadd.f32 %v691, %v704
      %706 = vdwg.mxu0
      %707 = vmatpush.bf16.msra.mxu0 %v632
      %708 = vmatpush.bf16.msra.mxu0 %v631
      %709 = vmatpush.bf16.msra.mxu0 %v630
      %710 = vmatpush.bf16.msra.mxu0 %v629
      %711 = vmatpush.bf16.msra.mxu0 %v628
      %712 = vmatpush.bf16.msra.mxu0 %v627
      %713 = vmatpush.bf16.msra.mxu0 %v626
      %714 = vmatpush.bf16.msra.mxu0 %v625
      %715 = vmatmul.bf16.gmra.mxu0 %v406
      %v716 = vpop.f32.mrf.mxu0
      %v717 = vadd.f32 %v703, %v716
      %v718 = vpop.f32.mrf.mxu0
      %v719 = vadd.f32 %v705, %v718
      %720 = vdwg.mxu0
      %v721 = vadd.f32 %v407, %v717
      %v722 = vadd.f32 %v408, %v719
      %723 = vst [vmem:[#allocation2] sm:$0xff] %v721
      %724 = vst [vmem:[#allocation2 + $0x8] sm:$0xff] %v722
      // Predicated region
      $region37: #{_lambda_.27} parent=31 // pred_check
        %p725 = pneg %p377
      $region38: #{_lambda_.27} parent=31 // pred_check_branch
        %727 = sbr.rel (%p725) target = $region40
      $region39: #{_lambda_.27} parent=31 // pred_region
        %v728 = vld [vmem:[#allocation2] sm:$0xff]
        %v729 = vld [vmem:[#allocation2 + $0x8] sm:$0xff]
        %v730 = vld [vmem:[%s353] sm:$0x1]
        %v732 = vperm.slane %v730, 0
        %v734 = vadd.f32 %v728, %v732
        %v735 = vadd.f32 %v729, %v732
        %v736 = vpack.c.bf16 %v734, %v734
        %v737 = vpack.c.bf16 %v735, %v735
        %738 = vst [vmem:[%s365] sm:$0xf] %v736
        %739 = vst [vmem:[%s365 + $0x4] sm:$0xf] %v737
        %v740 = vadd.f32 %v734, %v735
        %v741 = vrot.slane %v740, 4
        %v742 = vadd.f32 %v740, %v741
        %v743 = vrot.slane %v742, 2
        %v744 = vadd.f32 %v742, %v743
        %v745 = vrot.slane %v744, 1
        %v746 = vadd.f32 %v744, %v745
        %v747 = vmul.f32 %v734, %v734
        %v748 = vmul.f32 %v735, %v735
        %v749 = vadd.f32 %v747, %v748
        %v750 = vrot.slane %v749, 4
        %v751 = vadd.f32 %v749, %v750
        %v752 = vrot.slane %v751, 2
        %v753 = vadd.f32 %v751, %v752
        %v754 = vrot.slane %v753, 1
        %v755 = vadd.f32 %v753, %v754
        %v756 = vlaneseq
        %v757 = vshrl.u32 %v756, 7
        %vm758 = vcmp.eq.s32.totalorder %v757, 0
        %vm759 = vcmp.eq.s32.totalorder %v757, 1
        %v760 = vsel %vm759, %v755, 0.0
        %v761 = vsel %vm758, %v746, %v760
        %762 = vst [vmem:[%s376] sm:$0xff] %v761
      $region40: #{_lambda_.27} parent=31 // pred_fallthru
        _
      %s763 = smul.u32 2, %s23
      %p764 = scmp.lt.s32.totalorder %s22, 3
      %s765 = scalar_select %p764, %s22, 3
      %p766 = scmp.lt.s32.totalorder %s763, 1
      %s767 = scalar_select %p766, %s763, 1
      %p768 = scmp.lt.s32.totalorder %s24, 0
      %s769 = scalar_select %p768, %s24, 0
      %s770 = sadd.s32 %s769, %s767
      %s771 = smul.addr %s765, 2
      %s772 = sadd.s32 %s770, %s771
      %s773 = smul.addr %s772, 4
      %s774 = scalar_lea.vmem %s3, %s773
      %p775 = scmp.lt.s32.totalorder %s22, 3
      %s776 = scalar_select %p775, %s22, 3
      %p777 = scmp.lt.s32.totalorder %s23, 0
      %s778 = scalar_select %p777, %s23, 0
      %p779 = scmp.lt.s32.totalorder %s24, 0
      %s780 = scalar_select %p779, %s24, 0
      %s781 = sadd.s32 %s780, %s778
      %s782 = sadd.s32 %s781, %s776
      %s783 = smul.addr %s782, 8
      %s784 = scalar_lea.vmem %s4, %s783
      // Predicated region
      $region41: #{_lambda_.27} parent=31 // pred_check
        %p785 = pneg %p152
      $region42: #{_lambda_.27} parent=31 // pred_check_branch
        %787 = sbr.rel (%p785) target = $region44
      $region43: #{_lambda_.27} parent=31 // pred_region
        %s788 = smul.u32 2, %s23
      $region44: #{_lambda_.27} parent=31 // pred_fallthru
        _
      // Predicated region
      $region45: #{_lambda_.27} parent=31 // pred_check
        %p789 = pneg %p182
      $region46: #{_lambda_.27} parent=31 // pred_check_branch
        %791 = sbr.rel (%p789) target = $region48
      $region47: #{_lambda_.27} parent=31 // pred_region
        _
      $region48: #{_lambda_.27} parent=31 // pred_fallthru
        _
    $region32: #{_lambda_.27} parent=5 // pred_fallthru
      _
    %p792 = scmp.le.s32.totalorder 2, %s11
    // Predicated region
    $region49: #{_lambda_.27} parent=5 // pred_check
      %p793 = pneg %p792
    $region50: #{_lambda_.27} parent=5 // pred_check_branch
      %795 = sbr.rel (%p793) target = $region52
    $region51: #{_lambda_.27} parent=5 // pred_region
      %s796 = ssub.s32 %s11, 2
      // Predicated region
      $region53: #{_lambda_.27} parent=51 // pred_check
        %p797 = pneg %p158
      $region54: #{_lambda_.27} parent=51 // pred_check_branch
        %799 = sbr.rel (%p797) target = $region56
      $region55: #{_lambda_.27} parent=51 // pred_region
        %s800 = smul.u32 2, %s27
        %p801 = scmp.lt.s32.totalorder %s26, 3
        %s802 = scalar_select %p801, %s26, 3
        %p803 = scmp.lt.s32.totalorder %s800, 1
        %s804 = scalar_select %p803, %s800, 1
        %p805 = scmp.lt.s32.totalorder %s28, 0
        %s806 = scalar_select %p805, %s28, 0
        %s807 = sadd.s32 %s806, %s804
        %s808 = smul.addr %s802, 2
        %s809 = sadd.s32 %s807, %s808
        %s810 = smul.addr %s809, 4
        %s811 = scalar_lea.vmem %s3, %s810
      $region56: #{_lambda_.27} parent=51 // pred_fallthru
        _
      // Predicated region
      $region57: #{_lambda_.27} parent=51 // pred_check
        %p812 = pneg %p188
      $region58: #{_lambda_.27} parent=51 // pred_check_branch
        %814 = sbr.rel (%p812) target = $region60
      $region59: #{_lambda_.27} parent=51 // pred_region
        %p815 = scmp.lt.s32.totalorder %s26, 3
        %s816 = scalar_select %p815, %s26, 3
        %p817 = scmp.lt.s32.totalorder %s27, 0
        %s818 = scalar_select %p817, %s27, 0
        %p819 = scmp.lt.s32.totalorder %s28, 0
        %s820 = scalar_select %p819, %s28, 0
        %s821 = sadd.s32 %s820, %s818
        %s822 = sadd.s32 %s821, %s816
        %s823 = smul.addr %s822, 8
        %s824 = scalar_lea.vmem %s4, %s823
      $region60: #{_lambda_.27} parent=51 // pred_fallthru
        _
    $region52: #{_lambda_.27} parent=5 // pred_fallthru
      _
  $region6: #{_lambda_.27} parent=0 // loop_footer
    %s15 = sadd.s32 1, %s11
  $region7: #{_lambda_.27} parent=0 // loop_footer_branch
    %10 = sbr.rel target = $region3
  $region8: #{_lambda_.27} parent=0 // loop_exit
    _

// kernel: _lambda_.29
$region0: #{_lambda_.29}
  #allocation0 [shape = 'u32[]', space=smem, size = 0x4, offset = 0x4, fixed_abs, tag = 'smem constant byte address 0x4 - core index']
  #allocation1 [shape = 'u32[72,128]{1,0:T(1,128)}', space=vmem, size = 0x9000, scoped, tag = 'internal scratch']
  #allocation2 [shape = 'f32[32,128]{1,0:T(8,128)}', space=vmem, size = 0x4000, scoped, tag = 'scratch operand']
  %s0 = inlined_call_operand.vmem [shape: bf16[4,32,256], index: 0, kind: input, shape index: {}]
  %s1 = inlined_call_operand.vmem [shape: bf16[4,256,128], index: 1, kind: input, shape index: {}]
  %s2 = inlined_call_operand.vmem [shape: f32[4,1,128], index: 2, kind: input, shape index: {}]
  %s3 = inlined_call_operand.vmem [shape: bf16[4,32,128], index: 3, kind: output, shape index: {0}]
  %s4 = inlined_call_operand.vmem [shape: f32[4,1,8,128], index: 4, kind: output, shape index: {1}]
  %5 = xla_tuple %s3, %s4
  %s6 = sld [smem:[#allocation0]]
  $region61: #{_lambda_.29} parent=0
    _
  %s8 = ssub.s32 1, %s6
  %s9 = scalar_select 0, %s8, %s6
  loop: start=0, step=1, limit=6
  $region2: #{_lambda_.29} parent=0 // loop_pre_header
    _
  $region3: #{_lambda_.29} parent=0 // loop_header
    %s11 = sphi 0, %s15
    %p12 = scmp.ge.s32.totalorder %s11, 6
    %s18 = sphi 0, %s44
    %s19 = sphi 0, %s40
    %s20 = sphi 0, %s36
    %s21 = sphi 0, %s32
    %s22 = sphi 0, %s18
    %s23 = sphi 0, %s19
    %s24 = sphi 0, %s20
    %s25 = sphi 0, %s21
    %s26 = sphi 0, %s22
    %s27 = sphi 0, %s23
    %s28 = sphi 0, %s24
    %s29 = sphi 0, %s25
    %s51 = sphi 0, %s53
    %s54 = sphi 0, %s51
    %s55 = sphi 0, %s54
    %s71 = sphi 0, %s55
    %s81 = sphi 0, %s83
    %s84 = sphi 0, %s81
    %s85 = sphi 0, %s84
    %s101 = sphi 0, %s85
    %s109 = sphi 0, %s111
    %s112 = sphi 0, %s109
    %s113 = sphi 0, %s112
    %s129 = sphi 0, %s113
    %s139 = sphi 0, %s141
    %s142 = sphi 0, %s139
    %s143 = sphi 0, %s142
    %s159 = sphi 0, %s143
    %s169 = sphi 0, %s171
    %s172 = sphi 0, %s169
    %s173 = sphi 0, %s172
    %s189 = sphi 0, %s173
  $region4: #{_lambda_.29} parent=0 // loop_header_branch
    %14 = sbr.rel (%p12) target = $region8
  $region5: #{_lambda_.29} parent=0 // loop_body
    %s16 = ssub.s32 %s11, 1
    %s17 = ssub.s32 %s11, 2
    %s30 = sadd.s32 1, %s21
    %p31 = scmp.ge.s32.totalorder %s30, 1
    %s32 = scalar_select %p31, 0, %s30
    %s33 = sadd.s32 1, %s20
    %s34 = scalar_select %p31, %s33, %s20
    %p35 = scmp.ge.s32.totalorder %s34, 1
    %s36 = scalar_select %p35, 0, %s34
    %s37 = sadd.s32 1, %s19
    %s38 = scalar_select %p35, %s37, %s19
    %p39 = scmp.ge.s32.totalorder %s38, 1
    %s40 = scalar_select %p39, 0, %s38
    %s41 = sadd.s32 1, %s18
    %s42 = scalar_select %p39, %s41, %s18
    %p43 = scmp.ge.s32.totalorder %s42, 4
    %s44 = scalar_select %p43, 0, %s42
    %s45 = ssub.s32 %s18, %s44
    %s46 = ssub.s32 %s19, %s40
    %s47 = sor.u32 %s45, %s46
    %s48 = ssub.s32 %s21, %s32
    %s49 = sor.u32 %s47, %s48
    %p50 = scmp.eq.s32.totalorder %s49, 0
    %s52 = sadd.s32 %s51, 1
    %s53 = scalar_select %p50, %s51, %s52
    %p56 = pneg %p50
    %p57 = scmp.eq.s32.totalorder %s11, 3
    %p58 = por %p56, %p57
    %p59 = scmp.ne.s32.totalorder %s51, %s54
    %p60 = scmp.eq.s32.totalorder %s11, 0
    %p61 = por %p59, %p60
    %p62 = scmp.ne.s32.totalorder %s51, %s54
    %p63 = scmp.eq.s32.totalorder %s16, 3
    %p64 = por %p62, %p63
    %p65 = scmp.ne.s32.totalorder %s54, %s55
    %p66 = scmp.eq.s32.totalorder %s16, 0
    %p67 = por %p65, %p66
    %p68 = scmp.ne.s32.totalorder %s54, %s55
    %p69 = scmp.eq.s32.totalorder %s17, 3
    %p70 = por %p68, %p69
    %p72 = scmp.ne.s32.totalorder %s55, %s71
    %p73 = scmp.eq.s32.totalorder %s17, 0
    %p74 = por %p72, %p73
    %s75 = ssub.s32 %s18, %s44
    %s76 = ssub.s32 %s21, %s32
    %s77 = sor.u32 %s75, %s76
    %s78 = ssub.s32 %s20, %s36
    %s79 = sor.u32 %s77, %s78
    %p80 = scmp.eq.s32.totalorder %s79, 0
    %s82 = sadd.s32 %s81, 1
    %s83 = scalar_select %p80, %s81, %s82
    %p86 = pneg %p80
    %p87 = scmp.eq.s32.totalorder %s11, 3
    %p88 = por %p86, %p87
    %p89 = scmp.ne.s32.totalorder %s81, %s84
    %p90 = scmp.eq.s32.totalorder %s11, 0
    %p91 = por %p89, %p90
    %p92 = scmp.ne.s32.totalorder %s81, %s84
    %p93 = scmp.eq.s32.totalorder %s16, 3
    %p94 = por %p92, %p93
    %p95 = scmp.ne.s32.totalorder %s84, %s85
    %p96 = scmp.eq.s32.totalorder %s16, 0
    %p97 = por %p95, %p96
    %p98 = scmp.ne.s32.totalorder %s84, %s85
    %p99 = scmp.eq.s32.totalorder %s17, 3
    %p100 = por %p98, %p99
    %p102 = scmp.ne.s32.totalorder %s85, %s101
    %p103 = scmp.eq.s32.totalorder %s17, 0
    %p104 = por %p102, %p103
    %s105 = ssub.s32 %s18, %s44
    %s106 = ssub.s32 %s20, %s36
    %s107 = sor.u32 %s105, %s106
    %p108 = scmp.eq.s32.totalorder %s107, 0
    %s110 = sadd.s32 %s109, 1
    %s111 = scalar_select %p108, %s109, %s110
    %p114 = pneg %p108
    %p115 = scmp.eq.s32.totalorder %s11, 3
    %p116 = por %p114, %p115
    %p117 = scmp.ne.s32.totalorder %s109, %s112
    %p118 = scmp.eq.s32.totalorder %s11, 0
    %p119 = por %p117, %p118
    %p120 = scmp.ne.s32.totalorder %s109, %s112
    %p121 = scmp.eq.s32.totalorder %s16, 3
    %p122 = por %p120, %p121
    %p123 = scmp.ne.s32.totalorder %s112, %s113
    %p124 = scmp.eq.s32.totalorder %s16, 0
    %p125 = por %p123, %p124
    %p126 = scmp.ne.s32.totalorder %s112, %s113
    %p127 = scmp.eq.s32.totalorder %s17, 3
    %p128 = por %p126, %p127
    %p130 = scmp.ne.s32.totalorder %s113, %s129
    %p131 = scmp.eq.s32.totalorder %s17, 0
    %p132 = por %p130, %p131
    %s133 = ssub.s32 %s18, %s44
    %s134 = ssub.s32 %s19, %s40
    %s135 = sor.u32 %s133, %s134
    %s136 = ssub.s32 %s20, %s36
    %s137 = sor.u32 %s135, %s136
    %p138 = scmp.eq.s32.totalorder %s137, 0
    %s140 = sadd.s32 %s139, 1
    %s141 = scalar_select %p138, %s139, %s140
    %p144 = pneg %p138
    %p145 = scmp.eq.s32.totalorder %s11, 3
    %p146 = por %p144, %p145
    %p147 = scmp.ne.s32.totalorder %s139, %s142
    %p148 = scmp.eq.s32.totalorder %s11, 0
    %p149 = por %p147, %p148
    %p150 = scmp.ne.s32.totalorder %s139, %s142
    %p151 = scmp.eq.s32.totalorder %s16, 3
    %p152 = por %p150, %p151
    %p153 = scmp.ne.s32.totalorder %s142, %s143
    %p154 = scmp.eq.s32.totalorder %s16, 0
    %p155 = por %p153, %p154
    %p156 = scmp.ne.s32.totalorder %s142, %s143
    %p157 = scmp.eq.s32.totalorder %s17, 3
    %p158 = por %p156, %p157
    %p160 = scmp.ne.s32.totalorder %s143, %s159
    %p161 = scmp.eq.s32.totalorder %s17, 0
    %p162 = por %p160, %p161
    %s163 = ssub.s32 %s18, %s44
    %s164 = ssub.s32 %s19, %s40
    %s165 = sor.u32 %s163, %s164
    %s166 = ssub.s32 %s20, %s36
    %s167 = sor.u32 %s165, %s166
    %p168 = scmp.eq.s32.totalorder %s167, 0
    %s170 = sadd.s32 %s169, 1
    %s171 = scalar_select %p168, %s169, %s170
    %p174 = pneg %p168
    %p175 = scmp.eq.s32.totalorder %s11, 3
    %p176 = por %p174, %p175
    %p177 = scmp.ne.s32.totalorder %s169, %s172
    %p178 = scmp.eq.s32.totalorder %s11, 0
    %p179 = por %p177, %p178
    %p180 = scmp.ne.s32.totalorder %s169, %s172
    %p181 = scmp.eq.s32.totalorder %s16, 3
    %p182 = por %p180, %p181
    %p183 = scmp.ne.s32.totalorder %s172, %s173
    %p184 = scmp.eq.s32.totalorder %s16, 0
    %p185 = por %p183, %p184
    %p186 = scmp.ne.s32.totalorder %s172, %s173
    %p187 = scmp.eq.s32.totalorder %s17, 3
    %p188 = por %p186, %p187
    %p190 = scmp.ne.s32.totalorder %s173, %s189
    %p191 = scmp.eq.s32.totalorder %s17, 0
    %p192 = por %p190, %p191
    %p193 = scmp.le.s32.totalorder 1, %s11
    %p194 = scmp.lt.s32.totalorder %s11, 5
    %p195 = pnand %p193, %p194
    %p196 = pneg %p195
    // Predicated region
    $region9: #{_lambda_.29} parent=5 // pred_check
      _
    $region10: #{_lambda_.29} parent=5 // pred_check_branch
      %198 = sbr.rel (%p195) target = $region12
    $region11: #{_lambda_.29} parent=5 // pred_region
      %s199 = ssub.s32 %s11, 1
    $region12: #{_lambda_.29} parent=5 // pred_fallthru
      _
    %p200 = scmp.lt.s32.totalorder %s11, 4
    // Predicated region
    $region13: #{_lambda_.29} parent=5 // pred_check
      %p201 = pneg %p200
    $region14: #{_lambda_.29} parent=5 // pred_check_branch
      %203 = sbr.rel (%p201) target = $region16
    $region15: #{_lambda_.29} parent=5 // pred_region
      // Predicated region
      $region17: #{_lambda_.29} parent=15 // pred_check
        %p204 = pneg %p61
      $region18: #{_lambda_.29} parent=15 // pred_check_branch
        %206 = sbr.rel (%p204) target = $region20
      $region19: #{_lambda_.29} parent=15 // pred_region
        %s207 = smul.u32 4, %s19
        %s208 = smul.u32 2, %s21
        %p209 = scmp.lt.s32.totalorder %s18, 3
        %s210 = scalar_select %p209, %s18, 3
        %p211 = scmp.lt.s32.totalorder %s207, 3
        %s212 = scalar_select %p211, %s207, 3
        %p213 = scmp.lt.s32.totalorder %s208, 1
        %s214 = scalar_select %p213, %s208, 1
        %s215 = smul.addr %s212, 2
        %s216 = sadd.s32 %s214, %s215
        %s217 = smul.addr %s210, 8
        %s218 = sadd.s32 %s216, %s217
        %s219 = smul.addr %s218, 4
        %s220 = scalar_lea.vmem %s0, %s219
        %s221 = smul.u32 4, %s19
        %s222 = smul.u32 2, %s21
      $region20: #{_lambda_.29} parent=15 // pred_fallthru
        _
      // Predicated region
      $region21: #{_lambda_.29} parent=15 // pred_check
        %p223 = pneg %p91
      $region22: #{_lambda_.29} parent=15 // pred_check_branch
        %225 = sbr.rel (%p223) target = $region24
      $region23: #{_lambda_.29} parent=15 // pred_region
        %s226 = smul.u32 32, %s21
        %p227 = scmp.lt.s32.totalorder %s18, 3
        %s228 = scalar_select %p227, %s18, 3
        %p229 = scmp.lt.s32.totalorder %s226, 31
        %s230 = scalar_select %p229, %s226, 31
        %p231 = scmp.lt.s32.totalorder %s20, 0
        %s232 = scalar_select %p231, %s20, 0
        %s233 = sadd.s32 %s232, %s230
        %s234 = smul.addr %s228, 32
        %s235 = sadd.s32 %s233, %s234
        %s236 = smul.addr %s235, 4
        %s237 = scalar_lea.vmem %s1, %s236
        %s238 = smul.u32 32, %s21
      $region24: #{_lambda_.29} parent=15 // pred_fallthru
        _
      // Predicated region
      $region25: #{_lambda_.29} parent=15 // pred_check
        %p239 = pneg %p119
      $region26: #{_lambda_.29} parent=15 // pred_check_branch
        %241 = sbr.rel (%p239) target = $region28
      $region27: #{_lambda_.29} parent=15 // pred_region
        %p242 = scmp.lt.s32.totalorder %s18, 3
        %s243 = scalar_select %p242, %s18, 3
        %p244 = scmp.lt.s32.totalorder %s20, 0
        %s245 = scalar_select %p244, %s20, 0
        %s246 = sadd.s32 %s245, %s243
        %s247 = scalar_lea.vmem %s2, %s246
      $region28: #{_lambda_.29} parent=15 // pred_fallthru
        _
    $region16: #{_lambda_.29} parent=5 // pred_fallthru
      _
    %p248 = scmp.le.s32.totalorder 1, %s11
    %p249 = scmp.lt.s32.totalorder %s11, 5
    %p250 = pnand %p248, %p249
    %p251 = pneg %p250
    // Predicated region
    $region29: #{_lambda_.29} parent=5 // pred_check
      _
    $region30: #{_lambda_.29} parent=5 // pred_check_branch
      %253 = sbr.rel (%p250) target = $region32
    $region31: #{_lambda_.29} parent=5 // pred_region
      %s254 = ssub.s32 %s11, 1
      %s255 = smul.u32 4, %s23
      %s256 = smul.u32 2, %s25
      %p257 = scmp.lt.s32.totalorder %s22, 3
      %s258 = scalar_select %p257, %s22, 3
      %p259 = scmp.lt.s32.totalorder %s255, 3
      %s260 = scalar_select %p259, %s255, 3
      %p261 = scmp.lt.s32.totalorder %s256, 1
      %s262 = scalar_select %p261, %s256, 1
      %s263 = smul.addr %s260, 2
      %s264 = sadd.s32 %s262, %s263
      %s265 = smul.addr %s258, 8
      %s266 = sadd.s32 %s264, %s265
      %s267 = smul.addr %s266, 4
      %s268 = scalar_lea.vmem %s0, %s267
      %p269 = pneg %p67
      %p270 = pneg %p64
      %s271 = smul.u32 32, %s25
      %p272 = scmp.lt.s32.totalorder %s22, 3
      %s273 = scalar_select %p272, %s22, 3
      %p274 = scmp.lt.s32.totalorder %s271, 31
      %s275 = scalar_select %p274, %s271, 31
      %p276 = scmp.lt.s32.totalorder %s24, 0
      %s277 = scalar_select %p276, %s24, 0
      %s278 = sadd.s32 %s277, %s275
      %s279 = smul.addr %s273, 32
      %s280 = sadd.s32 %s278, %s279
      %s281 = smul.addr %s280, 4
      %s282 = scalar_lea.vmem %s1, %s281
      %p283 = pneg %p97
      %p284 = pneg %p94
      %p285 = scmp.lt.s32.totalorder %s22, 3
      %s286 = scalar_select %p285, %s22, 3
      %p287 = scmp.lt.s32.totalorder %s24, 0
      %s288 = scalar_select %p287, %s24, 0
      %s289 = sadd.s32 %s288, %s286
      %s290 = scalar_lea.vmem %s2, %s289
      %p291 = pneg %p125
      %p292 = pneg %p122
      %p293 = pneg %p155
      %p294 = pneg %p152
      %s295 = smul.u32 4, %s23
      %p296 = scmp.lt.s32.totalorder %s22, 3
      %s297 = scalar_select %p296, %s22, 3
      %p298 = scmp.lt.s32.totalorder %s295, 3
      %s299 = scalar_select %p298, %s295, 3
      %p300 = scmp.lt.s32.totalorder %s24, 0
      %s301 = scalar_select %p300, %s24, 0
      %s302 = sadd.s32 %s301, %s299
      %s303 = smul.addr %s297, 4
      %s304 = sadd.s32 %s302, %s303
      %s305 = smul.addr %s304, 4
      %s306 = scalar_lea.vmem %s3, %s305
      %p307 = pneg %p185
      %p308 = pneg %p182
      %p309 = scmp.lt.s32.totalorder %s22, 3
      %s310 = scalar_select %p309, %s22, 3
      %p311 = scmp.lt.s32.totalorder %s23, 0
      %s312 = scalar_select %p311, %s23, 0
      %p313 = scmp.lt.s32.totalorder %s24, 0
      %s314 = scalar_select %p313, %s24, 0
      %s315 = sadd.s32 %s314, %s312
      %s316 = sadd.s32 %s315, %s310
      %s317 = smul.addr %s316, 8
      %s318 = scalar_lea.vmem %s4, %s317
      %s319 = smul.u32 4, %s23
      %s320 = smul.u32 2, %s25
      %p321 = scmp.lt.s32.totalorder %s22, 3
      %s322 = scalar_select %p321, %s22, 3
      %p323 = scmp.lt.s32.totalorder %s319, 3
      %s324 = scalar_select %p323, %s319, 3
      %p325 = scmp.lt.s32.totalorder %s320, 1
      %s326 = scalar_select %p325, %s320, 1
      %s327 = smul.addr %s324, 2
      %s328 = sadd.s32 %s326, %s327
      %s329 = smul.addr %s322, 8
      %s330 = sadd.s32 %s328, %s329
      %s331 = smul.addr %s330, 4
      %s332 = scalar_lea.vmem %s0, %s331
      %s333 = smul.u32 4, %s23
      %s334 = smul.u32 2, %s25
      %s335 = smul.u32 32, %s25
      %p336 = scmp.lt.s32.totalorder %s22, 3
      %s337 = scalar_select %p336, %s22, 3
      %p338 = scmp.lt.s32.totalorder %s335, 31
      %s339 = scalar_select %p338, %s335, 31
      %p340 = scmp.lt.s32.totalorder %s24, 0
      %s341 = scalar_select %p340, %s24, 0
      %s342 = sadd.s32 %s341, %s339
      %s343 = smul.addr %s337, 32
      %s344 = sadd.s32 %s342, %s343
      %s345 = smul.addr %s344, 4
      %s346 = scalar_lea.vmem %s1, %s345
      %s347 = smul.u32 32, %s25
      %p348 = scmp.lt.s32.totalorder %s22, 3
      %s349 = scalar_select %p348, %s22, 3
      %p350 = scmp.lt.s32.totalorder %s24, 0
      %s351 = scalar_select %p350, %s24, 0
      %s352 = sadd.s32 %s351, %s349
      %s353 = scalar_lea.vmem %s2, %s352
      %s354 = smul.u32 4, %s23
      %p355 = scmp.lt.s32.totalorder %s22, 3
      %s356 = scalar_select %p355, %s22, 3
      %p357 = scmp.lt.s32.totalorder %s354, 3
      %s358 = scalar_select %p357, %s354, 3
      %p359 = scmp.lt.s32.totalorder %s24, 0
      %s360 = scalar_select %p359, %s24, 0
      %s361 = sadd.s32 %s360, %s358
      %s362 = smul.addr %s356, 4
      %s363 = sadd.s32 %s361, %s362
      %s364 = smul.addr %s363, 4
      %s365 = scalar_lea.vmem %s3, %s364
      %s366 = smul.u32 4, %s23
      %p367 = scmp.lt.s32.totalorder %s22, 3
      %s368 = scalar_select %p367, %s22, 3
      %p369 = scmp.lt.s32.totalorder %s23, 0
      %s370 = scalar_select %p369, %s23, 0
      %p371 = scmp.lt.s32.totalorder %s24, 0
      %s372 = scalar_select %p371, %s24, 0
      %s373 = sadd.s32 %s372, %s370
      %s374 = sadd.s32 %s373, %s368
      %s375 = smul.addr %s374, 8
      %s376 = scalar_lea.vmem %s4, %s375
      %p377 = scmp.eq.s32.totalorder %s25, 0
      // Predicated region
      $region33: #{_lambda_.29} parent=31 // pred_check
        %p378 = pneg %p377
      $region34: #{_lambda_.29} parent=31 // pred_check_branch
        %380 = sbr.rel (%p378) target = $region36
      $region35: #{_lambda_.29} parent=31 // pred_region
        %381 = vst [vmem:[#allocation2] sm:$0xff] 0.0
        %382 = vst [vmem:[#allocation2 + $0x8] sm:$0xff] 0.0
        %383 = vst [vmem:[#allocation2 + $0x10] sm:$0xff] 0.0
        %384 = vst [vmem:[#allocation2 + $0x18] sm:$0xff] 0.0
      $region36: #{_lambda_.29} parent=31 // pred_fallthru
        _
      %v385 = vld [vmem:[%s332] sm:$0xff]
      %v386 = vld [vmem:[%s332 + $0x8] sm:$0xff]
      %v387 = vld [vmem:[%s332 + $0x10] sm:$0xff]
      %v388 = vld [vmem:[%s332 + $0x18] sm:$0xff]
      %v389 = vunpack.c.l.bf16 %v385
      %v390 = vunpack.c.h.bf16 %v385
      %v391 = vunpack.c.l.bf16 %v386
      %v392 = vunpack.c.h.bf16 %v386
      %v393 = vunpack.c.l.bf16 %v387
      %v394 = vunpack.c.h.bf16 %v387
      %v395 = vunpack.c.l.bf16 %v388
      %v396 = vunpack.c.h.bf16 %v388
      %v397 = vmax.f32 %v389, 0.0
      %v398 = vmax.f32 %v390, 0.0
      %v399 = vmax.f32 %v391, 0.0
      %v400 = vmax.f32 %v392, 0.0
      %v401 = vmax.f32 %v393, 0.0
      %v402 = vmax.f32 %v394, 0.0
      %v403 = vmax.f32 %v395, 0.0
      %v404 = vmax.f32 %v396, 0.0
      %v405 = vpack.c.bf16 %v399, %v397
      %v406 = vpack.c.bf16 %v400, %v398
      %v407 = vpack.c.bf16 %v403, %v401
      %v408 = vpack.c.bf16 %v404, %v402
      %v409 = vld [vmem:[#allocation2] sm:$0xff]
      %v410 = vld [vmem:[#allocation2 + $0x8] sm:$0xff]
      %v411 = vld [vmem:[#allocation2 + $0x10] sm:$0xff]
      %v412 = vld [vmem:[#allocation2 + $0x18] sm:$0xff]
      %v413 = vld [vmem:[%s346] sm:$0xf]
      %v414 = vld [vmem:[%s346 + $0x4] sm:$0xf]
      %v415 = vld [vmem:[%s346 + $0x8] sm:$0xf]
      %v416 = vld [vmem:[%s346 + $0xc] sm:$0xf]
      %v417 = vld [vmem:[%s346 + $0x10] sm:$0xf]
      %v418 = vld [vmem:[%s346 + $0x14] sm:$0xf]
      %v419 = vld [vmem:[%s346 + $0x18] sm:$0xf]
      %v420 = vld [vmem:[%s346 + $0x1c] sm:$0xf]
      %v421 = vld [vmem:[%s346 + $0x20] sm:$0xf]
      %v422 = vld [vmem:[%s346 + $0x24] sm:$0xf]
      %v423 = vld [vmem:[%s346 + $0x28] sm:$0xf]
      %v424 = vld [vmem:[%s346 + $0x2c] sm:$0xf]
      %v425 = vld [vmem:[%s346 + $0x30] sm:$0xf]
      %v426 = vld [vmem:[%s346 + $0x34] sm:$0xf]
      %v427 = vld [vmem:[%s346 + $0x38] sm:$0xf]
      %v428 = vld [vmem:[%s346 + $0x3c] sm:$0xf]
      %v429 = vld [vmem:[%s346 + $0x40] sm:$0xf]
      %v430 = vld [vmem:[%s346 + $0x44] sm:$0xf]
      %v431 = vld [vmem:[%s346 + $0x48] sm:$0xf]
      %v432 = vld [vmem:[%s346 + $0x4c] sm:$0xf]
      %v433 = vld [vmem:[%s346 + $0x50] sm:$0xf]
      %v434 = vld [vmem:[%s346 + $0x54] sm:$0xf]
      %v435 = vld [vmem:[%s346 + $0x58] sm:$0xf]
      %v436 = vld [vmem:[%s346 + $0x5c] sm:$0xf]
      %v437 = vld [vmem:[%s346 + $0x60] sm:$0xf]
      %v438 = vld [vmem:[%s346 + $0x64] sm:$0xf]
      %v439 = vld [vmem:[%s346 + $0x68] sm:$0xf]
      %v440 = vld [vmem:[%s346 + $0x6c] sm:$0xf]
      %v441 = vld [vmem:[%s346 + $0x70] sm:$0xf]
      %v442 = vld [vmem:[%s346 + $0x74] sm:$0xf]
      %v443 = vld [vmem:[%s346 + $0x78] sm:$0xf]
      %v444 = vld [vmem:[%s346 + $0x7c] sm:$0xf]
      %v477 = vunpack.c.l.b16 %v413
      %v478 = vunpack.c.l.b16 %v414
      %v479 = vunpack.c.l.b16 %v415
      %v480 = vunpack.c.l.b16 %v416
      %v481 = vunpack.c.l.b16 %v417
      %v482 = vunpack.c.l.b16 %v418
      %v483 = vunpack.c.l.b16 %v419
      %v484 = vunpack.c.l.b16 %v420
      %v485 = vunpack.c.l.b16 %v421
      %v486 = vunpack.c.l.b16 %v422
      %v487 = vunpack.c.l.b16 %v423
      %v488 = vunpack.c.l.b16 %v424
      %v489 = vunpack.c.l.b16 %v425
      %v490 = vunpack.c.l.b16 %v426
      %v491 = vunpack.c.l.b16 %v427
      %v492 = vunpack.c.l.b16 %v428
      %v493 = vunpack.c.l.b16 %v429
      %v494 = vunpack.c.l.b16 %v430
      %v495 = vunpack.c.l.b16 %v431
      %v496 = vunpack.c.l.b16 %v432
      %v497 = vunpack.c.l.b16 %v433
      %v498 = vunpack.c.l.b16 %v434
      %v499 = vunpack.c.l.b16 %v435
      %v500 = vunpack.c.l.b16 %v436
      %v501 = vunpack.c.l.b16 %v437
      %v502 = vunpack.c.l.b16 %v438
      %v503 = vunpack.c.l.b16 %v439
      %v504 = vunpack.c.l.b16 %v440
      %v505 = vunpack.c.l.b16 %v441
      %v506 = vunpack.c.l.b16 %v442
      %v507 = vunpack.c.l.b16 %v443
      %v508 = vunpack.c.l.b16 %v444
      %v509 = vpack.c.b16 %v478, %v477
      %v510 = vpack.c.b16 %v480, %v479
      %v511 = vpack.c.b16 %v482, %v481
      %v512 = vpack.c.b16 %v484, %v483
      %v513 = vpack.c.b16 %v486, %v485
      %v514 = vpack.c.b16 %v488, %v487
      %v515 = vpack.c.b16 %v490, %v489
      %v516 = vpack.c.b16 %v492, %v491
      %v517 = vpack.c.b16 %v494, %v493
      %v518 = vpack.c.b16 %v496, %v495
      %v519 = vpack.c.b16 %v498, %v497
      %v520 = vpack.c.b16 %v500, %v499
      %v521 = vpack.c.b16 %v502, %v501
      %v522 = vpack.c.b16 %v504, %v503
      %v523 = vpack.c.b16 %v506, %v505
      %v524 = vpack.c.b16 %v508, %v507
      %541 = vmatpush.bf16.msra.mxu0 %v516
      %542 = vmatpush.bf16.msra.mxu0 %v515
      %543 = vmatpush.bf16.msra.mxu0 %v514
      %544 = vmatpush.bf16.msra.mxu0 %v513
      %545 = vmatpush.bf16.msra.mxu0 %v512
      %546 = vmatpush.bf16.msra.mxu0 %v511
      %547 = vmatpush.bf16.msra.mxu0 %v510
      %548 = vmatpush.bf16.msra.mxu0 %v509
      %549 = vmatmul.bf16.gmra.mxu0 %v405
      %v550 = vpop.f32.mrf.mxu0
      %v551 = vadd.f32 0.0, %v550
      %v552 = vpop.f32.mrf.mxu0
      %v553 = vadd.f32 0.0, %v552
      %554 = vmatmul.bf16.gmra.mxu0 %v407
      %v555 = vpop.f32.mrf.mxu0
      %v556 = vadd.f32 0.0, %v555
      %v557 = vpop.f32.mrf.mxu0
      %v558 = vadd.f32 0.0, %v557
      %559 = vdwg.mxu0
      %560 = vmatpush.bf16.msra.mxu0 %v524
      %561 = vmatpush.bf16.msra.mxu0 %v523
      %562 = vmatpush.bf16.msra.mxu0 %v522
      %563 = vmatpush.bf16.msra.mxu0 %v521
      %564 = vmatpush.bf16.msra.mxu0 %v520
      %565 = vmatpush.bf16.msra.mxu0 %v519
      %566 = vmatpush.bf16.msra.mxu0 %v518
      %567 = vmatpush.bf16.msra.mxu0 %v517
      %568 = vmatmul.bf16.gmra.mxu0 %v406
      %v569 = vpop.f32.mrf.mxu0
      %v570 = vadd.f32 %v551, %v569
      %v571 = vpop.f32.mrf.mxu0
      %v572 = vadd.f32 %v553, %v571
      %573 = vmatmul.bf16.gmra.mxu0 %v408
      %v574 = vpop.f32.mrf.mxu0
      %v575 = vadd.f32 %v556, %v574
      %v576 = vpop.f32.mrf.mxu0
      %v577 = vadd.f32 %v558, %v576
      %578 = vdwg.mxu0
      %v579 = vadd.f32 %v409, %v570
      %v580 = vadd.f32 %v410, %v572
      %v581 = vadd.f32 %v411, %v575
      %v582 = vadd.f32 %v412, %v577
      %583 = vst [vmem:[#allocation2] sm:$0xff] %v579
      %584 = vst [vmem:[#allocation2 + $0x8] sm:$0xff] %v580
      %585 = vst [vmem:[#allocation2 + $0x10] sm:$0xff] %v581
      %586 = vst [vmem:[#allocation2 + $0x18] sm:$0xff] %v582
      // Predicated region
      $region37: #{_lambda_.29} parent=31 // pred_check
        %p587 = pneg %p377
      $region38: #{_lambda_.29} parent=31 // pred_check_branch
        %589 = sbr.rel (%p587) target = $region40
      $region39: #{_lambda_.29} parent=31 // pred_region
        %v590 = vld [vmem:[#allocation2] sm:$0xff]
        %v591 = vld [vmem:[#allocation2 + $0x8] sm:$0xff]
        %v592 = vld [vmem:[#allocation2 + $0x10] sm:$0xff]
        %v593 = vld [vmem:[#allocation2 + $0x18] sm:$0xff]
        %v594 = vld [vmem:[%s353] sm:$0x1]
        %v596 = vperm.slane %v594, 0
        %v598 = vadd.f32 %v590, %v596
        %v599 = vadd.f32 %v591, %v596
        %v600 = vadd.f32 %v592, %v596
        %v601 = vadd.f32 %v593, %v596
        %v602 = vpack.c.bf16 %v598, %v598
        %v603 = vpack.c.bf16 %v599, %v599
        %v604 = vpack.c.bf16 %v600, %v600
        %v605 = vpack.c.bf16 %v601, %v601
        %606 = vst [vmem:[%s365] sm:$0xf] %v602
        %607 = vst [vmem:[%s365 + $0x4] sm:$0xf] %v603
        %608 = vst [vmem:[%s365 + $0x8] sm:$0xf] %v604
        %609 = vst [vmem:[%s365 + $0xc] sm:$0xf] %v605
        %v610 = vadd.f32 %v598, %v599
        %v611 = vadd.f32 %v610, %v600
        %v612 = vadd.f32 %v611, %v601
        %v613 = vrot.slane %v612, 4
        %v614 = vadd.f32 %v612, %v613
        %v615 = vrot.slane %v614, 2
        %v616 = vadd.f32 %v614, %v615
        %v617 = vrot.slane %v616, 1
        %v618 = vadd.f32 %v616, %v617
        %v619 = vmul.f32 %v598, %v598
        %v620 = vmul.f32 %v599, %v599
        %v621 = vmul.f32 %v600, %v600
        %v622 = vmul.f32 %v601, %v601
        %v623 = vadd.f32 %v619, %v620
        %v624 = vadd.f32 %v623, %v621
        %v625 = vadd.f32 %v624, %v622
        %v626 = vrot.slane %v625, 4
        %v627 = vadd.f32 %v625, %v626
        %v628 = vrot.slane %v627, 2
        %v629 = vadd.f32 %v627, %v628
        %v630 = vrot.slane %v629, 1
        %v631 = vadd.f32 %v629, %v630
        %v632 = vlaneseq
        %v633 = vshrl.u32 %v632, 7
        %vm634 = vcmp.eq.s32.totalorder %v633, 0
        %vm635 = vcmp.eq.s32.totalorder %v633, 1
        %v636 = vsel %vm635, %v631, 0.0
        %v637 = vsel %vm634, %v618, %v636
        %638 = vst [vmem:[%s376] sm:$0xff] %v637
      $region40: #{_lambda_.29} parent=31 // pred_fallthru
        _
      %s639 = smul.u32 4, %s23
      %p640 = scmp.lt.s32.totalorder %s22, 3
      %s641 = scalar_select %p640, %s22, 3
      %p642 = scmp.lt.s32.totalorder %s639, 3
      %s643 = scalar_select %p642, %s639, 3
      %p644 = scmp.lt.s32.totalorder %s24, 0
      %s645 = scalar_select %p644, %s24, 0
      %s646 = sadd.s32 %s645, %s643
      %s647 = smul.addr %s641, 4
      %s648 = sadd.s32 %s646, %s647
      %s649 = smul.addr %s648, 4
      %s650 = scalar_lea.vmem %s3, %s649
      %p651 = scmp.lt.s32.totalorder %s22, 3
      %s652 = scalar_select %p651, %s22, 3
      %p653 = scmp.lt.s32.totalorder %s23, 0
      %s654 = scalar_select %p653, %s23, 0
      %p655 = scmp.lt.s32.totalorder %s24, 0
      %s656 = scalar_select %p655, %s24, 0
      %s657 = sadd.s32 %s656, %s654
      %s658 = sadd.s32 %s657, %s652
      %s659 = smul.addr %s658, 8
      %s660 = scalar_lea.vmem %s4, %s659
      // Predicated region
      $region41: #{_lambda_.29} parent=31 // pred_check
        %p661 = pneg %p152
      $region42: #{_lambda_.29} parent=31 // pred_check_branch
        %663 = sbr.rel (%p661) target = $region44
      $region43: #{_lambda_.29} parent=31 // pred_region
        %s664 = smul.u32 4, %s23
      $region44: #{_lambda_.29} parent=31 // pred_fallthru
        _
      // Predicated region
      $region45: #{_lambda_.29} parent=31 // pred_check
        %p665 = pneg %p182
      $region46: #{_lambda_.29} parent=31 // pred_check_branch
        %667 = sbr.rel (%p665) target = $region48
      $region47: #{_lambda_.29} parent=31 // pred_region
        _
      $region48: #{_lambda_.29} parent=31 // pred_fallthru
        _
    $region32: #{_lambda_.29} parent=5 // pred_fallthru
      _
    %p668 = scmp.le.s32.totalorder 2, %s11
    // Predicated region
    $region49: #{_lambda_.29} parent=5 // pred_check
      %p669 = pneg %p668
    $region50: #{_lambda_.29} parent=5 // pred_check_branch
      %671 = sbr.rel (%p669) target = $region52
    $region51: #{_lambda_.29} parent=5 // pred_region
      %s672 = ssub.s32 %s11, 2
      // Predicated region
      $region53: #{_lambda_.29} parent=51 // pred_check
        %p673 = pneg %p158
      $region54: #{_lambda_.29} parent=51 // pred_check_branch
        %675 = sbr.rel (%p673) target = $region56
      $region55: #{_lambda_.29} parent=51 // pred_region
        %s676 = smul.u32 4, %s27
        %p677 = scmp.lt.s32.totalorder %s26, 3
        %s678 = scalar_select %p677, %s26, 3
        %p679 = scmp.lt.s32.totalorder %s676, 3
        %s680 = scalar_select %p679, %s676, 3
        %p681 = scmp.lt.s32.totalorder %s28, 0
        %s682 = scalar_select %p681, %s28, 0
        %s683 = sadd.s32 %s682, %s680
        %s684 = smul.addr %s678, 4
        %s685 = sadd.s32 %s683, %s684
        %s686 = smul.addr %s685, 4
        %s687 = scalar_lea.vmem %s3, %s686
      $region56: #{_lambda_.29} parent=51 // pred_fallthru
        _
      // Predicated region
      $region57: #{_lambda_.29} parent=51 // pred_check
        %p688 = pneg %p188
      $region58: #{_lambda_.29} parent=51 // pred_check_branch
        %690 = sbr.rel (%p688) target = $region60
      $region59: #{_lambda_.29} parent=51 // pred_region
        %p691 = scmp.lt.s32.totalorder %s26, 3
        %s692 = scalar_select %p691, %s26, 3
        %p693 = scmp.lt.s32.totalorder %s27, 0
        %s694 = scalar_select %p693, %s27, 0
        %p695 = scmp.lt.s32.totalorder %s28, 0
        %s696 = scalar_select %p695, %s28, 0
        %s697 = sadd.s32 %s696, %s694
        %s698 = sadd.s32 %s697, %s692
        %s699 = smul.addr %s698, 8
        %s700 = scalar_lea.vmem %s4, %s699
      $region60: #{_lambda_.29} parent=51 // pred_fallthru
        _
    $region52: #{_lambda_.29} parent=5 // pred_fallthru
      _
  $region6: #{_lambda_.29} parent=0 // loop_footer
    %s15 = sadd.s32 1, %s11
  $region7: #{_lambda_.29} parent=0 // loop_footer_branch
    %10 = sbr.rel target = $region3
  $region8: #{_lambda_.29} parent=0 // loop_exit
    _

// kernel: tile.133
$region0: #{tile.133}
  #allocation0 [shape = 's32[1]{0}', space=sflag, size = 0x4, scoped, tag = 'scoped memory for tile.133']
  %s0 = inlined_call_operand.vmem [shape: f32[8], index: 0, kind: input, shape index: {}]
  %s1 = inlined_call_operand.vmem [shape: f32[16,8], index: 1, kind: output, shape index: {}]
  // Predicated region
  $region2: #{tile.133} parent=0 // pred_check
    _
  $region3: #{tile.133} parent=0 // pred_check_branch
    %3 = sbr.rel (0) target = $region5
  $region4: #{tile.133} parent=0 // pred_region
    _
  $region5: #{tile.133} parent=0 // pred_fallthru
    _
  %v4 = vld [vmem:[%s0] ss:$0 sm:$0xff]
  %5 = vst [vmem:[%s1] sm:$0xff] %v4
  %s6 = scalar_lea.vmem %s1, 8
  %7 = vst [vmem:[%s6] sm:$0xff] %v4

// kernel: tile.134
$region0: #{tile.134}
  %s0 = inlined_call_operand.vmem [shape: f32[16,8], index: 0, kind: input, shape index: {}]
  %s1 = inlined_call_operand.vmem [shape: f32[1,128], index: 1, kind: output, shape index: {}]
  $region1: #{tile.134} parent=0
    #allocation0 [shape = 'u8[4096]{0}', space=vmem, size = 0x1000, scoped, tag = 'scoped mem for output reshape']
    %v2 = vld [vmem:[%s0] sm:$0x1]
    %vm3 = vcmask 64512
    %4 = vst.msk [vmem:[#allocation0] sm:$0x1] %vm3, %v2
    %s5 = scalar_lea.vmem %s0, 15
    %v6 = vld [vmem:[%s5] sm:$0x1]
    %7 = vrot.lane.b32.xlu0 %v6, 120
    %v8 = vpop.permute.xlu0 %7
    %vm9 = vcmask 1048512
    %10 = vst.msk [vmem:[#allocation0] sm:$0x1] %vm9, %v8
    %s11 = scalar_lea.vmem %s0, 14
    %v12 = vld [vmem:[%s11] sm:$0x1]
    %13 = vrot.lane.b32.xlu0 %v12, 112
    %v14 = vpop.permute.xlu0 %13
    %vm15 = vcmask 982912
    %16 = vst.msk [vmem:[#allocation0] sm:$0x1] %vm15, %v14
    %s17 = scalar_lea.vmem %s0, 13
    %v18 = vld [vmem:[%s17] sm:$0x1]
    %19 = vrot.lane.b32.xlu0 %v18, 104
    %v20 = vpop.permute.xlu0 %19
    %vm21 = vcmask 917312
    %22 = vst.msk [vmem:[#allocation0] sm:$0x1] %vm21, %v20
    %s23 = scalar_lea.vmem %s0, 12
    %v24 = vld [vmem:[%s23] sm:$0x1]
    %25 = vrot.lane.b32.xlu0 %v24, 96
    %v26 = vpop.permute.xlu0 %25
    %vm27 = vcmask 851712
    %28 = vst.msk [vmem:[#allocation0] sm:$0x1] %vm27, %v26
    %s29 = scalar_lea.vmem %s0, 11
    %v30 = vld [vmem:[%s29] sm:$0x1]
    %31 = vrot.lane.b32.xlu0 %v30, 88
    %v32 = vpop.permute.xlu0 %31
    %vm33 = vcmask 786112
    %34 = vst.msk [vmem:[#allocation0] sm:$0x1] %vm33, %v32
    %s35 = scalar_lea.vmem %s0, 10
    %v36 = vld [vmem:[%s35] sm:$0x1]
    %37 = vrot.lane.b32.xlu0 %v36, 80
    %v38 = vpop.permute.xlu0 %37
    %vm39 = vcmask 720512
    %40 = vst.msk [vmem:[#allocation0] sm:$0x1] %vm39, %v38
    %s41 = scalar_lea.vmem %s0, 9
    %v42 = vld [vmem:[%s41] sm:$0x1]
    %43 = vrot.lane.b32.xlu0 %v42, 72
    %v44 = vpop.permute.xlu0 %43
    %vm45 = vcmask 654912
    %46 = vst.msk [vmem:[#allocation0] sm:$0x1] %vm45, %v44
    %s47 = scalar_lea.vmem %s0, 8
    %v48 = vld [vmem:[%s47] sm:$0x1]
    %49 = vrot.lane.b32.xlu0 %v48, 64
    %v50 = vpop.permute.xlu0 %49
    %vm51 = vcmask 589312
    %52 = vst.msk [vmem:[#allocation0] sm:$0x1] %vm51, %v50
    %s53 = scalar_lea.vmem %s0, 7
    %v54 = vld [vmem:[%s53] sm:$0x1]
    %55 = vrot.lane.b32.xlu0 %v54, 56
    %v56 = vpop.permute.xlu0 %55
    %vm57 = vcmask 523712
    %58 = vst.msk [vmem:[#allocation0] sm:$0x1] %vm57, %v56
    %s59 = scalar_lea.vmem %s0, 6
    %v60 = vld [vmem:[%s59] sm:$0x1]
    %61 = vrot.lane.b32.xlu0 %v60, 48
    %v62 = vpop.permute.xlu0 %61
    %vm63 = vcmask 458112
    %64 = vst.msk [vmem:[#allocation0] sm:$0x1] %vm63, %v62
    %s65 = scalar_lea.vmem %s0, 5
    %v66 = vld [vmem:[%s65] sm:$0x1]
    %67 = vrot.lane.b32.xlu0 %v66, 40
    %v68 = vpop.permute.xlu0 %67
    %vm69 = vcmask 392512
    %70 = vst.msk [vmem:[#allocation0] sm:$0x1] %vm69, %v68
    %s71 = scalar_lea.vmem %s0, 4
    %v72 = vld [vmem:[%s71] sm:$0x1]
    %73 = vrot.lane.b32.xlu0 %v72, 32
    %v74 = vpop.permute.xlu0 %73
    %vm75 = vcmask 326912
    %76 = vst.msk [vmem:[#allocation0] sm:$0x1] %vm75, %v74
    %s77 = scalar_lea.vmem %s0, 3
    %v78 = vld [vmem:[%s77] sm:$0x1]
    %79 = vrot.lane.b32.xlu0 %v78, 24
    %v80 = vpop.permute.xlu0 %79
    %vm81 = vcmask 261312
    %82 = vst.msk [vmem:[#allocation0] sm:$0x1] %vm81, %v80
    %s83 = scalar_lea.vmem %s0, 2
    %v84 = vld [vmem:[%s83] sm:$0x1]
    %85 = vrot.lane.b32.xlu0 %v84, 16
    %v86 = vpop.permute.xlu0 %85
    %vm87 = vcmask 195712
    %88 = vst.msk [vmem:[#allocation0] sm:$0x1] %vm87, %v86
    %s89 = scalar_lea.vmem %s0, 1
    %v90 = vld [vmem:[%s89] sm:$0x1]
    %91 = vrot.lane.b32.xlu0 %v90, 8
    %v92 = vpop.permute.xlu0 %91
    %vm93 = vcmask 130112
    %94 = vst.msk [vmem:[#allocation0] sm:$0x1] %vm93, %v92
    %s96 = ssub.s32 2, 1
    %v97 = vld [vmem:[#allocation0] sm:%s96]
    %s99 = ssub.s32 2, 1
    %100 = vst [vmem:[%s1] sm:%s99] %v97

// kernel: _lambda_.31
$region0: #{_lambda_.31}
  #allocation0 [shape = 'u32[]', space=smem, size = 0x4, offset = 0x4, fixed_abs, tag = 'smem constant byte address 0x4 - core index']
  #allocation1 [shape = 'u32[72,128]{1,0:T(1,128)}', space=vmem, size = 0x9000, scoped, tag = 'internal scratch']
  #allocation2 [shape = 'f32[128,128]{1,0:T(8,128)}', space=vmem, size = 0x10000, scoped, tag = 'scratch operand']
  %s0 = inlined_call_operand.vmem [shape: bf16[4,128,128], index: 0, kind: input, shape index: {}]
  %s1 = inlined_call_operand.vmem [shape: bf16[4,128,128], index: 1, kind: input, shape index: {}]
  %s2 = inlined_call_operand.vmem [shape: f32[4,1,128], index: 2, kind: input, shape index: {}]
  %s3 = inlined_call_operand.vmem [shape: bf16[4,128,128], index: 3, kind: output, shape index: {0}]
  %s4 = inlined_call_operand.vmem [shape: f32[4,1,8,128], index: 4, kind: output, shape index: {1}]
  %5 = xla_tuple %s3, %s4
  %s6 = sld [smem:[#allocation0]]
  $region61: #{_lambda_.31} parent=0
    _
  %s8 = ssub.s32 1, %s6
  %s9 = scalar_select 0, %s8, %s6
  loop: start=0, step=1, limit=6
  $region2: #{_lambda_.31} parent=0 // loop_pre_header
    _
  $region3: #{_lambda_.31} parent=0 // loop_header
    %s11 = sphi 0, %s15
    %p12 = scmp.ge.s32.totalorder %s11, 6
    %s18 = sphi 0, %s44
    %s19 = sphi 0, %s40
    %s20 = sphi 0, %s36
    %s21 = sphi 0, %s32
    %s22 = sphi 0, %s18
    %s23 = sphi 0, %s19
    %s24 = sphi 0, %s20
    %s25 = sphi 0, %s21
    %s26 = sphi 0, %s22
    %s27 = sphi 0, %s23
    %s28 = sphi 0, %s24
    %s29 = sphi 0, %s25
    %s51 = sphi 0, %s53
    %s54 = sphi 0, %s51
    %s55 = sphi 0, %s54
    %s71 = sphi 0, %s55
    %s81 = sphi 0, %s83
    %s84 = sphi 0, %s81
    %s85 = sphi 0, %s84
    %s101 = sphi 0, %s85
    %s109 = sphi 0, %s111
    %s112 = sphi 0, %s109
    %s113 = sphi 0, %s112
    %s129 = sphi 0, %s113
    %s139 = sphi 0, %s141
    %s142 = sphi 0, %s139
    %s143 = sphi 0, %s142
    %s159 = sphi 0, %s143
    %s169 = sphi 0, %s171
    %s172 = sphi 0, %s169
    %s173 = sphi 0, %s172
    %s189 = sphi 0, %s173
  $region4: #{_lambda_.31} parent=0 // loop_header_branch
    %14 = sbr.rel (%p12) target = $region8
  $region5: #{_lambda_.31} parent=0 // loop_body
    %s16 = ssub.s32 %s11, 1
    %s17 = ssub.s32 %s11, 2
    %s30 = sadd.s32 1, %s21
    %p31 = scmp.ge.s32.totalorder %s30, 1
    %s32 = scalar_select %p31, 0, %s30
    %s33 = sadd.s32 1, %s20
    %s34 = scalar_select %p31, %s33, %s20
    %p35 = scmp.ge.s32.totalorder %s34, 1
    %s36 = scalar_select %p35, 0, %s34
    %s37 = sadd.s32 1, %s19
    %s38 = scalar_select %p35, %s37, %s19
    %p39 = scmp.ge.s32.totalorder %s38, 1
    %s40 = scalar_select %p39, 0, %s38
    %s41 = sadd.s32 1, %s18
    %s42 = scalar_select %p39, %s41, %s18
    %p43 = scmp.ge.s32.totalorder %s42, 4
    %s44 = scalar_select %p43, 0, %s42
    %s45 = ssub.s32 %s18, %s44
    %s46 = ssub.s32 %s19, %s40
    %s47 = sor.u32 %s45, %s46
    %s48 = ssub.s32 %s21, %s32
    %s49 = sor.u32 %s47, %s48
    %p50 = scmp.eq.s32.totalorder %s49, 0
    %s52 = sadd.s32 %s51, 1
    %s53 = scalar_select %p50, %s51, %s52
    %p56 = pneg %p50
    %p57 = scmp.eq.s32.totalorder %s11, 3
    %p58 = por %p56, %p57
    %p59 = scmp.ne.s32.totalorder %s51, %s54
    %p60 = scmp.eq.s32.totalorder %s11, 0
    %p61 = por %p59, %p60
    %p62 = scmp.ne.s32.totalorder %s51, %s54
    %p63 = scmp.eq.s32.totalorder %s16, 3
    %p64 = por %p62, %p63
    %p65 = scmp.ne.s32.totalorder %s54, %s55
    %p66 = scmp.eq.s32.totalorder %s16, 0
    %p67 = por %p65, %p66
    %p68 = scmp.ne.s32.totalorder %s54, %s55
    %p69 = scmp.eq.s32.totalorder %s17, 3
    %p70 = por %p68, %p69
    %p72 = scmp.ne.s32.totalorder %s55, %s71
    %p73 = scmp.eq.s32.totalorder %s17, 0
    %p74 = por %p72, %p73
    %s75 = ssub.s32 %s18, %s44
    %s76 = ssub.s32 %s21, %s32
    %s77 = sor.u32 %s75, %s76
    %s78 = ssub.s32 %s20, %s36
    %s79 = sor.u32 %s77, %s78
    %p80 = scmp.eq.s32.totalorder %s79, 0
    %s82 = sadd.s32 %s81, 1
    %s83 = scalar_select %p80, %s81, %s82
    %p86 = pneg %p80
    %p87 = scmp.eq.s32.totalorder %s11, 3
    %p88 = por %p86, %p87
    %p89 = scmp.ne.s32.totalorder %s81, %s84
    %p90 = scmp.eq.s32.totalorder %s11, 0
    %p91 = por %p89, %p90
    %p92 = scmp.ne.s32.totalorder %s81, %s84
    %p93 = scmp.eq.s32.totalorder %s16, 3
    %p94 = por %p92, %p93
    %p95 = scmp.ne.s32.totalorder %s84, %s85
    %p96 = scmp.eq.s32.totalorder %s16, 0
    %p97 = por %p95, %p96
    %p98 = scmp.ne.s32.totalorder %s84, %s85
    %p99 = scmp.eq.s32.totalorder %s17, 3
    %p100 = por %p98, %p99
    %p102 = scmp.ne.s32.totalorder %s85, %s101
    %p103 = scmp.eq.s32.totalorder %s17, 0
    %p104 = por %p102, %p103
    %s105 = ssub.s32 %s18, %s44
    %s106 = ssub.s32 %s20, %s36
    %s107 = sor.u32 %s105, %s106
    %p108 = scmp.eq.s32.totalorder %s107, 0
    %s110 = sadd.s32 %s109, 1
    %s111 = scalar_select %p108, %s109, %s110
    %p114 = pneg %p108
    %p115 = scmp.eq.s32.totalorder %s11, 3
    %p116 = por %p114, %p115
    %p117 = scmp.ne.s32.totalorder %s109, %s112
    %p118 = scmp.eq.s32.totalorder %s11, 0
    %p119 = por %p117, %p118
    %p120 = scmp.ne.s32.totalorder %s109, %s112
    %p121 = scmp.eq.s32.totalorder %s16, 3
    %p122 = por %p120, %p121
    %p123 = scmp.ne.s32.totalorder %s112, %s113
    %p124 = scmp.eq.s32.totalorder %s16, 0
    %p125 = por %p123, %p124
    %p126 = scmp.ne.s32.totalorder %s112, %s113
    %p127 = scmp.eq.s32.totalorder %s17, 3
    %p128 = por %p126, %p127
    %p130 = scmp.ne.s32.totalorder %s113, %s129
    %p131 = scmp.eq.s32.totalorder %s17, 0
    %p132 = por %p130, %p131
    %s133 = ssub.s32 %s18, %s44
    %s134 = ssub.s32 %s19, %s40
    %s135 = sor.u32 %s133, %s134
    %s136 = ssub.s32 %s20, %s36
    %s137 = sor.u32 %s135, %s136
    %p138 = scmp.eq.s32.totalorder %s137, 0
    %s140 = sadd.s32 %s139, 1
    %s141 = scalar_select %p138, %s139, %s140
    %p144 = pneg %p138
    %p145 = scmp.eq.s32.totalorder %s11, 3
    %p146 = por %p144, %p145
    %p147 = scmp.ne.s32.totalorder %s139, %s142
    %p148 = scmp.eq.s32.totalorder %s11, 0
    %p149 = por %p147, %p148
    %p150 = scmp.ne.s32.totalorder %s139, %s142
    %p151 = scmp.eq.s32.totalorder %s16, 3
    %p152 = por %p150, %p151
    %p153 = scmp.ne.s32.totalorder %s142, %s143
    %p154 = scmp.eq.s32.totalorder %s16, 0
    %p155 = por %p153, %p154
    %p156 = scmp.ne.s32.totalorder %s142, %s143
    %p157 = scmp.eq.s32.totalorder %s17, 3
    %p158 = por %p156, %p157
    %p160 = scmp.ne.s32.totalorder %s143, %s159
    %p161 = scmp.eq.s32.totalorder %s17, 0
    %p162 = por %p160, %p161
    %s163 = ssub.s32 %s18, %s44
    %s164 = ssub.s32 %s19, %s40
    %s165 = sor.u32 %s163, %s164
    %s166 = ssub.s32 %s20, %s36
    %s167 = sor.u32 %s165, %s166
    %p168 = scmp.eq.s32.totalorder %s167, 0
    %s170 = sadd.s32 %s169, 1
    %s171 = scalar_select %p168, %s169, %s170
    %p174 = pneg %p168
    %p175 = scmp.eq.s32.totalorder %s11, 3
    %p176 = por %p174, %p175
    %p177 = scmp.ne.s32.totalorder %s169, %s172
    %p178 = scmp.eq.s32.totalorder %s11, 0
    %p179 = por %p177, %p178
    %p180 = scmp.ne.s32.totalorder %s169, %s172
    %p181 = scmp.eq.s32.totalorder %s16, 3
    %p182 = por %p180, %p181
    %p183 = scmp.ne.s32.totalorder %s172, %s173
    %p184 = scmp.eq.s32.totalorder %s16, 0
    %p185 = por %p183, %p184
    %p186 = scmp.ne.s32.totalorder %s172, %s173
    %p187 = scmp.eq.s32.totalorder %s17, 3
    %p188 = por %p186, %p187
    %p190 = scmp.ne.s32.totalorder %s173, %s189
    %p191 = scmp.eq.s32.totalorder %s17, 0
    %p192 = por %p190, %p191
    %p193 = scmp.le.s32.totalorder 1, %s11
    %p194 = scmp.lt.s32.totalorder %s11, 5
    %p195 = pnand %p193, %p194
    %p196 = pneg %p195
    // Predicated region
    $region9: #{_lambda_.31} parent=5 // pred_check
      _
    $region10: #{_lambda_.31} parent=5 // pred_check_branch
      %198 = sbr.rel (%p195) target = $region12
    $region11: #{_lambda_.31} parent=5 // pred_region
      %s199 = ssub.s32 %s11, 1
    $region12: #{_lambda_.31} parent=5 // pred_fallthru
      _
    %p200 = scmp.lt.s32.totalorder %s11, 4
    // Predicated region
    $region13: #{_lambda_.31} parent=5 // pred_check
      %p201 = pneg %p200
    $region14: #{_lambda_.31} parent=5 // pred_check_branch
      %203 = sbr.rel (%p201) target = $region16
    $region15: #{_lambda_.31} parent=5 // pred_region
      // Predicated region
      $region17: #{_lambda_.31} parent=15 // pred_check
        %p204 = pneg %p61
      $region18: #{_lambda_.31} parent=15 // pred_check_branch
        %206 = sbr.rel (%p204) target = $region20
      $region19: #{_lambda_.31} parent=15 // pred_region
        %s207 = smul.u32 16, %s19
        %p208 = scmp.lt.s32.totalorder %s18, 3
        %s209 = scalar_select %p208, %s18, 3
        %p210 = scmp.lt.s32.totalorder %s207, 15
        %s211 = scalar_select %p210, %s207, 15
        %p212 = scmp.lt.s32.totalorder %s21, 0
        %s213 = scalar_select %p212, %s21, 0
        %s214 = sadd.s32 %s213, %s211
        %s215 = smul.addr %s209, 16
        %s216 = sadd.s32 %s214, %s215
        %s217 = smul.addr %s216, 4
        %s218 = scalar_lea.vmem %s0, %s217
        %s219 = smul.u32 16, %s19
      $region20: #{_lambda_.31} parent=15 // pred_fallthru
        _
      // Predicated region
      $region21: #{_lambda_.31} parent=15 // pred_check
        %p220 = pneg %p91
      $region22: #{_lambda_.31} parent=15 // pred_check_branch
        %222 = sbr.rel (%p220) target = $region24
      $region23: #{_lambda_.31} parent=15 // pred_region
        %s223 = smul.u32 16, %s21
        %p224 = scmp.lt.s32.totalorder %s18, 3
        %s225 = scalar_select %p224, %s18, 3
        %p226 = scmp.lt.s32.totalorder %s223, 15
        %s227 = scalar_select %p226, %s223, 15
        %p228 = scmp.lt.s32.totalorder %s20, 0
        %s229 = scalar_select %p228, %s20, 0
        %s230 = sadd.s32 %s229, %s227
        %s231 = smul.addr %s225, 16
        %s232 = sadd.s32 %s230, %s231
        %s233 = smul.addr %s232, 4
        %s234 = scalar_lea.vmem %s1, %s233
        %s235 = smul.u32 16, %s21
      $region24: #{_lambda_.31} parent=15 // pred_fallthru
        _
      // Predicated region
      $region25: #{_lambda_.31} parent=15 // pred_check
        %p236 = pneg %p119
      $region26: #{_lambda_.31} parent=15 // pred_check_branch
        %238 = sbr.rel (%p236) target = $region28
      $region27: #{_lambda_.31} parent=15 // pred_region
        %p239 = scmp.lt.s32.totalorder %s18, 3
        %s240 = scalar_select %p239, %s18, 3
        %p241 = scmp.lt.s32.totalorder %s20, 0
        %s242 = scalar_select %p241, %s20, 0
        %s243 = sadd.s32 %s242, %s240
        %s244 = scalar_lea.vmem %s2, %s243
      $region28: #{_lambda_.31} parent=15 // pred_fallthru
        _
    $region16: #{_lambda_.31} parent=5 // pred_fallthru
      _
    %p245 = scmp.le.s32.totalorder 1, %s11
    %p246 = scmp.lt.s32.totalorder %s11, 5
    %p247 = pnand %p245, %p246
    %p248 = pneg %p247
    // Predicated region
    $region29: #{_lambda_.31} parent=5 // pred_check
      _
    $region30: #{_lambda_.31} parent=5 // pred_check_branch
      %250 = sbr.rel (%p247) target = $region32
    $region31: #{_lambda_.31} parent=5 // pred_region
      %s251 = ssub.s32 %s11, 1
      %s252 = smul.u32 16, %s23
      %p253 = scmp.lt.s32.totalorder %s22, 3
      %s254 = scalar_select %p253, %s22, 3
      %p255 = scmp.lt.s32.totalorder %s252, 15
      %s256 = scalar_select %p255, %s252, 15
      %p257 = scmp.lt.s32.totalorder %s25, 0
      %s258 = scalar_select %p257, %s25, 0
      %s259 = sadd.s32 %s258, %s256
      %s260 = smul.addr %s254, 16
      %s261 = sadd.s32 %s259, %s260
      %s262 = smul.addr %s261, 4
      %s263 = scalar_lea.vmem %s0, %s262
      %p264 = pneg %p67
      %p265 = pneg %p64
      %s266 = smul.u32 16, %s25
      %p267 = scmp.lt.s32.totalorder %s22, 3
      %s268 = scalar_select %p267, %s22, 3
      %p269 = scmp.lt.s32.totalorder %s266, 15
      %s270 = scalar_select %p269, %s266, 15
      %p271 = scmp.lt.s32.totalorder %s24, 0
      %s272 = scalar_select %p271, %s24, 0
      %s273 = sadd.s32 %s272, %s270
      %s274 = smul.addr %s268, 16
      %s275 = sadd.s32 %s273, %s274
      %s276 = smul.addr %s275, 4
      %s277 = scalar_lea.vmem %s1, %s276
      %p278 = pneg %p97
      %p279 = pneg %p94
      %p280 = scmp.lt.s32.totalorder %s22, 3
      %s281 = scalar_select %p280, %s22, 3
      %p282 = scmp.lt.s32.totalorder %s24, 0
      %s283 = scalar_select %p282, %s24, 0
      %s284 = sadd.s32 %s283, %s281
      %s285 = scalar_lea.vmem %s2, %s284
      %p286 = pneg %p125
      %p287 = pneg %p122
      %p288 = pneg %p155
      %p289 = pneg %p152
      %s290 = smul.u32 16, %s23
      %p291 = scmp.lt.s32.totalorder %s22, 3
      %s292 = scalar_select %p291, %s22, 3
      %p293 = scmp.lt.s32.totalorder %s290, 15
      %s294 = scalar_select %p293, %s290, 15
      %p295 = scmp.lt.s32.totalorder %s24, 0
      %s296 = scalar_select %p295, %s24, 0
      %s297 = sadd.s32 %s296, %s294
      %s298 = smul.addr %s292, 16
      %s299 = sadd.s32 %s297, %s298
      %s300 = smul.addr %s299, 4
      %s301 = scalar_lea.vmem %s3, %s300
      %p302 = pneg %p185
      %p303 = pneg %p182
      %p304 = scmp.lt.s32.totalorder %s22, 3
      %s305 = scalar_select %p304, %s22, 3
      %p306 = scmp.lt.s32.totalorder %s23, 0
      %s307 = scalar_select %p306, %s23, 0
      %p308 = scmp.lt.s32.totalorder %s24, 0
      %s309 = scalar_select %p308, %s24, 0
      %s310 = sadd.s32 %s309, %s307
      %s311 = sadd.s32 %s310, %s305
      %s312 = smul.addr %s311, 8
      %s313 = scalar_lea.vmem %s4, %s312
      %s314 = smul.u32 16, %s23
      %p315 = scmp.lt.s32.totalorder %s22, 3
      %s316 = scalar_select %p315, %s22, 3
      %p317 = scmp.lt.s32.totalorder %s314, 15
      %s318 = scalar_select %p317, %s314, 15
      %p319 = scmp.lt.s32.totalorder %s25, 0
      %s320 = scalar_select %p319, %s25, 0
      %s321 = sadd.s32 %s320, %s318
      %s322 = smul.addr %s316, 16
      %s323 = sadd.s32 %s321, %s322
      %s324 = smul.addr %s323, 4
      %s325 = scalar_lea.vmem %s0, %s324
      %s326 = smul.u32 16, %s23
      %s327 = smul.u32 16, %s25
      %p328 = scmp.lt.s32.totalorder %s22, 3
      %s329 = scalar_select %p328, %s22, 3
      %p330 = scmp.lt.s32.totalorder %s327, 15
      %s331 = scalar_select %p330, %s327, 15
      %p332 = scmp.lt.s32.totalorder %s24, 0
      %s333 = scalar_select %p332, %s24, 0
      %s334 = sadd.s32 %s333, %s331
      %s335 = smul.addr %s329, 16
      %s336 = sadd.s32 %s334, %s335
      %s337 = smul.addr %s336, 4
      %s338 = scalar_lea.vmem %s1, %s337
      %s339 = smul.u32 16, %s25
      %p340 = scmp.lt.s32.totalorder %s22, 3
      %s341 = scalar_select %p340, %s22, 3
      %p342 = scmp.lt.s32.totalorder %s24, 0
      %s343 = scalar_select %p342, %s24, 0
      %s344 = sadd.s32 %s343, %s341
      %s345 = scalar_lea.vmem %s2, %s344
      %s346 = smul.u32 16, %s23
      %p347 = scmp.lt.s32.totalorder %s22, 3
      %s348 = scalar_select %p347, %s22, 3
      %p349 = scmp.lt.s32.totalorder %s346, 15
      %s350 = scalar_select %p349, %s346, 15
      %p351 = scmp.lt.s32.totalorder %s24, 0
      %s352 = scalar_select %p351, %s24, 0
      %s353 = sadd.s32 %s352, %s350
      %s354 = smul.addr %s348, 16
      %s355 = sadd.s32 %s353, %s354
      %s356 = smul.addr %s355, 4
      %s357 = scalar_lea.vmem %s3, %s356
      %s358 = smul.u32 16, %s23
      %p359 = scmp.lt.s32.totalorder %s22, 3
      %s360 = scalar_select %p359, %s22, 3
      %p361 = scmp.lt.s32.totalorder %s23, 0
      %s362 = scalar_select %p361, %s23, 0
      %p363 = scmp.lt.s32.totalorder %s24, 0
      %s364 = scalar_select %p363, %s24, 0
      %s365 = sadd.s32 %s364, %s362
      %s366 = sadd.s32 %s365, %s360
      %s367 = smul.addr %s366, 8
      %s368 = scalar_lea.vmem %s4, %s367
      %p369 = scmp.eq.s32.totalorder %s25, 0
      // Predicated region
      $region33: #{_lambda_.31} parent=31 // pred_check
        %p370 = pneg %p369
      $region34: #{_lambda_.31} parent=31 // pred_check_branch
        %372 = sbr.rel (%p370) target = $region36
      $region35: #{_lambda_.31} parent=31 // pred_region
        %373 = vst [vmem:[#allocation2] sm:$0xff] 0.0
        %374 = vst [vmem:[#allocation2 + $0x8] sm:$0xff] 0.0
        %375 = vst [vmem:[#allocation2 + $0x10] sm:$0xff] 0.0
        %376 = vst [vmem:[#allocation2 + $0x18] sm:$0xff] 0.0
        %377 = vst [vmem:[#allocation2 + $0x20] sm:$0xff] 0.0
        %378 = vst [vmem:[#allocation2 + $0x28] sm:$0xff] 0.0
        %379 = vst [vmem:[#allocation2 + $0x30] sm:$0xff] 0.0
        %380 = vst [vmem:[#allocation2 + $0x38] sm:$0xff] 0.0
        %381 = vst [vmem:[#allocation2 + $0x40] sm:$0xff] 0.0
        %382 = vst [vmem:[#allocation2 + $0x48] sm:$0xff] 0.0
        %383 = vst [vmem:[#allocation2 + $0x50] sm:$0xff] 0.0
        %384 = vst [vmem:[#allocation2 + $0x58] sm:$0xff] 0.0
        %385 = vst [vmem:[#allocation2 + $0x60] sm:$0xff] 0.0
        %386 = vst [vmem:[#allocation2 + $0x68] sm:$0xff] 0.0
        %387 = vst [vmem:[#allocation2 + $0x70] sm:$0xff] 0.0
        %388 = vst [vmem:[#allocation2 + $0x78] sm:$0xff] 0.0
      $region36: #{_lambda_.31} parent=31 // pred_fallthru
        _
      %v389 = vld [vmem:[%s325] sm:$0xf]
      %v390 = vld [vmem:[%s325 + $0x4] sm:$0xf]
      %v391 = vld [vmem:[%s325 + $0x8] sm:$0xf]
      %v392 = vld [vmem:[%s325 + $0xc] sm:$0xf]
      %v393 = vld [vmem:[%s325 + $0x10] sm:$0xf]
      %v394 = vld [vmem:[%s325 + $0x14] sm:$0xf]
      %v395 = vld [vmem:[%s325 + $0x18] sm:$0xf]
      %v396 = vld [vmem:[%s325 + $0x1c] sm:$0xf]
      %v397 = vld [vmem:[%s325 + $0x20] sm:$0xf]
      %v398 = vld [vmem:[%s325 + $0x24] sm:$0xf]
      %v399 = vld [vmem:[%s325 + $0x28] sm:$0xf]
      %v400 = vld [vmem:[%s325 + $0x2c] sm:$0xf]
      %v401 = vld [vmem:[%s325 + $0x30] sm:$0xf]
      %v402 = vld [vmem:[%s325 + $0x34] sm:$0xf]
      %v403 = vld [vmem:[%s325 + $0x38] sm:$0xf]
      %v404 = vld [vmem:[%s325 + $0x3c] sm:$0xf]
      %v405 = vunpack.c.l.bf16 %v389
      %v406 = vunpack.c.l.bf16 %v390
      %v407 = vunpack.c.l.bf16 %v391
      %v408 = vunpack.c.l.bf16 %v392
      %v409 = vunpack.c.l.bf16 %v393
      %v410 = vunpack.c.l.bf16 %v394
      %v411 = vunpack.c.l.bf16 %v395
      %v412 = vunpack.c.l.bf16 %v396
      %v413 = vunpack.c.l.bf16 %v397
      %v414 = vunpack.c.l.bf16 %v398
      %v415 = vunpack.c.l.bf16 %v399
      %v416 = vunpack.c.l.bf16 %v400
      %v417 = vunpack.c.l.bf16 %v401
      %v418 = vunpack.c.l.bf16 %v402
      %v419 = vunpack.c.l.bf16 %v403
      %v420 = vunpack.c.l.bf16 %v404
      %v421 = vmax.f32 %v405, 0.0
      %v422 = vmax.f32 %v406, 0.0
      %v423 = vmax.f32 %v407, 0.0
      %v424 = vmax.f32 %v408, 0.0
      %v425 = vmax.f32 %v409, 0.0
      %v426 = vmax.f32 %v410, 0.0
      %v427 = vmax.f32 %v411, 0.0
      %v428 = vmax.f32 %v412, 0.0
      %v429 = vmax.f32 %v413, 0.0
      %v430 = vmax.f32 %v414, 0.0
      %v431 = vmax.f32 %v415, 0.0
      %v432 = vmax.f32 %v416, 0.0
      %v433 = vmax.f32 %v417, 0.0
      %v434 = vmax.f32 %v418, 0.0
      %v435 = vmax.f32 %v419, 0.0
      %v436 = vmax.f32 %v420, 0.0
      %v437 = vpack.c.bf16 %v422, %v421
      %v438 = vpack.c.bf16 %v424, %v423
      %v439 = vpack.c.bf16 %v426, %v425
      %v440 = vpack.c.bf16 %v428, %v427
      %v441 = vpack.c.bf16 %v430, %v429
      %v442 = vpack.c.bf16 %v432, %v431
      %v443 = vpack.c.bf16 %v434, %v433
      %v444 = vpack.c.bf16 %v436, %v435
      %v445 = vld [vmem:[#allocation2] sm:$0xff]
      %v446 = vld [vmem:[#allocation2 + $0x8] sm:$0xff]
      %v447 = vld [vmem:[#allocation2 + $0x10] sm:$0xff]
      %v448 = vld [vmem:[#allocation2 + $0x18] sm:$0xff]
      %v449 = vld [vmem:[#allocation2 + $0x20] sm:$0xff]
      %v450 = vld [vmem:[#allocation2 + $0x28] sm:$0xff]
      %v451 = vld [vmem:[#allocation2 + $0x30] sm:$0xff]
      %v452 = vld [vmem:[#allocation2 + $0x38] sm:$0xff]
      %v453 = vld [vmem:[#allocation2 + $0x40] sm:$0xff]
      %v454 = vld [vmem:[#allocation2 + $0x48] sm:$0xff]
      %v455 = vld [vmem:[#allocation2 + $0x50] sm:$0xff]
      %v456 = vld [vmem:[#allocation2 + $0x58] sm:$0xff]
      %v457 = vld [vmem:[#allocation2 + $0x60] sm:$0xff]
      %v458 = vld [vmem:[#allocation2 + $0x68] sm:$0xff]
      %v459 = vld [vmem:[#allocation2 + $0x70] sm:$0xff]
      %v460 = vld [vmem:[#allocation2 + $0x78] sm:$0xff]
      %v461 = vld [vmem:[%s338] sm:$0xf]
      %v462 = vld [vmem:[%s338 + $0x4] sm:$0xf]
      %v463 = vld [vmem:[%s338 + $0x8] sm:$0xf]
      %v464 = vld [vmem:[%s338 + $0xc] sm:$0xf]
      %v465 = vld [vmem:[%s338 + $0x10] sm:$0xf]
      %v466 = vld [vmem:[%s338 + $0x14] sm:$0xf]
      %v467 = vld [vmem:[%s338 + $0x18] sm:$0xf]
      %v468 = vld [vmem:[%s338 + $0x1c] sm:$0xf]
      %v469 = vld [vmem:[%s338 + $0x20] sm:$0xf]
      %v470 = vld [vmem:[%s338 + $0x24] sm:$0xf]
      %v471 = vld [vmem:[%s338 + $0x28] sm:$0xf]
      %v472 = vld [vmem:[%s338 + $0x2c] sm:$0xf]
      %v473 = vld [vmem:[%s338 + $0x30] sm:$0xf]
      %v474 = vld [vmem:[%s338 + $0x34] sm:$0xf]
      %v475 = vld [vmem:[%s338 + $0x38] sm:$0xf]
      %v476 = vld [vmem:[%s338 + $0x3c] sm:$0xf]
      %v493 = vunpack.c.l.b16 %v461
      %v494 = vunpack.c.l.b16 %v462
      %v495 = vunpack.c.l.b16 %v463
      %v496 = vunpack.c.l.b16 %v464
      %v497 = vunpack.c.l.b16 %v465
      %v498 = vunpack.c.l.b16 %v466
      %v499 = vunpack.c.l.b16 %v467
      %v500 = vunpack.c.l.b16 %v468
      %v501 = vunpack.c.l.b16 %v469
      %v502 = vunpack.c.l.b16 %v470
      %v503 = vunpack.c.l.b16 %v471
      %v504 = vunpack.c.l.b16 %v472
      %v505 = vunpack.c.l.b16 %v473
      %v506 = vunpack.c.l.b16 %v474
      %v507 = vunpack.c.l.b16 %v475
      %v508 = vunpack.c.l.b16 %v476
      %v509 = vpack.c.b16 %v494, %v493
      %v510 = vpack.c.b16 %v496, %v495
      %v511 = vpack.c.b16 %v498, %v497
      %v512 = vpack.c.b16 %v500, %v499
      %v513 = vpack.c.b16 %v502, %v501
      %v514 = vpack.c.b16 %v504, %v503
      %v515 = vpack.c.b16 %v506, %v505
      %v516 = vpack.c.b16 %v508, %v507
      %525 = vmatpush.bf16.msra.mxu0 %v516
      %526 = vmatpush.bf16.msra.mxu0 %v515
      %527 = vmatpush.bf16.msra.mxu0 %v514
      %528 = vmatpush.bf16.msra.mxu0 %v513
      %529 = vmatpush.bf16.msra.mxu0 %v512
      %530 = vmatpush.bf16.msra.mxu0 %v511
      %531 = vmatpush.bf16.msra.mxu0 %v510
      %532 = vmatpush.bf16.msra.mxu0 %v509
      %533 = vmatmul.bf16.gmra.mxu0 %v437
      %v534 = vpop.f32.mrf.mxu0
      %v535 = vadd.f32 0.0, %v534
      %v536 = vpop.f32.mrf.mxu0
      %v537 = vadd.f32 0.0, %v536
      %538 = vmatmul.bf16.gmra.mxu0 %v438
      %v539 = vpop.f32.mrf.mxu0
      %v540 = vadd.f32 0.0, %v539
      %v541 = vpop.f32.mrf.mxu0
      %v542 = vadd.f32 0.0, %v541
      %543 = vmatmul.bf16.gmra.mxu0 %v439
      %v544 = vpop.f32.mrf.mxu0
      %v545 = vadd.f32 0.0, %v544
      %v546 = vpop.f32.mrf.mxu0
      %v547 = vadd.f32 0.0, %v546
      %548 = vmatmul.bf16.gmra.mxu0 %v440
      %v549 = vpop.f32.mrf.mxu0
      %v550 = vadd.f32 0.0, %v549
      %v551 = vpop.f32.mrf.mxu0
      %v552 = vadd.f32 0.0, %v551
      %553 = vmatmul.bf16.gmra.mxu0 %v441
      %v554 = vpop.f32.mrf.mxu0
      %v555 = vadd.f32 0.0, %v554
      %v556 = vpop.f32.mrf.mxu0
      %v557 = vadd.f32 0.0, %v556
      %558 = vmatmul.bf16.gmra.mxu0 %v442
      %v559 = vpop.f32.mrf.mxu0
      %v560 = vadd.f32 0.0, %v559
      %v561 = vpop.f32.mrf.mxu0
      %v562 = vadd.f32 0.0, %v561
      %563 = vmatmul.bf16.gmra.mxu0 %v443
      %v564 = vpop.f32.mrf.mxu0
      %v565 = vadd.f32 0.0, %v564
      %v566 = vpop.f32.mrf.mxu0
      %v567 = vadd.f32 0.0, %v566
      %568 = vmatmul.bf16.gmra.mxu0 %v444
      %v569 = vpop.f32.mrf.mxu0
      %v570 = vadd.f32 0.0, %v569
      %v571 = vpop.f32.mrf.mxu0
      %v572 = vadd.f32 0.0, %v571
      %573 = vdwg.mxu0
      %v574 = vadd.f32 %v445, %v535
      %v575 = vadd.f32 %v446, %v537
      %v576 = vadd.f32 %v447, %v540
      %v577 = vadd.f32 %v448, %v542
      %v578 = vadd.f32 %v449, %v545
      %v579 = vadd.f32 %v450, %v547
      %v580 = vadd.f32 %v451, %v550
      %v581 = vadd.f32 %v452, %v552
      %v582 = vadd.f32 %v453, %v555
      %v583 = vadd.f32 %v454, %v557
      %v584 = vadd.f32 %v455, %v560
      %v585 = vadd.f32 %v456, %v562
      %v586 = vadd.f32 %v457, %v565
      %v587 = vadd.f32 %v458, %v567
      %v588 = vadd.f32 %v459, %v570
      %v589 = vadd.f32 %v460, %v572
      %590 = vst [vmem:[#allocation2] sm:$0xff] %v574
      %591 = vst [vmem:[#allocation2 + $0x8] sm:$0xff] %v575
      %592 = vst [vmem:[#allocation2 + $0x10] sm:$0xff] %v576
      %593 = vst [vmem:[#allocation2 + $0x18] sm:$0xff] %v577
      %594 = vst [vmem:[#allocation2 + $0x20] sm:$0xff] %v578
      %595 = vst [vmem:[#allocation2 + $0x28] sm:$0xff] %v579
      %596 = vst [vmem:[#allocation2 + $0x30] sm:$0xff] %v580
      %597 = vst [vmem:[#allocation2 + $0x38] sm:$0xff] %v581
      %598 = vst [vmem:[#allocation2 + $0x40] sm:$0xff] %v582
      %599 = vst [vmem:[#allocation2 + $0x48] sm:$0xff] %v583
      %600 = vst [vmem:[#allocation2 + $0x50] sm:$0xff] %v584
      %601 = vst [vmem:[#allocation2 + $0x58] sm:$0xff] %v585
      %602 = vst [vmem:[#allocation2 + $0x60] sm:$0xff] %v586
      %603 = vst [vmem:[#allocation2 + $0x68] sm:$0xff] %v587
      %604 = vst [vmem:[#allocation2 + $0x70] sm:$0xff] %v588
      %605 = vst [vmem:[#allocation2 + $0x78] sm:$0xff] %v589
      // Predicated region
      $region37: #{_lambda_.31} parent=31 // pred_check
        %p606 = pneg %p369
      $region38: #{_lambda_.31} parent=31 // pred_check_branch
        %608 = sbr.rel (%p606) target = $region40
      $region39: #{_lambda_.31} parent=31 // pred_region
        %v609 = vld [vmem:[#allocation2] sm:$0xff]
        %v610 = vld [vmem:[#allocation2 + $0x8] sm:$0xff]
        %v611 = vld [vmem:[#allocation2 + $0x10] sm:$0xff]
        %v612 = vld [vmem:[#allocation2 + $0x18] sm:$0xff]
        %v613 = vld [vmem:[#allocation2 + $0x20] sm:$0xff]
        %v614 = vld [vmem:[#allocation2 + $0x28] sm:$0xff]
        %v615 = vld [vmem:[#allocation2 + $0x30] sm:$0xff]
        %v616 = vld [vmem:[#allocation2 + $0x38] sm:$0xff]
        %v617 = vld [vmem:[#allocation2 + $0x40] sm:$0xff]
        %v618 = vld [vmem:[#allocation2 + $0x48] sm:$0xff]
        %v619 = vld [vmem:[#allocation2 + $0x50] sm:$0xff]
        %v620 = vld [vmem:[#allocation2 + $0x58] sm:$0xff]
        %v621 = vld [vmem:[#allocation2 + $0x60] sm:$0xff]
        %v622 = vld [vmem:[#allocation2 + $0x68] sm:$0xff]
        %v623 = vld [vmem:[#allocation2 + $0x70] sm:$0xff]
        %v624 = vld [vmem:[#allocation2 + $0x78] sm:$0xff]
        %v625 = vld [vmem:[%s345] sm:$0x1]
        %v627 = vperm.slane %v625, 0
        %v629 = vadd.f32 %v609, %v627
        %v630 = vadd.f32 %v610, %v627
        %v631 = vadd.f32 %v611, %v627
        %v632 = vadd.f32 %v612, %v627
        %v633 = vadd.f32 %v613, %v627
        %v634 = vadd.f32 %v614, %v627
        %v635 = vadd.f32 %v615, %v627
        %v636 = vadd.f32 %v616, %v627
        %v637 = vadd.f32 %v617, %v627
        %v638 = vadd.f32 %v618, %v627
        %v639 = vadd.f32 %v619, %v627
        %v640 = vadd.f32 %v620, %v627
        %v641 = vadd.f32 %v621, %v627
        %v642 = vadd.f32 %v622, %v627
        %v643 = vadd.f32 %v623, %v627
        %v644 = vadd.f32 %v624, %v627
        %v645 = vpack.c.bf16 %v629, %v629
        %v646 = vpack.c.bf16 %v630, %v630
        %v647 = vpack.c.bf16 %v631, %v631
        %v648 = vpack.c.bf16 %v632, %v632
        %v649 = vpack.c.bf16 %v633, %v633
        %v650 = vpack.c.bf16 %v634, %v634
        %v651 = vpack.c.bf16 %v635, %v635
        %v652 = vpack.c.bf16 %v636, %v636
        %v653 = vpack.c.bf16 %v637, %v637
        %v654 = vpack.c.bf16 %v638, %v638
        %v655 = vpack.c.bf16 %v639, %v639
        %v656 = vpack.c.bf16 %v640, %v640
        %v657 = vpack.c.bf16 %v641, %v641
        %v658 = vpack.c.bf16 %v642, %v642
        %v659 = vpack.c.bf16 %v643, %v643
        %v660 = vpack.c.bf16 %v644, %v644
        %661 = vst [vmem:[%s357] sm:$0xf] %v645
        %662 = vst [vmem:[%s357 + $0x4] sm:$0xf] %v646
        %663 = vst [vmem:[%s357 + $0x8] sm:$0xf] %v647
        %664 = vst [vmem:[%s357 + $0xc] sm:$0xf] %v648
        %665 = vst [vmem:[%s357 + $0x10] sm:$0xf] %v649
        %666 = vst [vmem:[%s357 + $0x14] sm:$0xf] %v650
        %667 = vst [vmem:[%s357 + $0x18] sm:$0xf] %v651
        %668 = vst [vmem:[%s357 + $0x1c] sm:$0xf] %v652
        %669 = vst [vmem:[%s357 + $0x20] sm:$0xf] %v653
        %670 = vst [vmem:[%s357 + $0x24] sm:$0xf] %v654
        %671 = vst [vmem:[%s357 + $0x28] sm:$0xf] %v655
        %672 = vst [vmem:[%s357 + $0x2c] sm:$0xf] %v656
        %673 = vst [vmem:[%s357 + $0x30] sm:$0xf] %v657
        %674 = vst [vmem:[%s357 + $0x34] sm:$0xf] %v658
        %675 = vst [vmem:[%s357 + $0x38] sm:$0xf] %v659
        %676 = vst [vmem:[%s357 + $0x3c] sm:$0xf] %v660
        %v677 = vadd.f32 %v629, %v630
        %v678 = vadd.f32 %v677, %v631
        %v679 = vadd.f32 %v678, %v632
        %v680 = vadd.f32 %v679, %v633
        %v681 = vadd.f32 %v680, %v634
        %v682 = vadd.f32 %v681, %v635
        %v683 = vadd.f32 %v682, %v636
        %v684 = vadd.f32 %v683, %v637
        %v685 = vadd.f32 %v684, %v638
        %v686 = vadd.f32 %v685, %v639
        %v687 = vadd.f32 %v686, %v640
        %v688 = vadd.f32 %v687, %v641
        %v689 = vadd.f32 %v688, %v642
        %v690 = vadd.f32 %v689, %v643
        %v691 = vadd.f32 %v690, %v644
        %v692 = vrot.slane %v691, 4
        %v693 = vadd.f32 %v691, %v692
        %v694 = vrot.slane %v693, 2
        %v695 = vadd.f32 %v693, %v694
        %v696 = vrot.slane %v695, 1
        %v697 = vadd.f32 %v695, %v696
        %v698 = vmul.f32 %v629, %v629
        %v699 = vmul.f32 %v630, %v630
        %v700 = vmul.f32 %v631, %v631
        %v701 = vmul.f32 %v632, %v632
        %v702 = vmul.f32 %v633, %v633
        %v703 = vmul.f32 %v634, %v634
        %v704 = vmul.f32 %v635, %v635
        %v705 = vmul.f32 %v636, %v636
        %v706 = vmul.f32 %v637, %v637
        %v707 = vmul.f32 %v638, %v638
        %v708 = vmul.f32 %v639, %v639
        %v709 = vmul.f32 %v640, %v640
        %v710 = vmul.f32 %v641, %v641
        %v711 = vmul.f32 %v642, %v642
        %v712 = vmul.f32 %v643, %v643
        %v713 = vmul.f32 %v644, %v644
        %v714 = vadd.f32 %v698, %v699
        %v715 = vadd.f32 %v714, %v700
        %v716 = vadd.f32 %v715, %v701
        %v717 = vadd.f32 %v716, %v702
        %v718 = vadd.f32 %v717, %v703
        %v719 = vadd.f32 %v718, %v704
        %v720 = vadd.f32 %v719, %v705
        %v721 = vadd.f32 %v720, %v706
        %v722 = vadd.f32 %v721, %v707
        %v723 = vadd.f32 %v722, %v708
        %v724 = vadd.f32 %v723, %v709
        %v725 = vadd.f32 %v724, %v710
        %v726 = vadd.f32 %v725, %v711
        %v727 = vadd.f32 %v726, %v712
        %v728 = vadd.f32 %v727, %v713
        %v729 = vrot.slane %v728, 4
        %v730 = vadd.f32 %v728, %v729
        %v731 = vrot.slane %v730, 2
        %v732 = vadd.f32 %v730, %v731
        %v733 = vrot.slane %v732, 1
        %v734 = vadd.f32 %v732, %v733
        %v735 = vlaneseq
        %v736 = vshrl.u32 %v735, 7
        %vm737 = vcmp.eq.s32.totalorder %v736, 0
        %vm738 = vcmp.eq.s32.totalorder %v736, 1
        %v739 = vsel %vm738, %v734, 0.0
        %v740 = vsel %vm737, %v697, %v739
        %741 = vst [vmem:[%s368] sm:$0xff] %v740
      $region40: #{_lambda_.31} parent=31 // pred_fallthru
        _
      %s742 = smul.u32 16, %s23
      %p743 = scmp.lt.s32.totalorder %s22, 3
      %s744 = scalar_select %p743, %s22, 3
      %p745 = scmp.lt.s32.totalorder %s742, 15
      %s746 = scalar_select %p745, %s742, 15
      %p747 = scmp.lt.s32.totalorder %s24, 0
      %s748 = scalar_select %p747, %s24, 0
      %s749 = sadd.s32 %s748, %s746
      %s750 = smul.addr %s744, 16
      %s751 = sadd.s32 %s749, %s750
      %s752 = smul.addr %s751, 4
      %s753 = scalar_lea.vmem %s3, %s752
      %p754 = scmp.lt.s32.totalorder %s22, 3
      %s755 = scalar_select %p754, %s22, 3
      %p756 = scmp.lt.s32.totalorder %s23, 0
      %s757 = scalar_select %p756, %s23, 0
      %p758 = scmp.lt.s32.totalorder %s24, 0
      %s759 = scalar_select %p758, %s24, 0
      %s760 = sadd.s32 %s759, %s757
      %s761 = sadd.s32 %s760, %s755
      %s762 = smul.addr %s761, 8
      %s763 = scalar_lea.vmem %s4, %s762
      // Predicated region
      $region41: #{_lambda_.31} parent=31 // pred_check
        %p764 = pneg %p152
      $region42: #{_lambda_.31} parent=31 // pred_check_branch
        %766 = sbr.rel (%p764) target = $region44
      $region43: #{_lambda_.31} parent=31 // pred_region
        %s767 = smul.u32 16, %s23
      $region44: #{_lambda_.31} parent=31 // pred_fallthru
        _
      // Predicated region
      $region45: #{_lambda_.31} parent=31 // pred_check
        %p768 = pneg %p182
      $region46: #{_lambda_.31} parent=31 // pred_check_branch
        %770 = sbr.rel (%p768) target = $region48
      $region47: #{_lambda_.31} parent=31 // pred_region
        _
      $region48: #{_lambda_.31} parent=31 // pred_fallthru
        _
    $region32: #{_lambda_.31} parent=5 // pred_fallthru
      _
    %p771 = scmp.le.s32.totalorder 2, %s11
    // Predicated region
    $region49: #{_lambda_.31} parent=5 // pred_check
      %p772 = pneg %p771
    $region50: #{_lambda_.31} parent=5 // pred_check_branch
      %774 = sbr.rel (%p772) target = $region52
    $region51: #{_lambda_.31} parent=5 // pred_region
      %s775 = ssub.s32 %s11, 2
      // Predicated region
      $region53: #{_lambda_.31} parent=51 // pred_check
        %p776 = pneg %p158
      $region54: #{_lambda_.31} parent=51 // pred_check_branch
        %778 = sbr.rel (%p776) target = $region56
      $region55: #{_lambda_.31} parent=51 // pred_region
        %s779 = smul.u32 16, %s27
        %p780 = scmp.lt.s32.totalorder %s26, 3
        %s781 = scalar_select %p780, %s26, 3
        %p782 = scmp.lt.s32.totalorder %s779, 15
        %s783 = scalar_select %p782, %s779, 15
        %p784 = scmp.lt.s32.totalorder %s28, 0
        %s785 = scalar_select %p784, %s28, 0
        %s786 = sadd.s32 %s785, %s783
        %s787 = smul.addr %s781, 16
        %s788 = sadd.s32 %s786, %s787
        %s789 = smul.addr %s788, 4
        %s790 = scalar_lea.vmem %s3, %s789
      $region56: #{_lambda_.31} parent=51 // pred_fallthru
        _
      // Predicated region
      $region57: #{_lambda_.31} parent=51 // pred_check
        %p791 = pneg %p188
      $region58: #{_lambda_.31} parent=51 // pred_check_branch
        %793 = sbr.rel (%p791) target = $region60
      $region59: #{_lambda_.31} parent=51 // pred_region
        %p794 = scmp.lt.s32.totalorder %s26, 3
        %s795 = scalar_select %p794, %s26, 3
        %p796 = scmp.lt.s32.totalorder %s27, 0
        %s797 = scalar_select %p796, %s27, 0
        %p798 = scmp.lt.s32.totalorder %s28, 0
        %s799 = scalar_select %p798, %s28, 0
        %s800 = sadd.s32 %s799, %s797
        %s801 = sadd.s32 %s800, %s795
        %s802 = smul.addr %s801, 8
        %s803 = scalar_lea.vmem %s4, %s802
      $region60: #{_lambda_.31} parent=51 // pred_fallthru
        _
    $region52: #{_lambda_.31} parent=5 // pred_fallthru
      _
  $region6: #{_lambda_.31} parent=0 // loop_footer
    %s15 = sadd.s32 1, %s11
  $region7: #{_lambda_.31} parent=0 // loop_footer_branch
    %10 = sbr.rel target = $region3
  $region8: #{_lambda_.31} parent=0 // loop_exit
    _

// kernel: _lambda_.32
$region0: #{_lambda_.32}
  #allocation0 [shape = 'u32[]', space=smem, size = 0x4, offset = 0x4, fixed_abs, tag = 'smem constant byte address 0x4 - core index']
  #allocation1 [shape = 'u32[72,128]{1,0:T(1,128)}', space=vmem, size = 0x9000, scoped, tag = 'internal scratch']
  %s0 = inlined_call_operand.vmem [shape: bf16[32,128], index: 0, kind: input, shape index: {}]
  %s1 = inlined_call_operand.vmem [shape: f32[1,128], index: 1, kind: input, shape index: {}]
  %s2 = inlined_call_operand.vmem [shape: f32[1,128], index: 2, kind: input, shape index: {}]
  %s3 = inlined_call_operand.vmem [shape: bf16[32,128], index: 3, kind: output, shape index: {}]
  %s4 = sld [smem:[#allocation0]]
  $region22: #{_lambda_.32} parent=0
    _
  %s6 = ssub.s32 1, %s4
  %s7 = scalar_select 0, %s6, %s4
  // Predicated region
  $region2: #{_lambda_.32} parent=0 // pred_check
    _
  $region3: #{_lambda_.32} parent=0 // pred_check_branch
    %9 = sbr.rel (0) target = $region5
  $region4: #{_lambda_.32} parent=0 // pred_region
    _
  $region5: #{_lambda_.32} parent=0 // pred_fallthru
    _
  // Predicated region
  $region6: #{_lambda_.32} parent=0 // pred_check
    _
  $region7: #{_lambda_.32} parent=0 // pred_check_branch
    %11 = sbr.rel (0) target = $region9
  $region8: #{_lambda_.32} parent=0 // pred_region
    _
  $region9: #{_lambda_.32} parent=0 // pred_fallthru
    _
  // Predicated region
  $region10: #{_lambda_.32} parent=0 // pred_check
    _
  $region11: #{_lambda_.32} parent=0 // pred_check_branch
    %13 = sbr.rel (0) target = $region13
  $region12: #{_lambda_.32} parent=0 // pred_region
    _
  $region13: #{_lambda_.32} parent=0 // pred_fallthru
    _
  %v14 = vld [vmem:[%s0] sm:$0xf]
  %v15 = vld [vmem:[%s0 + $0x4] sm:$0xf]
  %v16 = vld [vmem:[%s0 + $0x8] sm:$0xf]
  %v17 = vld [vmem:[%s0 + $0xc] sm:$0xf]
  %v18 = vunpack.c.l.bf16 %v14
  %v19 = vunpack.c.l.bf16 %v15
  %v20 = vunpack.c.l.bf16 %v16
  %v21 = vunpack.c.l.bf16 %v17
  %v22 = vld [vmem:[%s1] sm:$0x1]
  %v24 = vperm.slane %v22, 0
  %v26 = vmul.f32 %v18, %v24
  %v27 = vmul.f32 %v19, %v24
  %v28 = vmul.f32 %v20, %v24
  %v29 = vmul.f32 %v21, %v24
  %v30 = vld [vmem:[%s2] sm:$0x1]
  %v32 = vperm.slane %v30, 0
  %v34 = vadd.f32 %v26, %v32
  %v35 = vadd.f32 %v27, %v32
  %v36 = vadd.f32 %v28, %v32
  %v37 = vadd.f32 %v29, %v32
  %v38 = vpack.c.bf16 %v34, %v34
  %v39 = vpack.c.bf16 %v35, %v35
  %v40 = vpack.c.bf16 %v36, %v36
  %v41 = vpack.c.bf16 %v37, %v37
  %42 = vst [vmem:[%s3] sm:$0xf] %v38
  %43 = vst [vmem:[%s3 + $0x4] sm:$0xf] %v39
  %44 = vst [vmem:[%s3 + $0x8] sm:$0xf] %v40
  %45 = vst [vmem:[%s3 + $0xc] sm:$0xf] %v41
  // Predicated region
  $region14: #{_lambda_.32} parent=0 // pred_check
    _
  $region15: #{_lambda_.32} parent=0 // pred_check_branch
    %47 = sbr.rel (0) target = $region17
  $region16: #{_lambda_.32} parent=0 // pred_region
    _
  $region17: #{_lambda_.32} parent=0 // pred_fallthru
    _
  // Predicated region
  $region18: #{_lambda_.32} parent=0 // pred_check
    _
  $region19: #{_lambda_.32} parent=0 // pred_check_branch
    %49 = sbr.rel (0) target = $region21
  $region20: #{_lambda_.32} parent=0 // pred_region
    _
  $region21: #{_lambda_.32} parent=0 // pred_fallthru
    _

// kernel: _lambda_.33
$region0: #{_lambda_.33}
  #allocation0 [shape = 'u32[]', space=smem, size = 0x4, offset = 0x4, fixed_abs, tag = 'smem constant byte address 0x4 - core index']
  #allocation1 [shape = 'u32[72,128]{1,0:T(1,128)}', space=vmem, size = 0x9000, scoped, tag = 'internal scratch']
  #allocation2 [shape = 'f32[512,128]{1,0:T(8,128)}', space=vmem, size = 0x40000, scoped, tag = 'scratch operand']
  %s0 = inlined_call_operand.vmem [shape: bf16[4,512,128], index: 0, kind: input, shape index: {}]
  %s1 = inlined_call_operand.vmem [shape: bf16[4,128,128], index: 1, kind: input, shape index: {}]
  %s2 = inlined_call_operand.vmem [shape: f32[4,1,128], index: 2, kind: input, shape index: {}]
  %s3 = inlined_call_operand.vmem [shape: f32[4,512,128], index: 3, kind: output, shape index: {}]
  %s4 = sld [smem:[#allocation0]]
  $region53: #{_lambda_.33} parent=0
    _
  %s6 = ssub.s32 1, %s4
  %s7 = scalar_select 0, %s6, %s4
  loop: start=0, step=1, limit=6
  $region2: #{_lambda_.33} parent=0 // loop_pre_header
    _
  $region3: #{_lambda_.33} parent=0 // loop_header
    %s9 = sphi 0, %s13
    %p10 = scmp.ge.s32.totalorder %s9, 6
    %s16 = sphi 0, %s42
    %s17 = sphi 0, %s38
    %s18 = sphi 0, %s34
    %s19 = sphi 0, %s30
    %s20 = sphi 0, %s16
    %s21 = sphi 0, %s17
    %s22 = sphi 0, %s18
    %s23 = sphi 0, %s19
    %s24 = sphi 0, %s20
    %s25 = sphi 0, %s21
    %s26 = sphi 0, %s22
    %s27 = sphi 0, %s23
    %s49 = sphi 0, %s51
    %s52 = sphi 0, %s49
    %s53 = sphi 0, %s52
    %s69 = sphi 0, %s53
    %s79 = sphi 0, %s81
    %s82 = sphi 0, %s79
    %s83 = sphi 0, %s82
    %s99 = sphi 0, %s83
    %s107 = sphi 0, %s109
    %s110 = sphi 0, %s107
    %s111 = sphi 0, %s110
    %s127 = sphi 0, %s111
    %s137 = sphi 0, %s139
    %s140 = sphi 0, %s137
    %s141 = sphi 0, %s140
    %s157 = sphi 0, %s141
  $region4: #{_lambda_.33} parent=0 // loop_header_branch
    %12 = sbr.rel (%p10) target = $region8
  $region5: #{_lambda_.33} parent=0 // loop_body
    %s14 = ssub.s32 %s9, 1
    %s15 = ssub.s32 %s9, 2
    %s28 = sadd.s32 1, %s19
    %p29 = scmp.ge.s32.totalorder %s28, 1
    %s30 = scalar_select %p29, 0, %s28
    %s31 = sadd.s32 1, %s18
    %s32 = scalar_select %p29, %s31, %s18
    %p33 = scmp.ge.s32.totalorder %s32, 1
    %s34 = scalar_select %p33, 0, %s32
    %s35 = sadd.s32 1, %s17
    %s36 = scalar_select %p33, %s35, %s17
    %p37 = scmp.ge.s32.totalorder %s36, 1
    %s38 = scalar_select %p37, 0, %s36
    %s39 = sadd.s32 1, %s16
    %s40 = scalar_select %p37, %s39, %s16
    %p41 = scmp.ge.s32.totalorder %s40, 4
    %s42 = scalar_select %p41, 0, %s40
    %s43 = ssub.s32 %s16, %s42
    %s44 = ssub.s32 %s17, %s38
    %s45 = sor.u32 %s43, %s44
    %s46 = ssub.s32 %s19, %s30
    %s47 = sor.u32 %s45, %s46
    %p48 = scmp.eq.s32.totalorder %s47, 0
    %s50 = sadd.s32 %s49, 1
    %s51 = scalar_select %p48, %s49, %s50
    %p54 = pneg %p48
    %p55 = scmp.eq.s32.totalorder %s9, 3
    %p56 = por %p54, %p55
    %p57 = scmp.ne.s32.totalorder %s49, %s52
    %p58 = scmp.eq.s32.totalorder %s9, 0
    %p59 = por %p57, %p58
    %p60 = scmp.ne.s32.totalorder %s49, %s52
    %p61 = scmp.eq.s32.totalorder %s14, 3
    %p62 = por %p60, %p61
    %p63 = scmp.ne.s32.totalorder %s52, %s53
    %p64 = scmp.eq.s32.totalorder %s14, 0
    %p65 = por %p63, %p64
    %p66 = scmp.ne.s32.totalorder %s52, %s53
    %p67 = scmp.eq.s32.totalorder %s15, 3
    %p68 = por %p66, %p67
    %p70 = scmp.ne.s32.totalorder %s53, %s69
    %p71 = scmp.eq.s32.totalorder %s15, 0
    %p72 = por %p70, %p71
    %s73 = ssub.s32 %s16, %s42
    %s74 = ssub.s32 %s19, %s30
    %s75 = sor.u32 %s73, %s74
    %s76 = ssub.s32 %s18, %s34
    %s77 = sor.u32 %s75, %s76
    %p78 = scmp.eq.s32.totalorder %s77, 0
    %s80 = sadd.s32 %s79, 1
    %s81 = scalar_select %p78, %s79, %s80
    %p84 = pneg %p78
    %p85 = scmp.eq.s32.totalorder %s9, 3
    %p86 = por %p84, %p85
    %p87 = scmp.ne.s32.totalorder %s79, %s82
    %p88 = scmp.eq.s32.totalorder %s9, 0
    %p89 = por %p87, %p88
    %p90 = scmp.ne.s32.totalorder %s79, %s82
    %p91 = scmp.eq.s32.totalorder %s14, 3
    %p92 = por %p90, %p91
    %p93 = scmp.ne.s32.totalorder %s82, %s83
    %p94 = scmp.eq.s32.totalorder %s14, 0
    %p95 = por %p93, %p94
    %p96 = scmp.ne.s32.totalorder %s82, %s83
    %p97 = scmp.eq.s32.totalorder %s15, 3
    %p98 = por %p96, %p97
    %p100 = scmp.ne.s32.totalorder %s83, %s99
    %p101 = scmp.eq.s32.totalorder %s15, 0
    %p102 = por %p100, %p101
    %s103 = ssub.s32 %s16, %s42
    %s104 = ssub.s32 %s18, %s34
    %s105 = sor.u32 %s103, %s104
    %p106 = scmp.eq.s32.totalorder %s105, 0
    %s108 = sadd.s32 %s107, 1
    %s109 = scalar_select %p106, %s107, %s108
    %p112 = pneg %p106
    %p113 = scmp.eq.s32.totalorder %s9, 3
    %p114 = por %p112, %p113
    %p115 = scmp.ne.s32.totalorder %s107, %s110
    %p116 = scmp.eq.s32.totalorder %s9, 0
    %p117 = por %p115, %p116
    %p118 = scmp.ne.s32.totalorder %s107, %s110
    %p119 = scmp.eq.s32.totalorder %s14, 3
    %p120 = por %p118, %p119
    %p121 = scmp.ne.s32.totalorder %s110, %s111
    %p122 = scmp.eq.s32.totalorder %s14, 0
    %p123 = por %p121, %p122
    %p124 = scmp.ne.s32.totalorder %s110, %s111
    %p125 = scmp.eq.s32.totalorder %s15, 3
    %p126 = por %p124, %p125
    %p128 = scmp.ne.s32.totalorder %s111, %s127
    %p129 = scmp.eq.s32.totalorder %s15, 0
    %p130 = por %p128, %p129
    %s131 = ssub.s32 %s16, %s42
    %s132 = ssub.s32 %s17, %s38
    %s133 = sor.u32 %s131, %s132
    %s134 = ssub.s32 %s18, %s34
    %s135 = sor.u32 %s133, %s134
    %p136 = scmp.eq.s32.totalorder %s135, 0
    %s138 = sadd.s32 %s137, 1
    %s139 = scalar_select %p136, %s137, %s138
    %p142 = pneg %p136
    %p143 = scmp.eq.s32.totalorder %s9, 3
    %p144 = por %p142, %p143
    %p145 = scmp.ne.s32.totalorder %s137, %s140
    %p146 = scmp.eq.s32.totalorder %s9, 0
    %p147 = por %p145, %p146
    %p148 = scmp.ne.s32.totalorder %s137, %s140
    %p149 = scmp.eq.s32.totalorder %s14, 3
    %p150 = por %p148, %p149
    %p151 = scmp.ne.s32.totalorder %s140, %s141
    %p152 = scmp.eq.s32.totalorder %s14, 0
    %p153 = por %p151, %p152
    %p154 = scmp.ne.s32.totalorder %s140, %s141
    %p155 = scmp.eq.s32.totalorder %s15, 3
    %p156 = por %p154, %p155
    %p158 = scmp.ne.s32.totalorder %s141, %s157
    %p159 = scmp.eq.s32.totalorder %s15, 0
    %p160 = por %p158, %p159
    %p161 = scmp.le.s32.totalorder 1, %s9
    %p162 = scmp.lt.s32.totalorder %s9, 5
    %p163 = pnand %p161, %p162
    %p164 = pneg %p163
    // Predicated region
    $region9: #{_lambda_.33} parent=5 // pred_check
      _
    $region10: #{_lambda_.33} parent=5 // pred_check_branch
      %166 = sbr.rel (%p163) target = $region12
    $region11: #{_lambda_.33} parent=5 // pred_region
      %s167 = ssub.s32 %s9, 1
    $region12: #{_lambda_.33} parent=5 // pred_fallthru
      _
    %p168 = scmp.lt.s32.totalorder %s9, 4
    // Predicated region
    $region13: #{_lambda_.33} parent=5 // pred_check
      %p169 = pneg %p168
    $region14: #{_lambda_.33} parent=5 // pred_check_branch
      %171 = sbr.rel (%p169) target = $region16
    $region15: #{_lambda_.33} parent=5 // pred_region
      // Predicated region
      $region17: #{_lambda_.33} parent=15 // pred_check
        %p172 = pneg %p59
      $region18: #{_lambda_.33} parent=15 // pred_check_branch
        %174 = sbr.rel (%p172) target = $region20
      $region19: #{_lambda_.33} parent=15 // pred_region
        %s175 = smul.u32 64, %s17
        %p176 = scmp.lt.s32.totalorder %s16, 3
        %s177 = scalar_select %p176, %s16, 3
        %p178 = scmp.lt.s32.totalorder %s175, 63
        %s179 = scalar_select %p178, %s175, 63
        %p180 = scmp.lt.s32.totalorder %s19, 0
        %s181 = scalar_select %p180, %s19, 0
        %s182 = sadd.s32 %s181, %s179
        %s183 = smul.addr %s177, 64
        %s184 = sadd.s32 %s182, %s183
        %s185 = smul.addr %s184, 4
        %s186 = scalar_lea.vmem %s0, %s185
        %s187 = smul.u32 64, %s17
      $region20: #{_lambda_.33} parent=15 // pred_fallthru
        _
      // Predicated region
      $region21: #{_lambda_.33} parent=15 // pred_check
        %p188 = pneg %p89
      $region22: #{_lambda_.33} parent=15 // pred_check_branch
        %190 = sbr.rel (%p188) target = $region24
      $region23: #{_lambda_.33} parent=15 // pred_region
        %s191 = smul.u32 16, %s19
        %p192 = scmp.lt.s32.totalorder %s16, 3
        %s193 = scalar_select %p192, %s16, 3
        %p194 = scmp.lt.s32.totalorder %s191, 15
        %s195 = scalar_select %p194, %s191, 15
        %p196 = scmp.lt.s32.totalorder %s18, 0
        %s197 = scalar_select %p196, %s18, 0
        %s198 = sadd.s32 %s197, %s195
        %s199 = smul.addr %s193, 16
        %s200 = sadd.s32 %s198, %s199
        %s201 = smul.addr %s200, 4
        %s202 = scalar_lea.vmem %s1, %s201
        %s203 = smul.u32 16, %s19
      $region24: #{_lambda_.33} parent=15 // pred_fallthru
        _
      // Predicated region
      $region25: #{_lambda_.33} parent=15 // pred_check
        %p204 = pneg %p117
      $region26: #{_lambda_.33} parent=15 // pred_check_branch
        %206 = sbr.rel (%p204) target = $region28
      $region27: #{_lambda_.33} parent=15 // pred_region
        %p207 = scmp.lt.s32.totalorder %s16, 3
        %s208 = scalar_select %p207, %s16, 3
        %p209 = scmp.lt.s32.totalorder %s18, 0
        %s210 = scalar_select %p209, %s18, 0
        %s211 = sadd.s32 %s210, %s208
        %s212 = scalar_lea.vmem %s2, %s211
      $region28: #{_lambda_.33} parent=15 // pred_fallthru
        _
    $region16: #{_lambda_.33} parent=5 // pred_fallthru
      _
    %p213 = scmp.le.s32.totalorder 1, %s9
    %p214 = scmp.lt.s32.totalorder %s9, 5
    %p215 = pnand %p213, %p214
    %p216 = pneg %p215
    // Predicated region
    $region29: #{_lambda_.33} parent=5 // pred_check
      _
    $region30: #{_lambda_.33} parent=5 // pred_check_branch
      %218 = sbr.rel (%p215) target = $region32
    $region31: #{_lambda_.33} parent=5 // pred_region
      %s219 = ssub.s32 %s9, 1
      %s220 = smul.u32 64, %s21
      %p221 = scmp.lt.s32.totalorder %s20, 3
      %s222 = scalar_select %p221, %s20, 3
      %p223 = scmp.lt.s32.totalorder %s220, 63
      %s224 = scalar_select %p223, %s220, 63
      %p225 = scmp.lt.s32.totalorder %s23, 0
      %s226 = scalar_select %p225, %s23, 0
      %s227 = sadd.s32 %s226, %s224
      %s228 = smul.addr %s222, 64
      %s229 = sadd.s32 %s227, %s228
      %s230 = smul.addr %s229, 4
      %s231 = scalar_lea.vmem %s0, %s230
      %p232 = pneg %p65
      %p233 = pneg %p62
      %s234 = smul.u32 16, %s23
      %p235 = scmp.lt.s32.totalorder %s20, 3
      %s236 = scalar_select %p235, %s20, 3
      %p237 = scmp.lt.s32.totalorder %s234, 15
      %s238 = scalar_select %p237, %s234, 15
      %p239 = scmp.lt.s32.totalorder %s22, 0
      %s240 = scalar_select %p239, %s22, 0
      %s241 = sadd.s32 %s240, %s238
      %s242 = smul.addr %s236, 16
      %s243 = sadd.s32 %s241, %s242
      %s244 = smul.addr %s243, 4
      %s245 = scalar_lea.vmem %s1, %s244
      %p246 = pneg %p95
      %p247 = pneg %p92
      %p248 = scmp.lt.s32.totalorder %s20, 3
      %s249 = scalar_select %p248, %s20, 3
      %p250 = scmp.lt.s32.totalorder %s22, 0
      %s251 = scalar_select %p250, %s22, 0
      %s252 = sadd.s32 %s251, %s249
      %s253 = scalar_lea.vmem %s2, %s252
      %p254 = pneg %p123
      %p255 = pneg %p120
      %p256 = pneg %p153
      %p257 = pneg %p150
      %s258 = smul.u32 64, %s21
      %p259 = scmp.lt.s32.totalorder %s20, 3
      %s260 = scalar_select %p259, %s20, 3
      %p261 = scmp.lt.s32.totalorder %s258, 63
      %s262 = scalar_select %p261, %s258, 63
      %p263 = scmp.lt.s32.totalorder %s22, 0
      %s264 = scalar_select %p263, %s22, 0
      %s265 = sadd.s32 %s264, %s262
      %s266 = smul.addr %s260, 64
      %s267 = sadd.s32 %s265, %s266
      %s268 = smul.addr %s267, 8
      %s269 = scalar_lea.vmem %s3, %s268
      %s270 = smul.u32 64, %s21
      %p271 = scmp.lt.s32.totalorder %s20, 3
      %s272 = scalar_select %p271, %s20, 3
      %p273 = scmp.lt.s32.totalorder %s270, 63
      %s274 = scalar_select %p273, %s270, 63
      %p275 = scmp.lt.s32.totalorder %s23, 0
      %s276 = scalar_select %p275, %s23, 0
      %s277 = sadd.s32 %s276, %s274
      %s278 = smul.addr %s272, 64
      %s279 = sadd.s32 %s277, %s278
      %s280 = smul.addr %s279, 4
      %s281 = scalar_lea.vmem %s0, %s280
      %s282 = smul.u32 64, %s21
      %s283 = smul.u32 16, %s23
      %p284 = scmp.lt.s32.totalorder %s20, 3
      %s285 = scalar_select %p284, %s20, 3
      %p286 = scmp.lt.s32.totalorder %s283, 15
      %s287 = scalar_select %p286, %s283, 15
      %p288 = scmp.lt.s32.totalorder %s22, 0
      %s289 = scalar_select %p288, %s22, 0
      %s290 = sadd.s32 %s289, %s287
      %s291 = smul.addr %s285, 16
      %s292 = sadd.s32 %s290, %s291
      %s293 = smul.addr %s292, 4
      %s294 = scalar_lea.vmem %s1, %s293
      %s295 = smul.u32 16, %s23
      %p296 = scmp.lt.s32.totalorder %s20, 3
      %s297 = scalar_select %p296, %s20, 3
      %p298 = scmp.lt.s32.totalorder %s22, 0
      %s299 = scalar_select %p298, %s22, 0
      %s300 = sadd.s32 %s299, %s297
      %s301 = scalar_lea.vmem %s2, %s300
      %s302 = smul.u32 64, %s21
      %p303 = scmp.lt.s32.totalorder %s20, 3
      %s304 = scalar_select %p303, %s20, 3
      %p305 = scmp.lt.s32.totalorder %s302, 63
      %s306 = scalar_select %p305, %s302, 63
      %p307 = scmp.lt.s32.totalorder %s22, 0
      %s308 = scalar_select %p307, %s22, 0
      %s309 = sadd.s32 %s308, %s306
      %s310 = smul.addr %s304, 64
      %s311 = sadd.s32 %s309, %s310
      %s312 = smul.addr %s311, 8
      %s313 = scalar_lea.vmem %s3, %s312
      %s314 = smul.u32 64, %s21
      %p315 = scmp.eq.s32.totalorder %s23, 0
      // Predicated region
      $region33: #{_lambda_.33} parent=31 // pred_check
        %p316 = pneg %p315
      $region34: #{_lambda_.33} parent=31 // pred_check_branch
        %318 = sbr.rel (%p316) target = $region36
      $region35: #{_lambda_.33} parent=31 // pred_region
        %319 = vst [vmem:[#allocation2] sm:$0xff] 0.0
        %320 = vst [vmem:[#allocation2 + $0x8] sm:$0xff] 0.0
        %321 = vst [vmem:[#allocation2 + $0x10] sm:$0xff] 0.0
        %322 = vst [vmem:[#allocation2 + $0x18] sm:$0xff] 0.0
        %323 = vst [vmem:[#allocation2 + $0x20] sm:$0xff] 0.0
        %324 = vst [vmem:[#allocation2 + $0x28] sm:$0xff] 0.0
        %325 = vst [vmem:[#allocation2 + $0x30] sm:$0xff] 0.0
        %326 = vst [vmem:[#allocation2 + $0x38] sm:$0xff] 0.0
        %327 = vst [vmem:[#allocation2 + $0x40] sm:$0xff] 0.0
        %328 = vst [vmem:[#allocation2 + $0x48] sm:$0xff] 0.0
        %329 = vst [vmem:[#allocation2 + $0x50] sm:$0xff] 0.0
        %330 = vst [vmem:[#allocation2 + $0x58] sm:$0xff] 0.0
        %331 = vst [vmem:[#allocation2 + $0x60] sm:$0xff] 0.0
        %332 = vst [vmem:[#allocation2 + $0x68] sm:$0xff] 0.0
        %333 = vst [vmem:[#allocation2 + $0x70] sm:$0xff] 0.0
        %334 = vst [vmem:[#allocation2 + $0x78] sm:$0xff] 0.0
        %335 = vst [vmem:[#allocation2 + $0x80] sm:$0xff] 0.0
        %336 = vst [vmem:[#allocation2 + $0x88] sm:$0xff] 0.0
        %337 = vst [vmem:[#allocation2 + $0x90] sm:$0xff] 0.0
        %338 = vst [vmem:[#allocation2 + $0x98] sm:$0xff] 0.0
        %339 = vst [vmem:[#allocation2 + $0xa0] sm:$0xff] 0.0
        %340 = vst [vmem:[#allocation2 + $0xa8] sm:$0xff] 0.0
        %341 = vst [vmem:[#allocation2 + $0xb0] sm:$0xff] 0.0
        %342 = vst [vmem:[#allocation2 + $0xb8] sm:$0xff] 0.0
        %343 = vst [vmem:[#allocation2 + $0xc0] sm:$0xff] 0.0
        %344 = vst [vmem:[#allocation2 + $0xc8] sm:$0xff] 0.0
        %345 = vst [vmem:[#allocation2 + $0xd0] sm:$0xff] 0.0
        %346 = vst [vmem:[#allocation2 + $0xd8] sm:$0xff] 0.0
        %347 = vst [vmem:[#allocation2 + $0xe0] sm:$0xff] 0.0
        %348 = vst [vmem:[#allocation2 + $0xe8] sm:$0xff] 0.0
        %349 = vst [vmem:[#allocation2 + $0xf0] sm:$0xff] 0.0
        %350 = vst [vmem:[#allocation2 + $0xf8] sm:$0xff] 0.0
        %351 = vst [vmem:[#allocation2 + $0x100] sm:$0xff] 0.0
        %352 = vst [vmem:[#allocation2 + $0x108] sm:$0xff] 0.0
        %353 = vst [vmem:[#allocation2 + $0x110] sm:$0xff] 0.0
        %354 = vst [vmem:[#allocation2 + $0x118] sm:$0xff] 0.0
        %355 = vst [vmem:[#allocation2 + $0x120] sm:$0xff] 0.0
        %356 = vst [vmem:[#allocation2 + $0x128] sm:$0xff] 0.0
        %357 = vst [vmem:[#allocation2 + $0x130] sm:$0xff] 0.0
        %358 = vst [vmem:[#allocation2 + $0x138] sm:$0xff] 0.0
        %359 = vst [vmem:[#allocation2 + $0x140] sm:$0xff] 0.0
        %360 = vst [vmem:[#allocation2 + $0x148] sm:$0xff] 0.0
        %361 = vst [vmem:[#allocation2 + $0x150] sm:$0xff] 0.0
        %362 = vst [vmem:[#allocation2 + $0x158] sm:$0xff] 0.0
        %363 = vst [vmem:[#allocation2 + $0x160] sm:$0xff] 0.0
        %364 = vst [vmem:[#allocation2 + $0x168] sm:$0xff] 0.0
        %365 = vst [vmem:[#allocation2 + $0x170] sm:$0xff] 0.0
        %366 = vst [vmem:[#allocation2 + $0x178] sm:$0xff] 0.0
        %367 = vst [vmem:[#allocation2 + $0x180] sm:$0xff] 0.0
        %368 = vst [vmem:[#allocation2 + $0x188] sm:$0xff] 0.0
        %369 = vst [vmem:[#allocation2 + $0x190] sm:$0xff] 0.0
        %370 = vst [vmem:[#allocation2 + $0x198] sm:$0xff] 0.0
        %371 = vst [vmem:[#allocation2 + $0x1a0] sm:$0xff] 0.0
        %372 = vst [vmem:[#allocation2 + $0x1a8] sm:$0xff] 0.0
        %373 = vst [vmem:[#allocation2 + $0x1b0] sm:$0xff] 0.0
        %374 = vst [vmem:[#allocation2 + $0x1b8] sm:$0xff] 0.0
        %375 = vst [vmem:[#allocation2 + $0x1c0] sm:$0xff] 0.0
        %376 = vst [vmem:[#allocation2 + $0x1c8] sm:$0xff] 0.0
        %377 = vst [vmem:[#allocation2 + $0x1d0] sm:$0xff] 0.0
        %378 = vst [vmem:[#allocation2 + $0x1d8] sm:$0xff] 0.0
        %379 = vst [vmem:[#allocation2 + $0x1e0] sm:$0xff] 0.0
        %380 = vst [vmem:[#allocation2 + $0x1e8] sm:$0xff] 0.0
        %381 = vst [vmem:[#allocation2 + $0x1f0] sm:$0xff] 0.0
        %382 = vst [vmem:[#allocation2 + $0x1f8] sm:$0xff] 0.0
      $region36: #{_lambda_.33} parent=31 // pred_fallthru
        _
      %v383 = vld [vmem:[%s281] sm:$0xf]
      %v384 = vld [vmem:[%s281 + $0x4] sm:$0xf]
      %v385 = vld [vmem:[%s281 + $0x8] sm:$0xf]
      %v386 = vld [vmem:[%s281 + $0xc] sm:$0xf]
      %v387 = vld [vmem:[%s281 + $0x10] sm:$0xf]
      %v388 = vld [vmem:[%s281 + $0x14] sm:$0xf]
      %v389 = vld [vmem:[%s281 + $0x18] sm:$0xf]
      %v390 = vld [vmem:[%s281 + $0x1c] sm:$0xf]
      %v391 = vld [vmem:[%s281 + $0x20] sm:$0xf]
      %v392 = vld [vmem:[%s281 + $0x24] sm:$0xf]
      %v393 = vld [vmem:[%s281 + $0x28] sm:$0xf]
      %v394 = vld [vmem:[%s281 + $0x2c] sm:$0xf]
      %v395 = vld [vmem:[%s281 + $0x30] sm:$0xf]
      %v396 = vld [vmem:[%s281 + $0x34] sm:$0xf]
      %v397 = vld [vmem:[%s281 + $0x38] sm:$0xf]
      %v398 = vld [vmem:[%s281 + $0x3c] sm:$0xf]
      %v399 = vld [vmem:[%s281 + $0x40] sm:$0xf]
      %v400 = vld [vmem:[%s281 + $0x44] sm:$0xf]
      %v401 = vld [vmem:[%s281 + $0x48] sm:$0xf]
      %v402 = vld [vmem:[%s281 + $0x4c] sm:$0xf]
      %v403 = vld [vmem:[%s281 + $0x50] sm:$0xf]
      %v404 = vld [vmem:[%s281 + $0x54] sm:$0xf]
      %v405 = vld [vmem:[%s281 + $0x58] sm:$0xf]
      %v406 = vld [vmem:[%s281 + $0x5c] sm:$0xf]
      %v407 = vld [vmem:[%s281 + $0x60] sm:$0xf]
      %v408 = vld [vmem:[%s281 + $0x64] sm:$0xf]
      %v409 = vld [vmem:[%s281 + $0x68] sm:$0xf]
      %v410 = vld [vmem:[%s281 + $0x6c] sm:$0xf]
      %v411 = vld [vmem:[%s281 + $0x70] sm:$0xf]
      %v412 = vld [vmem:[%s281 + $0x74] sm:$0xf]
      %v413 = vld [vmem:[%s281 + $0x78] sm:$0xf]
      %v414 = vld [vmem:[%s281 + $0x7c] sm:$0xf]
      %v415 = vld [vmem:[%s281 + $0x80] sm:$0xf]
      %v416 = vld [vmem:[%s281 + $0x84] sm:$0xf]
      %v417 = vld [vmem:[%s281 + $0x88] sm:$0xf]
      %v418 = vld [vmem:[%s281 + $0x8c] sm:$0xf]
      %v419 = vld [vmem:[%s281 + $0x90] sm:$0xf]
      %v420 = vld [vmem:[%s281 + $0x94] sm:$0xf]
      %v421 = vld [vmem:[%s281 + $0x98] sm:$0xf]
      %v422 = vld [vmem:[%s281 + $0x9c] sm:$0xf]
      %v423 = vld [vmem:[%s281 + $0xa0] sm:$0xf]
      %v424 = vld [vmem:[%s281 + $0xa4] sm:$0xf]
      %v425 = vld [vmem:[%s281 + $0xa8] sm:$0xf]
      %v426 = vld [vmem:[%s281 + $0xac] sm:$0xf]
      %v427 = vld [vmem:[%s281 + $0xb0] sm:$0xf]
      %v428 = vld [vmem:[%s281 + $0xb4] sm:$0xf]
      %v429 = vld [vmem:[%s281 + $0xb8] sm:$0xf]
      %v430 = vld [vmem:[%s281 + $0xbc] sm:$0xf]
      %v431 = vld [vmem:[%s281 + $0xc0] sm:$0xf]
      %v432 = vld [vmem:[%s281 + $0xc4] sm:$0xf]
      %v433 = vld [vmem:[%s281 + $0xc8] sm:$0xf]
      %v434 = vld [vmem:[%s281 + $0xcc] sm:$0xf]
      %v435 = vld [vmem:[%s281 + $0xd0] sm:$0xf]
      %v436 = vld [vmem:[%s281 + $0xd4] sm:$0xf]
      %v437 = vld [vmem:[%s281 + $0xd8] sm:$0xf]
      %v438 = vld [vmem:[%s281 + $0xdc] sm:$0xf]
      %v439 = vld [vmem:[%s281 + $0xe0] sm:$0xf]
      %v440 = vld [vmem:[%s281 + $0xe4] sm:$0xf]
      %v441 = vld [vmem:[%s281 + $0xe8] sm:$0xf]
      %v442 = vld [vmem:[%s281 + $0xec] sm:$0xf]
      %v443 = vld [vmem:[%s281 + $0xf0] sm:$0xf]
      %v444 = vld [vmem:[%s281 + $0xf4] sm:$0xf]
      %v445 = vld [vmem:[%s281 + $0xf8] sm:$0xf]
      %v446 = vld [vmem:[%s281 + $0xfc] sm:$0xf]
      %v447 = vunpack.c.l.bf16 %v383
      %v448 = vunpack.c.l.bf16 %v384
      %v449 = vunpack.c.l.bf16 %v385
      %v450 = vunpack.c.l.bf16 %v386
      %v451 = vunpack.c.l.bf16 %v387
      %v452 = vunpack.c.l.bf16 %v388
      %v453 = vunpack.c.l.bf16 %v389
      %v454 = vunpack.c.l.bf16 %v390
      %v455 = vunpack.c.l.bf16 %v391
      %v456 = vunpack.c.l.bf16 %v392
      %v457 = vunpack.c.l.bf16 %v393
      %v458 = vunpack.c.l.bf16 %v394
      %v459 = vunpack.c.l.bf16 %v395
      %v460 = vunpack.c.l.bf16 %v396
      %v461 = vunpack.c.l.bf16 %v397
      %v462 = vunpack.c.l.bf16 %v398
      %v463 = vunpack.c.l.bf16 %v399
      %v464 = vunpack.c.l.bf16 %v400
      %v465 = vunpack.c.l.bf16 %v401
      %v466 = vunpack.c.l.bf16 %v402
      %v467 = vunpack.c.l.bf16 %v403
      %v468 = vunpack.c.l.bf16 %v404
      %v469 = vunpack.c.l.bf16 %v405
      %v470 = vunpack.c.l.bf16 %v406
      %v471 = vunpack.c.l.bf16 %v407
      %v472 = vunpack.c.l.bf16 %v408
      %v473 = vunpack.c.l.bf16 %v409
      %v474 = vunpack.c.l.bf16 %v410
      %v475 = vunpack.c.l.bf16 %v411
      %v476 = vunpack.c.l.bf16 %v412
      %v477 = vunpack.c.l.bf16 %v413
      %v478 = vunpack.c.l.bf16 %v414
      %v479 = vunpack.c.l.bf16 %v415
      %v480 = vunpack.c.l.bf16 %v416
      %v481 = vunpack.c.l.bf16 %v417
      %v482 = vunpack.c.l.bf16 %v418
      %v483 = vunpack.c.l.bf16 %v419
      %v484 = vunpack.c.l.bf16 %v420
      %v485 = vunpack.c.l.bf16 %v421
      %v486 = vunpack.c.l.bf16 %v422
      %v487 = vunpack.c.l.bf16 %v423
      %v488 = vunpack.c.l.bf16 %v424
      %v489 = vunpack.c.l.bf16 %v425
      %v490 = vunpack.c.l.bf16 %v426
      %v491 = vunpack.c.l.bf16 %v427
      %v492 = vunpack.c.l.bf16 %v428
      %v493 = vunpack.c.l.bf16 %v429
      %v494 = vunpack.c.l.bf16 %v430
      %v495 = vunpack.c.l.bf16 %v431
      %v496 = vunpack.c.l.bf16 %v432
      %v497 = vunpack.c.l.bf16 %v433
      %v498 = vunpack.c.l.bf16 %v434
      %v499 = vunpack.c.l.bf16 %v435
      %v500 = vunpack.c.l.bf16 %v436
      %v501 = vunpack.c.l.bf16 %v437
      %v502 = vunpack.c.l.bf16 %v438
      %v503 = vunpack.c.l.bf16 %v439
      %v504 = vunpack.c.l.bf16 %v440
      %v505 = vunpack.c.l.bf16 %v441
      %v506 = vunpack.c.l.bf16 %v442
      %v507 = vunpack.c.l.bf16 %v443
      %v508 = vunpack.c.l.bf16 %v444
      %v509 = vunpack.c.l.bf16 %v445
      %v510 = vunpack.c.l.bf16 %v446
      %v511 = vmax.f32 %v447, 0.0
      %v512 = vmax.f32 %v448, 0.0
      %v513 = vmax.f32 %v449, 0.0
      %v514 = vmax.f32 %v450, 0.0
      %v515 = vmax.f32 %v451, 0.0
      %v516 = vmax.f32 %v452, 0.0
      %v517 = vmax.f32 %v453, 0.0
      %v518 = vmax.f32 %v454, 0.0
      %v519 = vmax.f32 %v455, 0.0
      %v520 = vmax.f32 %v456, 0.0
      %v521 = vmax.f32 %v457, 0.0
      %v522 = vmax.f32 %v458, 0.0
      %v523 = vmax.f32 %v459, 0.0
      %v524 = vmax.f32 %v460, 0.0
      %v525 = vmax.f32 %v461, 0.0
      %v526 = vmax.f32 %v462, 0.0
      %v527 = vmax.f32 %v463, 0.0
      %v528 = vmax.f32 %v464, 0.0
      %v529 = vmax.f32 %v465, 0.0
      %v530 = vmax.f32 %v466, 0.0
      %v531 = vmax.f32 %v467, 0.0
      %v532 = vmax.f32 %v468, 0.0
      %v533 = vmax.f32 %v469, 0.0
      %v534 = vmax.f32 %v470, 0.0
      %v535 = vmax.f32 %v471, 0.0
      %v536 = vmax.f32 %v472, 0.0
      %v537 = vmax.f32 %v473, 0.0
      %v538 = vmax.f32 %v474, 0.0
      %v539 = vmax.f32 %v475, 0.0
      %v540 = vmax.f32 %v476, 0.0
      %v541 = vmax.f32 %v477, 0.0
      %v542 = vmax.f32 %v478, 0.0
      %v543 = vmax.f32 %v479, 0.0
      %v544 = vmax.f32 %v480, 0.0
      %v545 = vmax.f32 %v481, 0.0
      %v546 = vmax.f32 %v482, 0.0
      %v547 = vmax.f32 %v483, 0.0
      %v548 = vmax.f32 %v484, 0.0
      %v549 = vmax.f32 %v485, 0.0
      %v550 = vmax.f32 %v486, 0.0
      %v551 = vmax.f32 %v487, 0.0
      %v552 = vmax.f32 %v488, 0.0
      %v553 = vmax.f32 %v489, 0.0
      %v554 = vmax.f32 %v490, 0.0
      %v555 = vmax.f32 %v491, 0.0
      %v556 = vmax.f32 %v492, 0.0
      %v557 = vmax.f32 %v493, 0.0
      %v558 = vmax.f32 %v494, 0.0
      %v559 = vmax.f32 %v495, 0.0
      %v560 = vmax.f32 %v496, 0.0
      %v561 = vmax.f32 %v497, 0.0
      %v562 = vmax.f32 %v498, 0.0
      %v563 = vmax.f32 %v499, 0.0
      %v564 = vmax.f32 %v500, 0.0
      %v565 = vmax.f32 %v501, 0.0
      %v566 = vmax.f32 %v502, 0.0
      %v567 = vmax.f32 %v503, 0.0
      %v568 = vmax.f32 %v504, 0.0
      %v569 = vmax.f32 %v505, 0.0
      %v570 = vmax.f32 %v506, 0.0
      %v571 = vmax.f32 %v507, 0.0
      %v572 = vmax.f32 %v508, 0.0
      %v573 = vmax.f32 %v509, 0.0
      %v574 = vmax.f32 %v510, 0.0
      %v575 = vpack.c.bf16 %v512, %v511
      %v576 = vpack.c.bf16 %v514, %v513
      %v577 = vpack.c.bf16 %v516, %v515
      %v578 = vpack.c.bf16 %v518, %v517
      %v579 = vpack.c.bf16 %v520, %v519
      %v580 = vpack.c.bf16 %v522, %v521
      %v581 = vpack.c.bf16 %v524, %v523
      %v582 = vpack.c.bf16 %v526, %v525
      %v583 = vpack.c.bf16 %v528, %v527
      %v584 = vpack.c.bf16 %v530, %v529
      %v585 = vpack.c.bf16 %v532, %v531
      %v586 = vpack.c.bf16 %v534, %v533
      %v587 = vpack.c.bf16 %v536, %v535
      %v588 = vpack.c.bf16 %v538, %v537
      %v589 = vpack.c.bf16 %v540, %v539
      %v590 = vpack.c.bf16 %v542, %v541
      %v591 = vpack.c.bf16 %v544, %v543
      %v592 = vpack.c.bf16 %v546, %v545
      %v593 = vpack.c.bf16 %v548, %v547
      %v594 = vpack.c.bf16 %v550, %v549
      %v595 = vpack.c.bf16 %v552, %v551
      %v596 = vpack.c.bf16 %v554, %v553
      %v597 = vpack.c.bf16 %v556, %v555
      %v598 = vpack.c.bf16 %v558, %v557
      %v599 = vpack.c.bf16 %v560, %v559
      %v600 = vpack.c.bf16 %v562, %v561
      %v601 = vpack.c.bf16 %v564, %v563
      %v602 = vpack.c.bf16 %v566, %v565
      %v603 = vpack.c.bf16 %v568, %v567
      %v604 = vpack.c.bf16 %v570, %v569
      %v605 = vpack.c.bf16 %v572, %v571
      %v606 = vpack.c.bf16 %v574, %v573
      %v607 = vld [vmem:[#allocation2] sm:$0xff]
      %v608 = vld [vmem:[#allocation2 + $0x8] sm:$0xff]
      %v609 = vld [vmem:[#allocation2 + $0x10] sm:$0xff]
      %v610 = vld [vmem:[#allocation2 + $0x18] sm:$0xff]
      %v611 = vld [vmem:[#allocation2 + $0x20] sm:$0xff]
      %v612 = vld [vmem:[#allocation2 + $0x28] sm:$0xff]
      %v613 = vld [vmem:[#allocation2 + $0x30] sm:$0xff]
      %v614 = vld [vmem:[#allocation2 + $0x38] sm:$0xff]
      %v615 = vld [vmem:[#allocation2 + $0x40] sm:$0xff]
      %v616 = vld [vmem:[#allocation2 + $0x48] sm:$0xff]
      %v617 = vld [vmem:[#allocation2 + $0x50] sm:$0xff]
      %v618 = vld [vmem:[#allocation2 + $0x58] sm:$0xff]
      %v619 = vld [vmem:[#allocation2 + $0x60] sm:$0xff]
      %v620 = vld [vmem:[#allocation2 + $0x68] sm:$0xff]
      %v621 = vld [vmem:[#allocation2 + $0x70] sm:$0xff]
      %v622 = vld [vmem:[#allocation2 + $0x78] sm:$0xff]
      %v623 = vld [vmem:[#allocation2 + $0x80] sm:$0xff]
      %v624 = vld [vmem:[#allocation2 + $0x88] sm:$0xff]
      %v625 = vld [vmem:[#allocation2 + $0x90] sm:$0xff]
      %v626 = vld [vmem:[#allocation2 + $0x98] sm:$0xff]
      %v627 = vld [vmem:[#allocation2 + $0xa0] sm:$0xff]
      %v628 = vld [vmem:[#allocation2 + $0xa8] sm:$0xff]
      %v629 = vld [vmem:[#allocation2 + $0xb0] sm:$0xff]
      %v630 = vld [vmem:[#allocation2 + $0xb8] sm:$0xff]
      %v631 = vld [vmem:[#allocation2 + $0xc0] sm:$0xff]
      %v632 = vld [vmem:[#allocation2 + $0xc8] sm:$0xff]
      %v633 = vld [vmem:[#allocation2 + $0xd0] sm:$0xff]
      %v634 = vld [vmem:[#allocation2 + $0xd8] sm:$0xff]
      %v635 = vld [vmem:[#allocation2 + $0xe0] sm:$0xff]
      %v636 = vld [vmem:[#allocation2 + $0xe8] sm:$0xff]
      %v637 = vld [vmem:[#allocation2 + $0xf0] sm:$0xff]
      %v638 = vld [vmem:[#allocation2 + $0xf8] sm:$0xff]
      %v639 = vld [vmem:[#allocation2 + $0x100] sm:$0xff]
      %v640 = vld [vmem:[#allocation2 + $0x108] sm:$0xff]
      %v641 = vld [vmem:[#allocation2 + $0x110] sm:$0xff]
      %v642 = vld [vmem:[#allocation2 + $0x118] sm:$0xff]
      %v643 = vld [vmem:[#allocation2 + $0x120] sm:$0xff]
      %v644 = vld [vmem:[#allocation2 + $0x128] sm:$0xff]
      %v645 = vld [vmem:[#allocation2 + $0x130] sm:$0xff]
      %v646 = vld [vmem:[#allocation2 + $0x138] sm:$0xff]
      %v647 = vld [vmem:[#allocation2 + $0x140] sm:$0xff]
      %v648 = vld [vmem:[#allocation2 + $0x148] sm:$0xff]
      %v649 = vld [vmem:[#allocation2 + $0x150] sm:$0xff]
      %v650 = vld [vmem:[#allocation2 + $0x158] sm:$0xff]
      %v651 = vld [vmem:[#allocation2 + $0x160] sm:$0xff]
      %v652 = vld [vmem:[#allocation2 + $0x168] sm:$0xff]
      %v653 = vld [vmem:[#allocation2 + $0x170] sm:$0xff]
      %v654 = vld [vmem:[#allocation2 + $0x178] sm:$0xff]
      %v655 = vld [vmem:[#allocation2 + $0x180] sm:$0xff]
      %v656 = vld [vmem:[#allocation2 + $0x188] sm:$0xff]
      %v657 = vld [vmem:[#allocation2 + $0x190] sm:$0xff]
      %v658 = vld [vmem:[#allocation2 + $0x198] sm:$0xff]
      %v659 = vld [vmem:[#allocation2 + $0x1a0] sm:$0xff]
      %v660 = vld [vmem:[#allocation2 + $0x1a8] sm:$0xff]
      %v661 = vld [vmem:[#allocation2 + $0x1b0] sm:$0xff]
      %v662 = vld [vmem:[#allocation2 + $0x1b8] sm:$0xff]
      %v663 = vld [vmem:[#allocation2 + $0x1c0] sm:$0xff]
      %v664 = vld [vmem:[#allocation2 + $0x1c8] sm:$0xff]
      %v665 = vld [vmem:[#allocation2 + $0x1d0] sm:$0xff]
      %v666 = vld [vmem:[#allocation2 + $0x1d8] sm:$0xff]
      %v667 = vld [vmem:[#allocation2 + $0x1e0] sm:$0xff]
      %v668 = vld [vmem:[#allocation2 + $0x1e8] sm:$0xff]
      %v669 = vld [vmem:[#allocation2 + $0x1f0] sm:$0xff]
      %v670 = vld [vmem:[#allocation2 + $0x1f8] sm:$0xff]
      %v671 = vld [vmem:[%s294] sm:$0xf]
      %v672 = vld [vmem:[%s294 + $0x4] sm:$0xf]
      %v673 = vld [vmem:[%s294 + $0x8] sm:$0xf]
      %v674 = vld [vmem:[%s294 + $0xc] sm:$0xf]
      %v675 = vld [vmem:[%s294 + $0x10] sm:$0xf]
      %v676 = vld [vmem:[%s294 + $0x14] sm:$0xf]
      %v677 = vld [vmem:[%s294 + $0x18] sm:$0xf]
      %v678 = vld [vmem:[%s294 + $0x1c] sm:$0xf]
      %v679 = vld [vmem:[%s294 + $0x20] sm:$0xf]
      %v680 = vld [vmem:[%s294 + $0x24] sm:$0xf]
      %v681 = vld [vmem:[%s294 + $0x28] sm:$0xf]
      %v682 = vld [vmem:[%s294 + $0x2c] sm:$0xf]
      %v683 = vld [vmem:[%s294 + $0x30] sm:$0xf]
      %v684 = vld [vmem:[%s294 + $0x34] sm:$0xf]
      %v685 = vld [vmem:[%s294 + $0x38] sm:$0xf]
      %v686 = vld [vmem:[%s294 + $0x3c] sm:$0xf]
      %v703 = vunpack.c.l.b16 %v671
      %v704 = vunpack.c.l.b16 %v672
      %v705 = vunpack.c.l.b16 %v673
      %v706 = vunpack.c.l.b16 %v674
      %v707 = vunpack.c.l.b16 %v675
      %v708 = vunpack.c.l.b16 %v676
      %v709 = vunpack.c.l.b16 %v677
      %v710 = vunpack.c.l.b16 %v678
      %v711 = vunpack.c.l.b16 %v679
      %v712 = vunpack.c.l.b16 %v680
      %v713 = vunpack.c.l.b16 %v681
      %v714 = vunpack.c.l.b16 %v682
      %v715 = vunpack.c.l.b16 %v683
      %v716 = vunpack.c.l.b16 %v684
      %v717 = vunpack.c.l.b16 %v685
      %v718 = vunpack.c.l.b16 %v686
      %v719 = vpack.c.b16 %v704, %v703
      %v720 = vpack.c.b16 %v706, %v705
      %v721 = vpack.c.b16 %v708, %v707
      %v722 = vpack.c.b16 %v710, %v709
      %v723 = vpack.c.b16 %v712, %v711
      %v724 = vpack.c.b16 %v714, %v713
      %v725 = vpack.c.b16 %v716, %v715
      %v726 = vpack.c.b16 %v718, %v717
      %735 = vmatpush.bf16.msra.mxu0 %v726
      %736 = vmatpush.bf16.msra.mxu0 %v725
      %737 = vmatpush.bf16.msra.mxu0 %v724
      %738 = vmatpush.bf16.msra.mxu0 %v723
      %739 = vmatpush.bf16.msra.mxu0 %v722
      %740 = vmatpush.bf16.msra.mxu0 %v721
      %741 = vmatpush.bf16.msra.mxu0 %v720
      %742 = vmatpush.bf16.msra.mxu0 %v719
      %743 = vmatmul.bf16.gmra.mxu0 %v575
      %v744 = vpop.f32.mrf.mxu0
      %v745 = vadd.f32 0.0, %v744
      %v746 = vpop.f32.mrf.mxu0
      %v747 = vadd.f32 0.0, %v746
      %748 = vmatmul.bf16.gmra.mxu0 %v576
      %v749 = vpop.f32.mrf.mxu0
      %v750 = vadd.f32 0.0, %v749
      %v751 = vpop.f32.mrf.mxu0
      %v752 = vadd.f32 0.0, %v751
      %753 = vmatmul.bf16.gmra.mxu0 %v577
      %v754 = vpop.f32.mrf.mxu0
      %v755 = vadd.f32 0.0, %v754
      %v756 = vpop.f32.mrf.mxu0
      %v757 = vadd.f32 0.0, %v756
      %758 = vmatmul.bf16.gmra.mxu0 %v578
      %v759 = vpop.f32.mrf.mxu0
      %v760 = vadd.f32 0.0, %v759
      %v761 = vpop.f32.mrf.mxu0
      %v762 = vadd.f32 0.0, %v761
      %763 = vmatmul.bf16.gmra.mxu0 %v579
      %v764 = vpop.f32.mrf.mxu0
      %v765 = vadd.f32 0.0, %v764
      %v766 = vpop.f32.mrf.mxu0
      %v767 = vadd.f32 0.0, %v766
      %768 = vmatmul.bf16.gmra.mxu0 %v580
      %v769 = vpop.f32.mrf.mxu0
      %v770 = vadd.f32 0.0, %v769
      %v771 = vpop.f32.mrf.mxu0
      %v772 = vadd.f32 0.0, %v771
      %773 = vmatmul.bf16.gmra.mxu0 %v581
      %v774 = vpop.f32.mrf.mxu0
      %v775 = vadd.f32 0.0, %v774
      %v776 = vpop.f32.mrf.mxu0
      %v777 = vadd.f32 0.0, %v776
      %778 = vmatmul.bf16.gmra.mxu0 %v582
      %v779 = vpop.f32.mrf.mxu0
      %v780 = vadd.f32 0.0, %v779
      %v781 = vpop.f32.mrf.mxu0
      %v782 = vadd.f32 0.0, %v781
      %783 = vmatmul.bf16.gmra.mxu0 %v583
      %v784 = vpop.f32.mrf.mxu0
      %v785 = vadd.f32 0.0, %v784
      %v786 = vpop.f32.mrf.mxu0
      %v787 = vadd.f32 0.0, %v786
      %788 = vmatmul.bf16.gmra.mxu0 %v584
      %v789 = vpop.f32.mrf.mxu0
      %v790 = vadd.f32 0.0, %v789
      %v791 = vpop.f32.mrf.mxu0
      %v792 = vadd.f32 0.0, %v791
      %793 = vmatmul.bf16.gmra.mxu0 %v585
      %v794 = vpop.f32.mrf.mxu0
      %v795 = vadd.f32 0.0, %v794
      %v796 = vpop.f32.mrf.mxu0
      %v797 = vadd.f32 0.0, %v796
      %798 = vmatmul.bf16.gmra.mxu0 %v586
      %v799 = vpop.f32.mrf.mxu0
      %v800 = vadd.f32 0.0, %v799
      %v801 = vpop.f32.mrf.mxu0
      %v802 = vadd.f32 0.0, %v801
      %803 = vmatmul.bf16.gmra.mxu0 %v587
      %v804 = vpop.f32.mrf.mxu0
      %v805 = vadd.f32 0.0, %v804
      %v806 = vpop.f32.mrf.mxu0
      %v807 = vadd.f32 0.0, %v806
      %808 = vmatmul.bf16.gmra.mxu0 %v588
      %v809 = vpop.f32.mrf.mxu0
      %v810 = vadd.f32 0.0, %v809
      %v811 = vpop.f32.mrf.mxu0
      %v812 = vadd.f32 0.0, %v811
      %813 = vmatmul.bf16.gmra.mxu0 %v589
      %v814 = vpop.f32.mrf.mxu0
      %v815 = vadd.f32 0.0, %v814
      %v816 = vpop.f32.mrf.mxu0
      %v817 = vadd.f32 0.0, %v816
      %818 = vmatmul.bf16.gmra.mxu0 %v590
      %v819 = vpop.f32.mrf.mxu0
      %v820 = vadd.f32 0.0, %v819
      %v821 = vpop.f32.mrf.mxu0
      %v822 = vadd.f32 0.0, %v821
      %823 = vmatmul.bf16.gmra.mxu0 %v591
      %v824 = vpop.f32.mrf.mxu0
      %v825 = vadd.f32 0.0, %v824
      %v826 = vpop.f32.mrf.mxu0
      %v827 = vadd.f32 0.0, %v826
      %828 = vmatmul.bf16.gmra.mxu0 %v592
      %v829 = vpop.f32.mrf.mxu0
      %v830 = vadd.f32 0.0, %v829
      %v831 = vpop.f32.mrf.mxu0
      %v832 = vadd.f32 0.0, %v831
      %833 = vmatmul.bf16.gmra.mxu0 %v593
      %v834 = vpop.f32.mrf.mxu0
      %v835 = vadd.f32 0.0, %v834
      %v836 = vpop.f32.mrf.mxu0
      %v837 = vadd.f32 0.0, %v836
      %838 = vmatmul.bf16.gmra.mxu0 %v594
      %v839 = vpop.f32.mrf.mxu0
      %v840 = vadd.f32 0.0, %v839
      %v841 = vpop.f32.mrf.mxu0
      %v842 = vadd.f32 0.0, %v841
      %843 = vmatmul.bf16.gmra.mxu0 %v595
      %v844 = vpop.f32.mrf.mxu0
      %v845 = vadd.f32 0.0, %v844
      %v846 = vpop.f32.mrf.mxu0
      %v847 = vadd.f32 0.0, %v846
      %848 = vmatmul.bf16.gmra.mxu0 %v596
      %v849 = vpop.f32.mrf.mxu0
      %v850 = vadd.f32 0.0, %v849
      %v851 = vpop.f32.mrf.mxu0
      %v852 = vadd.f32 0.0, %v851
      %853 = vmatmul.bf16.gmra.mxu0 %v597
      %v854 = vpop.f32.mrf.mxu0
      %v855 = vadd.f32 0.0, %v854
      %v856 = vpop.f32.mrf.mxu0
      %v857 = vadd.f32 0.0, %v856
      %858 = vmatmul.bf16.gmra.mxu0 %v598
      %v859 = vpop.f32.mrf.mxu0
      %v860 = vadd.f32 0.0, %v859
      %v861 = vpop.f32.mrf.mxu0
      %v862 = vadd.f32 0.0, %v861
      %863 = vmatmul.bf16.gmra.mxu0 %v599
      %v864 = vpop.f32.mrf.mxu0
      %v865 = vadd.f32 0.0, %v864
      %v866 = vpop.f32.mrf.mxu0
      %v867 = vadd.f32 0.0, %v866
      %868 = vmatmul.bf16.gmra.mxu0 %v600
      %v869 = vpop.f32.mrf.mxu0
      %v870 = vadd.f32 0.0, %v869
      %v871 = vpop.f32.mrf.mxu0
      %v872 = vadd.f32 0.0, %v871
      %873 = vmatmul.bf16.gmra.mxu0 %v601
      %v874 = vpop.f32.mrf.mxu0
      %v875 = vadd.f32 0.0, %v874
      %v876 = vpop.f32.mrf.mxu0
      %v877 = vadd.f32 0.0, %v876
      %878 = vmatmul.bf16.gmra.mxu0 %v602
      %v879 = vpop.f32.mrf.mxu0
      %v880 = vadd.f32 0.0, %v879
      %v881 = vpop.f32.mrf.mxu0
      %v882 = vadd.f32 0.0, %v881
      %883 = vmatmul.bf16.gmra.mxu0 %v603
      %v884 = vpop.f32.mrf.mxu0
      %v885 = vadd.f32 0.0, %v884
      %v886 = vpop.f32.mrf.mxu0
      %v887 = vadd.f32 0.0, %v886
      %888 = vmatmul.bf16.gmra.mxu0 %v604
      %v889 = vpop.f32.mrf.mxu0
      %v890 = vadd.f32 0.0, %v889
      %v891 = vpop.f32.mrf.mxu0
      %v892 = vadd.f32 0.0, %v891
      %893 = vmatmul.bf16.gmra.mxu0 %v605
      %v894 = vpop.f32.mrf.mxu0
      %v895 = vadd.f32 0.0, %v894
      %v896 = vpop.f32.mrf.mxu0
      %v897 = vadd.f32 0.0, %v896
      %898 = vmatmul.bf16.gmra.mxu0 %v606
      %v899 = vpop.f32.mrf.mxu0
      %v900 = vadd.f32 0.0, %v899
      %v901 = vpop.f32.mrf.mxu0
      %v902 = vadd.f32 0.0, %v901
      %903 = vdwg.mxu0
      %v904 = vadd.f32 %v607, %v745
      %v905 = vadd.f32 %v608, %v747
      %v906 = vadd.f32 %v609, %v750
      %v907 = vadd.f32 %v610, %v752
      %v908 = vadd.f32 %v611, %v755
      %v909 = vadd.f32 %v612, %v757
      %v910 = vadd.f32 %v613, %v760
      %v911 = vadd.f32 %v614, %v762
      %v912 = vadd.f32 %v615, %v765
      %v913 = vadd.f32 %v616, %v767
      %v914 = vadd.f32 %v617, %v770
      %v915 = vadd.f32 %v618, %v772
      %v916 = vadd.f32 %v619, %v775
      %v917 = vadd.f32 %v620, %v777
      %v918 = vadd.f32 %v621, %v780
      %v919 = vadd.f32 %v622, %v782
      %v920 = vadd.f32 %v623, %v785
      %v921 = vadd.f32 %v624, %v787
      %v922 = vadd.f32 %v625, %v790
      %v923 = vadd.f32 %v626, %v792
      %v924 = vadd.f32 %v627, %v795
      %v925 = vadd.f32 %v628, %v797
      %v926 = vadd.f32 %v629, %v800
      %v927 = vadd.f32 %v630, %v802
      %v928 = vadd.f32 %v631, %v805
      %v929 = vadd.f32 %v632, %v807
      %v930 = vadd.f32 %v633, %v810
      %v931 = vadd.f32 %v634, %v812
      %v932 = vadd.f32 %v635, %v815
      %v933 = vadd.f32 %v636, %v817
      %v934 = vadd.f32 %v637, %v820
      %v935 = vadd.f32 %v638, %v822
      %v936 = vadd.f32 %v639, %v825
      %v937 = vadd.f32 %v640, %v827
      %v938 = vadd.f32 %v641, %v830
      %v939 = vadd.f32 %v642, %v832
      %v940 = vadd.f32 %v643, %v835
      %v941 = vadd.f32 %v644, %v837
      %v942 = vadd.f32 %v645, %v840
      %v943 = vadd.f32 %v646, %v842
      %v944 = vadd.f32 %v647, %v845
      %v945 = vadd.f32 %v648, %v847
      %v946 = vadd.f32 %v649, %v850
      %v947 = vadd.f32 %v650, %v852
      %v948 = vadd.f32 %v651, %v855
      %v949 = vadd.f32 %v652, %v857
      %v950 = vadd.f32 %v653, %v860
      %v951 = vadd.f32 %v654, %v862
      %v952 = vadd.f32 %v655, %v865
      %v953 = vadd.f32 %v656, %v867
      %v954 = vadd.f32 %v657, %v870
      %v955 = vadd.f32 %v658, %v872
      %v956 = vadd.f32 %v659, %v875
      %v957 = vadd.f32 %v660, %v877
      %v958 = vadd.f32 %v661, %v880
      %v959 = vadd.f32 %v662, %v882
      %v960 = vadd.f32 %v663, %v885
      %v961 = vadd.f32 %v664, %v887
      %v962 = vadd.f32 %v665, %v890
      %v963 = vadd.f32 %v666, %v892
      %v964 = vadd.f32 %v667, %v895
      %v965 = vadd.f32 %v668, %v897
      %v966 = vadd.f32 %v669, %v900
      %v967 = vadd.f32 %v670, %v902
      %968 = vst [vmem:[#allocation2] sm:$0xff] %v904
      %969 = vst [vmem:[#allocation2 + $0x8] sm:$0xff] %v905
      %970 = vst [vmem:[#allocation2 + $0x10] sm:$0xff] %v906
      %971 = vst [vmem:[#allocation2 + $0x18] sm:$0xff] %v907
      %972 = vst [vmem:[#allocation2 + $0x20] sm:$0xff] %v908
      %973 = vst [vmem:[#allocation2 + $0x28] sm:$0xff] %v909
      %974 = vst [vmem:[#allocation2 + $0x30] sm:$0xff] %v910
      %975 = vst [vmem:[#allocation2 + $0x38] sm:$0xff] %v911
      %976 = vst [vmem:[#allocation2 + $0x40] sm:$0xff] %v912
      %977 = vst [vmem:[#allocation2 + $0x48] sm:$0xff] %v913
      %978 = vst [vmem:[#allocation2 + $0x50] sm:$0xff] %v914
      %979 = vst [vmem:[#allocation2 + $0x58] sm:$0xff] %v915
      %980 = vst [vmem:[#allocation2 + $0x60] sm:$0xff] %v916
      %981 = vst [vmem:[#allocation2 + $0x68] sm:$0xff] %v917
      %982 = vst [vmem:[#allocation2 + $0x70] sm:$0xff] %v918
      %983 = vst [vmem:[#allocation2 + $0x78] sm:$0xff] %v919
      %984 = vst [vmem:[#allocation2 + $0x80] sm:$0xff] %v920
      %985 = vst [vmem:[#allocation2 + $0x88] sm:$0xff] %v921
      %986 = vst [vmem:[#allocation2 + $0x90] sm:$0xff] %v922
      %987 = vst [vmem:[#allocation2 + $0x98] sm:$0xff] %v923
      %988 = vst [vmem:[#allocation2 + $0xa0] sm:$0xff] %v924
      %989 = vst [vmem:[#allocation2 + $0xa8] sm:$0xff] %v925
      %990 = vst [vmem:[#allocation2 + $0xb0] sm:$0xff] %v926
      %991 = vst [vmem:[#allocation2 + $0xb8] sm:$0xff] %v927
      %992 = vst [vmem:[#allocation2 + $0xc0] sm:$0xff] %v928
      %993 = vst [vmem:[#allocation2 + $0xc8] sm:$0xff] %v929
      %994 = vst [vmem:[#allocation2 + $0xd0] sm:$0xff] %v930
      %995 = vst [vmem:[#allocation2 + $0xd8] sm:$0xff] %v931
      %996 = vst [vmem:[#allocation2 + $0xe0] sm:$0xff] %v932
      %997 = vst [vmem:[#allocation2 + $0xe8] sm:$0xff] %v933
      %998 = vst [vmem:[#allocation2 + $0xf0] sm:$0xff] %v934
      %999 = vst [vmem:[#allocation2 + $0xf8] sm:$0xff] %v935
      %1000 = vst [vmem:[#allocation2 + $0x100] sm:$0xff] %v936
      %1001 = vst [vmem:[#allocation2 + $0x108] sm:$0xff] %v937
      %1002 = vst [vmem:[#allocation2 + $0x110] sm:$0xff] %v938
      %1003 = vst [vmem:[#allocation2 + $0x118] sm:$0xff] %v939
      %1004 = vst [vmem:[#allocation2 + $0x120] sm:$0xff] %v940
      %1005 = vst [vmem:[#allocation2 + $0x128] sm:$0xff] %v941
      %1006 = vst [vmem:[#allocation2 + $0x130] sm:$0xff] %v942
      %1007 = vst [vmem:[#allocation2 + $0x138] sm:$0xff] %v943
      %1008 = vst [vmem:[#allocation2 + $0x140] sm:$0xff] %v944
      %1009 = vst [vmem:[#allocation2 + $0x148] sm:$0xff] %v945
      %1010 = vst [vmem:[#allocation2 + $0x150] sm:$0xff] %v946
      %1011 = vst [vmem:[#allocation2 + $0x158] sm:$0xff] %v947
      %1012 = vst [vmem:[#allocation2 + $0x160] sm:$0xff] %v948
      %1013 = vst [vmem:[#allocation2 + $0x168] sm:$0xff] %v949
      %1014 = vst [vmem:[#allocation2 + $0x170] sm:$0xff] %v950
      %1015 = vst [vmem:[#allocation2 + $0x178] sm:$0xff] %v951
      %1016 = vst [vmem:[#allocation2 + $0x180] sm:$0xff] %v952
      %1017 = vst [vmem:[#allocation2 + $0x188] sm:$0xff] %v953
      %1018 = vst [vmem:[#allocation2 + $0x190] sm:$0xff] %v954
      %1019 = vst [vmem:[#allocation2 + $0x198] sm:$0xff] %v955
      %1020 = vst [vmem:[#allocation2 + $0x1a0] sm:$0xff] %v956
      %1021 = vst [vmem:[#allocation2 + $0x1a8] sm:$0xff] %v957
      %1022 = vst [vmem:[#allocation2 + $0x1b0] sm:$0xff] %v958
      %1023 = vst [vmem:[#allocation2 + $0x1b8] sm:$0xff] %v959
      %1024 = vst [vmem:[#allocation2 + $0x1c0] sm:$0xff] %v960
      %1025 = vst [vmem:[#allocation2 + $0x1c8] sm:$0xff] %v961
      %1026 = vst [vmem:[#allocation2 + $0x1d0] sm:$0xff] %v962
      %1027 = vst [vmem:[#allocation2 + $0x1d8] sm:$0xff] %v963
      %1028 = vst [vmem:[#allocation2 + $0x1e0] sm:$0xff] %v964
      %1029 = vst [vmem:[#allocation2 + $0x1e8] sm:$0xff] %v965
      %1030 = vst [vmem:[#allocation2 + $0x1f0] sm:$0xff] %v966
      %1031 = vst [vmem:[#allocation2 + $0x1f8] sm:$0xff] %v967
      // Predicated region
      $region37: #{_lambda_.33} parent=31 // pred_check
        %p1032 = pneg %p315
      $region38: #{_lambda_.33} parent=31 // pred_check_branch
        %1034 = sbr.rel (%p1032) target = $region40
      $region39: #{_lambda_.33} parent=31 // pred_region
        %v1035 = vld [vmem:[#allocation2] sm:$0xff]
        %v1036 = vld [vmem:[#allocation2 + $0x8] sm:$0xff]
        %v1037 = vld [vmem:[#allocation2 + $0x10] sm:$0xff]
        %v1038 = vld [vmem:[#allocation2 + $0x18] sm:$0xff]
        %v1039 = vld [vmem:[#allocation2 + $0x20] sm:$0xff]
        %v1040 = vld [vmem:[#allocation2 + $0x28] sm:$0xff]
        %v1041 = vld [vmem:[#allocation2 + $0x30] sm:$0xff]
        %v1042 = vld [vmem:[#allocation2 + $0x38] sm:$0xff]
        %v1043 = vld [vmem:[#allocation2 + $0x40] sm:$0xff]
        %v1044 = vld [vmem:[#allocation2 + $0x48] sm:$0xff]
        %v1045 = vld [vmem:[#allocation2 + $0x50] sm:$0xff]
        %v1046 = vld [vmem:[#allocation2 + $0x58] sm:$0xff]
        %v1047 = vld [vmem:[#allocation2 + $0x60] sm:$0xff]
        %v1048 = vld [vmem:[#allocation2 + $0x68] sm:$0xff]
        %v1049 = vld [vmem:[#allocation2 + $0x70] sm:$0xff]
        %v1050 = vld [vmem:[#allocation2 + $0x78] sm:$0xff]
        %v1051 = vld [vmem:[#allocation2 + $0x80] sm:$0xff]
        %v1052 = vld [vmem:[#allocation2 + $0x88] sm:$0xff]
        %v1053 = vld [vmem:[#allocation2 + $0x90] sm:$0xff]
        %v1054 = vld [vmem:[#allocation2 + $0x98] sm:$0xff]
        %v1055 = vld [vmem:[#allocation2 + $0xa0] sm:$0xff]
        %v1056 = vld [vmem:[#allocation2 + $0xa8] sm:$0xff]
        %v1057 = vld [vmem:[#allocation2 + $0xb0] sm:$0xff]
        %v1058 = vld [vmem:[#allocation2 + $0xb8] sm:$0xff]
        %v1059 = vld [vmem:[#allocation2 + $0xc0] sm:$0xff]
        %v1060 = vld [vmem:[#allocation2 + $0xc8] sm:$0xff]
        %v1061 = vld [vmem:[#allocation2 + $0xd0] sm:$0xff]
        %v1062 = vld [vmem:[#allocation2 + $0xd8] sm:$0xff]
        %v1063 = vld [vmem:[#allocation2 + $0xe0] sm:$0xff]
        %v1064 = vld [vmem:[#allocation2 + $0xe8] sm:$0xff]
        %v1065 = vld [vmem:[#allocation2 + $0xf0] sm:$0xff]
        %v1066 = vld [vmem:[#allocation2 + $0xf8] sm:$0xff]
        %v1067 = vld [vmem:[#allocation2 + $0x100] sm:$0xff]
        %v1068 = vld [vmem:[#allocation2 + $0x108] sm:$0xff]
        %v1069 = vld [vmem:[#allocation2 + $0x110] sm:$0xff]
        %v1070 = vld [vmem:[#allocation2 + $0x118] sm:$0xff]
        %v1071 = vld [vmem:[#allocation2 + $0x120] sm:$0xff]
        %v1072 = vld [vmem:[#allocation2 + $0x128] sm:$0xff]
        %v1073 = vld [vmem:[#allocation2 + $0x130] sm:$0xff]
        %v1074 = vld [vmem:[#allocation2 + $0x138] sm:$0xff]
        %v1075 = vld [vmem:[#allocation2 + $0x140] sm:$0xff]
        %v1076 = vld [vmem:[#allocation2 + $0x148] sm:$0xff]
        %v1077 = vld [vmem:[#allocation2 + $0x150] sm:$0xff]
        %v1078 = vld [vmem:[#allocation2 + $0x158] sm:$0xff]
        %v1079 = vld [vmem:[#allocation2 + $0x160] sm:$0xff]
        %v1080 = vld [vmem:[#allocation2 + $0x168] sm:$0xff]
        %v1081 = vld [vmem:[#allocation2 + $0x170] sm:$0xff]
        %v1082 = vld [vmem:[#allocation2 + $0x178] sm:$0xff]
        %v1083 = vld [vmem:[#allocation2 + $0x180] sm:$0xff]
        %v1084 = vld [vmem:[#allocation2 + $0x188] sm:$0xff]
        %v1085 = vld [vmem:[#allocation2 + $0x190] sm:$0xff]
        %v1086 = vld [vmem:[#allocation2 + $0x198] sm:$0xff]
        %v1087 = vld [vmem:[#allocation2 + $0x1a0] sm:$0xff]
        %v1088 = vld [vmem:[#allocation2 + $0x1a8] sm:$0xff]
        %v1089 = vld [vmem:[#allocation2 + $0x1b0] sm:$0xff]
        %v1090 = vld [vmem:[#allocation2 + $0x1b8] sm:$0xff]
        %v1091 = vld [vmem:[#allocation2 + $0x1c0] sm:$0xff]
        %v1092 = vld [vmem:[#allocation2 + $0x1c8] sm:$0xff]
        %v1093 = vld [vmem:[#allocation2 + $0x1d0] sm:$0xff]
        %v1094 = vld [vmem:[#allocation2 + $0x1d8] sm:$0xff]
        %v1095 = vld [vmem:[#allocation2 + $0x1e0] sm:$0xff]
        %v1096 = vld [vmem:[#allocation2 + $0x1e8] sm:$0xff]
        %v1097 = vld [vmem:[#allocation2 + $0x1f0] sm:$0xff]
        %v1098 = vld [vmem:[#allocation2 + $0x1f8] sm:$0xff]
        %v1099 = vld [vmem:[%s301] sm:$0x1]
        %v1101 = vperm.slane %v1099, 0
        %v1103 = vadd.f32 %v1035, %v1101
        %v1104 = vadd.f32 %v1036, %v1101
        %v1105 = vadd.f32 %v1037, %v1101
        %v1106 = vadd.f32 %v1038, %v1101
        %v1107 = vadd.f32 %v1039, %v1101
        %v1108 = vadd.f32 %v1040, %v1101
        %v1109 = vadd.f32 %v1041, %v1101
        %v1110 = vadd.f32 %v1042, %v1101
        %v1111 = vadd.f32 %v1043, %v1101
        %v1112 = vadd.f32 %v1044, %v1101
        %v1113 = vadd.f32 %v1045, %v1101
        %v1114 = vadd.f32 %v1046, %v1101
        %v1115 = vadd.f32 %v1047, %v1101
        %v1116 = vadd.f32 %v1048, %v1101
        %v1117 = vadd.f32 %v1049, %v1101
        %v1118 = vadd.f32 %v1050, %v1101
        %v1119 = vadd.f32 %v1051, %v1101
        %v1120 = vadd.f32 %v1052, %v1101
        %v1121 = vadd.f32 %v1053, %v1101
        %v1122 = vadd.f32 %v1054, %v1101
        %v1123 = vadd.f32 %v1055, %v1101
        %v1124 = vadd.f32 %v1056, %v1101
        %v1125 = vadd.f32 %v1057, %v1101
        %v1126 = vadd.f32 %v1058, %v1101
        %v1127 = vadd.f32 %v1059, %v1101
        %v1128 = vadd.f32 %v1060, %v1101
        %v1129 = vadd.f32 %v1061, %v1101
        %v1130 = vadd.f32 %v1062, %v1101
        %v1131 = vadd.f32 %v1063, %v1101
        %v1132 = vadd.f32 %v1064, %v1101
        %v1133 = vadd.f32 %v1065, %v1101
        %v1134 = vadd.f32 %v1066, %v1101
        %v1135 = vadd.f32 %v1067, %v1101
        %v1136 = vadd.f32 %v1068, %v1101
        %v1137 = vadd.f32 %v1069, %v1101
        %v1138 = vadd.f32 %v1070, %v1101
        %v1139 = vadd.f32 %v1071, %v1101
        %v1140 = vadd.f32 %v1072, %v1101
        %v1141 = vadd.f32 %v1073, %v1101
        %v1142 = vadd.f32 %v1074, %v1101
        %v1143 = vadd.f32 %v1075, %v1101
        %v1144 = vadd.f32 %v1076, %v1101
        %v1145 = vadd.f32 %v1077, %v1101
        %v1146 = vadd.f32 %v1078, %v1101
        %v1147 = vadd.f32 %v1079, %v1101
        %v1148 = vadd.f32 %v1080, %v1101
        %v1149 = vadd.f32 %v1081, %v1101
        %v1150 = vadd.f32 %v1082, %v1101
        %v1151 = vadd.f32 %v1083, %v1101
        %v1152 = vadd.f32 %v1084, %v1101
        %v1153 = vadd.f32 %v1085, %v1101
        %v1154 = vadd.f32 %v1086, %v1101
        %v1155 = vadd.f32 %v1087, %v1101
        %v1156 = vadd.f32 %v1088, %v1101
        %v1157 = vadd.f32 %v1089, %v1101
        %v1158 = vadd.f32 %v1090, %v1101
        %v1159 = vadd.f32 %v1091, %v1101
        %v1160 = vadd.f32 %v1092, %v1101
        %v1161 = vadd.f32 %v1093, %v1101
        %v1162 = vadd.f32 %v1094, %v1101
        %v1163 = vadd.f32 %v1095, %v1101
        %v1164 = vadd.f32 %v1096, %v1101
        %v1165 = vadd.f32 %v1097, %v1101
        %v1166 = vadd.f32 %v1098, %v1101
        %v1167 = vtanh.pop %v1103
        %v1168 = vtanh.pop %v1104
        %v1169 = vtanh.pop %v1105
        %v1170 = vtanh.pop %v1106
        %v1171 = vtanh.pop %v1107
        %v1172 = vtanh.pop %v1108
        %v1173 = vtanh.pop %v1109
        %v1174 = vtanh.pop %v1110
        %v1175 = vtanh.pop %v1111
        %v1176 = vtanh.pop %v1112
        %v1177 = vtanh.pop %v1113
        %v1178 = vtanh.pop %v1114
        %v1179 = vtanh.pop %v1115
        %v1180 = vtanh.pop %v1116
        %v1181 = vtanh.pop %v1117
        %v1182 = vtanh.pop %v1118
        %v1183 = vtanh.pop %v1119
        %v1184 = vtanh.pop %v1120
        %v1185 = vtanh.pop %v1121
        %v1186 = vtanh.pop %v1122
        %v1187 = vtanh.pop %v1123
        %v1188 = vtanh.pop %v1124
        %v1189 = vtanh.pop %v1125
        %v1190 = vtanh.pop %v1126
        %v1191 = vtanh.pop %v1127
        %v1192 = vtanh.pop %v1128
        %v1193 = vtanh.pop %v1129
        %v1194 = vtanh.pop %v1130
        %v1195 = vtanh.pop %v1131
        %v1196 = vtanh.pop %v1132
        %v1197 = vtanh.pop %v1133
        %v1198 = vtanh.pop %v1134
        %v1199 = vtanh.pop %v1135
        %v1200 = vtanh.pop %v1136
        %v1201 = vtanh.pop %v1137
        %v1202 = vtanh.pop %v1138
        %v1203 = vtanh.pop %v1139
        %v1204 = vtanh.pop %v1140
        %v1205 = vtanh.pop %v1141
        %v1206 = vtanh.pop %v1142
        %v1207 = vtanh.pop %v1143
        %v1208 = vtanh.pop %v1144
        %v1209 = vtanh.pop %v1145
        %v1210 = vtanh.pop %v1146
        %v1211 = vtanh.pop %v1147
        %v1212 = vtanh.pop %v1148
        %v1213 = vtanh.pop %v1149
        %v1214 = vtanh.pop %v1150
        %v1215 = vtanh.pop %v1151
        %v1216 = vtanh.pop %v1152
        %v1217 = vtanh.pop %v1153
        %v1218 = vtanh.pop %v1154
        %v1219 = vtanh.pop %v1155
        %v1220 = vtanh.pop %v1156
        %v1221 = vtanh.pop %v1157
        %v1222 = vtanh.pop %v1158
        %v1223 = vtanh.pop %v1159
        %v1224 = vtanh.pop %v1160
        %v1225 = vtanh.pop %v1161
        %v1226 = vtanh.pop %v1162
        %v1227 = vtanh.pop %v1163
        %v1228 = vtanh.pop %v1164
        %v1229 = vtanh.pop %v1165
        %v1230 = vtanh.pop %v1166
        %1231 = vst [vmem:[%s313] sm:$0xff] %v1167
        %1232 = vst [vmem:[%s313 + $0x8] sm:$0xff] %v1168
        %1233 = vst [vmem:[%s313 + $0x10] sm:$0xff] %v1169
        %1234 = vst [vmem:[%s313 + $0x18] sm:$0xff] %v1170
        %1235 = vst [vmem:[%s313 + $0x20] sm:$0xff] %v1171
        %1236 = vst [vmem:[%s313 + $0x28] sm:$0xff] %v1172
        %1237 = vst [vmem:[%s313 + $0x30] sm:$0xff] %v1173
        %1238 = vst [vmem:[%s313 + $0x38] sm:$0xff] %v1174
        %1239 = vst [vmem:[%s313 + $0x40] sm:$0xff] %v1175
        %1240 = vst [vmem:[%s313 + $0x48] sm:$0xff] %v1176
        %1241 = vst [vmem:[%s313 + $0x50] sm:$0xff] %v1177
        %1242 = vst [vmem:[%s313 + $0x58] sm:$0xff] %v1178
        %1243 = vst [vmem:[%s313 + $0x60] sm:$0xff] %v1179
        %1244 = vst [vmem:[%s313 + $0x68] sm:$0xff] %v1180
        %1245 = vst [vmem:[%s313 + $0x70] sm:$0xff] %v1181
        %1246 = vst [vmem:[%s313 + $0x78] sm:$0xff] %v1182
        %1247 = vst [vmem:[%s313 + $0x80] sm:$0xff] %v1183
        %1248 = vst [vmem:[%s313 + $0x88] sm:$0xff] %v1184
        %1249 = vst [vmem:[%s313 + $0x90] sm:$0xff] %v1185
        %1250 = vst [vmem:[%s313 + $0x98] sm:$0xff] %v1186
        %1251 = vst [vmem:[%s313 + $0xa0] sm:$0xff] %v1187
        %1252 = vst [vmem:[%s313 + $0xa8] sm:$0xff] %v1188
        %1253 = vst [vmem:[%s313 + $0xb0] sm:$0xff] %v1189
        %1254 = vst [vmem:[%s313 + $0xb8] sm:$0xff] %v1190
        %1255 = vst [vmem:[%s313 + $0xc0] sm:$0xff] %v1191
        %1256 = vst [vmem:[%s313 + $0xc8] sm:$0xff] %v1192
        %1257 = vst [vmem:[%s313 + $0xd0] sm:$0xff] %v1193
        %1258 = vst [vmem:[%s313 + $0xd8] sm:$0xff] %v1194
        %1259 = vst [vmem:[%s313 + $0xe0] sm:$0xff] %v1195
        %1260 = vst [vmem:[%s313 + $0xe8] sm:$0xff] %v1196
        %1261 = vst [vmem:[%s313 + $0xf0] sm:$0xff] %v1197
        %1262 = vst [vmem:[%s313 + $0xf8] sm:$0xff] %v1198
        %1263 = vst [vmem:[%s313 + $0x100] sm:$0xff] %v1199
        %1264 = vst [vmem:[%s313 + $0x108] sm:$0xff] %v1200
        %1265 = vst [vmem:[%s313 + $0x110] sm:$0xff] %v1201
        %1266 = vst [vmem:[%s313 + $0x118] sm:$0xff] %v1202
        %1267 = vst [vmem:[%s313 + $0x120] sm:$0xff] %v1203
        %1268 = vst [vmem:[%s313 + $0x128] sm:$0xff] %v1204
        %1269 = vst [vmem:[%s313 + $0x130] sm:$0xff] %v1205
        %1270 = vst [vmem:[%s313 + $0x138] sm:$0xff] %v1206
        %1271 = vst [vmem:[%s313 + $0x140] sm:$0xff] %v1207
        %1272 = vst [vmem:[%s313 + $0x148] sm:$0xff] %v1208
        %1273 = vst [vmem:[%s313 + $0x150] sm:$0xff] %v1209
        %1274 = vst [vmem:[%s313 + $0x158] sm:$0xff] %v1210
        %1275 = vst [vmem:[%s313 + $0x160] sm:$0xff] %v1211
        %1276 = vst [vmem:[%s313 + $0x168] sm:$0xff] %v1212
        %1277 = vst [vmem:[%s313 + $0x170] sm:$0xff] %v1213
        %1278 = vst [vmem:[%s313 + $0x178] sm:$0xff] %v1214
        %1279 = vst [vmem:[%s313 + $0x180] sm:$0xff] %v1215
        %1280 = vst [vmem:[%s313 + $0x188] sm:$0xff] %v1216
        %1281 = vst [vmem:[%s313 + $0x190] sm:$0xff] %v1217
        %1282 = vst [vmem:[%s313 + $0x198] sm:$0xff] %v1218
        %1283 = vst [vmem:[%s313 + $0x1a0] sm:$0xff] %v1219
        %1284 = vst [vmem:[%s313 + $0x1a8] sm:$0xff] %v1220
        %1285 = vst [vmem:[%s313 + $0x1b0] sm:$0xff] %v1221
        %1286 = vst [vmem:[%s313 + $0x1b8] sm:$0xff] %v1222
        %1287 = vst [vmem:[%s313 + $0x1c0] sm:$0xff] %v1223
        %1288 = vst [vmem:[%s313 + $0x1c8] sm:$0xff] %v1224
        %1289 = vst [vmem:[%s313 + $0x1d0] sm:$0xff] %v1225
        %1290 = vst [vmem:[%s313 + $0x1d8] sm:$0xff] %v1226
        %1291 = vst [vmem:[%s313 + $0x1e0] sm:$0xff] %v1227
        %1292 = vst [vmem:[%s313 + $0x1e8] sm:$0xff] %v1228
        %1293 = vst [vmem:[%s313 + $0x1f0] sm:$0xff] %v1229
        %1294 = vst [vmem:[%s313 + $0x1f8] sm:$0xff] %v1230
      $region40: #{_lambda_.33} parent=31 // pred_fallthru
        _
      %s1295 = smul.u32 64, %s21
      %p1296 = scmp.lt.s32.totalorder %s20, 3
      %s1297 = scalar_select %p1296, %s20, 3
      %p1298 = scmp.lt.s32.totalorder %s1295, 63
      %s1299 = scalar_select %p1298, %s1295, 63
      %p1300 = scmp.lt.s32.totalorder %s22, 0
      %s1301 = scalar_select %p1300, %s22, 0
      %s1302 = sadd.s32 %s1301, %s1299
      %s1303 = smul.addr %s1297, 64
      %s1304 = sadd.s32 %s1302, %s1303
      %s1305 = smul.addr %s1304, 8
      %s1306 = scalar_lea.vmem %s3, %s1305
      // Predicated region
      $region41: #{_lambda_.33} parent=31 // pred_check
        %p1307 = pneg %p150
      $region42: #{_lambda_.33} parent=31 // pred_check_branch
        %1309 = sbr.rel (%p1307) target = $region44
      $region43: #{_lambda_.33} parent=31 // pred_region
        %s1310 = smul.u32 64, %s21
      $region44: #{_lambda_.33} parent=31 // pred_fallthru
        _
    $region32: #{_lambda_.33} parent=5 // pred_fallthru
      _
    %p1311 = scmp.le.s32.totalorder 2, %s9
    // Predicated region
    $region45: #{_lambda_.33} parent=5 // pred_check
      %p1312 = pneg %p1311
    $region46: #{_lambda_.33} parent=5 // pred_check_branch
      %1314 = sbr.rel (%p1312) target = $region48
    $region47: #{_lambda_.33} parent=5 // pred_region
      %s1315 = ssub.s32 %s9, 2
      // Predicated region
      $region49: #{_lambda_.33} parent=47 // pred_check
        %p1316 = pneg %p156
      $region50: #{_lambda_.33} parent=47 // pred_check_branch
        %1318 = sbr.rel (%p1316) target = $region52
      $region51: #{_lambda_.33} parent=47 // pred_region
        %s1319 = smul.u32 64, %s25
        %p1320 = scmp.lt.s32.totalorder %s24, 3
        %s1321 = scalar_select %p1320, %s24, 3
        %p1322 = scmp.lt.s32.totalorder %s1319, 63
        %s1323 = scalar_select %p1322, %s1319, 63
        %p1324 = scmp.lt.s32.totalorder %s26, 0
        %s1325 = scalar_select %p1324, %s26, 0
        %s1326 = sadd.s32 %s1325, %s1323
        %s1327 = smul.addr %s1321, 64
        %s1328 = sadd.s32 %s1326, %s1327
        %s1329 = smul.addr %s1328, 8
        %s1330 = scalar_lea.vmem %s3, %s1329
      $region52: #{_lambda_.33} parent=47 // pred_fallthru
        _
    $region48: #{_lambda_.33} parent=5 // pred_fallthru
      _
  $region6: #{_lambda_.33} parent=0 // loop_footer
    %s13 = sadd.s32 1, %s9
  $region7: #{_lambda_.33} parent=0 // loop_footer_branch
    %8 = sbr.rel target = $region3
  $region8: #{_lambda_.33} parent=0 // loop_exit
    _

</llo_original>
